<compile_context>
chip_gen: v5e
topology: v5e:2x2
jax: 0.10.0
libtpu: 0.0.40
codegen_flags: <defaults>
</compile_context>

<pallas_src>
import jax
import jax.numpy as jnp
from jax import lax
from jax.experimental import pallas as pl
from jax.experimental.pallas import tpu as pltpu

BN_EPS = 1e-4                   # KAIR basicblock uses nn.BatchNorm2d(..., eps=1e-04)
MATMUL_DTYPE = jnp.bfloat16     # MXU input dtype for body conv weights
ACT_DTYPE = jnp.bfloat16        # resident activation dtype (MXU operand)


def _tile_padded_bytes(shape, dtype):
    """Physical VMEM bytes of an array, accounting for (sublane, 128)-lane tiling."""
    itemsize = jnp.dtype(dtype).itemsize
    shape = tuple(int(d) for d in shape)
    if len(shape) == 1:
        shape = (1,) + shape
    lead = 1
    for d in shape[:-2]:
        lead *= d
    s, l = shape[-2], shape[-1]
    sub_tile = 8 * max(1, 4 // itemsize)        # f32: 8, bf16: 16, int8: 32
    s_pad = -(-s // sub_tile) * sub_tile
    l_pad = -(-l // 128) * 128
    return lead * s_pad * l_pad * itemsize


def _vmem_budget_bytes():
    """Per-generation scoped-VMEM budget (v5e/v6e: 128 MiB phys, v7x: 64 MiB phys)."""
    cap = 64 * 1024 * 1024      # conservative fallback (v7x per-core capacity)
    try:
        cap = int(pltpu.get_tpu_info().vmem_capacity_bytes)
    except Exception:
        pass
    cap = max(32 * 1024 * 1024, min(cap, 128 * 1024 * 1024))
    return int(cap * 0.7)


def _make_fused_call(N, H, W, in_nc, out_nc, nc, nb):
    """Build the single fused pallas_call for the whole WDNN forward pass."""
    assert in_nc == 1 and out_nc == 1, "kernel specialized to in_nc = out_nc = 1"
    assert nb >= 2
    n_body = nb - 2

    Hp, Wp = H + 2, W + 2
    Npad = N * Hp * Wp          # flat zero-padded plane length (lane axis)
    S = Wp + 1                  # span start: first plane index whose 3x3 stencil is in-bounds
    Ospan = Npad - 2 * S        # conv span length (covers every interior pixel)
    M = N * H * W               # true interior pixel count (BatchNorm population)
    inv_m = 1.0 / float(M)

    # ---- tile-padded VMEM footprint guard (I/O + params + scratch + live temporaries) ----
    footprint = 0
    footprint += 2 * _tile_padded_bytes((1, Npad), jnp.float32)            # x, out
    footprint += _tile_padded_bytes((1, Ospan), jnp.float32)               # interior mask
    footprint += 2 * _tile_padded_bytes((nc, 9), jnp.float32)              # head/tail taps
    footprint += 3 * _tile_padded_bytes((nc, 1), jnp.float32)              # head/tail biases
    footprint += n_body * (_tile_padded_bytes((9, nc, nc), MATMUL_DTYPE)
                           + 3 * _tile_padded_bytes((nc, 1), jnp.float32))
    footprint += 2 * _tile_padded_bytes((nc, Npad), ACT_DTYPE)             # ping-pong acts
    footprint += 10 * _tile_padded_bytes((nc, Ospan), jnp.float32)         # temporaries
    footprint += 4 * _tile_padded_bytes((nc, Ospan), ACT_DTYPE)

    budget = _vmem_budget_bytes()
    if footprint > budget:
        # TODO(synk): spatially tiled two-pass-BatchNorm variant for this problem size.
        raise NotImplementedError(
            f"fused WDNN working set ({footprint} B) exceeds the VMEM budget "
            f"({budget} B); a tiled two-pass-BatchNorm variant is required")

    # Flat-plane offset of tap (ky, kx) relative to the span start S.
    tap_starts = tuple(ky * Wp + kx for ky in range(3) for kx in range(3))

    def kernel(*refs):
        it = iter(refs)
        x_ref = next(it)      # (1, Npad)    f32  zero-padded flat plane
        m_ref = next(it)      # (1, Ospan)   f32  1.0 on interior pixels, 0.0 on padding
        wh_ref = next(it)     # (nc, 9)      f32  head taps
        bh_ref = next(it)     # (nc, 1)      f32
        body = [tuple(next(it) for _ in range(4)) for _ in range(n_body)]
        #                      wT (9,nc,nc) bf16, bias / gamma / beta (nc,1) f32
        wt_ref = next(it)     # (nc, 9)      f32  tail taps
        bt_ref = next(it)     # (1, 1)       f32
        o_ref = next(it)      # (1, Npad)    f32
        act_a = next(it)      # (nc, Npad)   bf16 scratch (ping)
        act_b = next(it)      # (nc, Npad)   bf16 scratch (pong)

        mask = m_ref[...]                                   # (1, Ospan)

        # Border-only zeroing: only the first/last S lanes of each ping-pong buffer are
        # never covered by the per-layer span store; zero just those thin chunks once.
        zchunk = jnp.zeros((nc, S), dtype=ACT_DTYPE)
        act_a[:, 0:S] = zchunk
        act_a[:, S + Ospan:Npad] = zchunk
        act_b[:, 0:S] = zchunk
        act_b[:, S + Ospan:Npad] = zchunk

        # ---- head: conv3x3(1 -> nc) + bias + ReLU on the VPU (Cin = 1, no MXU win) ----
        acc = jnp.broadcast_to(bh_ref[...], (nc, Ospan))
        for t, st in enumerate(tap_starts):
            acc = acc + wh_ref[:, t:t + 1] * x_ref[:, st:st + Ospan]
        acc = jnp.maximum(acc, 0.0) * mask
        act_a[:, S:S + Ospan] = acc.astype(ACT_DTYPE)

        src, dst = act_a, act_b

        # ---- body: conv3x3(nc -> nc) as 9 accumulating MXU matmuls + fused BN + ReLU ----
        for w_ref, b_ref, g_ref, be_ref in body:
            st0 = tap_starts[0]
            acc = jnp.dot(w_ref[0], src[:, st0:st0 + Ospan],
                          preferred_element_type=jnp.float32)
            for t in range(1, 9):
                st = tap_starts[t]
                acc = acc + jnp.dot(w_ref[t], src[:, st:st + Ospan],
                                    preferred_element_type=jnp.float32)
            acc = acc + b_ref[...]
            # One-pass training-mode BatchNorm stats over interior pixels only.
            acc_m = acc * mask
            s1 = jnp.sum(acc_m, axis=1, keepdims=True)               # (nc, 1)
            s2 = jnp.sum(acc_m * acc, axis=1, keepdims=True)         # sum x^2 (interior)
            mean = s1 * inv_m
            var = s2 * inv_m - mean * mean
            scale = g_ref[...] * lax.rsqrt(var + BN_EPS)
            shift = be_ref[...] - mean * scale
            r = jnp.maximum(acc * scale + shift, 0.0) * mask
            dst[:, S:S + Ospan] = r.astype(ACT_DTYPE)
            src, dst = dst, src

        # ---- tail: conv3x3(nc -> 1): 9 tap-FMAs into (nc, Ospan), ONE sublane reduce ----
        tacc = jnp.zeros((nc, Ospan), jnp.float32)
        for t, st in enumerate(tap_starts):
            tacc = tacc + src[:, st:st + Ospan].astype(jnp.float32) * wt_ref[:, t:t + 1]
        n_span = jnp.sum(tacc, axis=0, keepdims=True) + bt_ref[...]  # (1, Ospan)

        # ---- residual out = x - model(x): dense lane-wide store over the flat plane ----
        o_ref[...] = jnp.zeros_like(o_ref)
        o_ref[:, S:S + Ospan] = (x_ref[:, S:S + Ospan] - n_span) * mask

    n_inputs = 6 + 4 * n_body
    vmem = pl.BlockSpec(memory_space=pltpu.MemorySpace.VMEM)

    flops = 2 * M * 9 * (in_nc * nc + n_body * nc * nc + nc * out_nc)
    bytes_accessed = (2 * Npad * 4 + Ospan * 4
                      + 2 * (9 * nc + nc) * 4
                      + n_body * (9 * nc * nc * 2 + 3 * nc * 4))
    cost = pl.CostEstimate(flops=flops, transcendentals=n_body * nc,
                           bytes_accessed=bytes_accessed)

    # TODO(synk): add a "parallel" grid axis (batch / row tiles with halo) + two-pass BN
    # to shard across v7x's two TensorCores and pipeline DMA for large images.
    return pl.pallas_call(
        kernel,
        out_shape=jax.ShapeDtypeStruct((1, Npad), jnp.float32),
        in_specs=[vmem] * n_inputs,
        out_specs=vmem,
        scratch_shapes=[
            pltpu.VMEM((nc, Npad), ACT_DTYPE),
            pltpu.VMEM((nc, Npad), ACT_DTYPE),
        ],
        compiler_params=pltpu.CompilerParams(vmem_limit_bytes=budget),
        cost_estimate=cost,
    )


def init_params(key, in_nc=1, out_nc=1, nc=32, nb=4):
    """Deterministic synthetic parameters (shapes match the PyTorch module)."""
    chans = [in_nc] + [nc] * (nb - 1) + [out_nc]
    params = []
    for i in range(nb):
        cin, cout = chans[i], chans[i + 1]
        key, kw, kb, kg, kbt = jax.random.split(key, 5)
        scale = 1.0 / float(3 * 3 * cin) ** 0.5
        p = {
            'w': jax.random.uniform(kw, (3, 3, cin, cout), jnp.float32, -scale, scale),
            'b': jax.random.uniform(kb, (1, cout), jnp.float32, -scale, scale),
        }
        if 0 < i < nb - 1:  # body layers ('CBR') have BatchNorm
            p['gamma'] = jax.random.uniform(kg, (1, cout), jnp.float32, 0.5, 1.5)
            p['beta'] = jax.random.uniform(kbt, (1, cout), jnp.float32, -0.1, 0.1)
        params.append(p)
    return params


def wdnn_forward(x_nchw, params):
    """WDNN forward: x - model(x). Input/output NCHW (PyTorch convention)."""
    N, in_nc, H, W = x_nchw.shape
    nb = len(params)
    nc = params[0]['w'].shape[3]
    out_nc = params[-1]['w'].shape[3]
    Hp, Wp = H + 2, W + 2
    Npad = N * Hp * Wp
    S = Wp + 1
    Ospan = Npad - 2 * S

    # Lane-dense kernel I/O: flat zero-padded plane (1, N*Hp*Wp) + interior mask.
    x_img = x_nchw.reshape(N, H, W)
    x_pad = jnp.pad(x_img, ((0, 0), (1, 1), (1, 1))).reshape(1, Npad)
    mask = jnp.pad(jnp.ones((N, H, W), jnp.float32),
                   ((0, 0), (1, 1), (1, 1))).reshape(1, Npad)[:, S:S + Ospan]

    args = [x_pad, mask,
            jnp.transpose(params[0]['w'].reshape(9, nc)),          # head taps (nc, 9)
            params[0]['b'].reshape(nc, 1)]
    for p in params[1:-1]:
        wT = jnp.transpose(p['w'].reshape(9, nc, nc), (0, 2, 1)).astype(MATMUL_DTYPE)
        args += [wT, p['b'].reshape(nc, 1),
                 p['gamma'].reshape(nc, 1), p['beta'].reshape(nc, 1)]
    args += [jnp.transpose(params[-1]['w'].reshape(9, nc)),        # tail taps (nc, 9)
             params[-1]['b'].reshape(1, 1)]

    call = _make_fused_call(N, H, W, in_nc, out_nc, nc, nb)
    out_flat = call(*args)                                         # (1, Npad)
    out = out_flat.reshape(N, Hp, Wp)[:, 1:H + 1, 1:W + 1]
    return out.reshape(N, out_nc, H, W)


def wdnn_reference(x_nchw, params):
    """Pure-JAX (f32) reference for validation."""
    h = x_nchw
    nlayers = len(params)
    for li, p in enumerate(params):
        w_oihw = jnp.transpose(p['w'], (3, 2, 0, 1))
        h = lax.conv_general_dilated(h, w_oihw, (1, 1), ((1, 1), (1, 1)),
                                     dimension_numbers=('NCHW', 'OIHW', 'NCHW'))
        h = h + p['b'].reshape(1, -1, 1, 1)
        if 'gamma' in p:
            mean = jnp.mean(h, axis=(0, 2, 3), keepdims=True)
            var = jnp.mean(jnp.square(h - mean), axis=(0, 2, 3), keepdims=True)
            h = (h - mean) * lax.rsqrt(var + BN_EPS)
            h = h * p['gamma'].reshape(1, -1, 1, 1) + p['beta'].reshape(1, -1, 1, 1)
        if li < nlayers - 1:
            h = jnp.maximum(h, 0.0)
    return x_nchw - h


if __name__ == "__main__":
    key = jax.random.PRNGKey(0)
    kx, kp = jax.random.split(key)

    # Small shapes consistent with the module (in_nc=out_nc=1, nc channels, nb convs).
    N, in_nc, out_nc, H, W = 2, 1, 1, 16, 16
    nc, nb = 32, 4

    x = jax.random.normal(kx, (N, in_nc, H, W), jnp.float32)
    params = init_params(kp, in_nc=in_nc, out_nc=out_nc, nc=nc, nb=nb)

    fwd = jax.jit(wdnn_forward)
    out = jax.block_until_ready(fwd(x, params))

    assert out.shape == (N, out_nc, H, W)
    ref = wdnn_reference(x, params)
    max_err = float(jnp.max(jnp.abs(out - ref)))
    # bf16 MXU operands / bf16-resident activations (f32 accumulation) -> loosened tol.
    assert jnp.allclose(out, ref, rtol=5e-2, atol=5e-2), f"max_err={max_err}"

    print("KERNEL_OK")
</pallas_src>

<mosaic_0001>
module attributes {stable_mosaic.version = 11 : i64} {
  func.func @kernel(%arg0: memref<1x648xf32, #tpu.memory_space<vmem>>, %arg1: memref<1x610xf32, #tpu.memory_space<vmem>>, %arg2: memref<32x9xf32, #tpu.memory_space<vmem>>, %arg3: memref<32x1xf32, #tpu.memory_space<vmem>>, %arg4: memref<9x32x32xbf16, #tpu.memory_space<vmem>>, %arg5: memref<32x1xf32, #tpu.memory_space<vmem>>, %arg6: memref<32x1xf32, #tpu.memory_space<vmem>>, %arg7: memref<32x1xf32, #tpu.memory_space<vmem>>, %arg8: memref<9x32x32xbf16, #tpu.memory_space<vmem>>, %arg9: memref<32x1xf32, #tpu.memory_space<vmem>>, %arg10: memref<32x1xf32, #tpu.memory_space<vmem>>, %arg11: memref<32x1xf32, #tpu.memory_space<vmem>>, %arg12: memref<32x9xf32, #tpu.memory_space<vmem>>, %arg13: memref<1x1xf32, #tpu.memory_space<vmem>>, %arg14: memref<1x648xf32, #tpu.memory_space<vmem>>, %arg15: memref<32x648xbf16, #tpu.memory_space<vmem>>, %arg16: memref<32x648xbf16, #tpu.memory_space<vmem>>) attributes {dimension_semantics = [], scalar_prefetch = 0 : i64, scratch_operands = 2 : i64, tpu.core_type = #tpu.core_type<tc>} {
    %c0 = arith.constant 0 : index
    %c0_0 = arith.constant 0 : index
    %0 = vector.load %arg1[%c0, %c0_0] : memref<1x610xf32, #tpu.memory_space<vmem>>, vector<1x610xf32>
    %cst = arith.constant 0.000000e+00 : bf16
    %1 = vector.broadcast %cst : bf16 to vector<32x19xbf16>
    %c0_1 = arith.constant 0 : index
    %c0_2 = arith.constant 0 : index
    %2 = vector.load %arg15[%c0_1, %c0_2] : memref<32x648xbf16, #tpu.memory_space<vmem>>, vector<32x19xbf16>
    tpu.vector_store %arg15[%c0_1, %c0_2], %1 {strides = array<i32>} : memref<32x648xbf16, #tpu.memory_space<vmem>>, vector<32x19xbf16>,
    %c0_3 = arith.constant 0 : index
    %c629 = arith.constant 629 : index
    %3 = vector.load %arg15[%c0_3, %c629] : memref<32x648xbf16, #tpu.memory_space<vmem>>, vector<32x19xbf16>
    tpu.vector_store %arg15[%c0_3, %c629], %1 {strides = array<i32>} : memref<32x648xbf16, #tpu.memory_space<vmem>>, vector<32x19xbf16>,
    %c0_4 = arith.constant 0 : index
    %c0_5 = arith.constant 0 : index
    %4 = vector.load %arg16[%c0_4, %c0_5] : memref<32x648xbf16, #tpu.memory_space<vmem>>, vector<32x19xbf16>
    tpu.vector_store %arg16[%c0_4, %c0_5], %1 {strides = array<i32>} : memref<32x648xbf16, #tpu.memory_space<vmem>>, vector<32x19xbf16>,
    %c0_6 = arith.constant 0 : index
    %c629_7 = arith.constant 629 : index
    %5 = vector.load %arg16[%c0_6, %c629_7] : memref<32x648xbf16, #tpu.memory_space<vmem>>, vector<32x19xbf16>
    tpu.vector_store %arg16[%c0_6, %c629_7], %1 {strides = array<i32>} : memref<32x648xbf16, #tpu.memory_space<vmem>>, vector<32x19xbf16>,
    %c0_8 = arith.constant 0 : index
    %c0_9 = arith.constant 0 : index
    %6 = vector.load %arg3[%c0_8, %c0_9] : memref<32x1xf32, #tpu.memory_space<vmem>>, vector<32x1xf32>
    %7 = vector.shape_cast %6 : vector<32x1xf32> to vector<32x1xf32>
    %8 = vector.broadcast %7 : vector<32x1xf32> to vector<32x610xf32>
    %c0_10 = arith.constant 0 : index
    %c0_11 = arith.constant 0 : index
    %9 = vector.load %arg2[%c0_10, %c0_11] : memref<32x9xf32, #tpu.memory_space<vmem>>, vector<32x1xf32>
    %c0_12 = arith.constant 0 : index
    %c0_13 = arith.constant 0 : index
    %10 = vector.load %arg0[%c0_12, %c0_13] : memref<1x648xf32, #tpu.memory_space<vmem>>, vector<1x610xf32>
    %11 = vector.broadcast %9 : vector<32x1xf32> to vector<32x610xf32>
    %12 = vector.broadcast %10 : vector<1x610xf32> to vector<32x610xf32>
    %13 = arith.mulf %11, %12 : vector<32x610xf32>
    %14 = arith.addf %8, %13 : vector<32x610xf32>
    %c0_14 = arith.constant 0 : index
    %c1 = arith.constant 1 : index
    %15 = vector.load %arg2[%c0_14, %c1] : memref<32x9xf32, #tpu.memory_space<vmem>>, vector<32x1xf32>
    %c0_15 = arith.constant 0 : index
    %c1_16 = arith.constant 1 : index
    %16 = vector.load %arg0[%c0_15, %c1_16] : memref<1x648xf32, #tpu.memory_space<vmem>>, vector<1x610xf32>
    %17 = vector.broadcast %15 : vector<32x1xf32> to vector<32x610xf32>
    %18 = vector.broadcast %16 : vector<1x610xf32> to vector<32x610xf32>
    %19 = arith.mulf %17, %18 : vector<32x610xf32>
    %20 = arith.addf %14, %19 : vector<32x610xf32>
    %c0_17 = arith.constant 0 : index
    %c2 = arith.constant 2 : index
    %21 = vector.load %arg2[%c0_17, %c2] : memref<32x9xf32, #tpu.memory_space<vmem>>, vector<32x1xf32>
    %c0_18 = arith.constant 0 : index
    %c2_19 = arith.constant 2 : index
    %22 = vector.load %arg0[%c0_18, %c2_19] : memref<1x648xf32, #tpu.memory_space<vmem>>, vector<1x610xf32>
    %23 = vector.broadcast %21 : vector<32x1xf32> to vector<32x610xf32>
    %24 = vector.broadcast %22 : vector<1x610xf32> to vector<32x610xf32>
    %25 = arith.mulf %23, %24 : vector<32x610xf32>
    %26 = arith.addf %20, %25 : vector<32x610xf32>
    %c0_20 = arith.constant 0 : index
    %c3 = arith.constant 3 : index
    %27 = vector.load %arg2[%c0_20, %c3] : memref<32x9xf32, #tpu.memory_space<vmem>>, vector<32x1xf32>
    %c0_21 = arith.constant 0 : index
    %c18 = arith.constant 18 : index
    %28 = vector.load %arg0[%c0_21, %c18] : memref<1x648xf32, #tpu.memory_space<vmem>>, vector<1x610xf32>
    %29 = vector.broadcast %27 : vector<32x1xf32> to vector<32x610xf32>
    %30 = vector.broadcast %28 : vector<1x610xf32> to vector<32x610xf32>
    %31 = arith.mulf %29, %30 : vector<32x610xf32>
    %32 = arith.addf %26, %31 : vector<32x610xf32>
    %c0_22 = arith.constant 0 : index
    %c4 = arith.constant 4 : index
    %33 = vector.load %arg2[%c0_22, %c4] : memref<32x9xf32, #tpu.memory_space<vmem>>, vector<32x1xf32>
    %c0_23 = arith.constant 0 : index
    %c19 = arith.constant 19 : index
    %34 = vector.load %arg0[%c0_23, %c19] : memref<1x648xf32, #tpu.memory_space<vmem>>, vector<1x610xf32>
    %35 = vector.broadcast %33 : vector<32x1xf32> to vector<32x610xf32>
    %36 = vector.broadcast %34 : vector<1x610xf32> to vector<32x610xf32>
    %37 = arith.mulf %35, %36 : vector<32x610xf32>
    %38 = arith.addf %32, %37 : vector<32x610xf32>
    %c0_24 = arith.constant 0 : index
    %c5 = arith.constant 5 : index
    %39 = vector.load %arg2[%c0_24, %c5] : memref<32x9xf32, #tpu.memory_space<vmem>>, vector<32x1xf32>
    %c0_25 = arith.constant 0 : index
    %c20 = arith.constant 20 : index
    %40 = vector.load %arg0[%c0_25, %c20] : memref<1x648xf32, #tpu.memory_space<vmem>>, vector<1x610xf32>
    %41 = vector.broadcast %39 : vector<32x1xf32> to vector<32x610xf32>
    %42 = vector.broadcast %40 : vector<1x610xf32> to vector<32x610xf32>
    %43 = arith.mulf %41, %42 : vector<32x610xf32>
    %44 = arith.addf %38, %43 : vector<32x610xf32>
    %c0_26 = arith.constant 0 : index
    %c6 = arith.constant 6 : index
    %45 = vector.load %arg2[%c0_26, %c6] : memref<32x9xf32, #tpu.memory_space<vmem>>, vector<32x1xf32>
    %c0_27 = arith.constant 0 : index
    %c36 = arith.constant 36 : index
    %46 = vector.load %arg0[%c0_27, %c36] : memref<1x648xf32, #tpu.memory_space<vmem>>, vector<1x610xf32>
    %47 = vector.broadcast %45 : vector<32x1xf32> to vector<32x610xf32>
    %48 = vector.broadcast %46 : vector<1x610xf32> to vector<32x610xf32>
    %49 = arith.mulf %47, %48 : vector<32x610xf32>
    %50 = arith.addf %44, %49 : vector<32x610xf32>
    %c0_28 = arith.constant 0 : index
    %c7 = arith.constant 7 : index
    %51 = vector.load %arg2[%c0_28, %c7] : memref<32x9xf32, #tpu.memory_space<vmem>>, vector<32x1xf32>
    %c0_29 = arith.constant 0 : index
    %c37 = arith.constant 37 : index
    %52 = vector.load %arg0[%c0_29, %c37] : memref<1x648xf32, #tpu.memory_space<vmem>>, vector<1x610xf32>
    %53 = vector.broadcast %51 : vector<32x1xf32> to vector<32x610xf32>
    %54 = vector.broadcast %52 : vector<1x610xf32> to vector<32x610xf32>
    %55 = arith.mulf %53, %54 : vector<32x610xf32>
    %56 = arith.addf %50, %55 : vector<32x610xf32>
    %c0_30 = arith.constant 0 : index
    %c8 = arith.constant 8 : index
    %57 = vector.load %arg2[%c0_30, %c8] : memref<32x9xf32, #tpu.memory_space<vmem>>, vector<32x1xf32>
    %c0_31 = arith.constant 0 : index
    %c38 = arith.constant 38 : index
    %58 = vector.load %arg0[%c0_31, %c38] : memref<1x648xf32, #tpu.memory_space<vmem>>, vector<1x610xf32>
    %59 = vector.broadcast %57 : vector<32x1xf32> to vector<32x610xf32>
    %60 = vector.broadcast %58 : vector<1x610xf32> to vector<32x610xf32>
    %61 = arith.mulf %59, %60 : vector<32x610xf32>
    %62 = arith.addf %56, %61 : vector<32x610xf32>
    %cst_32 = arith.constant 0.000000e+00 : f32
    %63 = vector.broadcast %cst_32 : f32 to vector<32x610xf32>
    %64 = arith.maximumf %62, %63 : vector<32x610xf32>
    %65 = vector.broadcast %0 : vector<1x610xf32> to vector<32x610xf32>
    %66 = arith.mulf %64, %65 : vector<32x610xf32>
    %67 = arith.truncf %66 : vector<32x610xf32> to vector<32x610xbf16>
    %c0_33 = arith.constant 0 : index
    %c19_34 = arith.constant 19 : index
    %68 = vector.load %arg15[%c0_33, %c19_34] : memref<32x648xbf16, #tpu.memory_space<vmem>>, vector<32x610xbf16>
    tpu.vector_store %arg15[%c0_33, %c19_34], %67 {strides = array<i32>} : memref<32x648xbf16, #tpu.memory_space<vmem>>, vector<32x610xbf16>,
    %c0_35 = arith.constant 0 : index
    %c0_36 = arith.constant 0 : index
    %c0_37 = arith.constant 0 : index
    %69 = vector.load %arg4[%c0_35, %c0_36, %c0_37] : memref<9x32x32xbf16, #tpu.memory_space<vmem>>, vector<1x32x32xbf16>
    %70 = vector.shape_cast %69 : vector<1x32x32xbf16> to vector<32x32xbf16>
    %c0_38 = arith.constant 0 : index
    %c0_39 = arith.constant 0 : index
    %71 = vector.load %arg15[%c0_38, %c0_39] : memref<32x648xbf16, #tpu.memory_space<vmem>>, vector<32x610xbf16>
    %cst_40 = arith.constant dense<0.000000e+00> : vector<32x610xf32>
    %72 = tpu.matmul %70, %71, %cst_40 {dimension_numbers = #tpu.dot_dimension_numbers<[1], [0], [0], [1], [0, 0, 1, 1], [], []>} : vector<32x32xbf16>, vector<32x610xbf16>, vector<32x610xf32> -> vector<32x610xf32>
    %c1_41 = arith.constant 1 : index
    %c0_42 = arith.constant 0 : index
    %c0_43 = arith.constant 0 : index
    %73 = vector.load %arg4[%c1_41, %c0_42, %c0_43] : memref<9x32x32xbf16, #tpu.memory_space<vmem>>, vector<1x32x32xbf16>
    %74 = vector.shape_cast %73 : vector<1x32x32xbf16> to vector<32x32xbf16>
    %c0_44 = arith.constant 0 : index
    %c1_45 = arith.constant 1 : index
    %75 = vector.load %arg15[%c0_44, %c1_45] : memref<32x648xbf16, #tpu.memory_space<vmem>>, vector<32x610xbf16>
    %cst_46 = arith.constant dense<0.000000e+00> : vector<32x610xf32>
    %76 = tpu.matmul %74, %75, %cst_46 {dimension_numbers = #tpu.dot_dimension_numbers<[1], [0], [0], [1], [0, 0, 1, 1], [], []>} : vector<32x32xbf16>, vector<32x610xbf16>, vector<32x610xf32> -> vector<32x610xf32>
    %77 = arith.addf %72, %76 : vector<32x610xf32>
    %c2_47 = arith.constant 2 : index
    %c0_48 = arith.constant 0 : index
    %c0_49 = arith.constant 0 : index
    %78 = vector.load %arg4[%c2_47, %c0_48, %c0_49] : memref<9x32x32xbf16, #tpu.memory_space<vmem>>, vector<1x32x32xbf16>
    %79 = vector.shape_cast %78 : vector<1x32x32xbf16> to vector<32x32xbf16>
    %c0_50 = arith.constant 0 : index
    %c2_51 = arith.constant 2 : index
    %80 = vector.load %arg15[%c0_50, %c2_51] : memref<32x648xbf16, #tpu.memory_space<vmem>>, vector<32x610xbf16>
    %cst_52 = arith.constant dense<0.000000e+00> : vector<32x610xf32>
    %81 = tpu.matmul %79, %80, %cst_52 {dimension_numbers = #tpu.dot_dimension_numbers<[1], [0], [0], [1], [0, 0, 1, 1], [], []>} : vector<32x32xbf16>, vector<32x610xbf16>, vector<32x610xf32> -> vector<32x610xf32>
    %82 = arith.addf %77, %81 : vector<32x610xf32>
    %c3_53 = arith.constant 3 : index
    %c0_54 = arith.constant 0 : index
    %c0_55 = arith.constant 0 : index
    %83 = vector.load %arg4[%c3_53, %c0_54, %c0_55] : memref<9x32x32xbf16, #tpu.memory_space<vmem>>, vector<1x32x32xbf16>
    %84 = vector.shape_cast %83 : vector<1x32x32xbf16> to vector<32x32xbf16>
    %c0_56 = arith.constant 0 : index
    %c18_57 = arith.constant 18 : index
    %85 = vector.load %arg15[%c0_56, %c18_57] : memref<32x648xbf16, #tpu.memory_space<vmem>>, vector<32x610xbf16>
    %cst_58 = arith.constant dense<0.000000e+00> : vector<32x610xf32>
    %86 = tpu.matmul %84, %85, %cst_58 {dimension_numbers = #tpu.dot_dimension_numbers<[1], [0], [0], [1], [0, 0, 1, 1], [], []>} : vector<32x32xbf16>, vector<32x610xbf16>, vector<32x610xf32> -> vector<32x610xf32>
    %87 = arith.addf %82, %86 : vector<32x610xf32>
    %c4_59 = arith.constant 4 : index
    %c0_60 = arith.constant 0 : index
    %c0_61 = arith.constant 0 : index
    %88 = vector.load %arg4[%c4_59, %c0_60, %c0_61] : memref<9x32x32xbf16, #tpu.memory_space<vmem>>, vector<1x32x32xbf16>
    %89 = vector.shape_cast %88 : vector<1x32x32xbf16> to vector<32x32xbf16>
    %c0_62 = arith.constant 0 : index
    %c19_63 = arith.constant 19 : index
    %90 = vector.load %arg15[%c0_62, %c19_63] : memref<32x648xbf16, #tpu.memory_space<vmem>>, vector<32x610xbf16>
    %cst_64 = arith.constant dense<0.000000e+00> : vector<32x610xf32>
    %91 = tpu.matmul %89, %90, %cst_64 {dimension_numbers = #tpu.dot_dimension_numbers<[1], [0], [0], [1], [0, 0, 1, 1], [], []>} : vector<32x32xbf16>, vector<32x610xbf16>, vector<32x610xf32> -> vector<32x610xf32>
    %92 = arith.addf %87, %91 : vector<32x610xf32>
    %c5_65 = arith.constant 5 : index
    %c0_66 = arith.constant 0 : index
    %c0_67 = arith.constant 0 : index
    %93 = vector.load %arg4[%c5_65, %c0_66, %c0_67] : memref<9x32x32xbf16, #tpu.memory_space<vmem>>, vector<1x32x32xbf16>
    %94 = vector.shape_cast %93 : vector<1x32x32xbf16> to vector<32x32xbf16>
    %c0_68 = arith.constant 0 : index
    %c20_69 = arith.constant 20 : index
    %95 = vector.load %arg15[%c0_68, %c20_69] : memref<32x648xbf16, #tpu.memory_space<vmem>>, vector<32x610xbf16>
    %cst_70 = arith.constant dense<0.000000e+00> : vector<32x610xf32>
    %96 = tpu.matmul %94, %95, %cst_70 {dimension_numbers = #tpu.dot_dimension_numbers<[1], [0], [0], [1], [0, 0, 1, 1], [], []>} : vector<32x32xbf16>, vector<32x610xbf16>, vector<32x610xf32> -> vector<32x610xf32>
    %97 = arith.addf %92, %96 : vector<32x610xf32>
    %c6_71 = arith.constant 6 : index
    %c0_72 = arith.constant 0 : index
    %c0_73 = arith.constant 0 : index
    %98 = vector.load %arg4[%c6_71, %c0_72, %c0_73] : memref<9x32x32xbf16, #tpu.memory_space<vmem>>, vector<1x32x32xbf16>
    %99 = vector.shape_cast %98 : vector<1x32x32xbf16> to vector<32x32xbf16>
    %c0_74 = arith.constant 0 : index
    %c36_75 = arith.constant 36 : index
    %100 = vector.load %arg15[%c0_74, %c36_75] : memref<32x648xbf16, #tpu.memory_space<vmem>>, vector<32x610xbf16>
    %cst_76 = arith.constant dense<0.000000e+00> : vector<32x610xf32>
    %101 = tpu.matmul %99, %100, %cst_76 {dimension_numbers = #tpu.dot_dimension_numbers<[1], [0], [0], [1], [0, 0, 1, 1], [], []>} : vector<32x32xbf16>, vector<32x610xbf16>, vector<32x610xf32> -> vector<32x610xf32>
    %102 = arith.addf %97, %101 : vector<32x610xf32>
    %c7_77 = arith.constant 7 : index
    %c0_78 = arith.constant 0 : index
    %c0_79 = arith.constant 0 : index
    %103 = vector.load %arg4[%c7_77, %c0_78, %c0_79] : memref<9x32x32xbf16, #tpu.memory_space<vmem>>, vector<1x32x32xbf16>
    %104 = vector.shape_cast %103 : vector<1x32x32xbf16> to vector<32x32xbf16>
    %c0_80 = arith.constant 0 : index
    %c37_81 = arith.constant 37 : index
    %105 = vector.load %arg15[%c0_80, %c37_81] : memref<32x648xbf16, #tpu.memory_space<vmem>>, vector<32x610xbf16>
    %cst_82 = arith.constant dense<0.000000e+00> : vector<32x610xf32>
    %106 = tpu.matmul %104, %105, %cst_82 {dimension_numbers = #tpu.dot_dimension_numbers<[1], [0], [0], [1], [0, 0, 1, 1], [], []>} : vector<32x32xbf16>, vector<32x610xbf16>, vector<32x610xf32> -> vector<32x610xf32>
    %107 = arith.addf %102, %106 : vector<32x610xf32>
    %c8_83 = arith.constant 8 : index
    %c0_84 = arith.constant 0 : index
    %c0_85 = arith.constant 0 : index
    %108 = vector.load %arg4[%c8_83, %c0_84, %c0_85] : memref<9x32x32xbf16, #tpu.memory_space<vmem>>, vector<1x32x32xbf16>
    %109 = vector.shape_cast %108 : vector<1x32x32xbf16> to vector<32x32xbf16>
    %c0_86 = arith.constant 0 : index
    %c38_87 = arith.constant 38 : index
    %110 = vector.load %arg15[%c0_86, %c38_87] : memref<32x648xbf16, #tpu.memory_space<vmem>>, vector<32x610xbf16>
    %cst_88 = arith.constant dense<0.000000e+00> : vector<32x610xf32>
    %111 = tpu.matmul %109, %110, %cst_88 {dimension_numbers = #tpu.dot_dimension_numbers<[1], [0], [0], [1], [0, 0, 1, 1], [], []>} : vector<32x32xbf16>, vector<32x610xbf16>, vector<32x610xf32> -> vector<32x610xf32>
    %112 = arith.addf %107, %111 : vector<32x610xf32>
    %c0_89 = arith.constant 0 : index
    %c0_90 = arith.constant 0 : index
    %113 = vector.load %arg5[%c0_89, %c0_90] : memref<32x1xf32, #tpu.memory_space<vmem>>, vector<32x1xf32>
    %114 = vector.broadcast %113 : vector<32x1xf32> to vector<32x610xf32>
    %115 = arith.addf %112, %114 : vector<32x610xf32>
    %116 = vector.broadcast %0 : vector<1x610xf32> to vector<32x610xf32>
    %117 = arith.mulf %115, %116 : vector<32x610xf32>
    %cst_91 = arith.constant dense<0.000000e+00> : vector<32xf32>
    %118 = vector.multi_reduction <add>, %117, %cst_91 [1] : vector<32x610xf32> to vector<32xf32>
    %119 = vector.shape_cast %118 : vector<32xf32> to vector<32x1xf32>
    %120 = arith.mulf %117, %115 : vector<32x610xf32>
    %cst_92 = arith.constant dense<0.000000e+00> : vector<32xf32>
    %121 = vector.multi_reduction <add>, %120, %cst_92 [1] : vector<32x610xf32> to vector<32xf32>
    %122 = vector.shape_cast %121 : vector<32xf32> to vector<32x1xf32>
    %cst_93 = arith.constant 0.001953125 : f32
    %123 = vector.broadcast %cst_93 : f32 to vector<32x1xf32>
    %124 = arith.mulf %119, %123 : vector<32x1xf32>
    %cst_94 = arith.constant 0.001953125 : f32
    %125 = vector.broadcast %cst_94 : f32 to vector<32x1xf32>
    %126 = arith.mulf %122, %125 : vector<32x1xf32>
    %127 = arith.mulf %124, %124 : vector<32x1xf32>
    %128 = arith.subf %126, %127 : vector<32x1xf32>
    %c0_95 = arith.constant 0 : index
    %c0_96 = arith.constant 0 : index
    %129 = vector.load %arg6[%c0_95, %c0_96] : memref<32x1xf32, #tpu.memory_space<vmem>>, vector<32x1xf32>
    %cst_97 = arith.constant 9.99999974E-5 : f32
    %130 = vector.broadcast %cst_97 : f32 to vector<32x1xf32>
    %131 = arith.addf %128, %130 : vector<32x1xf32>
    %132 = math.rsqrt %131 : vector<32x1xf32>
    %133 = arith.mulf %129, %132 : vector<32x1xf32>
    %c0_98 = arith.constant 0 : index
    %c0_99 = arith.constant 0 : index
    %134 = vector.load %arg7[%c0_98, %c0_99] : memref<32x1xf32, #tpu.memory_space<vmem>>, vector<32x1xf32>
    %135 = arith.mulf %124, %133 : vector<32x1xf32>
    %136 = arith.subf %134, %135 : vector<32x1xf32>
    %137 = vector.broadcast %133 : vector<32x1xf32> to vector<32x610xf32>
    %138 = arith.mulf %115, %137 : vector<32x610xf32>
    %139 = vector.broadcast %136 : vector<32x1xf32> to vector<32x610xf32>
    %140 = arith.addf %138, %139 : vector<32x610xf32>
    %cst_100 = arith.constant 0.000000e+00 : f32
    %141 = vector.broadcast %cst_100 : f32 to vector<32x610xf32>
    %142 = arith.maximumf %140, %141 : vector<32x610xf32>
    %143 = vector.broadcast %0 : vector<1x610xf32> to vector<32x610xf32>
    %144 = arith.mulf %142, %143 : vector<32x610xf32>
    %145 = arith.truncf %144 : vector<32x610xf32> to vector<32x610xbf16>
    %c0_101 = arith.constant 0 : index
    %c19_102 = arith.constant 19 : index
    %146 = vector.load %arg16[%c0_101, %c19_102] : memref<32x648xbf16, #tpu.memory_space<vmem>>, vector<32x610xbf16>
    tpu.vector_store %arg16[%c0_101, %c19_102], %145 {strides = array<i32>} : memref<32x648xbf16, #tpu.memory_space<vmem>>, vector<32x610xbf16>,
    %c0_103 = arith.constant 0 : index
    %c0_104 = arith.constant 0 : index
    %c0_105 = arith.constant 0 : index
    %147 = vector.load %arg8[%c0_103, %c0_104, %c0_105] : memref<9x32x32xbf16, #tpu.memory_space<vmem>>, vector<1x32x32xbf16>
    %148 = vector.shape_cast %147 : vector<1x32x32xbf16> to vector<32x32xbf16>
    %c0_106 = arith.constant 0 : index
    %c0_107 = arith.constant 0 : index
    %149 = vector.load %arg16[%c0_106, %c0_107] : memref<32x648xbf16, #tpu.memory_space<vmem>>, vector<32x610xbf16>
    %cst_108 = arith.constant dense<0.000000e+00> : vector<32x610xf32>
    %150 = tpu.matmul %148, %149, %cst_108 {dimension_numbers = #tpu.dot_dimension_numbers<[1], [0], [0], [1], [0, 0, 1, 1], [], []>} : vector<32x32xbf16>, vector<32x610xbf16>, vector<32x610xf32> -> vector<32x610xf32>
    %c1_109 = arith.constant 1 : index
    %c0_110 = arith.constant 0 : index
    %c0_111 = arith.constant 0 : index
    %151 = vector.load %arg8[%c1_109, %c0_110, %c0_111] : memref<9x32x32xbf16, #tpu.memory_space<vmem>>, vector<1x32x32xbf16>
    %152 = vector.shape_cast %151 : vector<1x32x32xbf16> to vector<32x32xbf16>
    %c0_112 = arith.constant 0 : index
    %c1_113 = arith.constant 1 : index
    %153 = vector.load %arg16[%c0_112, %c1_113] : memref<32x648xbf16, #tpu.memory_space<vmem>>, vector<32x610xbf16>
    %cst_114 = arith.constant dense<0.000000e+00> : vector<32x610xf32>
    %154 = tpu.matmul %152, %153, %cst_114 {dimension_numbers = #tpu.dot_dimension_numbers<[1], [0], [0], [1], [0, 0, 1, 1], [], []>} : vector<32x32xbf16>, vector<32x610xbf16>, vector<32x610xf32> -> vector<32x610xf32>
    %155 = arith.addf %150, %154 : vector<32x610xf32>
    %c2_115 = arith.constant 2 : index
    %c0_116 = arith.constant 0 : index
    %c0_117 = arith.constant 0 : index
    %156 = vector.load %arg8[%c2_115, %c0_116, %c0_117] : memref<9x32x32xbf16, #tpu.memory_space<vmem>>, vector<1x32x32xbf16>
    %157 = vector.shape_cast %156 : vector<1x32x32xbf16> to vector<32x32xbf16>
    %c0_118 = arith.constant 0 : index
    %c2_119 = arith.constant 2 : index
    %158 = vector.load %arg16[%c0_118, %c2_119] : memref<32x648xbf16, #tpu.memory_space<vmem>>, vector<32x610xbf16>
    %cst_120 = arith.constant dense<0.000000e+00> : vector<32x610xf32>
    %159 = tpu.matmul %157, %158, %cst_120 {dimension_numbers = #tpu.dot_dimension_numbers<[1], [0], [0], [1], [0, 0, 1, 1], [], []>} : vector<32x32xbf16>, vector<32x610xbf16>, vector<32x610xf32> -> vector<32x610xf32>
    %160 = arith.addf %155, %159 : vector<32x610xf32>
    %c3_121 = arith.constant 3 : index
    %c0_122 = arith.constant 0 : index
    %c0_123 = arith.constant 0 : index
    %161 = vector.load %arg8[%c3_121, %c0_122, %c0_123] : memref<9x32x32xbf16, #tpu.memory_space<vmem>>, vector<1x32x32xbf16>
    %162 = vector.shape_cast %161 : vector<1x32x32xbf16> to vector<32x32xbf16>
    %c0_124 = arith.constant 0 : index
    %c18_125 = arith.constant 18 : index
    %163 = vector.load %arg16[%c0_124, %c18_125] : memref<32x648xbf16, #tpu.memory_space<vmem>>, vector<32x610xbf16>
    %cst_126 = arith.constant dense<0.000000e+00> : vector<32x610xf32>
    %164 = tpu.matmul %162, %163, %cst_126 {dimension_numbers = #tpu.dot_dimension_numbers<[1], [0], [0], [1], [0, 0, 1, 1], [], []>} : vector<32x32xbf16>, vector<32x610xbf16>, vector<32x610xf32> -> vector<32x610xf32>
    %165 = arith.addf %160, %164 : vector<32x610xf32>
    %c4_127 = arith.constant 4 : index
    %c0_128 = arith.constant 0 : index
    %c0_129 = arith.constant 0 : index
    %166 = vector.load %arg8[%c4_127, %c0_128, %c0_129] : memref<9x32x32xbf16, #tpu.memory_space<vmem>>, vector<1x32x32xbf16>
    %167 = vector.shape_cast %166 : vector<1x32x32xbf16> to vector<32x32xbf16>
    %c0_130 = arith.constant 0 : index
    %c19_131 = arith.constant 19 : index
    %168 = vector.load %arg16[%c0_130, %c19_131] : memref<32x648xbf16, #tpu.memory_space<vmem>>, vector<32x610xbf16>
    %cst_132 = arith.constant dense<0.000000e+00> : vector<32x610xf32>
    %169 = tpu.matmul %167, %168, %cst_132 {dimension_numbers = #tpu.dot_dimension_numbers<[1], [0], [0], [1], [0, 0, 1, 1], [], []>} : vector<32x32xbf16>, vector<32x610xbf16>, vector<32x610xf32> -> vector<32x610xf32>
    %170 = arith.addf %165, %169 : vector<32x610xf32>
    %c5_133 = arith.constant 5 : index
    %c0_134 = arith.constant 0 : index
    %c0_135 = arith.constant 0 : index
    %171 = vector.load %arg8[%c5_133, %c0_134, %c0_135] : memref<9x32x32xbf16, #tpu.memory_space<vmem>>, vector<1x32x32xbf16>
    %172 = vector.shape_cast %171 : vector<1x32x32xbf16> to vector<32x32xbf16>
    %c0_136 = arith.constant 0 : index
    %c20_137 = arith.constant 20 : index
    %173 = vector.load %arg16[%c0_136, %c20_137] : memref<32x648xbf16, #tpu.memory_space<vmem>>, vector<32x610xbf16>
    %cst_138 = arith.constant dense<0.000000e+00> : vector<32x610xf32>
    %174 = tpu.matmul %172, %173, %cst_138 {dimension_numbers = #tpu.dot_dimension_numbers<[1], [0], [0], [1], [0, 0, 1, 1], [], []>} : vector<32x32xbf16>, vector<32x610xbf16>, vector<32x610xf32> -> vector<32x610xf32>
    %175 = arith.addf %170, %174 : vector<32x610xf32>
    %c6_139 = arith.constant 6 : index
    %c0_140 = arith.constant 0 : index
    %c0_141 = arith.constant 0 : index
    %176 = vector.load %arg8[%c6_139, %c0_140, %c0_141] : memref<9x32x32xbf16, #tpu.memory_space<vmem>>, vector<1x32x32xbf16>
    %177 = vector.shape_cast %176 : vector<1x32x32xbf16> to vector<32x32xbf16>
    %c0_142 = arith.constant 0 : index
    %c36_143 = arith.constant 36 : index
    %178 = vector.load %arg16[%c0_142, %c36_143] : memref<32x648xbf16, #tpu.memory_space<vmem>>, vector<32x610xbf16>
    %cst_144 = arith.constant dense<0.000000e+00> : vector<32x610xf32>
    %179 = tpu.matmul %177, %178, %cst_144 {dimension_numbers = #tpu.dot_dimension_numbers<[1], [0], [0], [1], [0, 0, 1, 1], [], []>} : vector<32x32xbf16>, vector<32x610xbf16>, vector<32x610xf32> -> vector<32x610xf32>
    %180 = arith.addf %175, %179 : vector<32x610xf32>
    %c7_145 = arith.constant 7 : index
    %c0_146 = arith.constant 0 : index
    %c0_147 = arith.constant 0 : index
    %181 = vector.load %arg8[%c7_145, %c0_146, %c0_147] : memref<9x32x32xbf16, #tpu.memory_space<vmem>>, vector<1x32x32xbf16>
    %182 = vector.shape_cast %181 : vector<1x32x32xbf16> to vector<32x32xbf16>
    %c0_148 = arith.constant 0 : index
    %c37_149 = arith.constant 37 : index
    %183 = vector.load %arg16[%c0_148, %c37_149] : memref<32x648xbf16, #tpu.memory_space<vmem>>, vector<32x610xbf16>
    %cst_150 = arith.constant dense<0.000000e+00> : vector<32x610xf32>
    %184 = tpu.matmul %182, %183, %cst_150 {dimension_numbers = #tpu.dot_dimension_numbers<[1], [0], [0], [1], [0, 0, 1, 1], [], []>} : vector<32x32xbf16>, vector<32x610xbf16>, vector<32x610xf32> -> vector<32x610xf32>
    %185 = arith.addf %180, %184 : vector<32x610xf32>
    %c8_151 = arith.constant 8 : index
    %c0_152 = arith.constant 0 : index
    %c0_153 = arith.constant 0 : index
    %186 = vector.load %arg8[%c8_151, %c0_152, %c0_153] : memref<9x32x32xbf16, #tpu.memory_space<vmem>>, vector<1x32x32xbf16>
    %187 = vector.shape_cast %186 : vector<1x32x32xbf16> to vector<32x32xbf16>
    %c0_154 = arith.constant 0 : index
    %c38_155 = arith.constant 38 : index
    %188 = vector.load %arg16[%c0_154, %c38_155] : memref<32x648xbf16, #tpu.memory_space<vmem>>, vector<32x610xbf16>
    %cst_156 = arith.constant dense<0.000000e+00> : vector<32x610xf32>
    %189 = tpu.matmul %187, %188, %cst_156 {dimension_numbers = #tpu.dot_dimension_numbers<[1], [0], [0], [1], [0, 0, 1, 1], [], []>} : vector<32x32xbf16>, vector<32x610xbf16>, vector<32x610xf32> -> vector<32x610xf32>
    %190 = arith.addf %185, %189 : vector<32x610xf32>
    %c0_157 = arith.constant 0 : index
    %c0_158 = arith.constant 0 : index
    %191 = vector.load %arg9[%c0_157, %c0_158] : memref<32x1xf32, #tpu.memory_space<vmem>>, vector<32x1xf32>
    %192 = vector.broadcast %191 : vector<32x1xf32> to vector<32x610xf32>
    %193 = arith.addf %190, %192 : vector<32x610xf32>
    %194 = vector.broadcast %0 : vector<1x610xf32> to vector<32x610xf32>
    %195 = arith.mulf %193, %194 : vector<32x610xf32>
    %cst_159 = arith.constant dense<0.000000e+00> : vector<32xf32>
    %196 = vector.multi_reduction <add>, %195, %cst_159 [1] : vector<32x610xf32> to vector<32xf32>
    %197 = vector.shape_cast %196 : vector<32xf32> to vector<32x1xf32>
    %198 = arith.mulf %195, %193 : vector<32x610xf32>
    %cst_160 = arith.constant dense<0.000000e+00> : vector<32xf32>
    %199 = vector.multi_reduction <add>, %198, %cst_160 [1] : vector<32x610xf32> to vector<32xf32>
    %200 = vector.shape_cast %199 : vector<32xf32> to vector<32x1xf32>
    %cst_161 = arith.constant 0.001953125 : f32
    %201 = vector.broadcast %cst_161 : f32 to vector<32x1xf32>
    %202 = arith.mulf %197, %201 : vector<32x1xf32>
    %cst_162 = arith.constant 0.001953125 : f32
    %203 = vector.broadcast %cst_162 : f32 to vector<32x1xf32>
    %204 = arith.mulf %200, %203 : vector<32x1xf32>
    %205 = arith.mulf %202, %202 : vector<32x1xf32>
    %206 = arith.subf %204, %205 : vector<32x1xf32>
    %c0_163 = arith.constant 0 : index
    %c0_164 = arith.constant 0 : index
    %207 = vector.load %arg10[%c0_163, %c0_164] : memref<32x1xf32, #tpu.memory_space<vmem>>, vector<32x1xf32>
    %cst_165 = arith.constant 9.99999974E-5 : f32
    %208 = vector.broadcast %cst_165 : f32 to vector<32x1xf32>
    %209 = arith.addf %206, %208 : vector<32x1xf32>
    %210 = math.rsqrt %209 : vector<32x1xf32>
    %211 = arith.mulf %207, %210 : vector<32x1xf32>
    %c0_166 = arith.constant 0 : index
    %c0_167 = arith.constant 0 : index
    %212 = vector.load %arg11[%c0_166, %c0_167] : memref<32x1xf32, #tpu.memory_space<vmem>>, vector<32x1xf32>
    %213 = arith.mulf %202, %211 : vector<32x1xf32>
    %214 = arith.subf %212, %213 : vector<32x1xf32>
    %215 = vector.broadcast %211 : vector<32x1xf32> to vector<32x610xf32>
    %216 = arith.mulf %193, %215 : vector<32x610xf32>
    %217 = vector.broadcast %214 : vector<32x1xf32> to vector<32x610xf32>
    %218 = arith.addf %216, %217 : vector<32x610xf32>
    %cst_168 = arith.constant 0.000000e+00 : f32
    %219 = vector.broadcast %cst_168 : f32 to vector<32x610xf32>
    %220 = arith.maximumf %218, %219 : vector<32x610xf32>
    %221 = vector.broadcast %0 : vector<1x610xf32> to vector<32x610xf32>
    %222 = arith.mulf %220, %221 : vector<32x610xf32>
    %223 = arith.truncf %222 : vector<32x610xf32> to vector<32x610xbf16>
    %c0_169 = arith.constant 0 : index
    %c19_170 = arith.constant 19 : index
    %224 = vector.load %arg15[%c0_169, %c19_170] : memref<32x648xbf16, #tpu.memory_space<vmem>>, vector<32x610xbf16>
    tpu.vector_store %arg15[%c0_169, %c19_170], %223 {strides = array<i32>} : memref<32x648xbf16, #tpu.memory_space<vmem>>, vector<32x610xbf16>,
    %cst_171 = arith.constant 0.000000e+00 : f32
    %225 = vector.broadcast %cst_171 : f32 to vector<32x610xf32>
    %c0_172 = arith.constant 0 : index
    %c0_173 = arith.constant 0 : index
    %226 = vector.load %arg15[%c0_172, %c0_173] : memref<32x648xbf16, #tpu.memory_space<vmem>>, vector<32x610xbf16>
    %227 = arith.extf %226 : vector<32x610xbf16> to vector<32x610xf32>
    %c0_174 = arith.constant 0 : index
    %c0_175 = arith.constant 0 : index
    %228 = vector.load %arg12[%c0_174, %c0_175] : memref<32x9xf32, #tpu.memory_space<vmem>>, vector<32x1xf32>
    %229 = vector.broadcast %228 : vector<32x1xf32> to vector<32x610xf32>
    %230 = arith.mulf %227, %229 : vector<32x610xf32>
    %231 = arith.addf %225, %230 : vector<32x610xf32>
    %c0_176 = arith.constant 0 : index
    %c1_177 = arith.constant 1 : index
    %232 = vector.load %arg15[%c0_176, %c1_177] : memref<32x648xbf16, #tpu.memory_space<vmem>>, vector<32x610xbf16>
    %233 = arith.extf %232 : vector<32x610xbf16> to vector<32x610xf32>
    %c0_178 = arith.constant 0 : index
    %c1_179 = arith.constant 1 : index
    %234 = vector.load %arg12[%c0_178, %c1_179] : memref<32x9xf32, #tpu.memory_space<vmem>>, vector<32x1xf32>
    %235 = vector.broadcast %234 : vector<32x1xf32> to vector<32x610xf32>
    %236 = arith.mulf %233, %235 : vector<32x610xf32>
    %237 = arith.addf %231, %236 : vector<32x610xf32>
    %c0_180 = arith.constant 0 : index
    %c2_181 = arith.constant 2 : index
    %238 = vector.load %arg15[%c0_180, %c2_181] : memref<32x648xbf16, #tpu.memory_space<vmem>>, vector<32x610xbf16>
    %239 = arith.extf %238 : vector<32x610xbf16> to vector<32x610xf32>
    %c0_182 = arith.constant 0 : index
    %c2_183 = arith.constant 2 : index
    %240 = vector.load %arg12[%c0_182, %c2_183] : memref<32x9xf32, #tpu.memory_space<vmem>>, vector<32x1xf32>
    %241 = vector.broadcast %240 : vector<32x1xf32> to vector<32x610xf32>
    %242 = arith.mulf %239, %241 : vector<32x610xf32>
    %243 = arith.addf %237, %242 : vector<32x610xf32>
    %c0_184 = arith.constant 0 : index
    %c18_185 = arith.constant 18 : index
    %244 = vector.load %arg15[%c0_184, %c18_185] : memref<32x648xbf16, #tpu.memory_space<vmem>>, vector<32x610xbf16>
    %245 = arith.extf %244 : vector<32x610xbf16> to vector<32x610xf32>
    %c0_186 = arith.constant 0 : index
    %c3_187 = arith.constant 3 : index
    %246 = vector.load %arg12[%c0_186, %c3_187] : memref<32x9xf32, #tpu.memory_space<vmem>>, vector<32x1xf32>
    %247 = vector.broadcast %246 : vector<32x1xf32> to vector<32x610xf32>
    %248 = arith.mulf %245, %247 : vector<32x610xf32>
    %249 = arith.addf %243, %248 : vector<32x610xf32>
    %c0_188 = arith.constant 0 : index
    %c19_189 = arith.constant 19 : index
    %250 = vector.load %arg15[%c0_188, %c19_189] : memref<32x648xbf16, #tpu.memory_space<vmem>>, vector<32x610xbf16>
    %251 = arith.extf %250 : vector<32x610xbf16> to vector<32x610xf32>
    %c0_190 = arith.constant 0 : index
    %c4_191 = arith.constant 4 : index
    %252 = vector.load %arg12[%c0_190, %c4_191] : memref<32x9xf32, #tpu.memory_space<vmem>>, vector<32x1xf32>
    %253 = vector.broadcast %252 : vector<32x1xf32> to vector<32x610xf32>
    %254 = arith.mulf %251, %253 : vector<32x610xf32>
    %255 = arith.addf %249, %254 : vector<32x610xf32>
    %c0_192 = arith.constant 0 : index
    %c20_193 = arith.constant 20 : index
    %256 = vector.load %arg15[%c0_192, %c20_193] : memref<32x648xbf16, #tpu.memory_space<vmem>>, vector<32x610xbf16>
    %257 = arith.extf %256 : vector<32x610xbf16> to vector<32x610xf32>
    %c0_194 = arith.constant 0 : index
    %c5_195 = arith.constant 5 : index
    %258 = vector.load %arg12[%c0_194, %c5_195] : memref<32x9xf32, #tpu.memory_space<vmem>>, vector<32x1xf32>
    %259 = vector.broadcast %258 : vector<32x1xf32> to vector<32x610xf32>
    %260 = arith.mulf %257, %259 : vector<32x610xf32>
    %261 = arith.addf %255, %260 : vector<32x610xf32>
    %c0_196 = arith.constant 0 : index
    %c36_197 = arith.constant 36 : index
    %262 = vector.load %arg15[%c0_196, %c36_197] : memref<32x648xbf16, #tpu.memory_space<vmem>>, vector<32x610xbf16>
    %263 = arith.extf %262 : vector<32x610xbf16> to vector<32x610xf32>
    %c0_198 = arith.constant 0 : index
    %c6_199 = arith.constant 6 : index
    %264 = vector.load %arg12[%c0_198, %c6_199] : memref<32x9xf32, #tpu.memory_space<vmem>>, vector<32x1xf32>
    %265 = vector.broadcast %264 : vector<32x1xf32> to vector<32x610xf32>
    %266 = arith.mulf %263, %265 : vector<32x610xf32>
    %267 = arith.addf %261, %266 : vector<32x610xf32>
    %c0_200 = arith.constant 0 : index
    %c37_201 = arith.constant 37 : index
    %268 = vector.load %arg15[%c0_200, %c37_201] : memref<32x648xbf16, #tpu.memory_space<vmem>>, vector<32x610xbf16>
    %269 = arith.extf %268 : vector<32x610xbf16> to vector<32x610xf32>
    %c0_202 = arith.constant 0 : index
    %c7_203 = arith.constant 7 : index
    %270 = vector.load %arg12[%c0_202, %c7_203] : memref<32x9xf32, #tpu.memory_space<vmem>>, vector<32x1xf32>
    %271 = vector.broadcast %270 : vector<32x1xf32> to vector<32x610xf32>
    %272 = arith.mulf %269, %271 : vector<32x610xf32>
    %273 = arith.addf %267, %272 : vector<32x610xf32>
    %c0_204 = arith.constant 0 : index
    %c38_205 = arith.constant 38 : index
    %274 = vector.load %arg15[%c0_204, %c38_205] : memref<32x648xbf16, #tpu.memory_space<vmem>>, vector<32x610xbf16>
    %275 = arith.extf %274 : vector<32x610xbf16> to vector<32x610xf32>
    %c0_206 = arith.constant 0 : index
    %c8_207 = arith.constant 8 : index
    %276 = vector.load %arg12[%c0_206, %c8_207] : memref<32x9xf32, #tpu.memory_space<vmem>>, vector<32x1xf32>
    %277 = vector.broadcast %276 : vector<32x1xf32> to vector<32x610xf32>
    %278 = arith.mulf %275, %277 : vector<32x610xf32>
    %279 = arith.addf %273, %278 : vector<32x610xf32>
    %cst_208 = arith.constant dense<0.000000e+00> : vector<610xf32>
    %280 = vector.multi_reduction <add>, %279, %cst_208 [0] : vector<32x610xf32> to vector<610xf32>
    %281 = vector.shape_cast %280 : vector<610xf32> to vector<1x610xf32>
    %c0_209 = arith.constant 0 : index
    %c0_210 = arith.constant 0 : index
    %282 = vector.load %arg13[%c0_209, %c0_210] : memref<1x1xf32, #tpu.memory_space<vmem>>, vector<1x1xf32>
    %283 = vector.broadcast %282 : vector<1x1xf32> to vector<1x610xf32>
    %284 = arith.addf %281, %283 : vector<1x610xf32>
    %cst_211 = arith.constant 0.000000e+00 : f32
    %285 = vector.broadcast %cst_211 : f32 to vector<1x648xf32>
    %c0_212 = arith.constant 0 : index
    %c0_213 = arith.constant 0 : index
    %286 = vector.load %arg14[%c0_212, %c0_213] : memref<1x648xf32, #tpu.memory_space<vmem>>, vector<1x648xf32>
    tpu.vector_store %arg14[%c0_212, %c0_213], %285 {strides = array<i32>} : memref<1x648xf32, #tpu.memory_space<vmem>>, vector<1x648xf32>,
    %c0_214 = arith.constant 0 : index
    %c19_215 = arith.constant 19 : index
    %287 = vector.load %arg0[%c0_214, %c19_215] : memref<1x648xf32, #tpu.memory_space<vmem>>, vector<1x610xf32>
    %288 = arith.subf %287, %284 : vector<1x610xf32>
    %289 = arith.mulf %288, %0 : vector<1x610xf32>
    %c0_216 = arith.constant 0 : index
    %c19_217 = arith.constant 19 : index
    %290 = vector.load %arg14[%c0_216, %c19_217] : memref<1x648xf32, #tpu.memory_space<vmem>>, vector<1x610xf32>
    tpu.vector_store %arg14[%c0_216, %c19_217], %289 {strides = array<i32>} : memref<1x648xf32, #tpu.memory_space<vmem>>, vector<1x610xf32>,
    return
  }
}

</mosaic_0001>

<llo_original>
// kernel: wdnn_forward.1
$region0: #{wdnn_forward.1}
  #allocation0 [shape = 'u32[]', space=smem, size = 0x4, offset = 0x4, fixed_abs, tag = 'smem constant byte address 0x4 - core index']
  #allocation1 [shape = 'u32[72,128]{1,0:T(1,128)}', space=vmem, size = 0x9000, scoped, tag = 'internal scratch']
  #allocation2 [shape = 'bf16[32,648]{1,0:T(8,128)(2,1)}', space=vmem, size = 0xc000, scoped, tag = 'scratch operand']
  #allocation3 [shape = 'bf16[32,648]{1,0:T(8,128)(2,1)}', space=vmem, size = 0xc000, scoped, tag = 'scratch operand']
  #allocation4 [shape = 'f32[1,1]{1,0:T(1,128)S(1)}', space=vmem, size = 0x200, scoped, tag = 'scoped memory for wdnn_forward.1']
  %s0 = inlined_call_operand.vmem [shape: f32[1,648], index: 0, kind: input, shape index: {}]
  %s1 = inlined_call_operand.vmem [shape: f32[1,610], index: 1, kind: input, shape index: {}]
  %s2 = inlined_call_operand.vmem [shape: f32[32,9], index: 2, kind: input, shape index: {}]
  %s3 = inlined_call_operand.vmem [shape: f32[32,1], index: 3, kind: input, shape index: {}]
  %s4 = inlined_call_operand.vmem [shape: bf16[9,32,32], index: 4, kind: input, shape index: {}]
  %s5 = inlined_call_operand.vmem [shape: f32[32,1], index: 5, kind: input, shape index: {}]
  %s6 = inlined_call_operand.vmem [shape: f32[32,1], index: 6, kind: input, shape index: {}]
  %s7 = inlined_call_operand.vmem [shape: f32[32,1], index: 7, kind: input, shape index: {}]
  %s8 = inlined_call_operand.vmem [shape: bf16[9,32,32], index: 8, kind: input, shape index: {}]
  %s9 = inlined_call_operand.vmem [shape: f32[32,1], index: 9, kind: input, shape index: {}]
  %s10 = inlined_call_operand.vmem [shape: f32[32,1], index: 10, kind: input, shape index: {}]
  %s11 = inlined_call_operand.vmem [shape: f32[32,1], index: 11, kind: input, shape index: {}]
  %s12 = inlined_call_operand.vmem [shape: f32[32,9], index: 12, kind: input, shape index: {}]
  %s13 = inlined_call_operand.<no memory space> [shape: f32[1,1], index: 13, kind: input, shape index: {}]
  %s14 = inlined_call_operand.vmem [shape: f32[1,648], index: 14, kind: output, shape index: {}]
  %s15 = sld [smem:[#allocation0]]
  $region66: #{wdnn_forward.1} parent=0
    _
  %s17 = ssub.s32 1, %s15
  %s18 = scalar_select 0, %s17, %s15
  %v19 = vstv %s13
  %20 = vst [vmem:[#allocation4] sm:$0x1] %v19
  // Predicated region
  $region2: #{wdnn_forward.1} parent=0 // pred_check
    _
  $region3: #{wdnn_forward.1} parent=0 // pred_check_branch
    %22 = sbr.rel (0) target = $region5
  $region4: #{wdnn_forward.1} parent=0 // pred_region
    _
  $region5: #{wdnn_forward.1} parent=0 // pred_fallthru
    _
  // Predicated region
  $region6: #{wdnn_forward.1} parent=0 // pred_check
    _
  $region7: #{wdnn_forward.1} parent=0 // pred_check_branch
    %24 = sbr.rel (0) target = $region9
  $region8: #{wdnn_forward.1} parent=0 // pred_region
    _
  $region9: #{wdnn_forward.1} parent=0 // pred_fallthru
    _
  // Predicated region
  $region10: #{wdnn_forward.1} parent=0 // pred_check
    _
  $region11: #{wdnn_forward.1} parent=0 // pred_check_branch
    %26 = sbr.rel (0) target = $region13
  $region12: #{wdnn_forward.1} parent=0 // pred_region
    _
  $region13: #{wdnn_forward.1} parent=0 // pred_fallthru
    _
  // Predicated region
  $region14: #{wdnn_forward.1} parent=0 // pred_check
    _
  $region15: #{wdnn_forward.1} parent=0 // pred_check_branch
    %28 = sbr.rel (0) target = $region17
  $region16: #{wdnn_forward.1} parent=0 // pred_region
    _
  $region17: #{wdnn_forward.1} parent=0 // pred_fallthru
    _
  // Predicated region
  $region18: #{wdnn_forward.1} parent=0 // pred_check
    _
  $region19: #{wdnn_forward.1} parent=0 // pred_check_branch
    %30 = sbr.rel (0) target = $region21
  $region20: #{wdnn_forward.1} parent=0 // pred_region
    _
  $region21: #{wdnn_forward.1} parent=0 // pred_fallthru
    _
  // Predicated region
  $region22: #{wdnn_forward.1} parent=0 // pred_check
    _
  $region23: #{wdnn_forward.1} parent=0 // pred_check_branch
    %32 = sbr.rel (0) target = $region25
  $region24: #{wdnn_forward.1} parent=0 // pred_region
    _
  $region25: #{wdnn_forward.1} parent=0 // pred_fallthru
    _
  // Predicated region
  $region26: #{wdnn_forward.1} parent=0 // pred_check
    _
  $region27: #{wdnn_forward.1} parent=0 // pred_check_branch
    %34 = sbr.rel (0) target = $region29
  $region28: #{wdnn_forward.1} parent=0 // pred_region
    _
  $region29: #{wdnn_forward.1} parent=0 // pred_fallthru
    _
  // Predicated region
  $region30: #{wdnn_forward.1} parent=0 // pred_check
    _
  $region31: #{wdnn_forward.1} parent=0 // pred_check_branch
    %36 = sbr.rel (0) target = $region33
  $region32: #{wdnn_forward.1} parent=0 // pred_region
    _
  $region33: #{wdnn_forward.1} parent=0 // pred_fallthru
    _
  // Predicated region
  $region34: #{wdnn_forward.1} parent=0 // pred_check
    _
  $region35: #{wdnn_forward.1} parent=0 // pred_check_branch
    %38 = sbr.rel (0) target = $region37
  $region36: #{wdnn_forward.1} parent=0 // pred_region
    _
  $region37: #{wdnn_forward.1} parent=0 // pred_fallthru
    _
  // Predicated region
  $region38: #{wdnn_forward.1} parent=0 // pred_check
    _
  $region39: #{wdnn_forward.1} parent=0 // pred_check_branch
    %40 = sbr.rel (0) target = $region41
  $region40: #{wdnn_forward.1} parent=0 // pred_region
    _
  $region41: #{wdnn_forward.1} parent=0 // pred_fallthru
    _
  // Predicated region
  $region42: #{wdnn_forward.1} parent=0 // pred_check
    _
  $region43: #{wdnn_forward.1} parent=0 // pred_check_branch
    %42 = sbr.rel (0) target = $region45
  $region44: #{wdnn_forward.1} parent=0 // pred_region
    _
  $region45: #{wdnn_forward.1} parent=0 // pred_fallthru
    _
  // Predicated region
  $region46: #{wdnn_forward.1} parent=0 // pred_check
    _
  $region47: #{wdnn_forward.1} parent=0 // pred_check_branch
    %44 = sbr.rel (0) target = $region49
  $region48: #{wdnn_forward.1} parent=0 // pred_region
    _
  $region49: #{wdnn_forward.1} parent=0 // pred_fallthru
    _
  // Predicated region
  $region50: #{wdnn_forward.1} parent=0 // pred_check
    _
  $region51: #{wdnn_forward.1} parent=0 // pred_check_branch
    %46 = sbr.rel (0) target = $region53
  $region52: #{wdnn_forward.1} parent=0 // pred_region
    _
  $region53: #{wdnn_forward.1} parent=0 // pred_fallthru
    _
  // Predicated region
  $region54: #{wdnn_forward.1} parent=0 // pred_check
    _
  $region55: #{wdnn_forward.1} parent=0 // pred_check_branch
    %48 = sbr.rel (0) target = $region57
  $region56: #{wdnn_forward.1} parent=0 // pred_region
    _
  $region57: #{wdnn_forward.1} parent=0 // pred_fallthru
    _
  %v50 = vld [vmem:[%s1] sm:$0x1f]
  %vm51 = vcmask 150528
  %52 = vst.msk [vmem:[#allocation2] sm:$0xf] %vm51, 0
  %53 = vst.msk [vmem:[#allocation2 + $0x18] sm:$0xf] %vm51, 0
  %54 = vst.msk [vmem:[#allocation2 + $0x30] sm:$0xf] %vm51, 0
  %55 = vst.msk [vmem:[#allocation2 + $0x48] sm:$0xf] %vm51, 0
  %vm56 = vcmask 1044392
  %vm57 = vcmask 64516
  %vm58 = vmor %vm57, %vm56
  %59 = vst.msk [vmem:[#allocation2 + $0x10] sm:$0xff] %vm58, 0
  %60 = vst.msk [vmem:[#allocation2 + $0x28] sm:$0xff] %vm58, 0
  %61 = vst.msk [vmem:[#allocation2 + $0x40] sm:$0xff] %vm58, 0
  %62 = vst.msk [vmem:[#allocation2 + $0x58] sm:$0xff] %vm58, 0
  %63 = vst.msk [vmem:[#allocation3] sm:$0xf] %vm51, 0
  %64 = vst.msk [vmem:[#allocation3 + $0x18] sm:$0xf] %vm51, 0
  %65 = vst.msk [vmem:[#allocation3 + $0x30] sm:$0xf] %vm51, 0
  %66 = vst.msk [vmem:[#allocation3 + $0x48] sm:$0xf] %vm51, 0
  %67 = vst.msk [vmem:[#allocation3 + $0x10] sm:$0xff] %vm58, 0
  %68 = vst.msk [vmem:[#allocation3 + $0x28] sm:$0xff] %vm58, 0
  %69 = vst.msk [vmem:[#allocation3 + $0x40] sm:$0xff] %vm58, 0
  %70 = vst.msk [vmem:[#allocation3 + $0x58] sm:$0xff] %vm58, 0
  %v71 = vld [vmem:[%s3] sm:$0xff]
  %v72 = vld [vmem:[%s3 + $0x8] sm:$0xff]
  %v73 = vld [vmem:[%s3 + $0x10] sm:$0xff]
  %v74 = vld [vmem:[%s3 + $0x18] sm:$0xff]
  %76 = vset.pattern.permute.xlu0 0
  %77 = vperm.xlu0 %76, %v71
  %v78 = vpop.permute.xlu0 %77
  %81 = vset.pattern.permute.xlu0 0
  %82 = vperm.xlu0 %81, %v72
  %v83 = vpop.permute.xlu0 %82
  %86 = vset.pattern.permute.xlu0 0
  %87 = vperm.xlu0 %86, %v73
  %v88 = vpop.permute.xlu0 %87
  %91 = vset.pattern.permute.xlu0 0
  %92 = vperm.xlu0 %91, %v74
  %v93 = vpop.permute.xlu0 %92
  %v95 = vld [vmem:[%s2] sm:$0xff]
  %v96 = vld [vmem:[%s2 + $0x8] sm:$0xff]
  %v97 = vld [vmem:[%s2 + $0x10] sm:$0xff]
  %v98 = vld [vmem:[%s2 + $0x18] sm:$0xff]
  %v99 = vld [vmem:[%s0] sm:$0x1f]
  %101 = vset.pattern.permute.xlu0 0
  %102 = vperm.xlu0 %101, %v95
  %v103 = vpop.permute.xlu0 %102
  %106 = vset.pattern.permute.xlu0 0
  %107 = vperm.xlu0 %106, %v96
  %v108 = vpop.permute.xlu0 %107
  %111 = vset.pattern.permute.xlu0 0
  %112 = vperm.xlu0 %111, %v97
  %v113 = vpop.permute.xlu0 %112
  %116 = vset.pattern.permute.xlu0 0
  %117 = vperm.xlu0 %116, %v98
  %v118 = vpop.permute.xlu0 %117
  %v121 = vperm.slane %v99, 0
  %v122 = vperm.slane %v99, 1
  %v123 = vperm.slane %v99, 2
  %v124 = vperm.slane %v99, 3
  %v125 = vperm.slane %v99, 4
  %v131 = vmul.f32 %v103, %v121
  %v132 = vmul.f32 %v103, %v122
  %v133 = vmul.f32 %v103, %v123
  %v134 = vmul.f32 %v103, %v124
  %v135 = vmul.f32 %v103, %v125
  %v136 = vmul.f32 %v108, %v121
  %v137 = vmul.f32 %v108, %v122
  %v138 = vmul.f32 %v108, %v123
  %v139 = vmul.f32 %v108, %v124
  %v140 = vmul.f32 %v108, %v125
  %v141 = vmul.f32 %v113, %v121
  %v142 = vmul.f32 %v113, %v122
  %v143 = vmul.f32 %v113, %v123
  %v144 = vmul.f32 %v113, %v124
  %v145 = vmul.f32 %v113, %v125
  %v146 = vmul.f32 %v118, %v121
  %v147 = vmul.f32 %v118, %v122
  %v148 = vmul.f32 %v118, %v123
  %v149 = vmul.f32 %v118, %v124
  %v150 = vmul.f32 %v118, %v125
  %v151 = vadd.f32 %v78, %v131
  %v152 = vadd.f32 %v78, %v132
  %v153 = vadd.f32 %v78, %v133
  %v154 = vadd.f32 %v78, %v134
  %v155 = vadd.f32 %v78, %v135
  %v156 = vadd.f32 %v83, %v136
  %v157 = vadd.f32 %v83, %v137
  %v158 = vadd.f32 %v83, %v138
  %v159 = vadd.f32 %v83, %v139
  %v160 = vadd.f32 %v83, %v140
  %v161 = vadd.f32 %v88, %v141
  %v162 = vadd.f32 %v88, %v142
  %v163 = vadd.f32 %v88, %v143
  %v164 = vadd.f32 %v88, %v144
  %v165 = vadd.f32 %v88, %v145
  %v166 = vadd.f32 %v93, %v146
  %v167 = vadd.f32 %v93, %v147
  %v168 = vadd.f32 %v93, %v148
  %v169 = vadd.f32 %v93, %v149
  %v170 = vadd.f32 %v93, %v150
  %171 = vset.pattern.permute.xlu0 1
  %172 = vperm.xlu0 %171, %v95
  %v173 = vpop.permute.xlu0 %172
  %175 = vset.pattern.permute.xlu0 1
  %176 = vperm.xlu0 %175, %v96
  %v177 = vpop.permute.xlu0 %176
  %179 = vset.pattern.permute.xlu0 1
  %180 = vperm.xlu0 %179, %v97
  %v181 = vpop.permute.xlu0 %180
  %183 = vset.pattern.permute.xlu0 1
  %184 = vperm.xlu0 %183, %v98
  %v185 = vpop.permute.xlu0 %184
  %v187 = vmul.f32 %v173, %v121
  %v188 = vmul.f32 %v173, %v122
  %v189 = vmul.f32 %v173, %v123
  %v190 = vmul.f32 %v173, %v124
  %v191 = vmul.f32 %v173, %v125
  %v192 = vmul.f32 %v177, %v121
  %v193 = vmul.f32 %v177, %v122
  %v194 = vmul.f32 %v177, %v123
  %v195 = vmul.f32 %v177, %v124
  %v196 = vmul.f32 %v177, %v125
  %v197 = vmul.f32 %v181, %v121
  %v198 = vmul.f32 %v181, %v122
  %v199 = vmul.f32 %v181, %v123
  %v200 = vmul.f32 %v181, %v124
  %v201 = vmul.f32 %v181, %v125
  %v202 = vmul.f32 %v185, %v121
  %v203 = vmul.f32 %v185, %v122
  %v204 = vmul.f32 %v185, %v123
  %v205 = vmul.f32 %v185, %v124
  %v206 = vmul.f32 %v185, %v125
  %227 = vrot.lane.b32.xlu0 %v187, 127
  %v228 = vpop.permute.xlu0 %227
  %229 = vrot.lane.b32.xlu0 %v188, 127
  %v230 = vpop.permute.xlu0 %229
  %231 = vrot.lane.b32.xlu0 %v189, 127
  %v232 = vpop.permute.xlu0 %231
  %233 = vrot.lane.b32.xlu0 %v190, 127
  %v234 = vpop.permute.xlu0 %233
  %235 = vrot.lane.b32.xlu0 %v191, 127
  %v236 = vpop.permute.xlu0 %235
  %237 = vrot.lane.b32.xlu0 %v192, 127
  %v238 = vpop.permute.xlu0 %237
  %239 = vrot.lane.b32.xlu0 %v193, 127
  %v240 = vpop.permute.xlu0 %239
  %241 = vrot.lane.b32.xlu0 %v194, 127
  %v242 = vpop.permute.xlu0 %241
  %243 = vrot.lane.b32.xlu0 %v195, 127
  %v244 = vpop.permute.xlu0 %243
  %245 = vrot.lane.b32.xlu0 %v196, 127
  %v246 = vpop.permute.xlu0 %245
  %247 = vrot.lane.b32.xlu0 %v197, 127
  %v248 = vpop.permute.xlu0 %247
  %249 = vrot.lane.b32.xlu0 %v198, 127
  %v250 = vpop.permute.xlu0 %249
  %251 = vrot.lane.b32.xlu0 %v199, 127
  %v252 = vpop.permute.xlu0 %251
  %253 = vrot.lane.b32.xlu0 %v200, 127
  %v254 = vpop.permute.xlu0 %253
  %255 = vrot.lane.b32.xlu0 %v201, 127
  %v256 = vpop.permute.xlu0 %255
  %257 = vrot.lane.b32.xlu0 %v202, 127
  %v258 = vpop.permute.xlu0 %257
  %259 = vrot.lane.b32.xlu0 %v203, 127
  %v260 = vpop.permute.xlu0 %259
  %261 = vrot.lane.b32.xlu0 %v204, 127
  %v262 = vpop.permute.xlu0 %261
  %263 = vrot.lane.b32.xlu0 %v205, 127
  %v264 = vpop.permute.xlu0 %263
  %265 = vrot.lane.b32.xlu0 %v206, 127
  %v266 = vpop.permute.xlu0 %265
  %vm267 = vcmask 1039360
  %v268 = vsel %vm267, %v228, %v230
  %v269 = vsel %vm267, %v230, %v232
  %v270 = vsel %vm267, %v232, %v234
  %v271 = vsel %vm267, %v234, %v236
  %v272 = vsel %vm267, %v238, %v240
  %v273 = vsel %vm267, %v240, %v242
  %v274 = vsel %vm267, %v242, %v244
  %v275 = vsel %vm267, %v244, %v246
  %v276 = vsel %vm267, %v248, %v250
  %v277 = vsel %vm267, %v250, %v252
  %v278 = vsel %vm267, %v252, %v254
  %v279 = vsel %vm267, %v254, %v256
  %v280 = vsel %vm267, %v258, %v260
  %v281 = vsel %vm267, %v260, %v262
  %v282 = vsel %vm267, %v262, %v264
  %v283 = vsel %vm267, %v264, %v266
  %v304 = vadd.f32 %v151, %v268
  %v305 = vadd.f32 %v152, %v269
  %v306 = vadd.f32 %v153, %v270
  %v307 = vadd.f32 %v154, %v271
  %v308 = vadd.f32 %v155, %v236
  %v309 = vadd.f32 %v156, %v272
  %v310 = vadd.f32 %v157, %v273
  %v311 = vadd.f32 %v158, %v274
  %v312 = vadd.f32 %v159, %v275
  %v313 = vadd.f32 %v160, %v246
  %v314 = vadd.f32 %v161, %v276
  %v315 = vadd.f32 %v162, %v277
  %v316 = vadd.f32 %v163, %v278
  %v317 = vadd.f32 %v164, %v279
  %v318 = vadd.f32 %v165, %v256
  %v319 = vadd.f32 %v166, %v280
  %v320 = vadd.f32 %v167, %v281
  %v321 = vadd.f32 %v168, %v282
  %v322 = vadd.f32 %v169, %v283
  %v323 = vadd.f32 %v170, %v266
  %324 = vset.pattern.permute.xlu0 2
  %325 = vperm.xlu0 %324, %v95
  %v326 = vpop.permute.xlu0 %325
  %328 = vset.pattern.permute.xlu0 2
  %329 = vperm.xlu0 %328, %v96
  %v330 = vpop.permute.xlu0 %329
  %332 = vset.pattern.permute.xlu0 2
  %333 = vperm.xlu0 %332, %v97
  %v334 = vpop.permute.xlu0 %333
  %336 = vset.pattern.permute.xlu0 2
  %337 = vperm.xlu0 %336, %v98
  %v338 = vpop.permute.xlu0 %337
  %v340 = vmul.f32 %v326, %v121
  %v341 = vmul.f32 %v326, %v122
  %v342 = vmul.f32 %v326, %v123
  %v343 = vmul.f32 %v326, %v124
  %v344 = vmul.f32 %v326, %v125
  %v345 = vmul.f32 %v330, %v121
  %v346 = vmul.f32 %v330, %v122
  %v347 = vmul.f32 %v330, %v123
  %v348 = vmul.f32 %v330, %v124
  %v349 = vmul.f32 %v330, %v125
  %v350 = vmul.f32 %v334, %v121
  %v351 = vmul.f32 %v334, %v122
  %v352 = vmul.f32 %v334, %v123
  %v353 = vmul.f32 %v334, %v124
  %v354 = vmul.f32 %v334, %v125
  %v355 = vmul.f32 %v338, %v121
  %v356 = vmul.f32 %v338, %v122
  %v357 = vmul.f32 %v338, %v123
  %v358 = vmul.f32 %v338, %v124
  %v359 = vmul.f32 %v338, %v125
  %380 = vrot.lane.b32.xlu0 %v340, 126
  %v381 = vpop.permute.xlu0 %380
  %382 = vrot.lane.b32.xlu0 %v341, 126
  %v383 = vpop.permute.xlu0 %382
  %384 = vrot.lane.b32.xlu0 %v342, 126
  %v385 = vpop.permute.xlu0 %384
  %386 = vrot.lane.b32.xlu0 %v343, 126
  %v387 = vpop.permute.xlu0 %386
  %388 = vrot.lane.b32.xlu0 %v344, 126
  %v389 = vpop.permute.xlu0 %388
  %390 = vrot.lane.b32.xlu0 %v345, 126
  %v391 = vpop.permute.xlu0 %390
  %392 = vrot.lane.b32.xlu0 %v346, 126
  %v393 = vpop.permute.xlu0 %392
  %394 = vrot.lane.b32.xlu0 %v347, 126
  %v395 = vpop.permute.xlu0 %394
  %396 = vrot.lane.b32.xlu0 %v348, 126
  %v397 = vpop.permute.xlu0 %396
  %398 = vrot.lane.b32.xlu0 %v349, 126
  %v399 = vpop.permute.xlu0 %398
  %400 = vrot.lane.b32.xlu0 %v350, 126
  %v401 = vpop.permute.xlu0 %400
  %402 = vrot.lane.b32.xlu0 %v351, 126
  %v403 = vpop.permute.xlu0 %402
  %404 = vrot.lane.b32.xlu0 %v352, 126
  %v405 = vpop.permute.xlu0 %404
  %406 = vrot.lane.b32.xlu0 %v353, 126
  %v407 = vpop.permute.xlu0 %406
  %408 = vrot.lane.b32.xlu0 %v354, 126
  %v409 = vpop.permute.xlu0 %408
  %410 = vrot.lane.b32.xlu0 %v355, 126
  %v411 = vpop.permute.xlu0 %410
  %412 = vrot.lane.b32.xlu0 %v356, 126
  %v413 = vpop.permute.xlu0 %412
  %414 = vrot.lane.b32.xlu0 %v357, 126
  %v415 = vpop.permute.xlu0 %414
  %416 = vrot.lane.b32.xlu0 %v358, 126
  %v417 = vpop.permute.xlu0 %416
  %418 = vrot.lane.b32.xlu0 %v359, 126
  %v419 = vpop.permute.xlu0 %418
  %vm420 = vcmask 1031168
  %v421 = vsel %vm420, %v381, %v383
  %v422 = vsel %vm420, %v383, %v385
  %v423 = vsel %vm420, %v385, %v387
  %v424 = vsel %vm420, %v387, %v389
  %v425 = vsel %vm420, %v391, %v393
  %v426 = vsel %vm420, %v393, %v395
  %v427 = vsel %vm420, %v395, %v397
  %v428 = vsel %vm420, %v397, %v399
  %v429 = vsel %vm420, %v401, %v403
  %v430 = vsel %vm420, %v403, %v405
  %v431 = vsel %vm420, %v405, %v407
  %v432 = vsel %vm420, %v407, %v409
  %v433 = vsel %vm420, %v411, %v413
  %v434 = vsel %vm420, %v413, %v415
  %v435 = vsel %vm420, %v415, %v417
  %v436 = vsel %vm420, %v417, %v419
  %v457 = vadd.f32 %v304, %v421
  %v458 = vadd.f32 %v305, %v422
  %v459 = vadd.f32 %v306, %v423
  %v460 = vadd.f32 %v307, %v424
  %v461 = vadd.f32 %v308, %v389
  %v462 = vadd.f32 %v309, %v425
  %v463 = vadd.f32 %v310, %v426
  %v464 = vadd.f32 %v311, %v427
  %v465 = vadd.f32 %v312, %v428
  %v466 = vadd.f32 %v313, %v399
  %v467 = vadd.f32 %v314, %v429
  %v468 = vadd.f32 %v315, %v430
  %v469 = vadd.f32 %v316, %v431
  %v470 = vadd.f32 %v317, %v432
  %v471 = vadd.f32 %v318, %v409
  %v472 = vadd.f32 %v319, %v433
  %v473 = vadd.f32 %v320, %v434
  %v474 = vadd.f32 %v321, %v435
  %v475 = vadd.f32 %v322, %v436
  %v476 = vadd.f32 %v323, %v419
  %477 = vset.pattern.permute.xlu0 3
  %478 = vperm.xlu0 %477, %v95
  %v479 = vpop.permute.xlu0 %478
  %481 = vset.pattern.permute.xlu0 3
  %482 = vperm.xlu0 %481, %v96
  %v483 = vpop.permute.xlu0 %482
  %485 = vset.pattern.permute.xlu0 3
  %486 = vperm.xlu0 %485, %v97
  %v487 = vpop.permute.xlu0 %486
  %489 = vset.pattern.permute.xlu0 3
  %490 = vperm.xlu0 %489, %v98
  %v491 = vpop.permute.xlu0 %490
  %v493 = vmul.f32 %v479, %v121
  %v494 = vmul.f32 %v479, %v122
  %v495 = vmul.f32 %v479, %v123
  %v496 = vmul.f32 %v479, %v124
  %v497 = vmul.f32 %v479, %v125
  %v498 = vmul.f32 %v483, %v121
  %v499 = vmul.f32 %v483, %v122
  %v500 = vmul.f32 %v483, %v123
  %v501 = vmul.f32 %v483, %v124
  %v502 = vmul.f32 %v483, %v125
  %v503 = vmul.f32 %v487, %v121
  %v504 = vmul.f32 %v487, %v122
  %v505 = vmul.f32 %v487, %v123
  %v506 = vmul.f32 %v487, %v124
  %v507 = vmul.f32 %v487, %v125
  %v508 = vmul.f32 %v491, %v121
  %v509 = vmul.f32 %v491, %v122
  %v510 = vmul.f32 %v491, %v123
  %v511 = vmul.f32 %v491, %v124
  %v512 = vmul.f32 %v491, %v125
  %533 = vrot.lane.b32.xlu0 %v493, 110
  %v534 = vpop.permute.xlu0 %533
  %535 = vrot.lane.b32.xlu0 %v494, 110
  %v536 = vpop.permute.xlu0 %535
  %537 = vrot.lane.b32.xlu0 %v495, 110
  %v538 = vpop.permute.xlu0 %537
  %539 = vrot.lane.b32.xlu0 %v496, 110
  %v540 = vpop.permute.xlu0 %539
  %541 = vrot.lane.b32.xlu0 %v497, 110
  %v542 = vpop.permute.xlu0 %541
  %543 = vrot.lane.b32.xlu0 %v498, 110
  %v544 = vpop.permute.xlu0 %543
  %545 = vrot.lane.b32.xlu0 %v499, 110
  %v546 = vpop.permute.xlu0 %545
  %547 = vrot.lane.b32.xlu0 %v500, 110
  %v548 = vpop.permute.xlu0 %547
  %549 = vrot.lane.b32.xlu0 %v501, 110
  %v550 = vpop.permute.xlu0 %549
  %551 = vrot.lane.b32.xlu0 %v502, 110
  %v552 = vpop.permute.xlu0 %551
  %553 = vrot.lane.b32.xlu0 %v503, 110
  %v554 = vpop.permute.xlu0 %553
  %555 = vrot.lane.b32.xlu0 %v504, 110
  %v556 = vpop.permute.xlu0 %555
  %557 = vrot.lane.b32.xlu0 %v505, 110
  %v558 = vpop.permute.xlu0 %557
  %559 = vrot.lane.b32.xlu0 %v506, 110
  %v560 = vpop.permute.xlu0 %559
  %561 = vrot.lane.b32.xlu0 %v507, 110
  %v562 = vpop.permute.xlu0 %561
  %563 = vrot.lane.b32.xlu0 %v508, 110
  %v564 = vpop.permute.xlu0 %563
  %565 = vrot.lane.b32.xlu0 %v509, 110
  %v566 = vpop.permute.xlu0 %565
  %567 = vrot.lane.b32.xlu0 %v510, 110
  %v568 = vpop.permute.xlu0 %567
  %569 = vrot.lane.b32.xlu0 %v511, 110
  %v570 = vpop.permute.xlu0 %569
  %571 = vrot.lane.b32.xlu0 %v512, 110
  %v572 = vpop.permute.xlu0 %571
  %vm573 = vcmask 900096
  %v574 = vsel %vm573, %v534, %v536
  %v575 = vsel %vm573, %v536, %v538
  %v576 = vsel %vm573, %v538, %v540
  %v577 = vsel %vm573, %v540, %v542
  %v578 = vsel %vm573, %v544, %v546
  %v579 = vsel %vm573, %v546, %v548
  %v580 = vsel %vm573, %v548, %v550
  %v581 = vsel %vm573, %v550, %v552
  %v582 = vsel %vm573, %v554, %v556
  %v583 = vsel %vm573, %v556, %v558
  %v584 = vsel %vm573, %v558, %v560
  %v585 = vsel %vm573, %v560, %v562
  %v586 = vsel %vm573, %v564, %v566
  %v587 = vsel %vm573, %v566, %v568
  %v588 = vsel %vm573, %v568, %v570
  %v589 = vsel %vm573, %v570, %v572
  %v610 = vadd.f32 %v457, %v574
  %v611 = vadd.f32 %v458, %v575
  %v612 = vadd.f32 %v459, %v576
  %v613 = vadd.f32 %v460, %v577
  %v614 = vadd.f32 %v461, %v542
  %v615 = vadd.f32 %v462, %v578
  %v616 = vadd.f32 %v463, %v579
  %v617 = vadd.f32 %v464, %v580
  %v618 = vadd.f32 %v465, %v581
  %v619 = vadd.f32 %v466, %v552
  %v620 = vadd.f32 %v467, %v582
  %v621 = vadd.f32 %v468, %v583
  %v622 = vadd.f32 %v469, %v584
  %v623 = vadd.f32 %v470, %v585
  %v624 = vadd.f32 %v471, %v562
  %v625 = vadd.f32 %v472, %v586
  %v626 = vadd.f32 %v473, %v587
  %v627 = vadd.f32 %v474, %v588
  %v628 = vadd.f32 %v475, %v589
  %v629 = vadd.f32 %v476, %v572
  %630 = vset.pattern.permute.xlu0 4
  %631 = vperm.xlu0 %630, %v95
  %v632 = vpop.permute.xlu0 %631
  %634 = vset.pattern.permute.xlu0 4
  %635 = vperm.xlu0 %634, %v96
  %v636 = vpop.permute.xlu0 %635
  %638 = vset.pattern.permute.xlu0 4
  %639 = vperm.xlu0 %638, %v97
  %v640 = vpop.permute.xlu0 %639
  %642 = vset.pattern.permute.xlu0 4
  %643 = vperm.xlu0 %642, %v98
  %v644 = vpop.permute.xlu0 %643
  %v646 = vmul.f32 %v632, %v121
  %v647 = vmul.f32 %v632, %v122
  %v648 = vmul.f32 %v632, %v123
  %v649 = vmul.f32 %v632, %v124
  %v650 = vmul.f32 %v632, %v125
  %v651 = vmul.f32 %v636, %v121
  %v652 = vmul.f32 %v636, %v122
  %v653 = vmul.f32 %v636, %v123
  %v654 = vmul.f32 %v636, %v124
  %v655 = vmul.f32 %v636, %v125
  %v656 = vmul.f32 %v640, %v121
  %v657 = vmul.f32 %v640, %v122
  %v658 = vmul.f32 %v640, %v123
  %v659 = vmul.f32 %v640, %v124
  %v660 = vmul.f32 %v640, %v125
  %v661 = vmul.f32 %v644, %v121
  %v662 = vmul.f32 %v644, %v122
  %v663 = vmul.f32 %v644, %v123
  %v664 = vmul.f32 %v644, %v124
  %v665 = vmul.f32 %v644, %v125
  %686 = vrot.lane.b32.xlu0 %v646, 109
  %v687 = vpop.permute.xlu0 %686
  %688 = vrot.lane.b32.xlu0 %v647, 109
  %v689 = vpop.permute.xlu0 %688
  %690 = vrot.lane.b32.xlu0 %v648, 109
  %v691 = vpop.permute.xlu0 %690
  %692 = vrot.lane.b32.xlu0 %v649, 109
  %v693 = vpop.permute.xlu0 %692
  %694 = vrot.lane.b32.xlu0 %v650, 109
  %v695 = vpop.permute.xlu0 %694
  %696 = vrot.lane.b32.xlu0 %v651, 109
  %v697 = vpop.permute.xlu0 %696
  %698 = vrot.lane.b32.xlu0 %v652, 109
  %v699 = vpop.permute.xlu0 %698
  %700 = vrot.lane.b32.xlu0 %v653, 109
  %v701 = vpop.permute.xlu0 %700
  %702 = vrot.lane.b32.xlu0 %v654, 109
  %v703 = vpop.permute.xlu0 %702
  %704 = vrot.lane.b32.xlu0 %v655, 109
  %v705 = vpop.permute.xlu0 %704
  %706 = vrot.lane.b32.xlu0 %v656, 109
  %v707 = vpop.permute.xlu0 %706
  %708 = vrot.lane.b32.xlu0 %v657, 109
  %v709 = vpop.permute.xlu0 %708
  %710 = vrot.lane.b32.xlu0 %v658, 109
  %v711 = vpop.permute.xlu0 %710
  %712 = vrot.lane.b32.xlu0 %v659, 109
  %v713 = vpop.permute.xlu0 %712
  %714 = vrot.lane.b32.xlu0 %v660, 109
  %v715 = vpop.permute.xlu0 %714
  %716 = vrot.lane.b32.xlu0 %v661, 109
  %v717 = vpop.permute.xlu0 %716
  %718 = vrot.lane.b32.xlu0 %v662, 109
  %v719 = vpop.permute.xlu0 %718
  %720 = vrot.lane.b32.xlu0 %v663, 109
  %v721 = vpop.permute.xlu0 %720
  %722 = vrot.lane.b32.xlu0 %v664, 109
  %v723 = vpop.permute.xlu0 %722
  %724 = vrot.lane.b32.xlu0 %v665, 109
  %v725 = vpop.permute.xlu0 %724
  %vm726 = vcmask 891904
  %v727 = vsel %vm726, %v687, %v689
  %v728 = vsel %vm726, %v689, %v691
  %v729 = vsel %vm726, %v691, %v693
  %v730 = vsel %vm726, %v693, %v695
  %v731 = vsel %vm726, %v697, %v699
  %v732 = vsel %vm726, %v699, %v701
  %v733 = vsel %vm726, %v701, %v703
  %v734 = vsel %vm726, %v703, %v705
  %v735 = vsel %vm726, %v707, %v709
  %v736 = vsel %vm726, %v709, %v711
  %v737 = vsel %vm726, %v711, %v713
  %v738 = vsel %vm726, %v713, %v715
  %v739 = vsel %vm726, %v717, %v719
  %v740 = vsel %vm726, %v719, %v721
  %v741 = vsel %vm726, %v721, %v723
  %v742 = vsel %vm726, %v723, %v725
  %v763 = vadd.f32 %v610, %v727
  %v764 = vadd.f32 %v611, %v728
  %v765 = vadd.f32 %v612, %v729
  %v766 = vadd.f32 %v613, %v730
  %v767 = vadd.f32 %v614, %v695
  %v768 = vadd.f32 %v615, %v731
  %v769 = vadd.f32 %v616, %v732
  %v770 = vadd.f32 %v617, %v733
  %v771 = vadd.f32 %v618, %v734
  %v772 = vadd.f32 %v619, %v705
  %v773 = vadd.f32 %v620, %v735
  %v774 = vadd.f32 %v621, %v736
  %v775 = vadd.f32 %v622, %v737
  %v776 = vadd.f32 %v623, %v738
  %v777 = vadd.f32 %v624, %v715
  %v778 = vadd.f32 %v625, %v739
  %v779 = vadd.f32 %v626, %v740
  %v780 = vadd.f32 %v627, %v741
  %v781 = vadd.f32 %v628, %v742
  %v782 = vadd.f32 %v629, %v725
  %783 = vset.pattern.permute.xlu0 5
  %784 = vperm.xlu0 %783, %v95
  %v785 = vpop.permute.xlu0 %784
  %787 = vset.pattern.permute.xlu0 5
  %788 = vperm.xlu0 %787, %v96
  %v789 = vpop.permute.xlu0 %788
  %791 = vset.pattern.permute.xlu0 5
  %792 = vperm.xlu0 %791, %v97
  %v793 = vpop.permute.xlu0 %792
  %795 = vset.pattern.permute.xlu0 5
  %796 = vperm.xlu0 %795, %v98
  %v797 = vpop.permute.xlu0 %796
  %v799 = vmul.f32 %v785, %v121
  %v800 = vmul.f32 %v785, %v122
  %v801 = vmul.f32 %v785, %v123
  %v802 = vmul.f32 %v785, %v124
  %v803 = vmul.f32 %v785, %v125
  %v804 = vmul.f32 %v789, %v121
  %v805 = vmul.f32 %v789, %v122
  %v806 = vmul.f32 %v789, %v123
  %v807 = vmul.f32 %v789, %v124
  %v808 = vmul.f32 %v789, %v125
  %v809 = vmul.f32 %v793, %v121
  %v810 = vmul.f32 %v793, %v122
  %v811 = vmul.f32 %v793, %v123
  %v812 = vmul.f32 %v793, %v124
  %v813 = vmul.f32 %v793, %v125
  %v814 = vmul.f32 %v797, %v121
  %v815 = vmul.f32 %v797, %v122
  %v816 = vmul.f32 %v797, %v123
  %v817 = vmul.f32 %v797, %v124
  %v818 = vmul.f32 %v797, %v125
  %839 = vrot.lane.b32.xlu0 %v799, 108
  %v840 = vpop.permute.xlu0 %839
  %841 = vrot.lane.b32.xlu0 %v800, 108
  %v842 = vpop.permute.xlu0 %841
  %843 = vrot.lane.b32.xlu0 %v801, 108
  %v844 = vpop.permute.xlu0 %843
  %845 = vrot.lane.b32.xlu0 %v802, 108
  %v846 = vpop.permute.xlu0 %845
  %847 = vrot.lane.b32.xlu0 %v803, 108
  %v848 = vpop.permute.xlu0 %847
  %849 = vrot.lane.b32.xlu0 %v804, 108
  %v850 = vpop.permute.xlu0 %849
  %851 = vrot.lane.b32.xlu0 %v805, 108
  %v852 = vpop.permute.xlu0 %851
  %853 = vrot.lane.b32.xlu0 %v806, 108
  %v854 = vpop.permute.xlu0 %853
  %855 = vrot.lane.b32.xlu0 %v807, 108
  %v856 = vpop.permute.xlu0 %855
  %857 = vrot.lane.b32.xlu0 %v808, 108
  %v858 = vpop.permute.xlu0 %857
  %859 = vrot.lane.b32.xlu0 %v809, 108
  %v860 = vpop.permute.xlu0 %859
  %861 = vrot.lane.b32.xlu0 %v810, 108
  %v862 = vpop.permute.xlu0 %861
  %863 = vrot.lane.b32.xlu0 %v811, 108
  %v864 = vpop.permute.xlu0 %863
  %865 = vrot.lane.b32.xlu0 %v812, 108
  %v866 = vpop.permute.xlu0 %865
  %867 = vrot.lane.b32.xlu0 %v813, 108
  %v868 = vpop.permute.xlu0 %867
  %869 = vrot.lane.b32.xlu0 %v814, 108
  %v870 = vpop.permute.xlu0 %869
  %871 = vrot.lane.b32.xlu0 %v815, 108
  %v872 = vpop.permute.xlu0 %871
  %873 = vrot.lane.b32.xlu0 %v816, 108
  %v874 = vpop.permute.xlu0 %873
  %875 = vrot.lane.b32.xlu0 %v817, 108
  %v876 = vpop.permute.xlu0 %875
  %877 = vrot.lane.b32.xlu0 %v818, 108
  %v878 = vpop.permute.xlu0 %877
  %vm879 = vcmask 883712
  %v880 = vsel %vm879, %v840, %v842
  %v881 = vsel %vm879, %v842, %v844
  %v882 = vsel %vm879, %v844, %v846
  %v883 = vsel %vm879, %v846, %v848
  %v884 = vsel %vm879, %v850, %v852
  %v885 = vsel %vm879, %v852, %v854
  %v886 = vsel %vm879, %v854, %v856
  %v887 = vsel %vm879, %v856, %v858
  %v888 = vsel %vm879, %v860, %v862
  %v889 = vsel %vm879, %v862, %v864
  %v890 = vsel %vm879, %v864, %v866
  %v891 = vsel %vm879, %v866, %v868
  %v892 = vsel %vm879, %v870, %v872
  %v893 = vsel %vm879, %v872, %v874
  %v894 = vsel %vm879, %v874, %v876
  %v895 = vsel %vm879, %v876, %v878
  %v916 = vadd.f32 %v763, %v880
  %v917 = vadd.f32 %v764, %v881
  %v918 = vadd.f32 %v765, %v882
  %v919 = vadd.f32 %v766, %v883
  %v920 = vadd.f32 %v767, %v848
  %v921 = vadd.f32 %v768, %v884
  %v922 = vadd.f32 %v769, %v885
  %v923 = vadd.f32 %v770, %v886
  %v924 = vadd.f32 %v771, %v887
  %v925 = vadd.f32 %v772, %v858
  %v926 = vadd.f32 %v773, %v888
  %v927 = vadd.f32 %v774, %v889
  %v928 = vadd.f32 %v775, %v890
  %v929 = vadd.f32 %v776, %v891
  %v930 = vadd.f32 %v777, %v868
  %v931 = vadd.f32 %v778, %v892
  %v932 = vadd.f32 %v779, %v893
  %v933 = vadd.f32 %v780, %v894
  %v934 = vadd.f32 %v781, %v895
  %v935 = vadd.f32 %v782, %v878
  %v936 = vld [vmem:[%s0] sm:$0x3f]
  %937 = vset.pattern.permute.xlu0 6
  %938 = vperm.xlu0 %937, %v95
  %v939 = vpop.permute.xlu0 %938
  %941 = vset.pattern.permute.xlu0 6
  %942 = vperm.xlu0 %941, %v96
  %v943 = vpop.permute.xlu0 %942
  %945 = vset.pattern.permute.xlu0 6
  %946 = vperm.xlu0 %945, %v97
  %v947 = vpop.permute.xlu0 %946
  %949 = vset.pattern.permute.xlu0 6
  %950 = vperm.xlu0 %949, %v98
  %v951 = vpop.permute.xlu0 %950
  %v954 = vperm.slane %v936, 0
  %v955 = vperm.slane %v936, 1
  %v956 = vperm.slane %v936, 2
  %v957 = vperm.slane %v936, 3
  %v958 = vperm.slane %v936, 4
  %v959 = vperm.slane %v936, 5
  %v966 = vmul.f32 %v939, %v954
  %v967 = vmul.f32 %v939, %v955
  %v968 = vmul.f32 %v939, %v956
  %v969 = vmul.f32 %v939, %v957
  %v970 = vmul.f32 %v939, %v958
  %v971 = vmul.f32 %v939, %v959
  %v972 = vmul.f32 %v943, %v954
  %v973 = vmul.f32 %v943, %v955
  %v974 = vmul.f32 %v943, %v956
  %v975 = vmul.f32 %v943, %v957
  %v976 = vmul.f32 %v943, %v958
  %v977 = vmul.f32 %v943, %v959
  %v978 = vmul.f32 %v947, %v954
  %v979 = vmul.f32 %v947, %v955
  %v980 = vmul.f32 %v947, %v956
  %v981 = vmul.f32 %v947, %v957
  %v982 = vmul.f32 %v947, %v958
  %v983 = vmul.f32 %v947, %v959
  %v984 = vmul.f32 %v951, %v954
  %v985 = vmul.f32 %v951, %v955
  %v986 = vmul.f32 %v951, %v956
  %v987 = vmul.f32 %v951, %v957
  %v988 = vmul.f32 %v951, %v958
  %v989 = vmul.f32 %v951, %v959
  %1014 = vrot.lane.b32.xlu0 %v966, 92
  %v1015 = vpop.permute.xlu0 %1014
  %1016 = vrot.lane.b32.xlu0 %v967, 92
  %v1017 = vpop.permute.xlu0 %1016
  %1018 = vrot.lane.b32.xlu0 %v968, 92
  %v1019 = vpop.permute.xlu0 %1018
  %1020 = vrot.lane.b32.xlu0 %v969, 92
  %v1021 = vpop.permute.xlu0 %1020
  %1022 = vrot.lane.b32.xlu0 %v970, 92
  %v1023 = vpop.permute.xlu0 %1022
  %1024 = vrot.lane.b32.xlu0 %v971, 92
  %v1025 = vpop.permute.xlu0 %1024
  %1026 = vrot.lane.b32.xlu0 %v972, 92
  %v1027 = vpop.permute.xlu0 %1026
  %1028 = vrot.lane.b32.xlu0 %v973, 92
  %v1029 = vpop.permute.xlu0 %1028
  %1030 = vrot.lane.b32.xlu0 %v974, 92
  %v1031 = vpop.permute.xlu0 %1030
  %1032 = vrot.lane.b32.xlu0 %v975, 92
  %v1033 = vpop.permute.xlu0 %1032
  %1034 = vrot.lane.b32.xlu0 %v976, 92
  %v1035 = vpop.permute.xlu0 %1034
  %1036 = vrot.lane.b32.xlu0 %v977, 92
  %v1037 = vpop.permute.xlu0 %1036
  %1038 = vrot.lane.b32.xlu0 %v978, 92
  %v1039 = vpop.permute.xlu0 %1038
  %1040 = vrot.lane.b32.xlu0 %v979, 92
  %v1041 = vpop.permute.xlu0 %1040
  %1042 = vrot.lane.b32.xlu0 %v980, 92
  %v1043 = vpop.permute.xlu0 %1042
  %1044 = vrot.lane.b32.xlu0 %v981, 92
  %v1045 = vpop.permute.xlu0 %1044
  %1046 = vrot.lane.b32.xlu0 %v982, 92
  %v1047 = vpop.permute.xlu0 %1046
  %1048 = vrot.lane.b32.xlu0 %v983, 92
  %v1049 = vpop.permute.xlu0 %1048
  %1050 = vrot.lane.b32.xlu0 %v984, 92
  %v1051 = vpop.permute.xlu0 %1050
  %1052 = vrot.lane.b32.xlu0 %v985, 92
  %v1053 = vpop.permute.xlu0 %1052
  %1054 = vrot.lane.b32.xlu0 %v986, 92
  %v1055 = vpop.permute.xlu0 %1054
  %1056 = vrot.lane.b32.xlu0 %v987, 92
  %v1057 = vpop.permute.xlu0 %1056
  %1058 = vrot.lane.b32.xlu0 %v988, 92
  %v1059 = vpop.permute.xlu0 %1058
  %1060 = vrot.lane.b32.xlu0 %v989, 92
  %v1061 = vpop.permute.xlu0 %1060
  %vm1062 = vcmask 752640
  %v1063 = vsel %vm1062, %v1015, %v1017
  %v1064 = vsel %vm1062, %v1017, %v1019
  %v1065 = vsel %vm1062, %v1019, %v1021
  %v1066 = vsel %vm1062, %v1021, %v1023
  %v1067 = vsel %vm1062, %v1023, %v1025
  %v1068 = vsel %vm1062, %v1027, %v1029
  %v1069 = vsel %vm1062, %v1029, %v1031
  %v1070 = vsel %vm1062, %v1031, %v1033
  %v1071 = vsel %vm1062, %v1033, %v1035
  %v1072 = vsel %vm1062, %v1035, %v1037
  %v1073 = vsel %vm1062, %v1039, %v1041
  %v1074 = vsel %vm1062, %v1041, %v1043
  %v1075 = vsel %vm1062, %v1043, %v1045
  %v1076 = vsel %vm1062, %v1045, %v1047
  %v1077 = vsel %vm1062, %v1047, %v1049
  %v1078 = vsel %vm1062, %v1051, %v1053
  %v1079 = vsel %vm1062, %v1053, %v1055
  %v1080 = vsel %vm1062, %v1055, %v1057
  %v1081 = vsel %vm1062, %v1057, %v1059
  %v1082 = vsel %vm1062, %v1059, %v1061
  %v1103 = vadd.f32 %v916, %v1063
  %v1104 = vadd.f32 %v917, %v1064
  %v1105 = vadd.f32 %v918, %v1065
  %v1106 = vadd.f32 %v919, %v1066
  %v1107 = vadd.f32 %v920, %v1067
  %v1108 = vadd.f32 %v921, %v1068
  %v1109 = vadd.f32 %v922, %v1069
  %v1110 = vadd.f32 %v923, %v1070
  %v1111 = vadd.f32 %v924, %v1071
  %v1112 = vadd.f32 %v925, %v1072
  %v1113 = vadd.f32 %v926, %v1073
  %v1114 = vadd.f32 %v927, %v1074
  %v1115 = vadd.f32 %v928, %v1075
  %v1116 = vadd.f32 %v929, %v1076
  %v1117 = vadd.f32 %v930, %v1077
  %v1118 = vadd.f32 %v931, %v1078
  %v1119 = vadd.f32 %v932, %v1079
  %v1120 = vadd.f32 %v933, %v1080
  %v1121 = vadd.f32 %v934, %v1081
  %v1122 = vadd.f32 %v935, %v1082
  %1123 = vset.pattern.permute.xlu0 7
  %1124 = vperm.xlu0 %1123, %v95
  %v1125 = vpop.permute.xlu0 %1124
  %1127 = vset.pattern.permute.xlu0 7
  %1128 = vperm.xlu0 %1127, %v96
  %v1129 = vpop.permute.xlu0 %1128
  %1131 = vset.pattern.permute.xlu0 7
  %1132 = vperm.xlu0 %1131, %v97
  %v1133 = vpop.permute.xlu0 %1132
  %1135 = vset.pattern.permute.xlu0 7
  %1136 = vperm.xlu0 %1135, %v98
  %v1137 = vpop.permute.xlu0 %1136
  %v1139 = vmul.f32 %v1125, %v954
  %v1140 = vmul.f32 %v1125, %v955
  %v1141 = vmul.f32 %v1125, %v956
  %v1142 = vmul.f32 %v1125, %v957
  %v1143 = vmul.f32 %v1125, %v958
  %v1144 = vmul.f32 %v1125, %v959
  %v1145 = vmul.f32 %v1129, %v954
  %v1146 = vmul.f32 %v1129, %v955
  %v1147 = vmul.f32 %v1129, %v956
  %v1148 = vmul.f32 %v1129, %v957
  %v1149 = vmul.f32 %v1129, %v958
  %v1150 = vmul.f32 %v1129, %v959
  %v1151 = vmul.f32 %v1133, %v954
  %v1152 = vmul.f32 %v1133, %v955
  %v1153 = vmul.f32 %v1133, %v956
  %v1154 = vmul.f32 %v1133, %v957
  %v1155 = vmul.f32 %v1133, %v958
  %v1156 = vmul.f32 %v1133, %v959
  %v1157 = vmul.f32 %v1137, %v954
  %v1158 = vmul.f32 %v1137, %v955
  %v1159 = vmul.f32 %v1137, %v956
  %v1160 = vmul.f32 %v1137, %v957
  %v1161 = vmul.f32 %v1137, %v958
  %v1162 = vmul.f32 %v1137, %v959
  %1187 = vrot.lane.b32.xlu0 %v1139, 91
  %v1188 = vpop.permute.xlu0 %1187
  %1189 = vrot.lane.b32.xlu0 %v1140, 91
  %v1190 = vpop.permute.xlu0 %1189
  %1191 = vrot.lane.b32.xlu0 %v1141, 91
  %v1192 = vpop.permute.xlu0 %1191
  %1193 = vrot.lane.b32.xlu0 %v1142, 91
  %v1194 = vpop.permute.xlu0 %1193
  %1195 = vrot.lane.b32.xlu0 %v1143, 91
  %v1196 = vpop.permute.xlu0 %1195
  %1197 = vrot.lane.b32.xlu0 %v1144, 91
  %v1198 = vpop.permute.xlu0 %1197
  %1199 = vrot.lane.b32.xlu0 %v1145, 91
  %v1200 = vpop.permute.xlu0 %1199
  %1201 = vrot.lane.b32.xlu0 %v1146, 91
  %v1202 = vpop.permute.xlu0 %1201
  %1203 = vrot.lane.b32.xlu0 %v1147, 91
  %v1204 = vpop.permute.xlu0 %1203
  %1205 = vrot.lane.b32.xlu0 %v1148, 91
  %v1206 = vpop.permute.xlu0 %1205
  %1207 = vrot.lane.b32.xlu0 %v1149, 91
  %v1208 = vpop.permute.xlu0 %1207
  %1209 = vrot.lane.b32.xlu0 %v1150, 91
  %v1210 = vpop.permute.xlu0 %1209
  %1211 = vrot.lane.b32.xlu0 %v1151, 91
  %v1212 = vpop.permute.xlu0 %1211
  %1213 = vrot.lane.b32.xlu0 %v1152, 91
  %v1214 = vpop.permute.xlu0 %1213
  %1215 = vrot.lane.b32.xlu0 %v1153, 91
  %v1216 = vpop.permute.xlu0 %1215
  %1217 = vrot.lane.b32.xlu0 %v1154, 91
  %v1218 = vpop.permute.xlu0 %1217
  %1219 = vrot.lane.b32.xlu0 %v1155, 91
  %v1220 = vpop.permute.xlu0 %1219
  %1221 = vrot.lane.b32.xlu0 %v1156, 91
  %v1222 = vpop.permute.xlu0 %1221
  %1223 = vrot.lane.b32.xlu0 %v1157, 91
  %v1224 = vpop.permute.xlu0 %1223
  %1225 = vrot.lane.b32.xlu0 %v1158, 91
  %v1226 = vpop.permute.xlu0 %1225
  %1227 = vrot.lane.b32.xlu0 %v1159, 91
  %v1228 = vpop.permute.xlu0 %1227
  %1229 = vrot.lane.b32.xlu0 %v1160, 91
  %v1230 = vpop.permute.xlu0 %1229
  %1231 = vrot.lane.b32.xlu0 %v1161, 91
  %v1232 = vpop.permute.xlu0 %1231
  %1233 = vrot.lane.b32.xlu0 %v1162, 91
  %v1234 = vpop.permute.xlu0 %1233
  %vm1235 = vcmask 744448
  %v1236 = vsel %vm1235, %v1188, %v1190
  %v1237 = vsel %vm1235, %v1190, %v1192
  %v1238 = vsel %vm1235, %v1192, %v1194
  %v1239 = vsel %vm1235, %v1194, %v1196
  %v1240 = vsel %vm1235, %v1196, %v1198
  %v1241 = vsel %vm1235, %v1200, %v1202
  %v1242 = vsel %vm1235, %v1202, %v1204
  %v1243 = vsel %vm1235, %v1204, %v1206
  %v1244 = vsel %vm1235, %v1206, %v1208
  %v1245 = vsel %vm1235, %v1208, %v1210
  %v1246 = vsel %vm1235, %v1212, %v1214
  %v1247 = vsel %vm1235, %v1214, %v1216
  %v1248 = vsel %vm1235, %v1216, %v1218
  %v1249 = vsel %vm1235, %v1218, %v1220
  %v1250 = vsel %vm1235, %v1220, %v1222
  %v1251 = vsel %vm1235, %v1224, %v1226
  %v1252 = vsel %vm1235, %v1226, %v1228
  %v1253 = vsel %vm1235, %v1228, %v1230
  %v1254 = vsel %vm1235, %v1230, %v1232
  %v1255 = vsel %vm1235, %v1232, %v1234
  %v1276 = vadd.f32 %v1103, %v1236
  %v1277 = vadd.f32 %v1104, %v1237
  %v1278 = vadd.f32 %v1105, %v1238
  %v1279 = vadd.f32 %v1106, %v1239
  %v1280 = vadd.f32 %v1107, %v1240
  %v1281 = vadd.f32 %v1108, %v1241
  %v1282 = vadd.f32 %v1109, %v1242
  %v1283 = vadd.f32 %v1110, %v1243
  %v1284 = vadd.f32 %v1111, %v1244
  %v1285 = vadd.f32 %v1112, %v1245
  %v1286 = vadd.f32 %v1113, %v1246
  %v1287 = vadd.f32 %v1114, %v1247
  %v1288 = vadd.f32 %v1115, %v1248
  %v1289 = vadd.f32 %v1116, %v1249
  %v1290 = vadd.f32 %v1117, %v1250
  %v1291 = vadd.f32 %v1118, %v1251
  %v1292 = vadd.f32 %v1119, %v1252
  %v1293 = vadd.f32 %v1120, %v1253
  %v1294 = vadd.f32 %v1121, %v1254
  %v1295 = vadd.f32 %v1122, %v1255
  %1296 = vset.pattern.permute.xlu0 8
  %1297 = vperm.xlu0 %1296, %v95
  %v1298 = vpop.permute.xlu0 %1297
  %1300 = vset.pattern.permute.xlu0 8
  %1301 = vperm.xlu0 %1300, %v96
  %v1302 = vpop.permute.xlu0 %1301
  %1304 = vset.pattern.permute.xlu0 8
  %1305 = vperm.xlu0 %1304, %v97
  %v1306 = vpop.permute.xlu0 %1305
  %1308 = vset.pattern.permute.xlu0 8
  %1309 = vperm.xlu0 %1308, %v98
  %v1310 = vpop.permute.xlu0 %1309
  %v1312 = vmul.f32 %v1298, %v954
  %v1313 = vmul.f32 %v1298, %v955
  %v1314 = vmul.f32 %v1298, %v956
  %v1315 = vmul.f32 %v1298, %v957
  %v1316 = vmul.f32 %v1298, %v958
  %v1317 = vmul.f32 %v1298, %v959
  %v1318 = vmul.f32 %v1302, %v954
  %v1319 = vmul.f32 %v1302, %v955
  %v1320 = vmul.f32 %v1302, %v956
  %v1321 = vmul.f32 %v1302, %v957
  %v1322 = vmul.f32 %v1302, %v958
  %v1323 = vmul.f32 %v1302, %v959
  %v1324 = vmul.f32 %v1306, %v954
  %v1325 = vmul.f32 %v1306, %v955
  %v1326 = vmul.f32 %v1306, %v956
  %v1327 = vmul.f32 %v1306, %v957
  %v1328 = vmul.f32 %v1306, %v958
  %v1329 = vmul.f32 %v1306, %v959
  %v1330 = vmul.f32 %v1310, %v954
  %v1331 = vmul.f32 %v1310, %v955
  %v1332 = vmul.f32 %v1310, %v956
  %v1333 = vmul.f32 %v1310, %v957
  %v1334 = vmul.f32 %v1310, %v958
  %v1335 = vmul.f32 %v1310, %v959
  %1360 = vrot.lane.b32.xlu0 %v1312, 90
  %v1361 = vpop.permute.xlu0 %1360
  %1362 = vrot.lane.b32.xlu0 %v1313, 90
  %v1363 = vpop.permute.xlu0 %1362
  %1364 = vrot.lane.b32.xlu0 %v1314, 90
  %v1365 = vpop.permute.xlu0 %1364
  %1366 = vrot.lane.b32.xlu0 %v1315, 90
  %v1367 = vpop.permute.xlu0 %1366
  %1368 = vrot.lane.b32.xlu0 %v1316, 90
  %v1369 = vpop.permute.xlu0 %1368
  %1370 = vrot.lane.b32.xlu0 %v1317, 90
  %v1371 = vpop.permute.xlu0 %1370
  %1372 = vrot.lane.b32.xlu0 %v1318, 90
  %v1373 = vpop.permute.xlu0 %1372
  %1374 = vrot.lane.b32.xlu0 %v1319, 90
  %v1375 = vpop.permute.xlu0 %1374
  %1376 = vrot.lane.b32.xlu0 %v1320, 90
  %v1377 = vpop.permute.xlu0 %1376
  %1378 = vrot.lane.b32.xlu0 %v1321, 90
  %v1379 = vpop.permute.xlu0 %1378
  %1380 = vrot.lane.b32.xlu0 %v1322, 90
  %v1381 = vpop.permute.xlu0 %1380
  %1382 = vrot.lane.b32.xlu0 %v1323, 90
  %v1383 = vpop.permute.xlu0 %1382
  %1384 = vrot.lane.b32.xlu0 %v1324, 90
  %v1385 = vpop.permute.xlu0 %1384
  %1386 = vrot.lane.b32.xlu0 %v1325, 90
  %v1387 = vpop.permute.xlu0 %1386
  %1388 = vrot.lane.b32.xlu0 %v1326, 90
  %v1389 = vpop.permute.xlu0 %1388
  %1390 = vrot.lane.b32.xlu0 %v1327, 90
  %v1391 = vpop.permute.xlu0 %1390
  %1392 = vrot.lane.b32.xlu0 %v1328, 90
  %v1393 = vpop.permute.xlu0 %1392
  %1394 = vrot.lane.b32.xlu0 %v1329, 90
  %v1395 = vpop.permute.xlu0 %1394
  %1396 = vrot.lane.b32.xlu0 %v1330, 90
  %v1397 = vpop.permute.xlu0 %1396
  %1398 = vrot.lane.b32.xlu0 %v1331, 90
  %v1399 = vpop.permute.xlu0 %1398
  %1400 = vrot.lane.b32.xlu0 %v1332, 90
  %v1401 = vpop.permute.xlu0 %1400
  %1402 = vrot.lane.b32.xlu0 %v1333, 90
  %v1403 = vpop.permute.xlu0 %1402
  %1404 = vrot.lane.b32.xlu0 %v1334, 90
  %v1405 = vpop.permute.xlu0 %1404
  %1406 = vrot.lane.b32.xlu0 %v1335, 90
  %v1407 = vpop.permute.xlu0 %1406
  %vm1408 = vcmask 736256
  %v1409 = vsel %vm1408, %v1361, %v1363
  %v1410 = vsel %vm1408, %v1363, %v1365
  %v1411 = vsel %vm1408, %v1365, %v1367
  %v1412 = vsel %vm1408, %v1367, %v1369
  %v1413 = vsel %vm1408, %v1369, %v1371
  %v1414 = vsel %vm1408, %v1373, %v1375
  %v1415 = vsel %vm1408, %v1375, %v1377
  %v1416 = vsel %vm1408, %v1377, %v1379
  %v1417 = vsel %vm1408, %v1379, %v1381
  %v1418 = vsel %vm1408, %v1381, %v1383
  %v1419 = vsel %vm1408, %v1385, %v1387
  %v1420 = vsel %vm1408, %v1387, %v1389
  %v1421 = vsel %vm1408, %v1389, %v1391
  %v1422 = vsel %vm1408, %v1391, %v1393
  %v1423 = vsel %vm1408, %v1393, %v1395
  %v1424 = vsel %vm1408, %v1397, %v1399
  %v1425 = vsel %vm1408, %v1399, %v1401
  %v1426 = vsel %vm1408, %v1401, %v1403
  %v1427 = vsel %vm1408, %v1403, %v1405
  %v1428 = vsel %vm1408, %v1405, %v1407
  %v1449 = vadd.f32 %v1276, %v1409
  %v1450 = vadd.f32 %v1277, %v1410
  %v1451 = vadd.f32 %v1278, %v1411
  %v1452 = vadd.f32 %v1279, %v1412
  %v1453 = vadd.f32 %v1280, %v1413
  %v1454 = vadd.f32 %v1281, %v1414
  %v1455 = vadd.f32 %v1282, %v1415
  %v1456 = vadd.f32 %v1283, %v1416
  %v1457 = vadd.f32 %v1284, %v1417
  %v1458 = vadd.f32 %v1285, %v1418
  %v1459 = vadd.f32 %v1286, %v1419
  %v1460 = vadd.f32 %v1287, %v1420
  %v1461 = vadd.f32 %v1288, %v1421
  %v1462 = vadd.f32 %v1289, %v1422
  %v1463 = vadd.f32 %v1290, %v1423
  %v1464 = vadd.f32 %v1291, %v1424
  %v1465 = vadd.f32 %v1292, %v1425
  %v1466 = vadd.f32 %v1293, %v1426
  %v1467 = vadd.f32 %v1294, %v1427
  %v1468 = vadd.f32 %v1295, %v1428
  %v1469 = vmax.f32 %v1449, 0.0
  %v1470 = vmax.f32 %v1450, 0.0
  %v1471 = vmax.f32 %v1451, 0.0
  %v1472 = vmax.f32 %v1452, 0.0
  %v1473 = vmax.f32 %v1453, 0.0
  %v1474 = vmax.f32 %v1454, 0.0
  %v1475 = vmax.f32 %v1455, 0.0
  %v1476 = vmax.f32 %v1456, 0.0
  %v1477 = vmax.f32 %v1457, 0.0
  %v1478 = vmax.f32 %v1458, 0.0
  %v1479 = vmax.f32 %v1459, 0.0
  %v1480 = vmax.f32 %v1460, 0.0
  %v1481 = vmax.f32 %v1461, 0.0
  %v1482 = vmax.f32 %v1462, 0.0
  %v1483 = vmax.f32 %v1463, 0.0
  %v1484 = vmax.f32 %v1464, 0.0
  %v1485 = vmax.f32 %v1465, 0.0
  %v1486 = vmax.f32 %v1466, 0.0
  %v1487 = vmax.f32 %v1467, 0.0
  %v1488 = vmax.f32 %v1468, 0.0
  %v1490 = vperm.slane %v50, 0
  %v1491 = vperm.slane %v50, 1
  %v1492 = vperm.slane %v50, 2
  %v1493 = vperm.slane %v50, 3
  %v1494 = vperm.slane %v50, 4
  %v1500 = vmul.f32 %v1469, %v1490
  %v1501 = vmul.f32 %v1470, %v1491
  %v1502 = vmul.f32 %v1471, %v1492
  %v1503 = vmul.f32 %v1472, %v1493
  %v1504 = vmul.f32 %v1473, %v1494
  %v1505 = vmul.f32 %v1474, %v1490
  %v1506 = vmul.f32 %v1475, %v1491
  %v1507 = vmul.f32 %v1476, %v1492
  %v1508 = vmul.f32 %v1477, %v1493
  %v1509 = vmul.f32 %v1478, %v1494
  %v1510 = vmul.f32 %v1479, %v1490
  %v1511 = vmul.f32 %v1480, %v1491
  %v1512 = vmul.f32 %v1481, %v1492
  %v1513 = vmul.f32 %v1482, %v1493
  %v1514 = vmul.f32 %v1483, %v1494
  %v1515 = vmul.f32 %v1484, %v1490
  %v1516 = vmul.f32 %v1485, %v1491
  %v1517 = vmul.f32 %v1486, %v1492
  %v1518 = vmul.f32 %v1487, %v1493
  %v1519 = vmul.f32 %v1488, %v1494
  %v1520 = vpack.c.bf16 %v1501, %v1500
  %v1521 = vpack.c.bf16 %v1503, %v1502
  %v1522 = vpack.c.bf16 %v1504, %v1504
  %v1523 = vpack.c.bf16 %v1506, %v1505
  %v1524 = vpack.c.bf16 %v1508, %v1507
  %v1525 = vpack.c.bf16 %v1509, %v1509
  %v1526 = vpack.c.bf16 %v1511, %v1510
  %v1527 = vpack.c.bf16 %v1513, %v1512
  %v1528 = vpack.c.bf16 %v1514, %v1514
  %v1529 = vpack.c.bf16 %v1516, %v1515
  %v1530 = vpack.c.bf16 %v1518, %v1517
  %v1531 = vpack.c.bf16 %v1519, %v1519
  %1544 = vrot.lane.b32.xlu0 %v1520, 19
  %v1545 = vpop.permute.xlu0 %1544
  %1546 = vrot.lane.b32.xlu0 %v1521, 19
  %v1547 = vpop.permute.xlu0 %1546
  %1548 = vrot.lane.b32.xlu0 %v1522, 19
  %v1549 = vpop.permute.xlu0 %1548
  %1550 = vrot.lane.b32.xlu0 %v1523, 19
  %v1551 = vpop.permute.xlu0 %1550
  %1552 = vrot.lane.b32.xlu0 %v1524, 19
  %v1553 = vpop.permute.xlu0 %1552
  %1554 = vrot.lane.b32.xlu0 %v1525, 19
  %v1555 = vpop.permute.xlu0 %1554
  %1556 = vrot.lane.b32.xlu0 %v1526, 19
  %v1557 = vpop.permute.xlu0 %1556
  %1558 = vrot.lane.b32.xlu0 %v1527, 19
  %v1559 = vpop.permute.xlu0 %1558
  %1560 = vrot.lane.b32.xlu0 %v1528, 19
  %v1561 = vpop.permute.xlu0 %1560
  %1562 = vrot.lane.b32.xlu0 %v1529, 19
  %v1563 = vpop.permute.xlu0 %1562
  %1564 = vrot.lane.b32.xlu0 %v1530, 19
  %v1565 = vpop.permute.xlu0 %1564
  %1566 = vrot.lane.b32.xlu0 %v1531, 19
  %v1567 = vpop.permute.xlu0 %1566
  %v1568 = vrot.slane %v1545, 4
  %v1569 = vrot.slane %v1547, 4
  %v1570 = vrot.slane %v1551, 4
  %v1571 = vrot.slane %v1553, 4
  %v1572 = vrot.slane %v1557, 4
  %v1573 = vrot.slane %v1559, 4
  %v1574 = vrot.slane %v1563, 4
  %v1575 = vrot.slane %v1565, 4
  %vm1576 = vcmask 154624
  %v1577 = vsel %vm1576, %v1568, %v1545
  %vm1578 = vcmask 1043456
  %v1579 = vsel %vm1578, %v1568, %v1569
  %v1580 = vsel %vm1576, %v1579, %v1547
  %v1581 = vsel %vm1576, %v1569, %v1549
  %v1582 = vsel %vm1576, %v1570, %v1551
  %v1583 = vsel %vm1578, %v1570, %v1571
  %v1584 = vsel %vm1576, %v1583, %v1553
  %v1585 = vsel %vm1576, %v1571, %v1555
  %v1586 = vsel %vm1576, %v1572, %v1557
  %v1587 = vsel %vm1578, %v1572, %v1573
  %v1588 = vsel %vm1576, %v1587, %v1559
  %v1589 = vsel %vm1576, %v1573, %v1561
  %v1590 = vsel %vm1576, %v1574, %v1563
  %v1591 = vsel %vm1578, %v1574, %v1575
  %v1592 = vsel %vm1576, %v1591, %v1565
  %v1593 = vsel %vm1576, %v1575, %v1567
  %vm1606 = vcmask 1043608
  %vm1607 = vcmask 1047556
  %vm1608 = vmor %vm1607, %vm1606
  %1609 = vst.msk [vmem:[#allocation2] sm:$0xff] %vm1608, %v1577
  %1610 = vst [vmem:[#allocation2 + $0x8] sm:$0xff] %v1580
  %vm1611 = vcmask 953344
  %1612 = vst.msk [vmem:[#allocation2 + $0x10] sm:$0xf] %vm1611, %v1581
  %1613 = vst.msk [vmem:[#allocation2 + $0x18] sm:$0xff] %vm1608, %v1582
  %1614 = vst [vmem:[#allocation2 + $0x20] sm:$0xff] %v1584
  %1615 = vst.msk [vmem:[#allocation2 + $0x28] sm:$0xf] %vm1611, %v1585
  %1616 = vst.msk [vmem:[#allocation2 + $0x30] sm:$0xff] %vm1608, %v1586
  %1617 = vst [vmem:[#allocation2 + $0x38] sm:$0xff] %v1588
  %1618 = vst.msk [vmem:[#allocation2 + $0x40] sm:$0xf] %vm1611, %v1589
  %1619 = vst.msk [vmem:[#allocation2 + $0x48] sm:$0xff] %vm1608, %v1590
  %1620 = vst [vmem:[#allocation2 + $0x50] sm:$0xff] %v1592
  %1621 = vst.msk [vmem:[#allocation2 + $0x58] sm:$0xf] %vm1611, %v1593
  %v1622 = vld [vmem:[%s4] sm:$0xf]
  %v1623 = vld [vmem:[%s4 + $0x4] sm:$0xf]
  %v1624 = vld [vmem:[%s4 + $0x8] sm:$0xf]
  %v1625 = vld [vmem:[%s4 + $0xc] sm:$0xf]
  %v1626 = vld [vmem:[#allocation2] sm:$0xff]
  %v1627 = vld [vmem:[#allocation2 + $0x8] sm:$0xff]
  %v1628 = vld [vmem:[#allocation2 + $0x10] sm:$0xf]
  %v1629 = vld [vmem:[#allocation2 + $0x18] sm:$0xff]
  %v1630 = vld [vmem:[#allocation2 + $0x20] sm:$0xff]
  %v1631 = vld [vmem:[#allocation2 + $0x28] sm:$0xf]
  %v1632 = vld [vmem:[#allocation2 + $0x30] sm:$0xff]
  %v1633 = vld [vmem:[#allocation2 + $0x38] sm:$0xff]
  %v1634 = vld [vmem:[#allocation2 + $0x40] sm:$0xf]
  %v1635 = vld [vmem:[#allocation2 + $0x48] sm:$0xff]
  %v1636 = vld [vmem:[#allocation2 + $0x50] sm:$0xff]
  %v1637 = vld [vmem:[#allocation2 + $0x58] sm:$0xf]
  %s1638 = scalar_lea.vmem %s4, 16
  %v1639 = vld [vmem:[%s1638] sm:$0xf]
  %v1640 = vld [vmem:[%s1638 + $0x4] sm:$0xf]
  %v1641 = vld [vmem:[%s1638 + $0x8] sm:$0xf]
  %v1642 = vld [vmem:[%s1638 + $0xc] sm:$0xf]
  %v1647 = vunpack.c.l.b16 %v1639
  %v1648 = vunpack.c.l.b16 %v1640
  %v1649 = vunpack.c.l.b16 %v1641
  %v1650 = vunpack.c.l.b16 %v1642
  %v1651 = vpack.c.b16 %v1648, %v1647
  %v1652 = vpack.c.b16 %v1650, %v1649
  %v1665 = vunpack.c.l.b16 %v1626
  %v1666 = vunpack.c.h.b16 %v1626
  %v1667 = vunpack.c.l.b16 %v1627
  %v1668 = vunpack.c.h.b16 %v1627
  %v1669 = vunpack.c.l.b16 %v1628
  %v1670 = vunpack.c.l.b16 %v1629
  %v1671 = vunpack.c.h.b16 %v1629
  %v1672 = vunpack.c.l.b16 %v1630
  %v1673 = vunpack.c.h.b16 %v1630
  %v1674 = vunpack.c.l.b16 %v1631
  %v1675 = vunpack.c.l.b16 %v1632
  %v1676 = vunpack.c.h.b16 %v1632
  %v1677 = vunpack.c.l.b16 %v1633
  %v1678 = vunpack.c.h.b16 %v1633
  %v1679 = vunpack.c.l.b16 %v1634
  %v1680 = vunpack.c.l.b16 %v1635
  %v1681 = vunpack.c.h.b16 %v1635
  %v1682 = vunpack.c.l.b16 %v1636
  %v1683 = vunpack.c.h.b16 %v1636
  %v1684 = vunpack.c.l.b16 %v1637
  %v1685 = vpack.c.b16 %v1670, %v1665
  %v1686 = vpack.c.b16 %v1671, %v1666
  %v1687 = vpack.c.b16 %v1672, %v1667
  %v1688 = vpack.c.b16 %v1673, %v1668
  %v1689 = vpack.c.b16 %v1674, %v1669
  %v1690 = vpack.c.b16 %v1680, %v1675
  %v1691 = vpack.c.b16 %v1681, %v1676
  %v1692 = vpack.c.b16 %v1682, %v1677
  %v1693 = vpack.c.b16 %v1683, %v1678
  %v1694 = vpack.c.b16 %v1684, %v1679
  %1695 = vrot.lane.b32.xlu0 %v1685, 127
  %v1696 = vpop.permute.xlu0 %1695
  %1697 = vrot.lane.b32.xlu0 %v1686, 127
  %v1698 = vpop.permute.xlu0 %1697
  %1699 = vrot.lane.b32.xlu0 %v1687, 127
  %v1700 = vpop.permute.xlu0 %1699
  %1701 = vrot.lane.b32.xlu0 %v1688, 127
  %v1702 = vpop.permute.xlu0 %1701
  %1703 = vrot.lane.b32.xlu0 %v1689, 127
  %v1704 = vpop.permute.xlu0 %1703
  %1705 = vrot.lane.b32.xlu0 %v1690, 127
  %v1706 = vpop.permute.xlu0 %1705
  %1707 = vrot.lane.b32.xlu0 %v1691, 127
  %v1708 = vpop.permute.xlu0 %1707
  %1709 = vrot.lane.b32.xlu0 %v1692, 127
  %v1710 = vpop.permute.xlu0 %1709
  %1711 = vrot.lane.b32.xlu0 %v1693, 127
  %v1712 = vpop.permute.xlu0 %1711
  %1713 = vrot.lane.b32.xlu0 %v1694, 127
  %v1714 = vpop.permute.xlu0 %1713
  %vm1715 = vcmask 1039360
  %v1716 = vsel %vm1715, %v1696, %v1698
  %v1717 = vsel %vm1715, %v1698, %v1700
  %v1718 = vsel %vm1715, %v1700, %v1702
  %v1719 = vsel %vm1715, %v1702, %v1704
  %v1720 = vsel %vm1715, %v1706, %v1708
  %v1721 = vsel %vm1715, %v1708, %v1710
  %v1722 = vsel %vm1715, %v1710, %v1712
  %v1723 = vsel %vm1715, %v1712, %v1714
  %vm1734 = vcmask 261120
  %v1736 = vsel %vm1734, %v1651, 0
  %v1739 = vsel %vm1734, %v1652, 0
  %1741 = vmatpush.bf16.msra.mxu0 0
  %1742 = vmatpush.bf16.msra.mxu0 0
  %1743 = vmatpush.bf16.msra.mxu0 0
  %1744 = vmatpush.bf16.msra.mxu0 0
  %1745 = vmatpush.bf16.msra.mxu0 0
  %1746 = vmatpush.bf16.msra.mxu0 0
  %1747 = vmatpush.bf16.msra.mxu0 %v1720
  %1748 = vmatpush.bf16.msra.mxu0 %v1716
  %1749 = vmatmul.bf16.gmra.mxu0 %v1736
  %v1750 = vpop.f32.mrf.mxu0
  %v1751 = vadd.f32 0.0, %v1750
  %v1752 = vpop.f32.mrf.mxu0
  %v1753 = vadd.f32 0.0, %v1752
  %1754 = vmatmul.bf16.gmra.mxu0 %v1739
  %v1755 = vpop.f32.mrf.mxu0
  %v1756 = vadd.f32 0.0, %v1755
  %v1757 = vpop.f32.mrf.mxu0
  %v1758 = vadd.f32 0.0, %v1757
  %1759 = vdwg.mxu0
  %1760 = vmatpush.bf16.msra.mxu0 0
  %1761 = vmatpush.bf16.msra.mxu0 0
  %1762 = vmatpush.bf16.msra.mxu0 0
  %1763 = vmatpush.bf16.msra.mxu0 0
  %1764 = vmatpush.bf16.msra.mxu0 0
  %1765 = vmatpush.bf16.msra.mxu0 0
  %1766 = vmatpush.bf16.msra.mxu0 %v1721
  %1767 = vmatpush.bf16.msra.mxu0 %v1717
  %1768 = vmatmul.bf16.gmra.mxu0 %v1736
  %v1769 = vpop.f32.mrf.mxu0
  %v1770 = vadd.f32 0.0, %v1769
  %v1771 = vpop.f32.mrf.mxu0
  %v1772 = vadd.f32 0.0, %v1771
  %1773 = vmatmul.bf16.gmra.mxu0 %v1739
  %v1774 = vpop.f32.mrf.mxu0
  %v1775 = vadd.f32 0.0, %v1774
  %v1776 = vpop.f32.mrf.mxu0
  %v1777 = vadd.f32 0.0, %v1776
  %1778 = vdwg.mxu0
  %1779 = vmatpush.bf16.msra.mxu0 0
  %1780 = vmatpush.bf16.msra.mxu0 0
  %1781 = vmatpush.bf16.msra.mxu0 0
  %1782 = vmatpush.bf16.msra.mxu0 0
  %1783 = vmatpush.bf16.msra.mxu0 0
  %1784 = vmatpush.bf16.msra.mxu0 0
  %1785 = vmatpush.bf16.msra.mxu0 %v1722
  %1786 = vmatpush.bf16.msra.mxu0 %v1718
  %1787 = vmatmul.bf16.gmra.mxu0 %v1736
  %v1788 = vpop.f32.mrf.mxu0
  %v1789 = vadd.f32 0.0, %v1788
  %v1790 = vpop.f32.mrf.mxu0
  %v1791 = vadd.f32 0.0, %v1790
  %1792 = vmatmul.bf16.gmra.mxu0 %v1739
  %v1793 = vpop.f32.mrf.mxu0
  %v1794 = vadd.f32 0.0, %v1793
  %v1795 = vpop.f32.mrf.mxu0
  %v1796 = vadd.f32 0.0, %v1795
  %1797 = vdwg.mxu0
  %1798 = vmatpush.bf16.msra.mxu0 0
  %1799 = vmatpush.bf16.msra.mxu0 0
  %1800 = vmatpush.bf16.msra.mxu0 0
  %1801 = vmatpush.bf16.msra.mxu0 0
  %1802 = vmatpush.bf16.msra.mxu0 0
  %1803 = vmatpush.bf16.msra.mxu0 0
  %1804 = vmatpush.bf16.msra.mxu0 %v1723
  %1805 = vmatpush.bf16.msra.mxu0 %v1719
  %1806 = vmatmul.bf16.gmra.mxu0 %v1736
  %v1807 = vpop.f32.mrf.mxu0
  %v1808 = vadd.f32 0.0, %v1807
  %v1809 = vpop.f32.mrf.mxu0
  %v1810 = vadd.f32 0.0, %v1809
  %1811 = vmatmul.bf16.gmra.mxu0 %v1739
  %v1812 = vpop.f32.mrf.mxu0
  %v1813 = vadd.f32 0.0, %v1812
  %v1814 = vpop.f32.mrf.mxu0
  %v1815 = vadd.f32 0.0, %v1814
  %1816 = vdwg.mxu0
  %1817 = vmatpush.bf16.msra.mxu0 0
  %1818 = vmatpush.bf16.msra.mxu0 0
  %1819 = vmatpush.bf16.msra.mxu0 0
  %1820 = vmatpush.bf16.msra.mxu0 0
  %1821 = vmatpush.bf16.msra.mxu0 0
  %1822 = vmatpush.bf16.msra.mxu0 0
  %1823 = vmatpush.bf16.msra.mxu0 %v1714
  %1824 = vmatpush.bf16.msra.mxu0 %v1704
  %1825 = vmatmul.bf16.gmra.mxu0 %v1736
  %v1826 = vpop.f32.mrf.mxu0
  %v1827 = vadd.f32 0.0, %v1826
  %v1828 = vpop.f32.mrf.mxu0
  %v1829 = vadd.f32 0.0, %v1828
  %1830 = vmatmul.bf16.gmra.mxu0 %v1739
  %v1831 = vpop.f32.mrf.mxu0
  %v1832 = vadd.f32 0.0, %v1831
  %v1833 = vpop.f32.mrf.mxu0
  %v1834 = vadd.f32 0.0, %v1833
  %1835 = vdwg.mxu0
  %v1840 = vunpack.c.l.b16 %v1622
  %v1841 = vunpack.c.l.b16 %v1623
  %v1842 = vunpack.c.l.b16 %v1624
  %v1843 = vunpack.c.l.b16 %v1625
  %v1844 = vpack.c.b16 %v1841, %v1840
  %v1845 = vpack.c.b16 %v1843, %v1842
  %v1857 = vsel %vm1734, %v1844, 0
  %v1860 = vsel %vm1734, %v1845, 0
  %1862 = vmatpush.bf16.msra.mxu0 0
  %1863 = vmatpush.bf16.msra.mxu0 0
  %1864 = vmatpush.bf16.msra.mxu0 0
  %1865 = vmatpush.bf16.msra.mxu0 0
  %1866 = vmatpush.bf16.msra.mxu0 0
  %1867 = vmatpush.bf16.msra.mxu0 0
  %1868 = vmatpush.bf16.msra.mxu0 %v1690
  %1869 = vmatpush.bf16.msra.mxu0 %v1685
  %1870 = vmatmul.bf16.gmra.mxu0 %v1857
  %v1871 = vpop.f32.mrf.mxu0
  %v1872 = vadd.f32 %v1751, %v1871
  %v1873 = vpop.f32.mrf.mxu0
  %v1874 = vadd.f32 %v1753, %v1873
  %1875 = vmatmul.bf16.gmra.mxu0 %v1860
  %v1876 = vpop.f32.mrf.mxu0
  %v1877 = vadd.f32 %v1756, %v1876
  %v1878 = vpop.f32.mrf.mxu0
  %v1879 = vadd.f32 %v1758, %v1878
  %1880 = vdwg.mxu0
  %1881 = vmatpush.bf16.msra.mxu0 0
  %1882 = vmatpush.bf16.msra.mxu0 0
  %1883 = vmatpush.bf16.msra.mxu0 0
  %1884 = vmatpush.bf16.msra.mxu0 0
  %1885 = vmatpush.bf16.msra.mxu0 0
  %1886 = vmatpush.bf16.msra.mxu0 0
  %1887 = vmatpush.bf16.msra.mxu0 %v1691
  %1888 = vmatpush.bf16.msra.mxu0 %v1686
  %1889 = vmatmul.bf16.gmra.mxu0 %v1857
  %v1890 = vpop.f32.mrf.mxu0
  %v1891 = vadd.f32 %v1770, %v1890
  %v1892 = vpop.f32.mrf.mxu0
  %v1893 = vadd.f32 %v1772, %v1892
  %1894 = vmatmul.bf16.gmra.mxu0 %v1860
  %v1895 = vpop.f32.mrf.mxu0
  %v1896 = vadd.f32 %v1775, %v1895
  %v1897 = vpop.f32.mrf.mxu0
  %v1898 = vadd.f32 %v1777, %v1897
  %1899 = vdwg.mxu0
  %1900 = vmatpush.bf16.msra.mxu0 0
  %1901 = vmatpush.bf16.msra.mxu0 0
  %1902 = vmatpush.bf16.msra.mxu0 0
  %1903 = vmatpush.bf16.msra.mxu0 0
  %1904 = vmatpush.bf16.msra.mxu0 0
  %1905 = vmatpush.bf16.msra.mxu0 0
  %1906 = vmatpush.bf16.msra.mxu0 %v1692
  %1907 = vmatpush.bf16.msra.mxu0 %v1687
  %1908 = vmatmul.bf16.gmra.mxu0 %v1857
  %v1909 = vpop.f32.mrf.mxu0
  %v1910 = vadd.f32 %v1789, %v1909
  %v1911 = vpop.f32.mrf.mxu0
  %v1912 = vadd.f32 %v1791, %v1911
  %1913 = vmatmul.bf16.gmra.mxu0 %v1860
  %v1914 = vpop.f32.mrf.mxu0
  %v1915 = vadd.f32 %v1794, %v1914
  %v1916 = vpop.f32.mrf.mxu0
  %v1917 = vadd.f32 %v1796, %v1916
  %1918 = vdwg.mxu0
  %1919 = vmatpush.bf16.msra.mxu0 0
  %1920 = vmatpush.bf16.msra.mxu0 0
  %1921 = vmatpush.bf16.msra.mxu0 0
  %1922 = vmatpush.bf16.msra.mxu0 0
  %1923 = vmatpush.bf16.msra.mxu0 0
  %1924 = vmatpush.bf16.msra.mxu0 0
  %1925 = vmatpush.bf16.msra.mxu0 %v1693
  %1926 = vmatpush.bf16.msra.mxu0 %v1688
  %1927 = vmatmul.bf16.gmra.mxu0 %v1857
  %v1928 = vpop.f32.mrf.mxu0
  %v1929 = vadd.f32 %v1808, %v1928
  %v1930 = vpop.f32.mrf.mxu0
  %v1931 = vadd.f32 %v1810, %v1930
  %1932 = vmatmul.bf16.gmra.mxu0 %v1860
  %v1933 = vpop.f32.mrf.mxu0
  %v1934 = vadd.f32 %v1813, %v1933
  %v1935 = vpop.f32.mrf.mxu0
  %v1936 = vadd.f32 %v1815, %v1935
  %1937 = vdwg.mxu0
  %1938 = vmatpush.bf16.msra.mxu0 0
  %1939 = vmatpush.bf16.msra.mxu0 0
  %1940 = vmatpush.bf16.msra.mxu0 0
  %1941 = vmatpush.bf16.msra.mxu0 0
  %1942 = vmatpush.bf16.msra.mxu0 0
  %1943 = vmatpush.bf16.msra.mxu0 0
  %1944 = vmatpush.bf16.msra.mxu0 %v1694
  %1945 = vmatpush.bf16.msra.mxu0 %v1689
  %1946 = vmatmul.bf16.gmra.mxu0 %v1857
  %v1947 = vpop.f32.mrf.mxu0
  %v1948 = vadd.f32 %v1827, %v1947
  %v1949 = vpop.f32.mrf.mxu0
  %v1950 = vadd.f32 %v1829, %v1949
  %1951 = vmatmul.bf16.gmra.mxu0 %v1860
  %v1952 = vpop.f32.mrf.mxu0
  %v1953 = vadd.f32 %v1832, %v1952
  %v1954 = vpop.f32.mrf.mxu0
  %v1955 = vadd.f32 %v1834, %v1954
  %1956 = vdwg.mxu0
  %s1957 = scalar_lea.vmem %s4, 32
  %v1958 = vld [vmem:[%s1957] sm:$0xf]
  %v1959 = vld [vmem:[%s1957 + $0x4] sm:$0xf]
  %v1960 = vld [vmem:[%s1957 + $0x8] sm:$0xf]
  %v1961 = vld [vmem:[%s1957 + $0xc] sm:$0xf]
  %v1966 = vunpack.c.l.b16 %v1958
  %v1967 = vunpack.c.l.b16 %v1959
  %v1968 = vunpack.c.l.b16 %v1960
  %v1969 = vunpack.c.l.b16 %v1961
  %v1970 = vpack.c.b16 %v1967, %v1966
  %v1971 = vpack.c.b16 %v1969, %v1968
  %1972 = vrot.lane.b32.xlu0 %v1685, 126
  %v1973 = vpop.permute.xlu0 %1972
  %1974 = vrot.lane.b32.xlu0 %v1686, 126
  %v1975 = vpop.permute.xlu0 %1974
  %1976 = vrot.lane.b32.xlu0 %v1687, 126
  %v1977 = vpop.permute.xlu0 %1976
  %1978 = vrot.lane.b32.xlu0 %v1688, 126
  %v1979 = vpop.permute.xlu0 %1978
  %1980 = vrot.lane.b32.xlu0 %v1689, 126
  %v1981 = vpop.permute.xlu0 %1980
  %1982 = vrot.lane.b32.xlu0 %v1690, 126
  %v1983 = vpop.permute.xlu0 %1982
  %1984 = vrot.lane.b32.xlu0 %v1691, 126
  %v1985 = vpop.permute.xlu0 %1984
  %1986 = vrot.lane.b32.xlu0 %v1692, 126
  %v1987 = vpop.permute.xlu0 %1986
  %1988 = vrot.lane.b32.xlu0 %v1693, 126
  %v1989 = vpop.permute.xlu0 %1988
  %1990 = vrot.lane.b32.xlu0 %v1694, 126
  %v1991 = vpop.permute.xlu0 %1990
  %vm1992 = vcmask 1031168
  %v1993 = vsel %vm1992, %v1973, %v1975
  %v1994 = vsel %vm1992, %v1975, %v1977
  %v1995 = vsel %vm1992, %v1977, %v1979
  %v1996 = vsel %vm1992, %v1979, %v1981
  %v1997 = vsel %vm1992, %v1983, %v1985
  %v1998 = vsel %vm1992, %v1985, %v1987
  %v1999 = vsel %vm1992, %v1987, %v1989
  %v2000 = vsel %vm1992, %v1989, %v1991
  %v2012 = vsel %vm1734, %v1970, 0
  %v2015 = vsel %vm1734, %v1971, 0
  %2017 = vmatpush.bf16.msra.mxu0 0
  %2018 = vmatpush.bf16.msra.mxu0 0
  %2019 = vmatpush.bf16.msra.mxu0 0
  %2020 = vmatpush.bf16.msra.mxu0 0
  %2021 = vmatpush.bf16.msra.mxu0 0
  %2022 = vmatpush.bf16.msra.mxu0 0
  %2023 = vmatpush.bf16.msra.mxu0 %v1997
  %2024 = vmatpush.bf16.msra.mxu0 %v1993
  %2025 = vmatmul.bf16.gmra.mxu0 %v2012
  %v2026 = vpop.f32.mrf.mxu0
  %v2027 = vadd.f32 0.0, %v2026
  %v2028 = vpop.f32.mrf.mxu0
  %v2029 = vadd.f32 0.0, %v2028
  %2030 = vmatmul.bf16.gmra.mxu0 %v2015
  %v2031 = vpop.f32.mrf.mxu0
  %v2032 = vadd.f32 0.0, %v2031
  %v2033 = vpop.f32.mrf.mxu0
  %v2034 = vadd.f32 0.0, %v2033
  %2035 = vdwg.mxu0
  %2036 = vmatpush.bf16.msra.mxu0 0
  %2037 = vmatpush.bf16.msra.mxu0 0
  %2038 = vmatpush.bf16.msra.mxu0 0
  %2039 = vmatpush.bf16.msra.mxu0 0
  %2040 = vmatpush.bf16.msra.mxu0 0
  %2041 = vmatpush.bf16.msra.mxu0 0
  %2042 = vmatpush.bf16.msra.mxu0 %v1998
  %2043 = vmatpush.bf16.msra.mxu0 %v1994
  %2044 = vmatmul.bf16.gmra.mxu0 %v2012
  %v2045 = vpop.f32.mrf.mxu0
  %v2046 = vadd.f32 0.0, %v2045
  %v2047 = vpop.f32.mrf.mxu0
  %v2048 = vadd.f32 0.0, %v2047
  %2049 = vmatmul.bf16.gmra.mxu0 %v2015
  %v2050 = vpop.f32.mrf.mxu0
  %v2051 = vadd.f32 0.0, %v2050
  %v2052 = vpop.f32.mrf.mxu0
  %v2053 = vadd.f32 0.0, %v2052
  %2054 = vdwg.mxu0
  %2055 = vmatpush.bf16.msra.mxu0 0
  %2056 = vmatpush.bf16.msra.mxu0 0
  %2057 = vmatpush.bf16.msra.mxu0 0
  %2058 = vmatpush.bf16.msra.mxu0 0
  %2059 = vmatpush.bf16.msra.mxu0 0
  %2060 = vmatpush.bf16.msra.mxu0 0
  %2061 = vmatpush.bf16.msra.mxu0 %v1999
  %2062 = vmatpush.bf16.msra.mxu0 %v1995
  %2063 = vmatmul.bf16.gmra.mxu0 %v2012
  %v2064 = vpop.f32.mrf.mxu0
  %v2065 = vadd.f32 0.0, %v2064
  %v2066 = vpop.f32.mrf.mxu0
  %v2067 = vadd.f32 0.0, %v2066
  %2068 = vmatmul.bf16.gmra.mxu0 %v2015
  %v2069 = vpop.f32.mrf.mxu0
  %v2070 = vadd.f32 0.0, %v2069
  %v2071 = vpop.f32.mrf.mxu0
  %v2072 = vadd.f32 0.0, %v2071
  %2073 = vdwg.mxu0
  %2074 = vmatpush.bf16.msra.mxu0 0
  %2075 = vmatpush.bf16.msra.mxu0 0
  %2076 = vmatpush.bf16.msra.mxu0 0
  %2077 = vmatpush.bf16.msra.mxu0 0
  %2078 = vmatpush.bf16.msra.mxu0 0
  %2079 = vmatpush.bf16.msra.mxu0 0
  %2080 = vmatpush.bf16.msra.mxu0 %v2000
  %2081 = vmatpush.bf16.msra.mxu0 %v1996
  %2082 = vmatmul.bf16.gmra.mxu0 %v2012
  %v2083 = vpop.f32.mrf.mxu0
  %v2084 = vadd.f32 0.0, %v2083
  %v2085 = vpop.f32.mrf.mxu0
  %v2086 = vadd.f32 0.0, %v2085
  %2087 = vmatmul.bf16.gmra.mxu0 %v2015
  %v2088 = vpop.f32.mrf.mxu0
  %v2089 = vadd.f32 0.0, %v2088
  %v2090 = vpop.f32.mrf.mxu0
  %v2091 = vadd.f32 0.0, %v2090
  %2092 = vdwg.mxu0
  %2093 = vmatpush.bf16.msra.mxu0 0
  %2094 = vmatpush.bf16.msra.mxu0 0
  %2095 = vmatpush.bf16.msra.mxu0 0
  %2096 = vmatpush.bf16.msra.mxu0 0
  %2097 = vmatpush.bf16.msra.mxu0 0
  %2098 = vmatpush.bf16.msra.mxu0 0
  %2099 = vmatpush.bf16.msra.mxu0 %v1991
  %2100 = vmatpush.bf16.msra.mxu0 %v1981
  %2101 = vmatmul.bf16.gmra.mxu0 %v2012
  %v2102 = vpop.f32.mrf.mxu0
  %v2103 = vadd.f32 0.0, %v2102
  %v2104 = vpop.f32.mrf.mxu0
  %v2105 = vadd.f32 0.0, %v2104
  %2106 = vmatmul.bf16.gmra.mxu0 %v2015
  %v2107 = vpop.f32.mrf.mxu0
  %v2108 = vadd.f32 0.0, %v2107
  %v2109 = vpop.f32.mrf.mxu0
  %v2110 = vadd.f32 0.0, %v2109
  %2111 = vdwg.mxu0
  %v2112 = vadd.f32 %v1872, %v2027
  %v2113 = vadd.f32 %v1891, %v2046
  %v2114 = vadd.f32 %v1910, %v2065
  %v2115 = vadd.f32 %v1929, %v2084
  %v2116 = vadd.f32 %v1948, %v2103
  %v2117 = vadd.f32 %v1874, %v2029
  %v2118 = vadd.f32 %v1893, %v2048
  %v2119 = vadd.f32 %v1912, %v2067
  %v2120 = vadd.f32 %v1931, %v2086
  %v2121 = vadd.f32 %v1950, %v2105
  %v2122 = vadd.f32 %v1877, %v2032
  %v2123 = vadd.f32 %v1896, %v2051
  %v2124 = vadd.f32 %v1915, %v2070
  %v2125 = vadd.f32 %v1934, %v2089
  %v2126 = vadd.f32 %v1953, %v2108
  %v2127 = vadd.f32 %v1879, %v2034
  %v2128 = vadd.f32 %v1898, %v2053
  %v2129 = vadd.f32 %v1917, %v2072
  %v2130 = vadd.f32 %v1936, %v2091
  %v2131 = vadd.f32 %v1955, %v2110
  %s2132 = scalar_lea.vmem %s4, 48
  %v2133 = vld [vmem:[%s2132] sm:$0xf]
  %v2134 = vld [vmem:[%s2132 + $0x4] sm:$0xf]
  %v2135 = vld [vmem:[%s2132 + $0x8] sm:$0xf]
  %v2136 = vld [vmem:[%s2132 + $0xc] sm:$0xf]
  %v2141 = vunpack.c.l.b16 %v2133
  %v2142 = vunpack.c.l.b16 %v2134
  %v2143 = vunpack.c.l.b16 %v2135
  %v2144 = vunpack.c.l.b16 %v2136
  %v2145 = vpack.c.b16 %v2142, %v2141
  %v2146 = vpack.c.b16 %v2144, %v2143
  %2147 = vrot.lane.b32.xlu0 %v1685, 110
  %v2148 = vpop.permute.xlu0 %2147
  %2149 = vrot.lane.b32.xlu0 %v1686, 110
  %v2150 = vpop.permute.xlu0 %2149
  %2151 = vrot.lane.b32.xlu0 %v1687, 110
  %v2152 = vpop.permute.xlu0 %2151
  %2153 = vrot.lane.b32.xlu0 %v1688, 110
  %v2154 = vpop.permute.xlu0 %2153
  %2155 = vrot.lane.b32.xlu0 %v1689, 110
  %v2156 = vpop.permute.xlu0 %2155
  %2157 = vrot.lane.b32.xlu0 %v1690, 110
  %v2158 = vpop.permute.xlu0 %2157
  %2159 = vrot.lane.b32.xlu0 %v1691, 110
  %v2160 = vpop.permute.xlu0 %2159
  %2161 = vrot.lane.b32.xlu0 %v1692, 110
  %v2162 = vpop.permute.xlu0 %2161
  %2163 = vrot.lane.b32.xlu0 %v1693, 110
  %v2164 = vpop.permute.xlu0 %2163
  %2165 = vrot.lane.b32.xlu0 %v1694, 110
  %v2166 = vpop.permute.xlu0 %2165
  %vm2167 = vcmask 900096
  %v2168 = vsel %vm2167, %v2148, %v2150
  %v2169 = vsel %vm2167, %v2150, %v2152
  %v2170 = vsel %vm2167, %v2152, %v2154
  %v2171 = vsel %vm2167, %v2154, %v2156
  %v2172 = vsel %vm2167, %v2158, %v2160
  %v2173 = vsel %vm2167, %v2160, %v2162
  %v2174 = vsel %vm2167, %v2162, %v2164
  %v2175 = vsel %vm2167, %v2164, %v2166
  %v2187 = vsel %vm1734, %v2145, 0
  %v2190 = vsel %vm1734, %v2146, 0
  %2192 = vmatpush.bf16.msra.mxu0 0
  %2193 = vmatpush.bf16.msra.mxu0 0
  %2194 = vmatpush.bf16.msra.mxu0 0
  %2195 = vmatpush.bf16.msra.mxu0 0
  %2196 = vmatpush.bf16.msra.mxu0 0
  %2197 = vmatpush.bf16.msra.mxu0 0
  %2198 = vmatpush.bf16.msra.mxu0 %v2172
  %2199 = vmatpush.bf16.msra.mxu0 %v2168
  %2200 = vmatmul.bf16.gmra.mxu0 %v2187
  %v2201 = vpop.f32.mrf.mxu0
  %v2202 = vadd.f32 0.0, %v2201
  %v2203 = vpop.f32.mrf.mxu0
  %v2204 = vadd.f32 0.0, %v2203
  %2205 = vmatmul.bf16.gmra.mxu0 %v2190
  %v2206 = vpop.f32.mrf.mxu0
  %v2207 = vadd.f32 0.0, %v2206
  %v2208 = vpop.f32.mrf.mxu0
  %v2209 = vadd.f32 0.0, %v2208
  %2210 = vdwg.mxu0
  %2211 = vmatpush.bf16.msra.mxu0 0
  %2212 = vmatpush.bf16.msra.mxu0 0
  %2213 = vmatpush.bf16.msra.mxu0 0
  %2214 = vmatpush.bf16.msra.mxu0 0
  %2215 = vmatpush.bf16.msra.mxu0 0
  %2216 = vmatpush.bf16.msra.mxu0 0
  %2217 = vmatpush.bf16.msra.mxu0 %v2173
  %2218 = vmatpush.bf16.msra.mxu0 %v2169
  %2219 = vmatmul.bf16.gmra.mxu0 %v2187
  %v2220 = vpop.f32.mrf.mxu0
  %v2221 = vadd.f32 0.0, %v2220
  %v2222 = vpop.f32.mrf.mxu0
  %v2223 = vadd.f32 0.0, %v2222
  %2224 = vmatmul.bf16.gmra.mxu0 %v2190
  %v2225 = vpop.f32.mrf.mxu0
  %v2226 = vadd.f32 0.0, %v2225
  %v2227 = vpop.f32.mrf.mxu0
  %v2228 = vadd.f32 0.0, %v2227
  %2229 = vdwg.mxu0
  %2230 = vmatpush.bf16.msra.mxu0 0
  %2231 = vmatpush.bf16.msra.mxu0 0
  %2232 = vmatpush.bf16.msra.mxu0 0
  %2233 = vmatpush.bf16.msra.mxu0 0
  %2234 = vmatpush.bf16.msra.mxu0 0
  %2235 = vmatpush.bf16.msra.mxu0 0
  %2236 = vmatpush.bf16.msra.mxu0 %v2174
  %2237 = vmatpush.bf16.msra.mxu0 %v2170
  %2238 = vmatmul.bf16.gmra.mxu0 %v2187
  %v2239 = vpop.f32.mrf.mxu0
  %v2240 = vadd.f32 0.0, %v2239
  %v2241 = vpop.f32.mrf.mxu0
  %v2242 = vadd.f32 0.0, %v2241
  %2243 = vmatmul.bf16.gmra.mxu0 %v2190
  %v2244 = vpop.f32.mrf.mxu0
  %v2245 = vadd.f32 0.0, %v2244
  %v2246 = vpop.f32.mrf.mxu0
  %v2247 = vadd.f32 0.0, %v2246
  %2248 = vdwg.mxu0
  %2249 = vmatpush.bf16.msra.mxu0 0
  %2250 = vmatpush.bf16.msra.mxu0 0
  %2251 = vmatpush.bf16.msra.mxu0 0
  %2252 = vmatpush.bf16.msra.mxu0 0
  %2253 = vmatpush.bf16.msra.mxu0 0
  %2254 = vmatpush.bf16.msra.mxu0 0
  %2255 = vmatpush.bf16.msra.mxu0 %v2175
  %2256 = vmatpush.bf16.msra.mxu0 %v2171
  %2257 = vmatmul.bf16.gmra.mxu0 %v2187
  %v2258 = vpop.f32.mrf.mxu0
  %v2259 = vadd.f32 0.0, %v2258
  %v2260 = vpop.f32.mrf.mxu0
  %v2261 = vadd.f32 0.0, %v2260
  %2262 = vmatmul.bf16.gmra.mxu0 %v2190
  %v2263 = vpop.f32.mrf.mxu0
  %v2264 = vadd.f32 0.0, %v2263
  %v2265 = vpop.f32.mrf.mxu0
  %v2266 = vadd.f32 0.0, %v2265
  %2267 = vdwg.mxu0
  %2268 = vmatpush.bf16.msra.mxu0 0
  %2269 = vmatpush.bf16.msra.mxu0 0
  %2270 = vmatpush.bf16.msra.mxu0 0
  %2271 = vmatpush.bf16.msra.mxu0 0
  %2272 = vmatpush.bf16.msra.mxu0 0
  %2273 = vmatpush.bf16.msra.mxu0 0
  %2274 = vmatpush.bf16.msra.mxu0 %v2166
  %2275 = vmatpush.bf16.msra.mxu0 %v2156
  %2276 = vmatmul.bf16.gmra.mxu0 %v2187
  %v2277 = vpop.f32.mrf.mxu0
  %v2278 = vadd.f32 0.0, %v2277
  %v2279 = vpop.f32.mrf.mxu0
  %v2280 = vadd.f32 0.0, %v2279
  %2281 = vmatmul.bf16.gmra.mxu0 %v2190
  %v2282 = vpop.f32.mrf.mxu0
  %v2283 = vadd.f32 0.0, %v2282
  %v2284 = vpop.f32.mrf.mxu0
  %v2285 = vadd.f32 0.0, %v2284
  %2286 = vdwg.mxu0
  %v2287 = vadd.f32 %v2112, %v2202
  %v2288 = vadd.f32 %v2113, %v2221
  %v2289 = vadd.f32 %v2114, %v2240
  %v2290 = vadd.f32 %v2115, %v2259
  %v2291 = vadd.f32 %v2116, %v2278
  %v2292 = vadd.f32 %v2117, %v2204
  %v2293 = vadd.f32 %v2118, %v2223
  %v2294 = vadd.f32 %v2119, %v2242
  %v2295 = vadd.f32 %v2120, %v2261
  %v2296 = vadd.f32 %v2121, %v2280
  %v2297 = vadd.f32 %v2122, %v2207
  %v2298 = vadd.f32 %v2123, %v2226
  %v2299 = vadd.f32 %v2124, %v2245
  %v2300 = vadd.f32 %v2125, %v2264
  %v2301 = vadd.f32 %v2126, %v2283
  %v2302 = vadd.f32 %v2127, %v2209
  %v2303 = vadd.f32 %v2128, %v2228
  %v2304 = vadd.f32 %v2129, %v2247
  %v2305 = vadd.f32 %v2130, %v2266
  %v2306 = vadd.f32 %v2131, %v2285
  %s2307 = scalar_lea.vmem %s4, 64
  %v2308 = vld [vmem:[%s2307] sm:$0xf]
  %v2309 = vld [vmem:[%s2307 + $0x4] sm:$0xf]
  %v2310 = vld [vmem:[%s2307 + $0x8] sm:$0xf]
  %v2311 = vld [vmem:[%s2307 + $0xc] sm:$0xf]
  %v2316 = vunpack.c.l.b16 %v2308
  %v2317 = vunpack.c.l.b16 %v2309
  %v2318 = vunpack.c.l.b16 %v2310
  %v2319 = vunpack.c.l.b16 %v2311
  %v2320 = vpack.c.b16 %v2317, %v2316
  %v2321 = vpack.c.b16 %v2319, %v2318
  %2322 = vrot.lane.b32.xlu0 %v1685, 109
  %v2323 = vpop.permute.xlu0 %2322
  %2324 = vrot.lane.b32.xlu0 %v1686, 109
  %v2325 = vpop.permute.xlu0 %2324
  %2326 = vrot.lane.b32.xlu0 %v1687, 109
  %v2327 = vpop.permute.xlu0 %2326
  %2328 = vrot.lane.b32.xlu0 %v1688, 109
  %v2329 = vpop.permute.xlu0 %2328
  %2330 = vrot.lane.b32.xlu0 %v1689, 109
  %v2331 = vpop.permute.xlu0 %2330
  %2332 = vrot.lane.b32.xlu0 %v1690, 109
  %v2333 = vpop.permute.xlu0 %2332
  %2334 = vrot.lane.b32.xlu0 %v1691, 109
  %v2335 = vpop.permute.xlu0 %2334
  %2336 = vrot.lane.b32.xlu0 %v1692, 109
  %v2337 = vpop.permute.xlu0 %2336
  %2338 = vrot.lane.b32.xlu0 %v1693, 109
  %v2339 = vpop.permute.xlu0 %2338
  %2340 = vrot.lane.b32.xlu0 %v1694, 109
  %v2341 = vpop.permute.xlu0 %2340
  %vm2342 = vcmask 891904
  %v2343 = vsel %vm2342, %v2323, %v2325
  %v2344 = vsel %vm2342, %v2325, %v2327
  %v2345 = vsel %vm2342, %v2327, %v2329
  %v2346 = vsel %vm2342, %v2329, %v2331
  %v2347 = vsel %vm2342, %v2333, %v2335
  %v2348 = vsel %vm2342, %v2335, %v2337
  %v2349 = vsel %vm2342, %v2337, %v2339
  %v2350 = vsel %vm2342, %v2339, %v2341
  %v2362 = vsel %vm1734, %v2320, 0
  %v2365 = vsel %vm1734, %v2321, 0
  %2367 = vmatpush.bf16.msra.mxu0 0
  %2368 = vmatpush.bf16.msra.mxu0 0
  %2369 = vmatpush.bf16.msra.mxu0 0
  %2370 = vmatpush.bf16.msra.mxu0 0
  %2371 = vmatpush.bf16.msra.mxu0 0
  %2372 = vmatpush.bf16.msra.mxu0 0
  %2373 = vmatpush.bf16.msra.mxu0 %v2347
  %2374 = vmatpush.bf16.msra.mxu0 %v2343
  %2375 = vmatmul.bf16.gmra.mxu0 %v2362
  %v2376 = vpop.f32.mrf.mxu0
  %v2377 = vadd.f32 0.0, %v2376
  %v2378 = vpop.f32.mrf.mxu0
  %v2379 = vadd.f32 0.0, %v2378
  %2380 = vmatmul.bf16.gmra.mxu0 %v2365
  %v2381 = vpop.f32.mrf.mxu0
  %v2382 = vadd.f32 0.0, %v2381
  %v2383 = vpop.f32.mrf.mxu0
  %v2384 = vadd.f32 0.0, %v2383
  %2385 = vdwg.mxu0
  %2386 = vmatpush.bf16.msra.mxu0 0
  %2387 = vmatpush.bf16.msra.mxu0 0
  %2388 = vmatpush.bf16.msra.mxu0 0
  %2389 = vmatpush.bf16.msra.mxu0 0
  %2390 = vmatpush.bf16.msra.mxu0 0
  %2391 = vmatpush.bf16.msra.mxu0 0
  %2392 = vmatpush.bf16.msra.mxu0 %v2348
  %2393 = vmatpush.bf16.msra.mxu0 %v2344
  %2394 = vmatmul.bf16.gmra.mxu0 %v2362
  %v2395 = vpop.f32.mrf.mxu0
  %v2396 = vadd.f32 0.0, %v2395
  %v2397 = vpop.f32.mrf.mxu0
  %v2398 = vadd.f32 0.0, %v2397
  %2399 = vmatmul.bf16.gmra.mxu0 %v2365
  %v2400 = vpop.f32.mrf.mxu0
  %v2401 = vadd.f32 0.0, %v2400
  %v2402 = vpop.f32.mrf.mxu0
  %v2403 = vadd.f32 0.0, %v2402
  %2404 = vdwg.mxu0
  %2405 = vmatpush.bf16.msra.mxu0 0
  %2406 = vmatpush.bf16.msra.mxu0 0
  %2407 = vmatpush.bf16.msra.mxu0 0
  %2408 = vmatpush.bf16.msra.mxu0 0
  %2409 = vmatpush.bf16.msra.mxu0 0
  %2410 = vmatpush.bf16.msra.mxu0 0
  %2411 = vmatpush.bf16.msra.mxu0 %v2349
  %2412 = vmatpush.bf16.msra.mxu0 %v2345
  %2413 = vmatmul.bf16.gmra.mxu0 %v2362
  %v2414 = vpop.f32.mrf.mxu0
  %v2415 = vadd.f32 0.0, %v2414
  %v2416 = vpop.f32.mrf.mxu0
  %v2417 = vadd.f32 0.0, %v2416
  %2418 = vmatmul.bf16.gmra.mxu0 %v2365
  %v2419 = vpop.f32.mrf.mxu0
  %v2420 = vadd.f32 0.0, %v2419
  %v2421 = vpop.f32.mrf.mxu0
  %v2422 = vadd.f32 0.0, %v2421
  %2423 = vdwg.mxu0
  %2424 = vmatpush.bf16.msra.mxu0 0
  %2425 = vmatpush.bf16.msra.mxu0 0
  %2426 = vmatpush.bf16.msra.mxu0 0
  %2427 = vmatpush.bf16.msra.mxu0 0
  %2428 = vmatpush.bf16.msra.mxu0 0
  %2429 = vmatpush.bf16.msra.mxu0 0
  %2430 = vmatpush.bf16.msra.mxu0 %v2350
  %2431 = vmatpush.bf16.msra.mxu0 %v2346
  %2432 = vmatmul.bf16.gmra.mxu0 %v2362
  %v2433 = vpop.f32.mrf.mxu0
  %v2434 = vadd.f32 0.0, %v2433
  %v2435 = vpop.f32.mrf.mxu0
  %v2436 = vadd.f32 0.0, %v2435
  %2437 = vmatmul.bf16.gmra.mxu0 %v2365
  %v2438 = vpop.f32.mrf.mxu0
  %v2439 = vadd.f32 0.0, %v2438
  %v2440 = vpop.f32.mrf.mxu0
  %v2441 = vadd.f32 0.0, %v2440
  %2442 = vdwg.mxu0
  %2443 = vmatpush.bf16.msra.mxu0 0
  %2444 = vmatpush.bf16.msra.mxu0 0
  %2445 = vmatpush.bf16.msra.mxu0 0
  %2446 = vmatpush.bf16.msra.mxu0 0
  %2447 = vmatpush.bf16.msra.mxu0 0
  %2448 = vmatpush.bf16.msra.mxu0 0
  %2449 = vmatpush.bf16.msra.mxu0 %v2341
  %2450 = vmatpush.bf16.msra.mxu0 %v2331
  %2451 = vmatmul.bf16.gmra.mxu0 %v2362
  %v2452 = vpop.f32.mrf.mxu0
  %v2453 = vadd.f32 0.0, %v2452
  %v2454 = vpop.f32.mrf.mxu0
  %v2455 = vadd.f32 0.0, %v2454
  %2456 = vmatmul.bf16.gmra.mxu0 %v2365
  %v2457 = vpop.f32.mrf.mxu0
  %v2458 = vadd.f32 0.0, %v2457
  %v2459 = vpop.f32.mrf.mxu0
  %v2460 = vadd.f32 0.0, %v2459
  %2461 = vdwg.mxu0
  %v2462 = vadd.f32 %v2287, %v2377
  %v2463 = vadd.f32 %v2288, %v2396
  %v2464 = vadd.f32 %v2289, %v2415
  %v2465 = vadd.f32 %v2290, %v2434
  %v2466 = vadd.f32 %v2291, %v2453
  %v2467 = vadd.f32 %v2292, %v2379
  %v2468 = vadd.f32 %v2293, %v2398
  %v2469 = vadd.f32 %v2294, %v2417
  %v2470 = vadd.f32 %v2295, %v2436
  %v2471 = vadd.f32 %v2296, %v2455
  %v2472 = vadd.f32 %v2297, %v2382
  %v2473 = vadd.f32 %v2298, %v2401
  %v2474 = vadd.f32 %v2299, %v2420
  %v2475 = vadd.f32 %v2300, %v2439
  %v2476 = vadd.f32 %v2301, %v2458
  %v2477 = vadd.f32 %v2302, %v2384
  %v2478 = vadd.f32 %v2303, %v2403
  %v2479 = vadd.f32 %v2304, %v2422
  %v2480 = vadd.f32 %v2305, %v2441
  %v2481 = vadd.f32 %v2306, %v2460
  %s2482 = scalar_lea.vmem %s4, 80
  %v2483 = vld [vmem:[%s2482] sm:$0xf]
  %v2484 = vld [vmem:[%s2482 + $0x4] sm:$0xf]
  %v2485 = vld [vmem:[%s2482 + $0x8] sm:$0xf]
  %v2486 = vld [vmem:[%s2482 + $0xc] sm:$0xf]
  %v2491 = vunpack.c.l.b16 %v2483
  %v2492 = vunpack.c.l.b16 %v2484
  %v2493 = vunpack.c.l.b16 %v2485
  %v2494 = vunpack.c.l.b16 %v2486
  %v2495 = vpack.c.b16 %v2492, %v2491
  %v2496 = vpack.c.b16 %v2494, %v2493
  %2497 = vrot.lane.b32.xlu0 %v1685, 108
  %v2498 = vpop.permute.xlu0 %2497
  %2499 = vrot.lane.b32.xlu0 %v1686, 108
  %v2500 = vpop.permute.xlu0 %2499
  %2501 = vrot.lane.b32.xlu0 %v1687, 108
  %v2502 = vpop.permute.xlu0 %2501
  %2503 = vrot.lane.b32.xlu0 %v1688, 108
  %v2504 = vpop.permute.xlu0 %2503
  %2505 = vrot.lane.b32.xlu0 %v1689, 108
  %v2506 = vpop.permute.xlu0 %2505
  %2507 = vrot.lane.b32.xlu0 %v1690, 108
  %v2508 = vpop.permute.xlu0 %2507
  %2509 = vrot.lane.b32.xlu0 %v1691, 108
  %v2510 = vpop.permute.xlu0 %2509
  %2511 = vrot.lane.b32.xlu0 %v1692, 108
  %v2512 = vpop.permute.xlu0 %2511
  %2513 = vrot.lane.b32.xlu0 %v1693, 108
  %v2514 = vpop.permute.xlu0 %2513
  %2515 = vrot.lane.b32.xlu0 %v1694, 108
  %v2516 = vpop.permute.xlu0 %2515
  %vm2517 = vcmask 883712
  %v2518 = vsel %vm2517, %v2498, %v2500
  %v2519 = vsel %vm2517, %v2500, %v2502
  %v2520 = vsel %vm2517, %v2502, %v2504
  %v2521 = vsel %vm2517, %v2504, %v2506
  %v2522 = vsel %vm2517, %v2508, %v2510
  %v2523 = vsel %vm2517, %v2510, %v2512
  %v2524 = vsel %vm2517, %v2512, %v2514
  %v2525 = vsel %vm2517, %v2514, %v2516
  %v2537 = vsel %vm1734, %v2495, 0
  %v2540 = vsel %vm1734, %v2496, 0
  %2542 = vmatpush.bf16.msra.mxu0 0
  %2543 = vmatpush.bf16.msra.mxu0 0
  %2544 = vmatpush.bf16.msra.mxu0 0
  %2545 = vmatpush.bf16.msra.mxu0 0
  %2546 = vmatpush.bf16.msra.mxu0 0
  %2547 = vmatpush.bf16.msra.mxu0 0
  %2548 = vmatpush.bf16.msra.mxu0 %v2522
  %2549 = vmatpush.bf16.msra.mxu0 %v2518
  %2550 = vmatmul.bf16.gmra.mxu0 %v2537
  %v2551 = vpop.f32.mrf.mxu0
  %v2552 = vadd.f32 0.0, %v2551
  %v2553 = vpop.f32.mrf.mxu0
  %v2554 = vadd.f32 0.0, %v2553
  %2555 = vmatmul.bf16.gmra.mxu0 %v2540
  %v2556 = vpop.f32.mrf.mxu0
  %v2557 = vadd.f32 0.0, %v2556
  %v2558 = vpop.f32.mrf.mxu0
  %v2559 = vadd.f32 0.0, %v2558
  %2560 = vdwg.mxu0
  %2561 = vmatpush.bf16.msra.mxu0 0
  %2562 = vmatpush.bf16.msra.mxu0 0
  %2563 = vmatpush.bf16.msra.mxu0 0
  %2564 = vmatpush.bf16.msra.mxu0 0
  %2565 = vmatpush.bf16.msra.mxu0 0
  %2566 = vmatpush.bf16.msra.mxu0 0
  %2567 = vmatpush.bf16.msra.mxu0 %v2523
  %2568 = vmatpush.bf16.msra.mxu0 %v2519
  %2569 = vmatmul.bf16.gmra.mxu0 %v2537
  %v2570 = vpop.f32.mrf.mxu0
  %v2571 = vadd.f32 0.0, %v2570
  %v2572 = vpop.f32.mrf.mxu0
  %v2573 = vadd.f32 0.0, %v2572
  %2574 = vmatmul.bf16.gmra.mxu0 %v2540
  %v2575 = vpop.f32.mrf.mxu0
  %v2576 = vadd.f32 0.0, %v2575
  %v2577 = vpop.f32.mrf.mxu0
  %v2578 = vadd.f32 0.0, %v2577
  %2579 = vdwg.mxu0
  %2580 = vmatpush.bf16.msra.mxu0 0
  %2581 = vmatpush.bf16.msra.mxu0 0
  %2582 = vmatpush.bf16.msra.mxu0 0
  %2583 = vmatpush.bf16.msra.mxu0 0
  %2584 = vmatpush.bf16.msra.mxu0 0
  %2585 = vmatpush.bf16.msra.mxu0 0
  %2586 = vmatpush.bf16.msra.mxu0 %v2524
  %2587 = vmatpush.bf16.msra.mxu0 %v2520
  %2588 = vmatmul.bf16.gmra.mxu0 %v2537
  %v2589 = vpop.f32.mrf.mxu0
  %v2590 = vadd.f32 0.0, %v2589
  %v2591 = vpop.f32.mrf.mxu0
  %v2592 = vadd.f32 0.0, %v2591
  %2593 = vmatmul.bf16.gmra.mxu0 %v2540
  %v2594 = vpop.f32.mrf.mxu0
  %v2595 = vadd.f32 0.0, %v2594
  %v2596 = vpop.f32.mrf.mxu0
  %v2597 = vadd.f32 0.0, %v2596
  %2598 = vdwg.mxu0
  %2599 = vmatpush.bf16.msra.mxu0 0
  %2600 = vmatpush.bf16.msra.mxu0 0
  %2601 = vmatpush.bf16.msra.mxu0 0
  %2602 = vmatpush.bf16.msra.mxu0 0
  %2603 = vmatpush.bf16.msra.mxu0 0
  %2604 = vmatpush.bf16.msra.mxu0 0
  %2605 = vmatpush.bf16.msra.mxu0 %v2525
  %2606 = vmatpush.bf16.msra.mxu0 %v2521
  %2607 = vmatmul.bf16.gmra.mxu0 %v2537
  %v2608 = vpop.f32.mrf.mxu0
  %v2609 = vadd.f32 0.0, %v2608
  %v2610 = vpop.f32.mrf.mxu0
  %v2611 = vadd.f32 0.0, %v2610
  %2612 = vmatmul.bf16.gmra.mxu0 %v2540
  %v2613 = vpop.f32.mrf.mxu0
  %v2614 = vadd.f32 0.0, %v2613
  %v2615 = vpop.f32.mrf.mxu0
  %v2616 = vadd.f32 0.0, %v2615
  %2617 = vdwg.mxu0
  %2618 = vmatpush.bf16.msra.mxu0 0
  %2619 = vmatpush.bf16.msra.mxu0 0
  %2620 = vmatpush.bf16.msra.mxu0 0
  %2621 = vmatpush.bf16.msra.mxu0 0
  %2622 = vmatpush.bf16.msra.mxu0 0
  %2623 = vmatpush.bf16.msra.mxu0 0
  %2624 = vmatpush.bf16.msra.mxu0 %v2516
  %2625 = vmatpush.bf16.msra.mxu0 %v2506
  %2626 = vmatmul.bf16.gmra.mxu0 %v2537
  %v2627 = vpop.f32.mrf.mxu0
  %v2628 = vadd.f32 0.0, %v2627
  %v2629 = vpop.f32.mrf.mxu0
  %v2630 = vadd.f32 0.0, %v2629
  %2631 = vmatmul.bf16.gmra.mxu0 %v2540
  %v2632 = vpop.f32.mrf.mxu0
  %v2633 = vadd.f32 0.0, %v2632
  %v2634 = vpop.f32.mrf.mxu0
  %v2635 = vadd.f32 0.0, %v2634
  %2636 = vdwg.mxu0
  %v2637 = vadd.f32 %v2462, %v2552
  %v2638 = vadd.f32 %v2463, %v2571
  %v2639 = vadd.f32 %v2464, %v2590
  %v2640 = vadd.f32 %v2465, %v2609
  %v2641 = vadd.f32 %v2466, %v2628
  %v2642 = vadd.f32 %v2467, %v2554
  %v2643 = vadd.f32 %v2468, %v2573
  %v2644 = vadd.f32 %v2469, %v2592
  %v2645 = vadd.f32 %v2470, %v2611
  %v2646 = vadd.f32 %v2471, %v2630
  %v2647 = vadd.f32 %v2472, %v2557
  %v2648 = vadd.f32 %v2473, %v2576
  %v2649 = vadd.f32 %v2474, %v2595
  %v2650 = vadd.f32 %v2475, %v2614
  %v2651 = vadd.f32 %v2476, %v2633
  %v2652 = vadd.f32 %v2477, %v2559
  %v2653 = vadd.f32 %v2478, %v2578
  %v2654 = vadd.f32 %v2479, %v2597
  %v2655 = vadd.f32 %v2480, %v2616
  %v2656 = vadd.f32 %v2481, %v2635
  %s2657 = scalar_lea.vmem %s4, 96
  %v2658 = vld [vmem:[%s2657] sm:$0xf]
  %v2659 = vld [vmem:[%s2657 + $0x4] sm:$0xf]
  %v2660 = vld [vmem:[%s2657 + $0x8] sm:$0xf]
  %v2661 = vld [vmem:[%s2657 + $0xc] sm:$0xf]
  %v2662 = vld [vmem:[#allocation2] sm:$0xff]
  %v2663 = vld [vmem:[#allocation2 + $0x8] sm:$0xff]
  %v2664 = vld [vmem:[#allocation2 + $0x10] sm:$0xff]
  %v2665 = vld [vmem:[#allocation2 + $0x18] sm:$0xff]
  %v2666 = vld [vmem:[#allocation2 + $0x20] sm:$0xff]
  %v2667 = vld [vmem:[#allocation2 + $0x28] sm:$0xff]
  %v2668 = vld [vmem:[#allocation2 + $0x30] sm:$0xff]
  %v2669 = vld [vmem:[#allocation2 + $0x38] sm:$0xff]
  %v2670 = vld [vmem:[#allocation2 + $0x40] sm:$0xff]
  %v2671 = vld [vmem:[#allocation2 + $0x48] sm:$0xff]
  %v2672 = vld [vmem:[#allocation2 + $0x50] sm:$0xff]
  %v2673 = vld [vmem:[#allocation2 + $0x58] sm:$0xff]
  %v2678 = vunpack.c.l.b16 %v2658
  %v2679 = vunpack.c.l.b16 %v2659
  %v2680 = vunpack.c.l.b16 %v2660
  %v2681 = vunpack.c.l.b16 %v2661
  %v2682 = vpack.c.b16 %v2679, %v2678
  %v2683 = vpack.c.b16 %v2681, %v2680
  %v2696 = vunpack.c.l.b16 %v2662
  %v2697 = vunpack.c.h.b16 %v2662
  %v2698 = vunpack.c.l.b16 %v2663
  %v2699 = vunpack.c.h.b16 %v2663
  %v2700 = vunpack.c.l.b16 %v2664
  %v2701 = vunpack.c.h.b16 %v2664
  %v2702 = vunpack.c.l.b16 %v2665
  %v2703 = vunpack.c.h.b16 %v2665
  %v2704 = vunpack.c.l.b16 %v2666
  %v2705 = vunpack.c.h.b16 %v2666
  %v2706 = vunpack.c.l.b16 %v2667
  %v2707 = vunpack.c.h.b16 %v2667
  %v2708 = vunpack.c.l.b16 %v2668
  %v2709 = vunpack.c.h.b16 %v2668
  %v2710 = vunpack.c.l.b16 %v2669
  %v2711 = vunpack.c.h.b16 %v2669
  %v2712 = vunpack.c.l.b16 %v2670
  %v2713 = vunpack.c.h.b16 %v2670
  %v2714 = vunpack.c.l.b16 %v2671
  %v2715 = vunpack.c.h.b16 %v2671
  %v2716 = vunpack.c.l.b16 %v2672
  %v2717 = vunpack.c.h.b16 %v2672
  %v2718 = vunpack.c.l.b16 %v2673
  %v2719 = vunpack.c.h.b16 %v2673
  %v2720 = vpack.c.b16 %v2702, %v2696
  %v2721 = vpack.c.b16 %v2703, %v2697
  %v2722 = vpack.c.b16 %v2704, %v2698
  %v2723 = vpack.c.b16 %v2705, %v2699
  %v2724 = vpack.c.b16 %v2706, %v2700
  %v2725 = vpack.c.b16 %v2707, %v2701
  %v2726 = vpack.c.b16 %v2714, %v2708
  %v2727 = vpack.c.b16 %v2715, %v2709
  %v2728 = vpack.c.b16 %v2716, %v2710
  %v2729 = vpack.c.b16 %v2717, %v2711
  %v2730 = vpack.c.b16 %v2718, %v2712
  %v2731 = vpack.c.b16 %v2719, %v2713
  %2732 = vrot.lane.b32.xlu0 %v2720, 92
  %v2733 = vpop.permute.xlu0 %2732
  %2734 = vrot.lane.b32.xlu0 %v2721, 92
  %v2735 = vpop.permute.xlu0 %2734
  %2736 = vrot.lane.b32.xlu0 %v2722, 92
  %v2737 = vpop.permute.xlu0 %2736
  %2738 = vrot.lane.b32.xlu0 %v2723, 92
  %v2739 = vpop.permute.xlu0 %2738
  %2740 = vrot.lane.b32.xlu0 %v2724, 92
  %v2741 = vpop.permute.xlu0 %2740
  %2742 = vrot.lane.b32.xlu0 %v2725, 92
  %v2743 = vpop.permute.xlu0 %2742
  %2744 = vrot.lane.b32.xlu0 %v2726, 92
  %v2745 = vpop.permute.xlu0 %2744
  %2746 = vrot.lane.b32.xlu0 %v2727, 92
  %v2747 = vpop.permute.xlu0 %2746
  %2748 = vrot.lane.b32.xlu0 %v2728, 92
  %v2749 = vpop.permute.xlu0 %2748
  %2750 = vrot.lane.b32.xlu0 %v2729, 92
  %v2751 = vpop.permute.xlu0 %2750
  %2752 = vrot.lane.b32.xlu0 %v2730, 92
  %v2753 = vpop.permute.xlu0 %2752
  %2754 = vrot.lane.b32.xlu0 %v2731, 92
  %v2755 = vpop.permute.xlu0 %2754
  %vm2756 = vcmask 752640
  %v2757 = vsel %vm2756, %v2733, %v2735
  %v2758 = vsel %vm2756, %v2735, %v2737
  %v2759 = vsel %vm2756, %v2737, %v2739
  %v2760 = vsel %vm2756, %v2739, %v2741
  %v2761 = vsel %vm2756, %v2741, %v2743
  %v2762 = vsel %vm2756, %v2745, %v2747
  %v2763 = vsel %vm2756, %v2747, %v2749
  %v2764 = vsel %vm2756, %v2749, %v2751
  %v2765 = vsel %vm2756, %v2751, %v2753
  %v2766 = vsel %vm2756, %v2753, %v2755
  %v2778 = vsel %vm1734, %v2682, 0
  %v2781 = vsel %vm1734, %v2683, 0
  %2783 = vmatpush.bf16.msra.mxu0 0
  %2784 = vmatpush.bf16.msra.mxu0 0
  %2785 = vmatpush.bf16.msra.mxu0 0
  %2786 = vmatpush.bf16.msra.mxu0 0
  %2787 = vmatpush.bf16.msra.mxu0 0
  %2788 = vmatpush.bf16.msra.mxu0 0
  %2789 = vmatpush.bf16.msra.mxu0 %v2762
  %2790 = vmatpush.bf16.msra.mxu0 %v2757
  %2791 = vmatmul.bf16.gmra.mxu0 %v2778
  %v2792 = vpop.f32.mrf.mxu0
  %v2793 = vadd.f32 0.0, %v2792
  %v2794 = vpop.f32.mrf.mxu0
  %v2795 = vadd.f32 0.0, %v2794
  %2796 = vmatmul.bf16.gmra.mxu0 %v2781
  %v2797 = vpop.f32.mrf.mxu0
  %v2798 = vadd.f32 0.0, %v2797
  %v2799 = vpop.f32.mrf.mxu0
  %v2800 = vadd.f32 0.0, %v2799
  %2801 = vdwg.mxu0
  %2802 = vmatpush.bf16.msra.mxu0 0
  %2803 = vmatpush.bf16.msra.mxu0 0
  %2804 = vmatpush.bf16.msra.mxu0 0
  %2805 = vmatpush.bf16.msra.mxu0 0
  %2806 = vmatpush.bf16.msra.mxu0 0
  %2807 = vmatpush.bf16.msra.mxu0 0
  %2808 = vmatpush.bf16.msra.mxu0 %v2763
  %2809 = vmatpush.bf16.msra.mxu0 %v2758
  %2810 = vmatmul.bf16.gmra.mxu0 %v2778
  %v2811 = vpop.f32.mrf.mxu0
  %v2812 = vadd.f32 0.0, %v2811
  %v2813 = vpop.f32.mrf.mxu0
  %v2814 = vadd.f32 0.0, %v2813
  %2815 = vmatmul.bf16.gmra.mxu0 %v2781
  %v2816 = vpop.f32.mrf.mxu0
  %v2817 = vadd.f32 0.0, %v2816
  %v2818 = vpop.f32.mrf.mxu0
  %v2819 = vadd.f32 0.0, %v2818
  %2820 = vdwg.mxu0
  %2821 = vmatpush.bf16.msra.mxu0 0
  %2822 = vmatpush.bf16.msra.mxu0 0
  %2823 = vmatpush.bf16.msra.mxu0 0
  %2824 = vmatpush.bf16.msra.mxu0 0
  %2825 = vmatpush.bf16.msra.mxu0 0
  %2826 = vmatpush.bf16.msra.mxu0 0
  %2827 = vmatpush.bf16.msra.mxu0 %v2764
  %2828 = vmatpush.bf16.msra.mxu0 %v2759
  %2829 = vmatmul.bf16.gmra.mxu0 %v2778
  %v2830 = vpop.f32.mrf.mxu0
  %v2831 = vadd.f32 0.0, %v2830
  %v2832 = vpop.f32.mrf.mxu0
  %v2833 = vadd.f32 0.0, %v2832
  %2834 = vmatmul.bf16.gmra.mxu0 %v2781
  %v2835 = vpop.f32.mrf.mxu0
  %v2836 = vadd.f32 0.0, %v2835
  %v2837 = vpop.f32.mrf.mxu0
  %v2838 = vadd.f32 0.0, %v2837
  %2839 = vdwg.mxu0
  %2840 = vmatpush.bf16.msra.mxu0 0
  %2841 = vmatpush.bf16.msra.mxu0 0
  %2842 = vmatpush.bf16.msra.mxu0 0
  %2843 = vmatpush.bf16.msra.mxu0 0
  %2844 = vmatpush.bf16.msra.mxu0 0
  %2845 = vmatpush.bf16.msra.mxu0 0
  %2846 = vmatpush.bf16.msra.mxu0 %v2765
  %2847 = vmatpush.bf16.msra.mxu0 %v2760
  %2848 = vmatmul.bf16.gmra.mxu0 %v2778
  %v2849 = vpop.f32.mrf.mxu0
  %v2850 = vadd.f32 0.0, %v2849
  %v2851 = vpop.f32.mrf.mxu0
  %v2852 = vadd.f32 0.0, %v2851
  %2853 = vmatmul.bf16.gmra.mxu0 %v2781
  %v2854 = vpop.f32.mrf.mxu0
  %v2855 = vadd.f32 0.0, %v2854
  %v2856 = vpop.f32.mrf.mxu0
  %v2857 = vadd.f32 0.0, %v2856
  %2858 = vdwg.mxu0
  %2859 = vmatpush.bf16.msra.mxu0 0
  %2860 = vmatpush.bf16.msra.mxu0 0
  %2861 = vmatpush.bf16.msra.mxu0 0
  %2862 = vmatpush.bf16.msra.mxu0 0
  %2863 = vmatpush.bf16.msra.mxu0 0
  %2864 = vmatpush.bf16.msra.mxu0 0
  %2865 = vmatpush.bf16.msra.mxu0 %v2766
  %2866 = vmatpush.bf16.msra.mxu0 %v2761
  %2867 = vmatmul.bf16.gmra.mxu0 %v2778
  %v2868 = vpop.f32.mrf.mxu0
  %v2869 = vadd.f32 0.0, %v2868
  %v2870 = vpop.f32.mrf.mxu0
  %v2871 = vadd.f32 0.0, %v2870
  %2872 = vmatmul.bf16.gmra.mxu0 %v2781
  %v2873 = vpop.f32.mrf.mxu0
  %v2874 = vadd.f32 0.0, %v2873
  %v2875 = vpop.f32.mrf.mxu0
  %v2876 = vadd.f32 0.0, %v2875
  %2877 = vdwg.mxu0
  %v2878 = vadd.f32 %v2637, %v2793
  %v2879 = vadd.f32 %v2638, %v2812
  %v2880 = vadd.f32 %v2639, %v2831
  %v2881 = vadd.f32 %v2640, %v2850
  %v2882 = vadd.f32 %v2641, %v2869
  %v2883 = vadd.f32 %v2642, %v2795
  %v2884 = vadd.f32 %v2643, %v2814
  %v2885 = vadd.f32 %v2644, %v2833
  %v2886 = vadd.f32 %v2645, %v2852
  %v2887 = vadd.f32 %v2646, %v2871
  %v2888 = vadd.f32 %v2647, %v2798
  %v2889 = vadd.f32 %v2648, %v2817
  %v2890 = vadd.f32 %v2649, %v2836
  %v2891 = vadd.f32 %v2650, %v2855
  %v2892 = vadd.f32 %v2651, %v2874
  %v2893 = vadd.f32 %v2652, %v2800
  %v2894 = vadd.f32 %v2653, %v2819
  %v2895 = vadd.f32 %v2654, %v2838
  %v2896 = vadd.f32 %v2655, %v2857
  %v2897 = vadd.f32 %v2656, %v2876
  %s2898 = scalar_lea.vmem %s4, 112
  %v2899 = vld [vmem:[%s2898] sm:$0xf]
  %v2900 = vld [vmem:[%s2898 + $0x4] sm:$0xf]
  %v2901 = vld [vmem:[%s2898 + $0x8] sm:$0xf]
  %v2902 = vld [vmem:[%s2898 + $0xc] sm:$0xf]
  %v2907 = vunpack.c.l.b16 %v2899
  %v2908 = vunpack.c.l.b16 %v2900
  %v2909 = vunpack.c.l.b16 %v2901
  %v2910 = vunpack.c.l.b16 %v2902
  %v2911 = vpack.c.b16 %v2908, %v2907
  %v2912 = vpack.c.b16 %v2910, %v2909
  %2913 = vrot.lane.b32.xlu0 %v2720, 91
  %v2914 = vpop.permute.xlu0 %2913
  %2915 = vrot.lane.b32.xlu0 %v2721, 91
  %v2916 = vpop.permute.xlu0 %2915
  %2917 = vrot.lane.b32.xlu0 %v2722, 91
  %v2918 = vpop.permute.xlu0 %2917
  %2919 = vrot.lane.b32.xlu0 %v2723, 91
  %v2920 = vpop.permute.xlu0 %2919
  %2921 = vrot.lane.b32.xlu0 %v2724, 91
  %v2922 = vpop.permute.xlu0 %2921
  %2923 = vrot.lane.b32.xlu0 %v2725, 91
  %v2924 = vpop.permute.xlu0 %2923
  %2925 = vrot.lane.b32.xlu0 %v2726, 91
  %v2926 = vpop.permute.xlu0 %2925
  %2927 = vrot.lane.b32.xlu0 %v2727, 91
  %v2928 = vpop.permute.xlu0 %2927
  %2929 = vrot.lane.b32.xlu0 %v2728, 91
  %v2930 = vpop.permute.xlu0 %2929
  %2931 = vrot.lane.b32.xlu0 %v2729, 91
  %v2932 = vpop.permute.xlu0 %2931
  %2933 = vrot.lane.b32.xlu0 %v2730, 91
  %v2934 = vpop.permute.xlu0 %2933
  %2935 = vrot.lane.b32.xlu0 %v2731, 91
  %v2936 = vpop.permute.xlu0 %2935
  %vm2937 = vcmask 744448
  %v2938 = vsel %vm2937, %v2914, %v2916
  %v2939 = vsel %vm2937, %v2916, %v2918
  %v2940 = vsel %vm2937, %v2918, %v2920
  %v2941 = vsel %vm2937, %v2920, %v2922
  %v2942 = vsel %vm2937, %v2922, %v2924
  %v2943 = vsel %vm2937, %v2926, %v2928
  %v2944 = vsel %vm2937, %v2928, %v2930
  %v2945 = vsel %vm2937, %v2930, %v2932
  %v2946 = vsel %vm2937, %v2932, %v2934
  %v2947 = vsel %vm2937, %v2934, %v2936
  %v2959 = vsel %vm1734, %v2911, 0
  %v2962 = vsel %vm1734, %v2912, 0
  %2964 = vmatpush.bf16.msra.mxu0 0
  %2965 = vmatpush.bf16.msra.mxu0 0
  %2966 = vmatpush.bf16.msra.mxu0 0
  %2967 = vmatpush.bf16.msra.mxu0 0
  %2968 = vmatpush.bf16.msra.mxu0 0
  %2969 = vmatpush.bf16.msra.mxu0 0
  %2970 = vmatpush.bf16.msra.mxu0 %v2943
  %2971 = vmatpush.bf16.msra.mxu0 %v2938
  %2972 = vmatmul.bf16.gmra.mxu0 %v2959
  %v2973 = vpop.f32.mrf.mxu0
  %v2974 = vadd.f32 0.0, %v2973
  %v2975 = vpop.f32.mrf.mxu0
  %v2976 = vadd.f32 0.0, %v2975
  %2977 = vmatmul.bf16.gmra.mxu0 %v2962
  %v2978 = vpop.f32.mrf.mxu0
  %v2979 = vadd.f32 0.0, %v2978
  %v2980 = vpop.f32.mrf.mxu0
  %v2981 = vadd.f32 0.0, %v2980
  %2982 = vdwg.mxu0
  %2983 = vmatpush.bf16.msra.mxu0 0
  %2984 = vmatpush.bf16.msra.mxu0 0
  %2985 = vmatpush.bf16.msra.mxu0 0
  %2986 = vmatpush.bf16.msra.mxu0 0
  %2987 = vmatpush.bf16.msra.mxu0 0
  %2988 = vmatpush.bf16.msra.mxu0 0
  %2989 = vmatpush.bf16.msra.mxu0 %v2944
  %2990 = vmatpush.bf16.msra.mxu0 %v2939
  %2991 = vmatmul.bf16.gmra.mxu0 %v2959
  %v2992 = vpop.f32.mrf.mxu0
  %v2993 = vadd.f32 0.0, %v2992
  %v2994 = vpop.f32.mrf.mxu0
  %v2995 = vadd.f32 0.0, %v2994
  %2996 = vmatmul.bf16.gmra.mxu0 %v2962
  %v2997 = vpop.f32.mrf.mxu0
  %v2998 = vadd.f32 0.0, %v2997
  %v2999 = vpop.f32.mrf.mxu0
  %v3000 = vadd.f32 0.0, %v2999
  %3001 = vdwg.mxu0
  %3002 = vmatpush.bf16.msra.mxu0 0
  %3003 = vmatpush.bf16.msra.mxu0 0
  %3004 = vmatpush.bf16.msra.mxu0 0
  %3005 = vmatpush.bf16.msra.mxu0 0
  %3006 = vmatpush.bf16.msra.mxu0 0
  %3007 = vmatpush.bf16.msra.mxu0 0
  %3008 = vmatpush.bf16.msra.mxu0 %v2945
  %3009 = vmatpush.bf16.msra.mxu0 %v2940
  %3010 = vmatmul.bf16.gmra.mxu0 %v2959
  %v3011 = vpop.f32.mrf.mxu0
  %v3012 = vadd.f32 0.0, %v3011
  %v3013 = vpop.f32.mrf.mxu0
  %v3014 = vadd.f32 0.0, %v3013
  %3015 = vmatmul.bf16.gmra.mxu0 %v2962
  %v3016 = vpop.f32.mrf.mxu0
  %v3017 = vadd.f32 0.0, %v3016
  %v3018 = vpop.f32.mrf.mxu0
  %v3019 = vadd.f32 0.0, %v3018
  %3020 = vdwg.mxu0
  %3021 = vmatpush.bf16.msra.mxu0 0
  %3022 = vmatpush.bf16.msra.mxu0 0
  %3023 = vmatpush.bf16.msra.mxu0 0
  %3024 = vmatpush.bf16.msra.mxu0 0
  %3025 = vmatpush.bf16.msra.mxu0 0
  %3026 = vmatpush.bf16.msra.mxu0 0
  %3027 = vmatpush.bf16.msra.mxu0 %v2946
  %3028 = vmatpush.bf16.msra.mxu0 %v2941
  %3029 = vmatmul.bf16.gmra.mxu0 %v2959
  %v3030 = vpop.f32.mrf.mxu0
  %v3031 = vadd.f32 0.0, %v3030
  %v3032 = vpop.f32.mrf.mxu0
  %v3033 = vadd.f32 0.0, %v3032
  %3034 = vmatmul.bf16.gmra.mxu0 %v2962
  %v3035 = vpop.f32.mrf.mxu0
  %v3036 = vadd.f32 0.0, %v3035
  %v3037 = vpop.f32.mrf.mxu0
  %v3038 = vadd.f32 0.0, %v3037
  %3039 = vdwg.mxu0
  %3040 = vmatpush.bf16.msra.mxu0 0
  %3041 = vmatpush.bf16.msra.mxu0 0
  %3042 = vmatpush.bf16.msra.mxu0 0
  %3043 = vmatpush.bf16.msra.mxu0 0
  %3044 = vmatpush.bf16.msra.mxu0 0
  %3045 = vmatpush.bf16.msra.mxu0 0
  %3046 = vmatpush.bf16.msra.mxu0 %v2947
  %3047 = vmatpush.bf16.msra.mxu0 %v2942
  %3048 = vmatmul.bf16.gmra.mxu0 %v2959
  %v3049 = vpop.f32.mrf.mxu0
  %v3050 = vadd.f32 0.0, %v3049
  %v3051 = vpop.f32.mrf.mxu0
  %v3052 = vadd.f32 0.0, %v3051
  %3053 = vmatmul.bf16.gmra.mxu0 %v2962
  %v3054 = vpop.f32.mrf.mxu0
  %v3055 = vadd.f32 0.0, %v3054
  %v3056 = vpop.f32.mrf.mxu0
  %v3057 = vadd.f32 0.0, %v3056
  %3058 = vdwg.mxu0
  %v3059 = vadd.f32 %v2878, %v2974
  %v3060 = vadd.f32 %v2879, %v2993
  %v3061 = vadd.f32 %v2880, %v3012
  %v3062 = vadd.f32 %v2881, %v3031
  %v3063 = vadd.f32 %v2882, %v3050
  %v3064 = vadd.f32 %v2883, %v2976
  %v3065 = vadd.f32 %v2884, %v2995
  %v3066 = vadd.f32 %v2885, %v3014
  %v3067 = vadd.f32 %v2886, %v3033
  %v3068 = vadd.f32 %v2887, %v3052
  %v3069 = vadd.f32 %v2888, %v2979
  %v3070 = vadd.f32 %v2889, %v2998
  %v3071 = vadd.f32 %v2890, %v3017
  %v3072 = vadd.f32 %v2891, %v3036
  %v3073 = vadd.f32 %v2892, %v3055
  %v3074 = vadd.f32 %v2893, %v2981
  %v3075 = vadd.f32 %v2894, %v3000
  %v3076 = vadd.f32 %v2895, %v3019
  %v3077 = vadd.f32 %v2896, %v3038
  %v3078 = vadd.f32 %v2897, %v3057
  %s3079 = scalar_lea.vmem %s4, 128
  %v3080 = vld [vmem:[%s3079] sm:$0xf]
  %v3081 = vld [vmem:[%s3079 + $0x4] sm:$0xf]
  %v3082 = vld [vmem:[%s3079 + $0x8] sm:$0xf]
  %v3083 = vld [vmem:[%s3079 + $0xc] sm:$0xf]
  %v3088 = vunpack.c.l.b16 %v3080
  %v3089 = vunpack.c.l.b16 %v3081
  %v3090 = vunpack.c.l.b16 %v3082
  %v3091 = vunpack.c.l.b16 %v3083
  %v3092 = vpack.c.b16 %v3089, %v3088
  %v3093 = vpack.c.b16 %v3091, %v3090
  %3094 = vrot.lane.b32.xlu0 %v2720, 90
  %v3095 = vpop.permute.xlu0 %3094
  %3096 = vrot.lane.b32.xlu0 %v2721, 90
  %v3097 = vpop.permute.xlu0 %3096
  %3098 = vrot.lane.b32.xlu0 %v2722, 90
  %v3099 = vpop.permute.xlu0 %3098
  %3100 = vrot.lane.b32.xlu0 %v2723, 90
  %v3101 = vpop.permute.xlu0 %3100
  %3102 = vrot.lane.b32.xlu0 %v2724, 90
  %v3103 = vpop.permute.xlu0 %3102
  %3104 = vrot.lane.b32.xlu0 %v2725, 90
  %v3105 = vpop.permute.xlu0 %3104
  %3106 = vrot.lane.b32.xlu0 %v2726, 90
  %v3107 = vpop.permute.xlu0 %3106
  %3108 = vrot.lane.b32.xlu0 %v2727, 90
  %v3109 = vpop.permute.xlu0 %3108
  %3110 = vrot.lane.b32.xlu0 %v2728, 90
  %v3111 = vpop.permute.xlu0 %3110
  %3112 = vrot.lane.b32.xlu0 %v2729, 90
  %v3113 = vpop.permute.xlu0 %3112
  %3114 = vrot.lane.b32.xlu0 %v2730, 90
  %v3115 = vpop.permute.xlu0 %3114
  %3116 = vrot.lane.b32.xlu0 %v2731, 90
  %v3117 = vpop.permute.xlu0 %3116
  %vm3118 = vcmask 736256
  %v3119 = vsel %vm3118, %v3095, %v3097
  %v3120 = vsel %vm3118, %v3097, %v3099
  %v3121 = vsel %vm3118, %v3099, %v3101
  %v3122 = vsel %vm3118, %v3101, %v3103
  %v3123 = vsel %vm3118, %v3103, %v3105
  %v3124 = vsel %vm3118, %v3107, %v3109
  %v3125 = vsel %vm3118, %v3109, %v3111
  %v3126 = vsel %vm3118, %v3111, %v3113
  %v3127 = vsel %vm3118, %v3113, %v3115
  %v3128 = vsel %vm3118, %v3115, %v3117
  %v3140 = vsel %vm1734, %v3092, 0
  %v3143 = vsel %vm1734, %v3093, 0
  %3145 = vmatpush.bf16.msra.mxu0 0
  %3146 = vmatpush.bf16.msra.mxu0 0
  %3147 = vmatpush.bf16.msra.mxu0 0
  %3148 = vmatpush.bf16.msra.mxu0 0
  %3149 = vmatpush.bf16.msra.mxu0 0
  %3150 = vmatpush.bf16.msra.mxu0 0
  %3151 = vmatpush.bf16.msra.mxu0 %v3124
  %3152 = vmatpush.bf16.msra.mxu0 %v3119
  %3153 = vmatmul.bf16.gmra.mxu0 %v3140
  %v3154 = vpop.f32.mrf.mxu0
  %v3155 = vadd.f32 0.0, %v3154
  %v3156 = vpop.f32.mrf.mxu0
  %v3157 = vadd.f32 0.0, %v3156
  %3158 = vmatmul.bf16.gmra.mxu0 %v3143
  %v3159 = vpop.f32.mrf.mxu0
  %v3160 = vadd.f32 0.0, %v3159
  %v3161 = vpop.f32.mrf.mxu0
  %v3162 = vadd.f32 0.0, %v3161
  %3163 = vdwg.mxu0
  %3164 = vmatpush.bf16.msra.mxu0 0
  %3165 = vmatpush.bf16.msra.mxu0 0
  %3166 = vmatpush.bf16.msra.mxu0 0
  %3167 = vmatpush.bf16.msra.mxu0 0
  %3168 = vmatpush.bf16.msra.mxu0 0
  %3169 = vmatpush.bf16.msra.mxu0 0
  %3170 = vmatpush.bf16.msra.mxu0 %v3125
  %3171 = vmatpush.bf16.msra.mxu0 %v3120
  %3172 = vmatmul.bf16.gmra.mxu0 %v3140
  %v3173 = vpop.f32.mrf.mxu0
  %v3174 = vadd.f32 0.0, %v3173
  %v3175 = vpop.f32.mrf.mxu0
  %v3176 = vadd.f32 0.0, %v3175
  %3177 = vmatmul.bf16.gmra.mxu0 %v3143
  %v3178 = vpop.f32.mrf.mxu0
  %v3179 = vadd.f32 0.0, %v3178
  %v3180 = vpop.f32.mrf.mxu0
  %v3181 = vadd.f32 0.0, %v3180
  %3182 = vdwg.mxu0
  %3183 = vmatpush.bf16.msra.mxu0 0
  %3184 = vmatpush.bf16.msra.mxu0 0
  %3185 = vmatpush.bf16.msra.mxu0 0
  %3186 = vmatpush.bf16.msra.mxu0 0
  %3187 = vmatpush.bf16.msra.mxu0 0
  %3188 = vmatpush.bf16.msra.mxu0 0
  %3189 = vmatpush.bf16.msra.mxu0 %v3126
  %3190 = vmatpush.bf16.msra.mxu0 %v3121
  %3191 = vmatmul.bf16.gmra.mxu0 %v3140
  %v3192 = vpop.f32.mrf.mxu0
  %v3193 = vadd.f32 0.0, %v3192
  %v3194 = vpop.f32.mrf.mxu0
  %v3195 = vadd.f32 0.0, %v3194
  %3196 = vmatmul.bf16.gmra.mxu0 %v3143
  %v3197 = vpop.f32.mrf.mxu0
  %v3198 = vadd.f32 0.0, %v3197
  %v3199 = vpop.f32.mrf.mxu0
  %v3200 = vadd.f32 0.0, %v3199
  %3201 = vdwg.mxu0
  %3202 = vmatpush.bf16.msra.mxu0 0
  %3203 = vmatpush.bf16.msra.mxu0 0
  %3204 = vmatpush.bf16.msra.mxu0 0
  %3205 = vmatpush.bf16.msra.mxu0 0
  %3206 = vmatpush.bf16.msra.mxu0 0
  %3207 = vmatpush.bf16.msra.mxu0 0
  %3208 = vmatpush.bf16.msra.mxu0 %v3127
  %3209 = vmatpush.bf16.msra.mxu0 %v3122
  %3210 = vmatmul.bf16.gmra.mxu0 %v3140
  %v3211 = vpop.f32.mrf.mxu0
  %v3212 = vadd.f32 0.0, %v3211
  %v3213 = vpop.f32.mrf.mxu0
  %v3214 = vadd.f32 0.0, %v3213
  %3215 = vmatmul.bf16.gmra.mxu0 %v3143
  %v3216 = vpop.f32.mrf.mxu0
  %v3217 = vadd.f32 0.0, %v3216
  %v3218 = vpop.f32.mrf.mxu0
  %v3219 = vadd.f32 0.0, %v3218
  %3220 = vdwg.mxu0
  %3221 = vmatpush.bf16.msra.mxu0 0
  %3222 = vmatpush.bf16.msra.mxu0 0
  %3223 = vmatpush.bf16.msra.mxu0 0
  %3224 = vmatpush.bf16.msra.mxu0 0
  %3225 = vmatpush.bf16.msra.mxu0 0
  %3226 = vmatpush.bf16.msra.mxu0 0
  %3227 = vmatpush.bf16.msra.mxu0 %v3128
  %3228 = vmatpush.bf16.msra.mxu0 %v3123
  %3229 = vmatmul.bf16.gmra.mxu0 %v3140
  %v3230 = vpop.f32.mrf.mxu0
  %v3231 = vadd.f32 0.0, %v3230
  %v3232 = vpop.f32.mrf.mxu0
  %v3233 = vadd.f32 0.0, %v3232
  %3234 = vmatmul.bf16.gmra.mxu0 %v3143
  %v3235 = vpop.f32.mrf.mxu0
  %v3236 = vadd.f32 0.0, %v3235
  %v3237 = vpop.f32.mrf.mxu0
  %v3238 = vadd.f32 0.0, %v3237
  %3239 = vdwg.mxu0
  %v3240 = vadd.f32 %v3059, %v3155
  %v3241 = vadd.f32 %v3060, %v3174
  %v3242 = vadd.f32 %v3061, %v3193
  %v3243 = vadd.f32 %v3062, %v3212
  %v3244 = vadd.f32 %v3063, %v3231
  %v3245 = vadd.f32 %v3064, %v3157
  %v3246 = vadd.f32 %v3065, %v3176
  %v3247 = vadd.f32 %v3066, %v3195
  %v3248 = vadd.f32 %v3067, %v3214
  %v3249 = vadd.f32 %v3068, %v3233
  %v3250 = vadd.f32 %v3069, %v3160
  %v3251 = vadd.f32 %v3070, %v3179
  %v3252 = vadd.f32 %v3071, %v3198
  %v3253 = vadd.f32 %v3072, %v3217
  %v3254 = vadd.f32 %v3073, %v3236
  %v3255 = vadd.f32 %v3074, %v3162
  %v3256 = vadd.f32 %v3075, %v3181
  %v3257 = vadd.f32 %v3076, %v3200
  %v3258 = vadd.f32 %v3077, %v3219
  %v3259 = vadd.f32 %v3078, %v3238
  %v3260 = vld [vmem:[%s5] sm:$0xff]
  %v3261 = vld [vmem:[%s5 + $0x8] sm:$0xff]
  %v3262 = vld [vmem:[%s5 + $0x10] sm:$0xff]
  %v3263 = vld [vmem:[%s5 + $0x18] sm:$0xff]
  %3265 = vset.pattern.permute.xlu0 0
  %3266 = vperm.xlu0 %3265, %v3260
  %v3267 = vpop.permute.xlu0 %3266
  %3270 = vset.pattern.permute.xlu0 0
  %3271 = vperm.xlu0 %3270, %v3261
  %v3272 = vpop.permute.xlu0 %3271
  %3275 = vset.pattern.permute.xlu0 0
  %3276 = vperm.xlu0 %3275, %v3262
  %v3277 = vpop.permute.xlu0 %3276
  %3280 = vset.pattern.permute.xlu0 0
  %3281 = vperm.xlu0 %3280, %v3263
  %v3282 = vpop.permute.xlu0 %3281
  %v3284 = vadd.f32 %v3240, %v3267
  %v3285 = vadd.f32 %v3241, %v3267
  %v3286 = vadd.f32 %v3242, %v3267
  %v3287 = vadd.f32 %v3243, %v3267
  %v3288 = vadd.f32 %v3244, %v3267
  %v3289 = vadd.f32 %v3245, %v3272
  %v3290 = vadd.f32 %v3246, %v3272
  %v3291 = vadd.f32 %v3247, %v3272
  %v3292 = vadd.f32 %v3248, %v3272
  %v3293 = vadd.f32 %v3249, %v3272
  %v3294 = vadd.f32 %v3250, %v3277
  %v3295 = vadd.f32 %v3251, %v3277
  %v3296 = vadd.f32 %v3252, %v3277
  %v3297 = vadd.f32 %v3253, %v3277
  %v3298 = vadd.f32 %v3254, %v3277
  %v3299 = vadd.f32 %v3255, %v3282
  %v3300 = vadd.f32 %v3256, %v3282
  %v3301 = vadd.f32 %v3257, %v3282
  %v3302 = vadd.f32 %v3258, %v3282
  %v3303 = vadd.f32 %v3259, %v3282
  %v3304 = vmul.f32 %v3284, %v1490
  %v3305 = vmul.f32 %v3285, %v1491
  %v3306 = vmul.f32 %v3286, %v1492
  %v3307 = vmul.f32 %v3287, %v1493
  %v3308 = vmul.f32 %v3288, %v1494
  %v3309 = vmul.f32 %v3289, %v1490
  %v3310 = vmul.f32 %v3290, %v1491
  %v3311 = vmul.f32 %v3291, %v1492
  %v3312 = vmul.f32 %v3292, %v1493
  %v3313 = vmul.f32 %v3293, %v1494
  %v3314 = vmul.f32 %v3294, %v1490
  %v3315 = vmul.f32 %v3295, %v1491
  %v3316 = vmul.f32 %v3296, %v1492
  %v3317 = vmul.f32 %v3297, %v1493
  %v3318 = vmul.f32 %v3298, %v1494
  %v3319 = vmul.f32 %v3299, %v1490
  %v3320 = vmul.f32 %v3300, %v1491
  %v3321 = vmul.f32 %v3301, %v1492
  %v3322 = vmul.f32 %v3302, %v1493
  %v3323 = vmul.f32 %v3303, %v1494
  %v3324 = vadd.f32 %v3304, %v3305
  %v3325 = vadd.f32 %v3324, %v3306
  %v3326 = vadd.f32 %v3325, %v3307
  %vm3327 = vcmask 801792
  %v3328 = vsel %vm3327, %v3308, 0.0
  %v3329 = vadd.f32 %v3326, %v3328
  %3330 = vadd.xlane.f32.xlu0 %v3329
  %v3331 = vpop.xlane.xlu0 %3330
  %v3332 = vadd.f32 %v3309, %v3310
  %v3333 = vadd.f32 %v3332, %v3311
  %v3334 = vadd.f32 %v3333, %v3312
  %v3335 = vsel %vm3327, %v3313, 0.0
  %v3336 = vadd.f32 %v3334, %v3335
  %3337 = vadd.xlane.f32.xlu0 %v3336
  %v3338 = vpop.xlane.xlu0 %3337
  %v3339 = vadd.f32 %v3314, %v3315
  %v3340 = vadd.f32 %v3339, %v3316
  %v3341 = vadd.f32 %v3340, %v3317
  %v3342 = vsel %vm3327, %v3318, 0.0
  %v3343 = vadd.f32 %v3341, %v3342
  %3344 = vadd.xlane.f32.xlu0 %v3343
  %v3345 = vpop.xlane.xlu0 %3344
  %v3346 = vadd.f32 %v3319, %v3320
  %v3347 = vadd.f32 %v3346, %v3321
  %v3348 = vadd.f32 %v3347, %v3322
  %v3349 = vsel %vm3327, %v3323, 0.0
  %v3350 = vadd.f32 %v3348, %v3349
  %3351 = vadd.xlane.f32.xlu0 %v3350
  %v3352 = vpop.xlane.xlu0 %3351
  %v3353 = vmul.f32 %v3304, %v3284
  %v3354 = vmul.f32 %v3305, %v3285
  %v3355 = vmul.f32 %v3306, %v3286
  %v3356 = vmul.f32 %v3307, %v3287
  %v3357 = vmul.f32 %v3308, %v3288
  %v3358 = vmul.f32 %v3309, %v3289
  %v3359 = vmul.f32 %v3310, %v3290
  %v3360 = vmul.f32 %v3311, %v3291
  %v3361 = vmul.f32 %v3312, %v3292
  %v3362 = vmul.f32 %v3313, %v3293
  %v3363 = vmul.f32 %v3314, %v3294
  %v3364 = vmul.f32 %v3315, %v3295
  %v3365 = vmul.f32 %v3316, %v3296
  %v3366 = vmul.f32 %v3317, %v3297
  %v3367 = vmul.f32 %v3318, %v3298
  %v3368 = vmul.f32 %v3319, %v3299
  %v3369 = vmul.f32 %v3320, %v3300
  %v3370 = vmul.f32 %v3321, %v3301
  %v3371 = vmul.f32 %v3322, %v3302
  %v3372 = vmul.f32 %v3323, %v3303
  %v3373 = vadd.f32 %v3353, %v3354
  %v3374 = vadd.f32 %v3373, %v3355
  %v3375 = vadd.f32 %v3374, %v3356
  %v3376 = vsel %vm3327, %v3357, 0.0
  %v3377 = vadd.f32 %v3375, %v3376
  %3378 = vadd.xlane.f32.xlu0 %v3377
  %v3379 = vpop.xlane.xlu0 %3378
  %v3380 = vadd.f32 %v3358, %v3359
  %v3381 = vadd.f32 %v3380, %v3360
  %v3382 = vadd.f32 %v3381, %v3361
  %v3383 = vsel %vm3327, %v3362, 0.0
  %v3384 = vadd.f32 %v3382, %v3383
  %3385 = vadd.xlane.f32.xlu0 %v3384
  %v3386 = vpop.xlane.xlu0 %3385
  %v3387 = vadd.f32 %v3363, %v3364
  %v3388 = vadd.f32 %v3387, %v3365
  %v3389 = vadd.f32 %v3388, %v3366
  %v3390 = vsel %vm3327, %v3367, 0.0
  %v3391 = vadd.f32 %v3389, %v3390
  %3392 = vadd.xlane.f32.xlu0 %v3391
  %v3393 = vpop.xlane.xlu0 %3392
  %v3394 = vadd.f32 %v3368, %v3369
  %v3395 = vadd.f32 %v3394, %v3370
  %v3396 = vadd.f32 %v3395, %v3371
  %v3397 = vsel %vm3327, %v3372, 0.0
  %v3398 = vadd.f32 %v3396, %v3397
  %3399 = vadd.xlane.f32.xlu0 %v3398
  %v3400 = vpop.xlane.xlu0 %3399
  %v3401 = vmul.f32 %v3331, 0.001953125
  %v3402 = vmul.f32 %v3338, 0.001953125
  %v3403 = vmul.f32 %v3345, 0.001953125
  %v3404 = vmul.f32 %v3352, 0.001953125
  %v3405 = vmul.f32 %v3379, 0.001953125
  %v3406 = vmul.f32 %v3386, 0.001953125
  %v3407 = vmul.f32 %v3393, 0.001953125
  %v3408 = vmul.f32 %v3400, 0.001953125
  %v3409 = vmul.f32 %v3401, %v3401
  %v3410 = vmul.f32 %v3402, %v3402
  %v3411 = vmul.f32 %v3403, %v3403
  %v3412 = vmul.f32 %v3404, %v3404
  %v3413 = vsub.f32 %v3405, %v3409
  %v3414 = vsub.f32 %v3406, %v3410
  %v3415 = vsub.f32 %v3407, %v3411
  %v3416 = vsub.f32 %v3408, %v3412
  %v3417 = vld [vmem:[%s6] sm:$0xff]
  %v3418 = vld [vmem:[%s6 + $0x8] sm:$0xff]
  %v3419 = vld [vmem:[%s6 + $0x10] sm:$0xff]
  %v3420 = vld [vmem:[%s6 + $0x18] sm:$0xff]
  %v3421 = vadd.f32 %v3413, 0.0001
  %v3422 = vadd.f32 %v3414, 0.0001
  %v3423 = vadd.f32 %v3415, 0.0001
  %v3424 = vadd.f32 %v3416, 0.0001
  %v3425 = vrsqrt.pop %v3421
  %v3426 = vmul.f32 %v3425, %v3421
  %v3427 = vmul.f32 %v3426, %v3425
  %v3428 = vmul.f32 0.5, %v3427
  %v3429 = vsub.f32 1.5, %v3428
  %v3430 = vmul.f32 %v3425, %v3429
  %vm3431 = vweird.f32 %v3421
  %vm3432 = vweird.f32 %v3425
  %vm3433 = vmor %vm3431, %vm3432
  %v3434 = vsel %vm3433, %v3425, %v3430
  %v3435 = vrsqrt.pop %v3422
  %v3436 = vmul.f32 %v3435, %v3422
  %v3437 = vmul.f32 %v3436, %v3435
  %v3438 = vmul.f32 0.5, %v3437
  %v3439 = vsub.f32 1.5, %v3438
  %v3440 = vmul.f32 %v3435, %v3439
  %vm3441 = vweird.f32 %v3422
  %vm3442 = vweird.f32 %v3435
  %vm3443 = vmor %vm3441, %vm3442
  %v3444 = vsel %vm3443, %v3435, %v3440
  %v3445 = vrsqrt.pop %v3423
  %v3446 = vmul.f32 %v3445, %v3423
  %v3447 = vmul.f32 %v3446, %v3445
  %v3448 = vmul.f32 0.5, %v3447
  %v3449 = vsub.f32 1.5, %v3448
  %v3450 = vmul.f32 %v3445, %v3449
  %vm3451 = vweird.f32 %v3423
  %vm3452 = vweird.f32 %v3445
  %vm3453 = vmor %vm3451, %vm3452
  %v3454 = vsel %vm3453, %v3445, %v3450
  %v3455 = vrsqrt.pop %v3424
  %v3456 = vmul.f32 %v3455, %v3424
  %v3457 = vmul.f32 %v3456, %v3455
  %v3458 = vmul.f32 0.5, %v3457
  %v3459 = vsub.f32 1.5, %v3458
  %v3460 = vmul.f32 %v3455, %v3459
  %vm3461 = vweird.f32 %v3424
  %vm3462 = vweird.f32 %v3455
  %vm3463 = vmor %vm3461, %vm3462
  %v3464 = vsel %vm3463, %v3455, %v3460
  %v3465 = vmul.f32 %v3417, %v3434
  %v3466 = vmul.f32 %v3418, %v3444
  %v3467 = vmul.f32 %v3419, %v3454
  %v3468 = vmul.f32 %v3420, %v3464
  %v3469 = vld [vmem:[%s7] sm:$0xff]
  %v3470 = vld [vmem:[%s7 + $0x8] sm:$0xff]
  %v3471 = vld [vmem:[%s7 + $0x10] sm:$0xff]
  %v3472 = vld [vmem:[%s7 + $0x18] sm:$0xff]
  %v3473 = vmul.f32 %v3401, %v3465
  %v3474 = vmul.f32 %v3402, %v3466
  %v3475 = vmul.f32 %v3403, %v3467
  %v3476 = vmul.f32 %v3404, %v3468
  %v3477 = vsub.f32 %v3469, %v3473
  %v3478 = vsub.f32 %v3470, %v3474
  %v3479 = vsub.f32 %v3471, %v3475
  %v3480 = vsub.f32 %v3472, %v3476
  %3482 = vset.pattern.permute.xlu0 0
  %3483 = vperm.xlu0 %3482, %v3465
  %v3484 = vpop.permute.xlu0 %3483
  %3487 = vset.pattern.permute.xlu0 0
  %3488 = vperm.xlu0 %3487, %v3466
  %v3489 = vpop.permute.xlu0 %3488
  %3492 = vset.pattern.permute.xlu0 0
  %3493 = vperm.xlu0 %3492, %v3467
  %v3494 = vpop.permute.xlu0 %3493
  %3497 = vset.pattern.permute.xlu0 0
  %3498 = vperm.xlu0 %3497, %v3468
  %v3499 = vpop.permute.xlu0 %3498
  %v3501 = vmul.f32 %v3284, %v3484
  %v3502 = vmul.f32 %v3285, %v3484
  %v3503 = vmul.f32 %v3286, %v3484
  %v3504 = vmul.f32 %v3287, %v3484
  %v3505 = vmul.f32 %v3288, %v3484
  %v3506 = vmul.f32 %v3289, %v3489
  %v3507 = vmul.f32 %v3290, %v3489
  %v3508 = vmul.f32 %v3291, %v3489
  %v3509 = vmul.f32 %v3292, %v3489
  %v3510 = vmul.f32 %v3293, %v3489
  %v3511 = vmul.f32 %v3294, %v3494
  %v3512 = vmul.f32 %v3295, %v3494
  %v3513 = vmul.f32 %v3296, %v3494
  %v3514 = vmul.f32 %v3297, %v3494
  %v3515 = vmul.f32 %v3298, %v3494
  %v3516 = vmul.f32 %v3299, %v3499
  %v3517 = vmul.f32 %v3300, %v3499
  %v3518 = vmul.f32 %v3301, %v3499
  %v3519 = vmul.f32 %v3302, %v3499
  %v3520 = vmul.f32 %v3303, %v3499
  %3522 = vset.pattern.permute.xlu0 0
  %3523 = vperm.xlu0 %3522, %v3477
  %v3524 = vpop.permute.xlu0 %3523
  %3527 = vset.pattern.permute.xlu0 0
  %3528 = vperm.xlu0 %3527, %v3478
  %v3529 = vpop.permute.xlu0 %3528
  %3532 = vset.pattern.permute.xlu0 0
  %3533 = vperm.xlu0 %3532, %v3479
  %v3534 = vpop.permute.xlu0 %3533
  %3537 = vset.pattern.permute.xlu0 0
  %3538 = vperm.xlu0 %3537, %v3480
  %v3539 = vpop.permute.xlu0 %3538
  %v3541 = vadd.f32 %v3501, %v3524
  %v3542 = vadd.f32 %v3502, %v3524
  %v3543 = vadd.f32 %v3503, %v3524
  %v3544 = vadd.f32 %v3504, %v3524
  %v3545 = vadd.f32 %v3505, %v3524
  %v3546 = vadd.f32 %v3506, %v3529
  %v3547 = vadd.f32 %v3507, %v3529
  %v3548 = vadd.f32 %v3508, %v3529
  %v3549 = vadd.f32 %v3509, %v3529
  %v3550 = vadd.f32 %v3510, %v3529
  %v3551 = vadd.f32 %v3511, %v3534
  %v3552 = vadd.f32 %v3512, %v3534
  %v3553 = vadd.f32 %v3513, %v3534
  %v3554 = vadd.f32 %v3514, %v3534
  %v3555 = vadd.f32 %v3515, %v3534
  %v3556 = vadd.f32 %v3516, %v3539
  %v3557 = vadd.f32 %v3517, %v3539
  %v3558 = vadd.f32 %v3518, %v3539
  %v3559 = vadd.f32 %v3519, %v3539
  %v3560 = vadd.f32 %v3520, %v3539
  %v3561 = vmax.f32 %v3541, 0.0
  %v3562 = vmax.f32 %v3542, 0.0
  %v3563 = vmax.f32 %v3543, 0.0
  %v3564 = vmax.f32 %v3544, 0.0
  %v3565 = vmax.f32 %v3545, 0.0
  %v3566 = vmax.f32 %v3546, 0.0
  %v3567 = vmax.f32 %v3547, 0.0
  %v3568 = vmax.f32 %v3548, 0.0
  %v3569 = vmax.f32 %v3549, 0.0
  %v3570 = vmax.f32 %v3550, 0.0
  %v3571 = vmax.f32 %v3551, 0.0
  %v3572 = vmax.f32 %v3552, 0.0
  %v3573 = vmax.f32 %v3553, 0.0
  %v3574 = vmax.f32 %v3554, 0.0
  %v3575 = vmax.f32 %v3555, 0.0
  %v3576 = vmax.f32 %v3556, 0.0
  %v3577 = vmax.f32 %v3557, 0.0
  %v3578 = vmax.f32 %v3558, 0.0
  %v3579 = vmax.f32 %v3559, 0.0
  %v3580 = vmax.f32 %v3560, 0.0
  %v3581 = vmul.f32 %v3561, %v1490
  %v3582 = vmul.f32 %v3562, %v1491
  %v3583 = vmul.f32 %v3563, %v1492
  %v3584 = vmul.f32 %v3564, %v1493
  %v3585 = vmul.f32 %v3565, %v1494
  %v3586 = vmul.f32 %v3566, %v1490
  %v3587 = vmul.f32 %v3567, %v1491
  %v3588 = vmul.f32 %v3568, %v1492
  %v3589 = vmul.f32 %v3569, %v1493
  %v3590 = vmul.f32 %v3570, %v1494
  %v3591 = vmul.f32 %v3571, %v1490
  %v3592 = vmul.f32 %v3572, %v1491
  %v3593 = vmul.f32 %v3573, %v1492
  %v3594 = vmul.f32 %v3574, %v1493
  %v3595 = vmul.f32 %v3575, %v1494
  %v3596 = vmul.f32 %v3576, %v1490
  %v3597 = vmul.f32 %v3577, %v1491
  %v3598 = vmul.f32 %v3578, %v1492
  %v3599 = vmul.f32 %v3579, %v1493
  %v3600 = vmul.f32 %v3580, %v1494
  %v3601 = vpack.c.bf16 %v3582, %v3581
  %v3602 = vpack.c.bf16 %v3584, %v3583
  %v3603 = vpack.c.bf16 %v3585, %v3585
  %v3604 = vpack.c.bf16 %v3587, %v3586
  %v3605 = vpack.c.bf16 %v3589, %v3588
  %v3606 = vpack.c.bf16 %v3590, %v3590
  %v3607 = vpack.c.bf16 %v3592, %v3591
  %v3608 = vpack.c.bf16 %v3594, %v3593
  %v3609 = vpack.c.bf16 %v3595, %v3595
  %v3610 = vpack.c.bf16 %v3597, %v3596
  %v3611 = vpack.c.bf16 %v3599, %v3598
  %v3612 = vpack.c.bf16 %v3600, %v3600
  %3625 = vrot.lane.b32.xlu0 %v3601, 19
  %v3626 = vpop.permute.xlu0 %3625
  %3627 = vrot.lane.b32.xlu0 %v3602, 19
  %v3628 = vpop.permute.xlu0 %3627
  %3629 = vrot.lane.b32.xlu0 %v3603, 19
  %v3630 = vpop.permute.xlu0 %3629
  %3631 = vrot.lane.b32.xlu0 %v3604, 19
  %v3632 = vpop.permute.xlu0 %3631
  %3633 = vrot.lane.b32.xlu0 %v3605, 19
  %v3634 = vpop.permute.xlu0 %3633
  %3635 = vrot.lane.b32.xlu0 %v3606, 19
  %v3636 = vpop.permute.xlu0 %3635
  %3637 = vrot.lane.b32.xlu0 %v3607, 19
  %v3638 = vpop.permute.xlu0 %3637
  %3639 = vrot.lane.b32.xlu0 %v3608, 19
  %v3640 = vpop.permute.xlu0 %3639
  %3641 = vrot.lane.b32.xlu0 %v3609, 19
  %v3642 = vpop.permute.xlu0 %3641
  %3643 = vrot.lane.b32.xlu0 %v3610, 19
  %v3644 = vpop.permute.xlu0 %3643
  %3645 = vrot.lane.b32.xlu0 %v3611, 19
  %v3646 = vpop.permute.xlu0 %3645
  %3647 = vrot.lane.b32.xlu0 %v3612, 19
  %v3648 = vpop.permute.xlu0 %3647
  %v3649 = vrot.slane %v3626, 4
  %v3650 = vrot.slane %v3628, 4
  %v3651 = vrot.slane %v3632, 4
  %v3652 = vrot.slane %v3634, 4
  %v3653 = vrot.slane %v3638, 4
  %v3654 = vrot.slane %v3640, 4
  %v3655 = vrot.slane %v3644, 4
  %v3656 = vrot.slane %v3646, 4
  %v3657 = vsel %vm1576, %v3649, %v3626
  %v3658 = vsel %vm1578, %v3649, %v3650
  %v3659 = vsel %vm1576, %v3658, %v3628
  %v3660 = vsel %vm1576, %v3650, %v3630
  %v3661 = vsel %vm1576, %v3651, %v3632
  %v3662 = vsel %vm1578, %v3651, %v3652
  %v3663 = vsel %vm1576, %v3662, %v3634
  %v3664 = vsel %vm1576, %v3652, %v3636
  %v3665 = vsel %vm1576, %v3653, %v3638
  %v3666 = vsel %vm1578, %v3653, %v3654
  %v3667 = vsel %vm1576, %v3666, %v3640
  %v3668 = vsel %vm1576, %v3654, %v3642
  %v3669 = vsel %vm1576, %v3655, %v3644
  %v3670 = vsel %vm1578, %v3655, %v3656
  %v3671 = vsel %vm1576, %v3670, %v3646
  %v3672 = vsel %vm1576, %v3656, %v3648
  %3685 = vst.msk [vmem:[#allocation3] sm:$0xff] %vm1608, %v3657
  %3686 = vst [vmem:[#allocation3 + $0x8] sm:$0xff] %v3659
  %3687 = vst.msk [vmem:[#allocation3 + $0x10] sm:$0xf] %vm1611, %v3660
  %3688 = vst.msk [vmem:[#allocation3 + $0x18] sm:$0xff] %vm1608, %v3661
  %3689 = vst [vmem:[#allocation3 + $0x20] sm:$0xff] %v3663
  %3690 = vst.msk [vmem:[#allocation3 + $0x28] sm:$0xf] %vm1611, %v3664
  %3691 = vst.msk [vmem:[#allocation3 + $0x30] sm:$0xff] %vm1608, %v3665
  %3692 = vst [vmem:[#allocation3 + $0x38] sm:$0xff] %v3667
  %3693 = vst.msk [vmem:[#allocation3 + $0x40] sm:$0xf] %vm1611, %v3668
  %3694 = vst.msk [vmem:[#allocation3 + $0x48] sm:$0xff] %vm1608, %v3669
  %3695 = vst [vmem:[#allocation3 + $0x50] sm:$0xff] %v3671
  %3696 = vst.msk [vmem:[#allocation3 + $0x58] sm:$0xf] %vm1611, %v3672
  %v3697 = vld [vmem:[%s8] sm:$0xf]
  %v3698 = vld [vmem:[%s8 + $0x4] sm:$0xf]
  %v3699 = vld [vmem:[%s8 + $0x8] sm:$0xf]
  %v3700 = vld [vmem:[%s8 + $0xc] sm:$0xf]
  %v3701 = vld [vmem:[#allocation3] sm:$0xff]
  %v3702 = vld [vmem:[#allocation3 + $0x8] sm:$0xff]
  %v3703 = vld [vmem:[#allocation3 + $0x10] sm:$0xf]
  %v3704 = vld [vmem:[#allocation3 + $0x18] sm:$0xff]
  %v3705 = vld [vmem:[#allocation3 + $0x20] sm:$0xff]
  %v3706 = vld [vmem:[#allocation3 + $0x28] sm:$0xf]
  %v3707 = vld [vmem:[#allocation3 + $0x30] sm:$0xff]
  %v3708 = vld [vmem:[#allocation3 + $0x38] sm:$0xff]
  %v3709 = vld [vmem:[#allocation3 + $0x40] sm:$0xf]
  %v3710 = vld [vmem:[#allocation3 + $0x48] sm:$0xff]
  %v3711 = vld [vmem:[#allocation3 + $0x50] sm:$0xff]
  %v3712 = vld [vmem:[#allocation3 + $0x58] sm:$0xf]
  %s3713 = scalar_lea.vmem %s8, 16
  %v3714 = vld [vmem:[%s3713] sm:$0xf]
  %v3715 = vld [vmem:[%s3713 + $0x4] sm:$0xf]
  %v3716 = vld [vmem:[%s3713 + $0x8] sm:$0xf]
  %v3717 = vld [vmem:[%s3713 + $0xc] sm:$0xf]
  %v3722 = vunpack.c.l.b16 %v3714
  %v3723 = vunpack.c.l.b16 %v3715
  %v3724 = vunpack.c.l.b16 %v3716
  %v3725 = vunpack.c.l.b16 %v3717
  %v3726 = vpack.c.b16 %v3723, %v3722
  %v3727 = vpack.c.b16 %v3725, %v3724
  %v3740 = vunpack.c.l.b16 %v3701
  %v3741 = vunpack.c.h.b16 %v3701
  %v3742 = vunpack.c.l.b16 %v3702
  %v3743 = vunpack.c.h.b16 %v3702
  %v3744 = vunpack.c.l.b16 %v3703
  %v3745 = vunpack.c.l.b16 %v3704
  %v3746 = vunpack.c.h.b16 %v3704
  %v3747 = vunpack.c.l.b16 %v3705
  %v3748 = vunpack.c.h.b16 %v3705
  %v3749 = vunpack.c.l.b16 %v3706
  %v3750 = vunpack.c.l.b16 %v3707
  %v3751 = vunpack.c.h.b16 %v3707
  %v3752 = vunpack.c.l.b16 %v3708
  %v3753 = vunpack.c.h.b16 %v3708
  %v3754 = vunpack.c.l.b16 %v3709
  %v3755 = vunpack.c.l.b16 %v3710
  %v3756 = vunpack.c.h.b16 %v3710
  %v3757 = vunpack.c.l.b16 %v3711
  %v3758 = vunpack.c.h.b16 %v3711
  %v3759 = vunpack.c.l.b16 %v3712
  %v3760 = vpack.c.b16 %v3745, %v3740
  %v3761 = vpack.c.b16 %v3746, %v3741
  %v3762 = vpack.c.b16 %v3747, %v3742
  %v3763 = vpack.c.b16 %v3748, %v3743
  %v3764 = vpack.c.b16 %v3749, %v3744
  %v3765 = vpack.c.b16 %v3755, %v3750
  %v3766 = vpack.c.b16 %v3756, %v3751
  %v3767 = vpack.c.b16 %v3757, %v3752
  %v3768 = vpack.c.b16 %v3758, %v3753
  %v3769 = vpack.c.b16 %v3759, %v3754
  %3770 = vrot.lane.b32.xlu0 %v3760, 127
  %v3771 = vpop.permute.xlu0 %3770
  %3772 = vrot.lane.b32.xlu0 %v3761, 127
  %v3773 = vpop.permute.xlu0 %3772
  %3774 = vrot.lane.b32.xlu0 %v3762, 127
  %v3775 = vpop.permute.xlu0 %3774
  %3776 = vrot.lane.b32.xlu0 %v3763, 127
  %v3777 = vpop.permute.xlu0 %3776
  %3778 = vrot.lane.b32.xlu0 %v3764, 127
  %v3779 = vpop.permute.xlu0 %3778
  %3780 = vrot.lane.b32.xlu0 %v3765, 127
  %v3781 = vpop.permute.xlu0 %3780
  %3782 = vrot.lane.b32.xlu0 %v3766, 127
  %v3783 = vpop.permute.xlu0 %3782
  %3784 = vrot.lane.b32.xlu0 %v3767, 127
  %v3785 = vpop.permute.xlu0 %3784
  %3786 = vrot.lane.b32.xlu0 %v3768, 127
  %v3787 = vpop.permute.xlu0 %3786
  %3788 = vrot.lane.b32.xlu0 %v3769, 127
  %v3789 = vpop.permute.xlu0 %3788
  %v3790 = vsel %vm1715, %v3771, %v3773
  %v3791 = vsel %vm1715, %v3773, %v3775
  %v3792 = vsel %vm1715, %v3775, %v3777
  %v3793 = vsel %vm1715, %v3777, %v3779
  %v3794 = vsel %vm1715, %v3781, %v3783
  %v3795 = vsel %vm1715, %v3783, %v3785
  %v3796 = vsel %vm1715, %v3785, %v3787
  %v3797 = vsel %vm1715, %v3787, %v3789
  %v3809 = vsel %vm1734, %v3726, 0
  %v3812 = vsel %vm1734, %v3727, 0
  %3814 = vmatpush.bf16.msra.mxu0 0
  %3815 = vmatpush.bf16.msra.mxu0 0
  %3816 = vmatpush.bf16.msra.mxu0 0
  %3817 = vmatpush.bf16.msra.mxu0 0
  %3818 = vmatpush.bf16.msra.mxu0 0
  %3819 = vmatpush.bf16.msra.mxu0 0
  %3820 = vmatpush.bf16.msra.mxu0 %v3794
  %3821 = vmatpush.bf16.msra.mxu0 %v3790
  %3822 = vmatmul.bf16.gmra.mxu0 %v3809
  %v3823 = vpop.f32.mrf.mxu0
  %v3824 = vadd.f32 0.0, %v3823
  %v3825 = vpop.f32.mrf.mxu0
  %v3826 = vadd.f32 0.0, %v3825
  %3827 = vmatmul.bf16.gmra.mxu0 %v3812
  %v3828 = vpop.f32.mrf.mxu0
  %v3829 = vadd.f32 0.0, %v3828
  %v3830 = vpop.f32.mrf.mxu0
  %v3831 = vadd.f32 0.0, %v3830
  %3832 = vdwg.mxu0
  %3833 = vmatpush.bf16.msra.mxu0 0
  %3834 = vmatpush.bf16.msra.mxu0 0
  %3835 = vmatpush.bf16.msra.mxu0 0
  %3836 = vmatpush.bf16.msra.mxu0 0
  %3837 = vmatpush.bf16.msra.mxu0 0
  %3838 = vmatpush.bf16.msra.mxu0 0
  %3839 = vmatpush.bf16.msra.mxu0 %v3795
  %3840 = vmatpush.bf16.msra.mxu0 %v3791
  %3841 = vmatmul.bf16.gmra.mxu0 %v3809
  %v3842 = vpop.f32.mrf.mxu0
  %v3843 = vadd.f32 0.0, %v3842
  %v3844 = vpop.f32.mrf.mxu0
  %v3845 = vadd.f32 0.0, %v3844
  %3846 = vmatmul.bf16.gmra.mxu0 %v3812
  %v3847 = vpop.f32.mrf.mxu0
  %v3848 = vadd.f32 0.0, %v3847
  %v3849 = vpop.f32.mrf.mxu0
  %v3850 = vadd.f32 0.0, %v3849
  %3851 = vdwg.mxu0
  %3852 = vmatpush.bf16.msra.mxu0 0
  %3853 = vmatpush.bf16.msra.mxu0 0
  %3854 = vmatpush.bf16.msra.mxu0 0
  %3855 = vmatpush.bf16.msra.mxu0 0
  %3856 = vmatpush.bf16.msra.mxu0 0
  %3857 = vmatpush.bf16.msra.mxu0 0
  %3858 = vmatpush.bf16.msra.mxu0 %v3796
  %3859 = vmatpush.bf16.msra.mxu0 %v3792
  %3860 = vmatmul.bf16.gmra.mxu0 %v3809
  %v3861 = vpop.f32.mrf.mxu0
  %v3862 = vadd.f32 0.0, %v3861
  %v3863 = vpop.f32.mrf.mxu0
  %v3864 = vadd.f32 0.0, %v3863
  %3865 = vmatmul.bf16.gmra.mxu0 %v3812
  %v3866 = vpop.f32.mrf.mxu0
  %v3867 = vadd.f32 0.0, %v3866
  %v3868 = vpop.f32.mrf.mxu0
  %v3869 = vadd.f32 0.0, %v3868
  %3870 = vdwg.mxu0
  %3871 = vmatpush.bf16.msra.mxu0 0
  %3872 = vmatpush.bf16.msra.mxu0 0
  %3873 = vmatpush.bf16.msra.mxu0 0
  %3874 = vmatpush.bf16.msra.mxu0 0
  %3875 = vmatpush.bf16.msra.mxu0 0
  %3876 = vmatpush.bf16.msra.mxu0 0
  %3877 = vmatpush.bf16.msra.mxu0 %v3797
  %3878 = vmatpush.bf16.msra.mxu0 %v3793
  %3879 = vmatmul.bf16.gmra.mxu0 %v3809
  %v3880 = vpop.f32.mrf.mxu0
  %v3881 = vadd.f32 0.0, %v3880
  %v3882 = vpop.f32.mrf.mxu0
  %v3883 = vadd.f32 0.0, %v3882
  %3884 = vmatmul.bf16.gmra.mxu0 %v3812
  %v3885 = vpop.f32.mrf.mxu0
  %v3886 = vadd.f32 0.0, %v3885
  %v3887 = vpop.f32.mrf.mxu0
  %v3888 = vadd.f32 0.0, %v3887
  %3889 = vdwg.mxu0
  %3890 = vmatpush.bf16.msra.mxu0 0
  %3891 = vmatpush.bf16.msra.mxu0 0
  %3892 = vmatpush.bf16.msra.mxu0 0
  %3893 = vmatpush.bf16.msra.mxu0 0
  %3894 = vmatpush.bf16.msra.mxu0 0
  %3895 = vmatpush.bf16.msra.mxu0 0
  %3896 = vmatpush.bf16.msra.mxu0 %v3789
  %3897 = vmatpush.bf16.msra.mxu0 %v3779
  %3898 = vmatmul.bf16.gmra.mxu0 %v3809
  %v3899 = vpop.f32.mrf.mxu0
  %v3900 = vadd.f32 0.0, %v3899
  %v3901 = vpop.f32.mrf.mxu0
  %v3902 = vadd.f32 0.0, %v3901
  %3903 = vmatmul.bf16.gmra.mxu0 %v3812
  %v3904 = vpop.f32.mrf.mxu0
  %v3905 = vadd.f32 0.0, %v3904
  %v3906 = vpop.f32.mrf.mxu0
  %v3907 = vadd.f32 0.0, %v3906
  %3908 = vdwg.mxu0
  %v3913 = vunpack.c.l.b16 %v3697
  %v3914 = vunpack.c.l.b16 %v3698
  %v3915 = vunpack.c.l.b16 %v3699
  %v3916 = vunpack.c.l.b16 %v3700
  %v3917 = vpack.c.b16 %v3914, %v3913
  %v3918 = vpack.c.b16 %v3916, %v3915
  %v3930 = vsel %vm1734, %v3917, 0
  %v3933 = vsel %vm1734, %v3918, 0
  %3935 = vmatpush.bf16.msra.mxu0 0
  %3936 = vmatpush.bf16.msra.mxu0 0
  %3937 = vmatpush.bf16.msra.mxu0 0
  %3938 = vmatpush.bf16.msra.mxu0 0
  %3939 = vmatpush.bf16.msra.mxu0 0
  %3940 = vmatpush.bf16.msra.mxu0 0
  %3941 = vmatpush.bf16.msra.mxu0 %v3765
  %3942 = vmatpush.bf16.msra.mxu0 %v3760
  %3943 = vmatmul.bf16.gmra.mxu0 %v3930
  %v3944 = vpop.f32.mrf.mxu0
  %v3945 = vadd.f32 %v3824, %v3944
  %v3946 = vpop.f32.mrf.mxu0
  %v3947 = vadd.f32 %v3826, %v3946
  %3948 = vmatmul.bf16.gmra.mxu0 %v3933
  %v3949 = vpop.f32.mrf.mxu0
  %v3950 = vadd.f32 %v3829, %v3949
  %v3951 = vpop.f32.mrf.mxu0
  %v3952 = vadd.f32 %v3831, %v3951
  %3953 = vdwg.mxu0
  %3954 = vmatpush.bf16.msra.mxu0 0
  %3955 = vmatpush.bf16.msra.mxu0 0
  %3956 = vmatpush.bf16.msra.mxu0 0
  %3957 = vmatpush.bf16.msra.mxu0 0
  %3958 = vmatpush.bf16.msra.mxu0 0
  %3959 = vmatpush.bf16.msra.mxu0 0
  %3960 = vmatpush.bf16.msra.mxu0 %v3766
  %3961 = vmatpush.bf16.msra.mxu0 %v3761
  %3962 = vmatmul.bf16.gmra.mxu0 %v3930
  %v3963 = vpop.f32.mrf.mxu0
  %v3964 = vadd.f32 %v3843, %v3963
  %v3965 = vpop.f32.mrf.mxu0
  %v3966 = vadd.f32 %v3845, %v3965
  %3967 = vmatmul.bf16.gmra.mxu0 %v3933
  %v3968 = vpop.f32.mrf.mxu0
  %v3969 = vadd.f32 %v3848, %v3968
  %v3970 = vpop.f32.mrf.mxu0
  %v3971 = vadd.f32 %v3850, %v3970
  %3972 = vdwg.mxu0
  %3973 = vmatpush.bf16.msra.mxu0 0
  %3974 = vmatpush.bf16.msra.mxu0 0
  %3975 = vmatpush.bf16.msra.mxu0 0
  %3976 = vmatpush.bf16.msra.mxu0 0
  %3977 = vmatpush.bf16.msra.mxu0 0
  %3978 = vmatpush.bf16.msra.mxu0 0
  %3979 = vmatpush.bf16.msra.mxu0 %v3767
  %3980 = vmatpush.bf16.msra.mxu0 %v3762
  %3981 = vmatmul.bf16.gmra.mxu0 %v3930
  %v3982 = vpop.f32.mrf.mxu0
  %v3983 = vadd.f32 %v3862, %v3982
  %v3984 = vpop.f32.mrf.mxu0
  %v3985 = vadd.f32 %v3864, %v3984
  %3986 = vmatmul.bf16.gmra.mxu0 %v3933
  %v3987 = vpop.f32.mrf.mxu0
  %v3988 = vadd.f32 %v3867, %v3987
  %v3989 = vpop.f32.mrf.mxu0
  %v3990 = vadd.f32 %v3869, %v3989
  %3991 = vdwg.mxu0
  %3992 = vmatpush.bf16.msra.mxu0 0
  %3993 = vmatpush.bf16.msra.mxu0 0
  %3994 = vmatpush.bf16.msra.mxu0 0
  %3995 = vmatpush.bf16.msra.mxu0 0
  %3996 = vmatpush.bf16.msra.mxu0 0
  %3997 = vmatpush.bf16.msra.mxu0 0
  %3998 = vmatpush.bf16.msra.mxu0 %v3768
  %3999 = vmatpush.bf16.msra.mxu0 %v3763
  %4000 = vmatmul.bf16.gmra.mxu0 %v3930
  %v4001 = vpop.f32.mrf.mxu0
  %v4002 = vadd.f32 %v3881, %v4001
  %v4003 = vpop.f32.mrf.mxu0
  %v4004 = vadd.f32 %v3883, %v4003
  %4005 = vmatmul.bf16.gmra.mxu0 %v3933
  %v4006 = vpop.f32.mrf.mxu0
  %v4007 = vadd.f32 %v3886, %v4006
  %v4008 = vpop.f32.mrf.mxu0
  %v4009 = vadd.f32 %v3888, %v4008
  %4010 = vdwg.mxu0
  %4011 = vmatpush.bf16.msra.mxu0 0
  %4012 = vmatpush.bf16.msra.mxu0 0
  %4013 = vmatpush.bf16.msra.mxu0 0
  %4014 = vmatpush.bf16.msra.mxu0 0
  %4015 = vmatpush.bf16.msra.mxu0 0
  %4016 = vmatpush.bf16.msra.mxu0 0
  %4017 = vmatpush.bf16.msra.mxu0 %v3769
  %4018 = vmatpush.bf16.msra.mxu0 %v3764
  %4019 = vmatmul.bf16.gmra.mxu0 %v3930
  %v4020 = vpop.f32.mrf.mxu0
  %v4021 = vadd.f32 %v3900, %v4020
  %v4022 = vpop.f32.mrf.mxu0
  %v4023 = vadd.f32 %v3902, %v4022
  %4024 = vmatmul.bf16.gmra.mxu0 %v3933
  %v4025 = vpop.f32.mrf.mxu0
  %v4026 = vadd.f32 %v3905, %v4025
  %v4027 = vpop.f32.mrf.mxu0
  %v4028 = vadd.f32 %v3907, %v4027
  %4029 = vdwg.mxu0
  %s4030 = scalar_lea.vmem %s8, 32
  %v4031 = vld [vmem:[%s4030] sm:$0xf]
  %v4032 = vld [vmem:[%s4030 + $0x4] sm:$0xf]
  %v4033 = vld [vmem:[%s4030 + $0x8] sm:$0xf]
  %v4034 = vld [vmem:[%s4030 + $0xc] sm:$0xf]
  %v4039 = vunpack.c.l.b16 %v4031
  %v4040 = vunpack.c.l.b16 %v4032
  %v4041 = vunpack.c.l.b16 %v4033
  %v4042 = vunpack.c.l.b16 %v4034
  %v4043 = vpack.c.b16 %v4040, %v4039
  %v4044 = vpack.c.b16 %v4042, %v4041
  %4045 = vrot.lane.b32.xlu0 %v3760, 126
  %v4046 = vpop.permute.xlu0 %4045
  %4047 = vrot.lane.b32.xlu0 %v3761, 126
  %v4048 = vpop.permute.xlu0 %4047
  %4049 = vrot.lane.b32.xlu0 %v3762, 126
  %v4050 = vpop.permute.xlu0 %4049
  %4051 = vrot.lane.b32.xlu0 %v3763, 126
  %v4052 = vpop.permute.xlu0 %4051
  %4053 = vrot.lane.b32.xlu0 %v3764, 126
  %v4054 = vpop.permute.xlu0 %4053
  %4055 = vrot.lane.b32.xlu0 %v3765, 126
  %v4056 = vpop.permute.xlu0 %4055
  %4057 = vrot.lane.b32.xlu0 %v3766, 126
  %v4058 = vpop.permute.xlu0 %4057
  %4059 = vrot.lane.b32.xlu0 %v3767, 126
  %v4060 = vpop.permute.xlu0 %4059
  %4061 = vrot.lane.b32.xlu0 %v3768, 126
  %v4062 = vpop.permute.xlu0 %4061
  %4063 = vrot.lane.b32.xlu0 %v3769, 126
  %v4064 = vpop.permute.xlu0 %4063
  %v4065 = vsel %vm1992, %v4046, %v4048
  %v4066 = vsel %vm1992, %v4048, %v4050
  %v4067 = vsel %vm1992, %v4050, %v4052
  %v4068 = vsel %vm1992, %v4052, %v4054
  %v4069 = vsel %vm1992, %v4056, %v4058
  %v4070 = vsel %vm1992, %v4058, %v4060
  %v4071 = vsel %vm1992, %v4060, %v4062
  %v4072 = vsel %vm1992, %v4062, %v4064
  %v4084 = vsel %vm1734, %v4043, 0
  %v4087 = vsel %vm1734, %v4044, 0
  %4089 = vmatpush.bf16.msra.mxu0 0
  %4090 = vmatpush.bf16.msra.mxu0 0
  %4091 = vmatpush.bf16.msra.mxu0 0
  %4092 = vmatpush.bf16.msra.mxu0 0
  %4093 = vmatpush.bf16.msra.mxu0 0
  %4094 = vmatpush.bf16.msra.mxu0 0
  %4095 = vmatpush.bf16.msra.mxu0 %v4069
  %4096 = vmatpush.bf16.msra.mxu0 %v4065
  %4097 = vmatmul.bf16.gmra.mxu0 %v4084
  %v4098 = vpop.f32.mrf.mxu0
  %v4099 = vadd.f32 0.0, %v4098
  %v4100 = vpop.f32.mrf.mxu0
  %v4101 = vadd.f32 0.0, %v4100
  %4102 = vmatmul.bf16.gmra.mxu0 %v4087
  %v4103 = vpop.f32.mrf.mxu0
  %v4104 = vadd.f32 0.0, %v4103
  %v4105 = vpop.f32.mrf.mxu0
  %v4106 = vadd.f32 0.0, %v4105
  %4107 = vdwg.mxu0
  %4108 = vmatpush.bf16.msra.mxu0 0
  %4109 = vmatpush.bf16.msra.mxu0 0
  %4110 = vmatpush.bf16.msra.mxu0 0
  %4111 = vmatpush.bf16.msra.mxu0 0
  %4112 = vmatpush.bf16.msra.mxu0 0
  %4113 = vmatpush.bf16.msra.mxu0 0
  %4114 = vmatpush.bf16.msra.mxu0 %v4070
  %4115 = vmatpush.bf16.msra.mxu0 %v4066
  %4116 = vmatmul.bf16.gmra.mxu0 %v4084
  %v4117 = vpop.f32.mrf.mxu0
  %v4118 = vadd.f32 0.0, %v4117
  %v4119 = vpop.f32.mrf.mxu0
  %v4120 = vadd.f32 0.0, %v4119
  %4121 = vmatmul.bf16.gmra.mxu0 %v4087
  %v4122 = vpop.f32.mrf.mxu0
  %v4123 = vadd.f32 0.0, %v4122
  %v4124 = vpop.f32.mrf.mxu0
  %v4125 = vadd.f32 0.0, %v4124
  %4126 = vdwg.mxu0
  %4127 = vmatpush.bf16.msra.mxu0 0
  %4128 = vmatpush.bf16.msra.mxu0 0
  %4129 = vmatpush.bf16.msra.mxu0 0
  %4130 = vmatpush.bf16.msra.mxu0 0
  %4131 = vmatpush.bf16.msra.mxu0 0
  %4132 = vmatpush.bf16.msra.mxu0 0
  %4133 = vmatpush.bf16.msra.mxu0 %v4071
  %4134 = vmatpush.bf16.msra.mxu0 %v4067
  %4135 = vmatmul.bf16.gmra.mxu0 %v4084
  %v4136 = vpop.f32.mrf.mxu0
  %v4137 = vadd.f32 0.0, %v4136
  %v4138 = vpop.f32.mrf.mxu0
  %v4139 = vadd.f32 0.0, %v4138
  %4140 = vmatmul.bf16.gmra.mxu0 %v4087
  %v4141 = vpop.f32.mrf.mxu0
  %v4142 = vadd.f32 0.0, %v4141
  %v4143 = vpop.f32.mrf.mxu0
  %v4144 = vadd.f32 0.0, %v4143
  %4145 = vdwg.mxu0
  %4146 = vmatpush.bf16.msra.mxu0 0
  %4147 = vmatpush.bf16.msra.mxu0 0
  %4148 = vmatpush.bf16.msra.mxu0 0
  %4149 = vmatpush.bf16.msra.mxu0 0
  %4150 = vmatpush.bf16.msra.mxu0 0
  %4151 = vmatpush.bf16.msra.mxu0 0
  %4152 = vmatpush.bf16.msra.mxu0 %v4072
  %4153 = vmatpush.bf16.msra.mxu0 %v4068
  %4154 = vmatmul.bf16.gmra.mxu0 %v4084
  %v4155 = vpop.f32.mrf.mxu0
  %v4156 = vadd.f32 0.0, %v4155
  %v4157 = vpop.f32.mrf.mxu0
  %v4158 = vadd.f32 0.0, %v4157
  %4159 = vmatmul.bf16.gmra.mxu0 %v4087
  %v4160 = vpop.f32.mrf.mxu0
  %v4161 = vadd.f32 0.0, %v4160
  %v4162 = vpop.f32.mrf.mxu0
  %v4163 = vadd.f32 0.0, %v4162
  %4164 = vdwg.mxu0
  %4165 = vmatpush.bf16.msra.mxu0 0
  %4166 = vmatpush.bf16.msra.mxu0 0
  %4167 = vmatpush.bf16.msra.mxu0 0
  %4168 = vmatpush.bf16.msra.mxu0 0
  %4169 = vmatpush.bf16.msra.mxu0 0
  %4170 = vmatpush.bf16.msra.mxu0 0
  %4171 = vmatpush.bf16.msra.mxu0 %v4064
  %4172 = vmatpush.bf16.msra.mxu0 %v4054
  %4173 = vmatmul.bf16.gmra.mxu0 %v4084
  %v4174 = vpop.f32.mrf.mxu0
  %v4175 = vadd.f32 0.0, %v4174
  %v4176 = vpop.f32.mrf.mxu0
  %v4177 = vadd.f32 0.0, %v4176
  %4178 = vmatmul.bf16.gmra.mxu0 %v4087
  %v4179 = vpop.f32.mrf.mxu0
  %v4180 = vadd.f32 0.0, %v4179
  %v4181 = vpop.f32.mrf.mxu0
  %v4182 = vadd.f32 0.0, %v4181
  %4183 = vdwg.mxu0
  %v4184 = vadd.f32 %v3945, %v4099
  %v4185 = vadd.f32 %v3964, %v4118
  %v4186 = vadd.f32 %v3983, %v4137
  %v4187 = vadd.f32 %v4002, %v4156
  %v4188 = vadd.f32 %v4021, %v4175
  %v4189 = vadd.f32 %v3947, %v4101
  %v4190 = vadd.f32 %v3966, %v4120
  %v4191 = vadd.f32 %v3985, %v4139
  %v4192 = vadd.f32 %v4004, %v4158
  %v4193 = vadd.f32 %v4023, %v4177
  %v4194 = vadd.f32 %v3950, %v4104
  %v4195 = vadd.f32 %v3969, %v4123
  %v4196 = vadd.f32 %v3988, %v4142
  %v4197 = vadd.f32 %v4007, %v4161
  %v4198 = vadd.f32 %v4026, %v4180
  %v4199 = vadd.f32 %v3952, %v4106
  %v4200 = vadd.f32 %v3971, %v4125
  %v4201 = vadd.f32 %v3990, %v4144
  %v4202 = vadd.f32 %v4009, %v4163
  %v4203 = vadd.f32 %v4028, %v4182
  %s4204 = scalar_lea.vmem %s8, 48
  %v4205 = vld [vmem:[%s4204] sm:$0xf]
  %v4206 = vld [vmem:[%s4204 + $0x4] sm:$0xf]
  %v4207 = vld [vmem:[%s4204 + $0x8] sm:$0xf]
  %v4208 = vld [vmem:[%s4204 + $0xc] sm:$0xf]
  %v4213 = vunpack.c.l.b16 %v4205
  %v4214 = vunpack.c.l.b16 %v4206
  %v4215 = vunpack.c.l.b16 %v4207
  %v4216 = vunpack.c.l.b16 %v4208
  %v4217 = vpack.c.b16 %v4214, %v4213
  %v4218 = vpack.c.b16 %v4216, %v4215
  %4219 = vrot.lane.b32.xlu0 %v3760, 110
  %v4220 = vpop.permute.xlu0 %4219
  %4221 = vrot.lane.b32.xlu0 %v3761, 110
  %v4222 = vpop.permute.xlu0 %4221
  %4223 = vrot.lane.b32.xlu0 %v3762, 110
  %v4224 = vpop.permute.xlu0 %4223
  %4225 = vrot.lane.b32.xlu0 %v3763, 110
  %v4226 = vpop.permute.xlu0 %4225
  %4227 = vrot.lane.b32.xlu0 %v3764, 110
  %v4228 = vpop.permute.xlu0 %4227
  %4229 = vrot.lane.b32.xlu0 %v3765, 110
  %v4230 = vpop.permute.xlu0 %4229
  %4231 = vrot.lane.b32.xlu0 %v3766, 110
  %v4232 = vpop.permute.xlu0 %4231
  %4233 = vrot.lane.b32.xlu0 %v3767, 110
  %v4234 = vpop.permute.xlu0 %4233
  %4235 = vrot.lane.b32.xlu0 %v3768, 110
  %v4236 = vpop.permute.xlu0 %4235
  %4237 = vrot.lane.b32.xlu0 %v3769, 110
  %v4238 = vpop.permute.xlu0 %4237
  %v4239 = vsel %vm2167, %v4220, %v4222
  %v4240 = vsel %vm2167, %v4222, %v4224
  %v4241 = vsel %vm2167, %v4224, %v4226
  %v4242 = vsel %vm2167, %v4226, %v4228
  %v4243 = vsel %vm2167, %v4230, %v4232
  %v4244 = vsel %vm2167, %v4232, %v4234
  %v4245 = vsel %vm2167, %v4234, %v4236
  %v4246 = vsel %vm2167, %v4236, %v4238
  %v4258 = vsel %vm1734, %v4217, 0
  %v4261 = vsel %vm1734, %v4218, 0
  %4263 = vmatpush.bf16.msra.mxu0 0
  %4264 = vmatpush.bf16.msra.mxu0 0
  %4265 = vmatpush.bf16.msra.mxu0 0
  %4266 = vmatpush.bf16.msra.mxu0 0
  %4267 = vmatpush.bf16.msra.mxu0 0
  %4268 = vmatpush.bf16.msra.mxu0 0
  %4269 = vmatpush.bf16.msra.mxu0 %v4243
  %4270 = vmatpush.bf16.msra.mxu0 %v4239
  %4271 = vmatmul.bf16.gmra.mxu0 %v4258
  %v4272 = vpop.f32.mrf.mxu0
  %v4273 = vadd.f32 0.0, %v4272
  %v4274 = vpop.f32.mrf.mxu0
  %v4275 = vadd.f32 0.0, %v4274
  %4276 = vmatmul.bf16.gmra.mxu0 %v4261
  %v4277 = vpop.f32.mrf.mxu0
  %v4278 = vadd.f32 0.0, %v4277
  %v4279 = vpop.f32.mrf.mxu0
  %v4280 = vadd.f32 0.0, %v4279
  %4281 = vdwg.mxu0
  %4282 = vmatpush.bf16.msra.mxu0 0
  %4283 = vmatpush.bf16.msra.mxu0 0
  %4284 = vmatpush.bf16.msra.mxu0 0
  %4285 = vmatpush.bf16.msra.mxu0 0
  %4286 = vmatpush.bf16.msra.mxu0 0
  %4287 = vmatpush.bf16.msra.mxu0 0
  %4288 = vmatpush.bf16.msra.mxu0 %v4244
  %4289 = vmatpush.bf16.msra.mxu0 %v4240
  %4290 = vmatmul.bf16.gmra.mxu0 %v4258
  %v4291 = vpop.f32.mrf.mxu0
  %v4292 = vadd.f32 0.0, %v4291
  %v4293 = vpop.f32.mrf.mxu0
  %v4294 = vadd.f32 0.0, %v4293
  %4295 = vmatmul.bf16.gmra.mxu0 %v4261
  %v4296 = vpop.f32.mrf.mxu0
  %v4297 = vadd.f32 0.0, %v4296
  %v4298 = vpop.f32.mrf.mxu0
  %v4299 = vadd.f32 0.0, %v4298
  %4300 = vdwg.mxu0
  %4301 = vmatpush.bf16.msra.mxu0 0
  %4302 = vmatpush.bf16.msra.mxu0 0
  %4303 = vmatpush.bf16.msra.mxu0 0
  %4304 = vmatpush.bf16.msra.mxu0 0
  %4305 = vmatpush.bf16.msra.mxu0 0
  %4306 = vmatpush.bf16.msra.mxu0 0
  %4307 = vmatpush.bf16.msra.mxu0 %v4245
  %4308 = vmatpush.bf16.msra.mxu0 %v4241
  %4309 = vmatmul.bf16.gmra.mxu0 %v4258
  %v4310 = vpop.f32.mrf.mxu0
  %v4311 = vadd.f32 0.0, %v4310
  %v4312 = vpop.f32.mrf.mxu0
  %v4313 = vadd.f32 0.0, %v4312
  %4314 = vmatmul.bf16.gmra.mxu0 %v4261
  %v4315 = vpop.f32.mrf.mxu0
  %v4316 = vadd.f32 0.0, %v4315
  %v4317 = vpop.f32.mrf.mxu0
  %v4318 = vadd.f32 0.0, %v4317
  %4319 = vdwg.mxu0
  %4320 = vmatpush.bf16.msra.mxu0 0
  %4321 = vmatpush.bf16.msra.mxu0 0
  %4322 = vmatpush.bf16.msra.mxu0 0
  %4323 = vmatpush.bf16.msra.mxu0 0
  %4324 = vmatpush.bf16.msra.mxu0 0
  %4325 = vmatpush.bf16.msra.mxu0 0
  %4326 = vmatpush.bf16.msra.mxu0 %v4246
  %4327 = vmatpush.bf16.msra.mxu0 %v4242
  %4328 = vmatmul.bf16.gmra.mxu0 %v4258
  %v4329 = vpop.f32.mrf.mxu0
  %v4330 = vadd.f32 0.0, %v4329
  %v4331 = vpop.f32.mrf.mxu0
  %v4332 = vadd.f32 0.0, %v4331
  %4333 = vmatmul.bf16.gmra.mxu0 %v4261
  %v4334 = vpop.f32.mrf.mxu0
  %v4335 = vadd.f32 0.0, %v4334
  %v4336 = vpop.f32.mrf.mxu0
  %v4337 = vadd.f32 0.0, %v4336
  %4338 = vdwg.mxu0
  %4339 = vmatpush.bf16.msra.mxu0 0
  %4340 = vmatpush.bf16.msra.mxu0 0
  %4341 = vmatpush.bf16.msra.mxu0 0
  %4342 = vmatpush.bf16.msra.mxu0 0
  %4343 = vmatpush.bf16.msra.mxu0 0
  %4344 = vmatpush.bf16.msra.mxu0 0
  %4345 = vmatpush.bf16.msra.mxu0 %v4238
  %4346 = vmatpush.bf16.msra.mxu0 %v4228
  %4347 = vmatmul.bf16.gmra.mxu0 %v4258
  %v4348 = vpop.f32.mrf.mxu0
  %v4349 = vadd.f32 0.0, %v4348
  %v4350 = vpop.f32.mrf.mxu0
  %v4351 = vadd.f32 0.0, %v4350
  %4352 = vmatmul.bf16.gmra.mxu0 %v4261
  %v4353 = vpop.f32.mrf.mxu0
  %v4354 = vadd.f32 0.0, %v4353
  %v4355 = vpop.f32.mrf.mxu0
  %v4356 = vadd.f32 0.0, %v4355
  %4357 = vdwg.mxu0
  %v4358 = vadd.f32 %v4184, %v4273
  %v4359 = vadd.f32 %v4185, %v4292
  %v4360 = vadd.f32 %v4186, %v4311
  %v4361 = vadd.f32 %v4187, %v4330
  %v4362 = vadd.f32 %v4188, %v4349
  %v4363 = vadd.f32 %v4189, %v4275
  %v4364 = vadd.f32 %v4190, %v4294
  %v4365 = vadd.f32 %v4191, %v4313
  %v4366 = vadd.f32 %v4192, %v4332
  %v4367 = vadd.f32 %v4193, %v4351
  %v4368 = vadd.f32 %v4194, %v4278
  %v4369 = vadd.f32 %v4195, %v4297
  %v4370 = vadd.f32 %v4196, %v4316
  %v4371 = vadd.f32 %v4197, %v4335
  %v4372 = vadd.f32 %v4198, %v4354
  %v4373 = vadd.f32 %v4199, %v4280
  %v4374 = vadd.f32 %v4200, %v4299
  %v4375 = vadd.f32 %v4201, %v4318
  %v4376 = vadd.f32 %v4202, %v4337
  %v4377 = vadd.f32 %v4203, %v4356
  %s4378 = scalar_lea.vmem %s8, 64
  %v4379 = vld [vmem:[%s4378] sm:$0xf]
  %v4380 = vld [vmem:[%s4378 + $0x4] sm:$0xf]
  %v4381 = vld [vmem:[%s4378 + $0x8] sm:$0xf]
  %v4382 = vld [vmem:[%s4378 + $0xc] sm:$0xf]
  %v4387 = vunpack.c.l.b16 %v4379
  %v4388 = vunpack.c.l.b16 %v4380
  %v4389 = vunpack.c.l.b16 %v4381
  %v4390 = vunpack.c.l.b16 %v4382
  %v4391 = vpack.c.b16 %v4388, %v4387
  %v4392 = vpack.c.b16 %v4390, %v4389
  %4393 = vrot.lane.b32.xlu0 %v3760, 109
  %v4394 = vpop.permute.xlu0 %4393
  %4395 = vrot.lane.b32.xlu0 %v3761, 109
  %v4396 = vpop.permute.xlu0 %4395
  %4397 = vrot.lane.b32.xlu0 %v3762, 109
  %v4398 = vpop.permute.xlu0 %4397
  %4399 = vrot.lane.b32.xlu0 %v3763, 109
  %v4400 = vpop.permute.xlu0 %4399
  %4401 = vrot.lane.b32.xlu0 %v3764, 109
  %v4402 = vpop.permute.xlu0 %4401
  %4403 = vrot.lane.b32.xlu0 %v3765, 109
  %v4404 = vpop.permute.xlu0 %4403
  %4405 = vrot.lane.b32.xlu0 %v3766, 109
  %v4406 = vpop.permute.xlu0 %4405
  %4407 = vrot.lane.b32.xlu0 %v3767, 109
  %v4408 = vpop.permute.xlu0 %4407
  %4409 = vrot.lane.b32.xlu0 %v3768, 109
  %v4410 = vpop.permute.xlu0 %4409
  %4411 = vrot.lane.b32.xlu0 %v3769, 109
  %v4412 = vpop.permute.xlu0 %4411
  %v4413 = vsel %vm2342, %v4394, %v4396
  %v4414 = vsel %vm2342, %v4396, %v4398
  %v4415 = vsel %vm2342, %v4398, %v4400
  %v4416 = vsel %vm2342, %v4400, %v4402
  %v4417 = vsel %vm2342, %v4404, %v4406
  %v4418 = vsel %vm2342, %v4406, %v4408
  %v4419 = vsel %vm2342, %v4408, %v4410
  %v4420 = vsel %vm2342, %v4410, %v4412
  %v4432 = vsel %vm1734, %v4391, 0
  %v4435 = vsel %vm1734, %v4392, 0
  %4437 = vmatpush.bf16.msra.mxu0 0
  %4438 = vmatpush.bf16.msra.mxu0 0
  %4439 = vmatpush.bf16.msra.mxu0 0
  %4440 = vmatpush.bf16.msra.mxu0 0
  %4441 = vmatpush.bf16.msra.mxu0 0
  %4442 = vmatpush.bf16.msra.mxu0 0
  %4443 = vmatpush.bf16.msra.mxu0 %v4417
  %4444 = vmatpush.bf16.msra.mxu0 %v4413
  %4445 = vmatmul.bf16.gmra.mxu0 %v4432
  %v4446 = vpop.f32.mrf.mxu0
  %v4447 = vadd.f32 0.0, %v4446
  %v4448 = vpop.f32.mrf.mxu0
  %v4449 = vadd.f32 0.0, %v4448
  %4450 = vmatmul.bf16.gmra.mxu0 %v4435
  %v4451 = vpop.f32.mrf.mxu0
  %v4452 = vadd.f32 0.0, %v4451
  %v4453 = vpop.f32.mrf.mxu0
  %v4454 = vadd.f32 0.0, %v4453
  %4455 = vdwg.mxu0
  %4456 = vmatpush.bf16.msra.mxu0 0
  %4457 = vmatpush.bf16.msra.mxu0 0
  %4458 = vmatpush.bf16.msra.mxu0 0
  %4459 = vmatpush.bf16.msra.mxu0 0
  %4460 = vmatpush.bf16.msra.mxu0 0
  %4461 = vmatpush.bf16.msra.mxu0 0
  %4462 = vmatpush.bf16.msra.mxu0 %v4418
  %4463 = vmatpush.bf16.msra.mxu0 %v4414
  %4464 = vmatmul.bf16.gmra.mxu0 %v4432
  %v4465 = vpop.f32.mrf.mxu0
  %v4466 = vadd.f32 0.0, %v4465
  %v4467 = vpop.f32.mrf.mxu0
  %v4468 = vadd.f32 0.0, %v4467
  %4469 = vmatmul.bf16.gmra.mxu0 %v4435
  %v4470 = vpop.f32.mrf.mxu0
  %v4471 = vadd.f32 0.0, %v4470
  %v4472 = vpop.f32.mrf.mxu0
  %v4473 = vadd.f32 0.0, %v4472
  %4474 = vdwg.mxu0
  %4475 = vmatpush.bf16.msra.mxu0 0
  %4476 = vmatpush.bf16.msra.mxu0 0
  %4477 = vmatpush.bf16.msra.mxu0 0
  %4478 = vmatpush.bf16.msra.mxu0 0
  %4479 = vmatpush.bf16.msra.mxu0 0
  %4480 = vmatpush.bf16.msra.mxu0 0
  %4481 = vmatpush.bf16.msra.mxu0 %v4419
  %4482 = vmatpush.bf16.msra.mxu0 %v4415
  %4483 = vmatmul.bf16.gmra.mxu0 %v4432
  %v4484 = vpop.f32.mrf.mxu0
  %v4485 = vadd.f32 0.0, %v4484
  %v4486 = vpop.f32.mrf.mxu0
  %v4487 = vadd.f32 0.0, %v4486
  %4488 = vmatmul.bf16.gmra.mxu0 %v4435
  %v4489 = vpop.f32.mrf.mxu0
  %v4490 = vadd.f32 0.0, %v4489
  %v4491 = vpop.f32.mrf.mxu0
  %v4492 = vadd.f32 0.0, %v4491
  %4493 = vdwg.mxu0
  %4494 = vmatpush.bf16.msra.mxu0 0
  %4495 = vmatpush.bf16.msra.mxu0 0
  %4496 = vmatpush.bf16.msra.mxu0 0
  %4497 = vmatpush.bf16.msra.mxu0 0
  %4498 = vmatpush.bf16.msra.mxu0 0
  %4499 = vmatpush.bf16.msra.mxu0 0
  %4500 = vmatpush.bf16.msra.mxu0 %v4420
  %4501 = vmatpush.bf16.msra.mxu0 %v4416
  %4502 = vmatmul.bf16.gmra.mxu0 %v4432
  %v4503 = vpop.f32.mrf.mxu0
  %v4504 = vadd.f32 0.0, %v4503
  %v4505 = vpop.f32.mrf.mxu0
  %v4506 = vadd.f32 0.0, %v4505
  %4507 = vmatmul.bf16.gmra.mxu0 %v4435
  %v4508 = vpop.f32.mrf.mxu0
  %v4509 = vadd.f32 0.0, %v4508
  %v4510 = vpop.f32.mrf.mxu0
  %v4511 = vadd.f32 0.0, %v4510
  %4512 = vdwg.mxu0
  %4513 = vmatpush.bf16.msra.mxu0 0
  %4514 = vmatpush.bf16.msra.mxu0 0
  %4515 = vmatpush.bf16.msra.mxu0 0
  %4516 = vmatpush.bf16.msra.mxu0 0
  %4517 = vmatpush.bf16.msra.mxu0 0
  %4518 = vmatpush.bf16.msra.mxu0 0
  %4519 = vmatpush.bf16.msra.mxu0 %v4412
  %4520 = vmatpush.bf16.msra.mxu0 %v4402
  %4521 = vmatmul.bf16.gmra.mxu0 %v4432
  %v4522 = vpop.f32.mrf.mxu0
  %v4523 = vadd.f32 0.0, %v4522
  %v4524 = vpop.f32.mrf.mxu0
  %v4525 = vadd.f32 0.0, %v4524
  %4526 = vmatmul.bf16.gmra.mxu0 %v4435
  %v4527 = vpop.f32.mrf.mxu0
  %v4528 = vadd.f32 0.0, %v4527
  %v4529 = vpop.f32.mrf.mxu0
  %v4530 = vadd.f32 0.0, %v4529
  %4531 = vdwg.mxu0
  %v4532 = vadd.f32 %v4358, %v4447
  %v4533 = vadd.f32 %v4359, %v4466
  %v4534 = vadd.f32 %v4360, %v4485
  %v4535 = vadd.f32 %v4361, %v4504
  %v4536 = vadd.f32 %v4362, %v4523
  %v4537 = vadd.f32 %v4363, %v4449
  %v4538 = vadd.f32 %v4364, %v4468
  %v4539 = vadd.f32 %v4365, %v4487
  %v4540 = vadd.f32 %v4366, %v4506
  %v4541 = vadd.f32 %v4367, %v4525
  %v4542 = vadd.f32 %v4368, %v4452
  %v4543 = vadd.f32 %v4369, %v4471
  %v4544 = vadd.f32 %v4370, %v4490
  %v4545 = vadd.f32 %v4371, %v4509
  %v4546 = vadd.f32 %v4372, %v4528
  %v4547 = vadd.f32 %v4373, %v4454
  %v4548 = vadd.f32 %v4374, %v4473
  %v4549 = vadd.f32 %v4375, %v4492
  %v4550 = vadd.f32 %v4376, %v4511
  %v4551 = vadd.f32 %v4377, %v4530
  %s4552 = scalar_lea.vmem %s8, 80
  %v4553 = vld [vmem:[%s4552] sm:$0xf]
  %v4554 = vld [vmem:[%s4552 + $0x4] sm:$0xf]
  %v4555 = vld [vmem:[%s4552 + $0x8] sm:$0xf]
  %v4556 = vld [vmem:[%s4552 + $0xc] sm:$0xf]
  %v4561 = vunpack.c.l.b16 %v4553
  %v4562 = vunpack.c.l.b16 %v4554
  %v4563 = vunpack.c.l.b16 %v4555
  %v4564 = vunpack.c.l.b16 %v4556
  %v4565 = vpack.c.b16 %v4562, %v4561
  %v4566 = vpack.c.b16 %v4564, %v4563
  %4567 = vrot.lane.b32.xlu0 %v3760, 108
  %v4568 = vpop.permute.xlu0 %4567
  %4569 = vrot.lane.b32.xlu0 %v3761, 108
  %v4570 = vpop.permute.xlu0 %4569
  %4571 = vrot.lane.b32.xlu0 %v3762, 108
  %v4572 = vpop.permute.xlu0 %4571
  %4573 = vrot.lane.b32.xlu0 %v3763, 108
  %v4574 = vpop.permute.xlu0 %4573
  %4575 = vrot.lane.b32.xlu0 %v3764, 108
  %v4576 = vpop.permute.xlu0 %4575
  %4577 = vrot.lane.b32.xlu0 %v3765, 108
  %v4578 = vpop.permute.xlu0 %4577
  %4579 = vrot.lane.b32.xlu0 %v3766, 108
  %v4580 = vpop.permute.xlu0 %4579
  %4581 = vrot.lane.b32.xlu0 %v3767, 108
  %v4582 = vpop.permute.xlu0 %4581
  %4583 = vrot.lane.b32.xlu0 %v3768, 108
  %v4584 = vpop.permute.xlu0 %4583
  %4585 = vrot.lane.b32.xlu0 %v3769, 108
  %v4586 = vpop.permute.xlu0 %4585
  %v4587 = vsel %vm2517, %v4568, %v4570
  %v4588 = vsel %vm2517, %v4570, %v4572
  %v4589 = vsel %vm2517, %v4572, %v4574
  %v4590 = vsel %vm2517, %v4574, %v4576
  %v4591 = vsel %vm2517, %v4578, %v4580
  %v4592 = vsel %vm2517, %v4580, %v4582
  %v4593 = vsel %vm2517, %v4582, %v4584
  %v4594 = vsel %vm2517, %v4584, %v4586
  %v4606 = vsel %vm1734, %v4565, 0
  %v4609 = vsel %vm1734, %v4566, 0
  %4611 = vmatpush.bf16.msra.mxu0 0
  %4612 = vmatpush.bf16.msra.mxu0 0
  %4613 = vmatpush.bf16.msra.mxu0 0
  %4614 = vmatpush.bf16.msra.mxu0 0
  %4615 = vmatpush.bf16.msra.mxu0 0
  %4616 = vmatpush.bf16.msra.mxu0 0
  %4617 = vmatpush.bf16.msra.mxu0 %v4591
  %4618 = vmatpush.bf16.msra.mxu0 %v4587
  %4619 = vmatmul.bf16.gmra.mxu0 %v4606
  %v4620 = vpop.f32.mrf.mxu0
  %v4621 = vadd.f32 0.0, %v4620
  %v4622 = vpop.f32.mrf.mxu0
  %v4623 = vadd.f32 0.0, %v4622
  %4624 = vmatmul.bf16.gmra.mxu0 %v4609
  %v4625 = vpop.f32.mrf.mxu0
  %v4626 = vadd.f32 0.0, %v4625
  %v4627 = vpop.f32.mrf.mxu0
  %v4628 = vadd.f32 0.0, %v4627
  %4629 = vdwg.mxu0
  %4630 = vmatpush.bf16.msra.mxu0 0
  %4631 = vmatpush.bf16.msra.mxu0 0
  %4632 = vmatpush.bf16.msra.mxu0 0
  %4633 = vmatpush.bf16.msra.mxu0 0
  %4634 = vmatpush.bf16.msra.mxu0 0
  %4635 = vmatpush.bf16.msra.mxu0 0
  %4636 = vmatpush.bf16.msra.mxu0 %v4592
  %4637 = vmatpush.bf16.msra.mxu0 %v4588
  %4638 = vmatmul.bf16.gmra.mxu0 %v4606
  %v4639 = vpop.f32.mrf.mxu0
  %v4640 = vadd.f32 0.0, %v4639
  %v4641 = vpop.f32.mrf.mxu0
  %v4642 = vadd.f32 0.0, %v4641
  %4643 = vmatmul.bf16.gmra.mxu0 %v4609
  %v4644 = vpop.f32.mrf.mxu0
  %v4645 = vadd.f32 0.0, %v4644
  %v4646 = vpop.f32.mrf.mxu0
  %v4647 = vadd.f32 0.0, %v4646
  %4648 = vdwg.mxu0
  %4649 = vmatpush.bf16.msra.mxu0 0
  %4650 = vmatpush.bf16.msra.mxu0 0
  %4651 = vmatpush.bf16.msra.mxu0 0
  %4652 = vmatpush.bf16.msra.mxu0 0
  %4653 = vmatpush.bf16.msra.mxu0 0
  %4654 = vmatpush.bf16.msra.mxu0 0
  %4655 = vmatpush.bf16.msra.mxu0 %v4593
  %4656 = vmatpush.bf16.msra.mxu0 %v4589
  %4657 = vmatmul.bf16.gmra.mxu0 %v4606
  %v4658 = vpop.f32.mrf.mxu0
  %v4659 = vadd.f32 0.0, %v4658
  %v4660 = vpop.f32.mrf.mxu0
  %v4661 = vadd.f32 0.0, %v4660
  %4662 = vmatmul.bf16.gmra.mxu0 %v4609
  %v4663 = vpop.f32.mrf.mxu0
  %v4664 = vadd.f32 0.0, %v4663
  %v4665 = vpop.f32.mrf.mxu0
  %v4666 = vadd.f32 0.0, %v4665
  %4667 = vdwg.mxu0
  %4668 = vmatpush.bf16.msra.mxu0 0
  %4669 = vmatpush.bf16.msra.mxu0 0
  %4670 = vmatpush.bf16.msra.mxu0 0
  %4671 = vmatpush.bf16.msra.mxu0 0
  %4672 = vmatpush.bf16.msra.mxu0 0
  %4673 = vmatpush.bf16.msra.mxu0 0
  %4674 = vmatpush.bf16.msra.mxu0 %v4594
  %4675 = vmatpush.bf16.msra.mxu0 %v4590
  %4676 = vmatmul.bf16.gmra.mxu0 %v4606
  %v4677 = vpop.f32.mrf.mxu0
  %v4678 = vadd.f32 0.0, %v4677
  %v4679 = vpop.f32.mrf.mxu0
  %v4680 = vadd.f32 0.0, %v4679
  %4681 = vmatmul.bf16.gmra.mxu0 %v4609
  %v4682 = vpop.f32.mrf.mxu0
  %v4683 = vadd.f32 0.0, %v4682
  %v4684 = vpop.f32.mrf.mxu0
  %v4685 = vadd.f32 0.0, %v4684
  %4686 = vdwg.mxu0
  %4687 = vmatpush.bf16.msra.mxu0 0
  %4688 = vmatpush.bf16.msra.mxu0 0
  %4689 = vmatpush.bf16.msra.mxu0 0
  %4690 = vmatpush.bf16.msra.mxu0 0
  %4691 = vmatpush.bf16.msra.mxu0 0
  %4692 = vmatpush.bf16.msra.mxu0 0
  %4693 = vmatpush.bf16.msra.mxu0 %v4586
  %4694 = vmatpush.bf16.msra.mxu0 %v4576
  %4695 = vmatmul.bf16.gmra.mxu0 %v4606
  %v4696 = vpop.f32.mrf.mxu0
  %v4697 = vadd.f32 0.0, %v4696
  %v4698 = vpop.f32.mrf.mxu0
  %v4699 = vadd.f32 0.0, %v4698
  %4700 = vmatmul.bf16.gmra.mxu0 %v4609
  %v4701 = vpop.f32.mrf.mxu0
  %v4702 = vadd.f32 0.0, %v4701
  %v4703 = vpop.f32.mrf.mxu0
  %v4704 = vadd.f32 0.0, %v4703
  %4705 = vdwg.mxu0
  %v4706 = vadd.f32 %v4532, %v4621
  %v4707 = vadd.f32 %v4533, %v4640
  %v4708 = vadd.f32 %v4534, %v4659
  %v4709 = vadd.f32 %v4535, %v4678
  %v4710 = vadd.f32 %v4536, %v4697
  %v4711 = vadd.f32 %v4537, %v4623
  %v4712 = vadd.f32 %v4538, %v4642
  %v4713 = vadd.f32 %v4539, %v4661
  %v4714 = vadd.f32 %v4540, %v4680
  %v4715 = vadd.f32 %v4541, %v4699
  %v4716 = vadd.f32 %v4542, %v4626
  %v4717 = vadd.f32 %v4543, %v4645
  %v4718 = vadd.f32 %v4544, %v4664
  %v4719 = vadd.f32 %v4545, %v4683
  %v4720 = vadd.f32 %v4546, %v4702
  %v4721 = vadd.f32 %v4547, %v4628
  %v4722 = vadd.f32 %v4548, %v4647
  %v4723 = vadd.f32 %v4549, %v4666
  %v4724 = vadd.f32 %v4550, %v4685
  %v4725 = vadd.f32 %v4551, %v4704
  %s4726 = scalar_lea.vmem %s8, 96
  %v4727 = vld [vmem:[%s4726] sm:$0xf]
  %v4728 = vld [vmem:[%s4726 + $0x4] sm:$0xf]
  %v4729 = vld [vmem:[%s4726 + $0x8] sm:$0xf]
  %v4730 = vld [vmem:[%s4726 + $0xc] sm:$0xf]
  %v4731 = vld [vmem:[#allocation3] sm:$0xff]
  %v4732 = vld [vmem:[#allocation3 + $0x8] sm:$0xff]
  %v4733 = vld [vmem:[#allocation3 + $0x10] sm:$0xff]
  %v4734 = vld [vmem:[#allocation3 + $0x18] sm:$0xff]
  %v4735 = vld [vmem:[#allocation3 + $0x20] sm:$0xff]
  %v4736 = vld [vmem:[#allocation3 + $0x28] sm:$0xff]
  %v4737 = vld [vmem:[#allocation3 + $0x30] sm:$0xff]
  %v4738 = vld [vmem:[#allocation3 + $0x38] sm:$0xff]
  %v4739 = vld [vmem:[#allocation3 + $0x40] sm:$0xff]
  %v4740 = vld [vmem:[#allocation3 + $0x48] sm:$0xff]
  %v4741 = vld [vmem:[#allocation3 + $0x50] sm:$0xff]
  %v4742 = vld [vmem:[#allocation3 + $0x58] sm:$0xff]
  %v4747 = vunpack.c.l.b16 %v4727
  %v4748 = vunpack.c.l.b16 %v4728
  %v4749 = vunpack.c.l.b16 %v4729
  %v4750 = vunpack.c.l.b16 %v4730
  %v4751 = vpack.c.b16 %v4748, %v4747
  %v4752 = vpack.c.b16 %v4750, %v4749
  %v4765 = vunpack.c.l.b16 %v4731
  %v4766 = vunpack.c.h.b16 %v4731
  %v4767 = vunpack.c.l.b16 %v4732
  %v4768 = vunpack.c.h.b16 %v4732
  %v4769 = vunpack.c.l.b16 %v4733
  %v4770 = vunpack.c.h.b16 %v4733
  %v4771 = vunpack.c.l.b16 %v4734
  %v4772 = vunpack.c.h.b16 %v4734
  %v4773 = vunpack.c.l.b16 %v4735
  %v4774 = vunpack.c.h.b16 %v4735
  %v4775 = vunpack.c.l.b16 %v4736
  %v4776 = vunpack.c.h.b16 %v4736
  %v4777 = vunpack.c.l.b16 %v4737
  %v4778 = vunpack.c.h.b16 %v4737
  %v4779 = vunpack.c.l.b16 %v4738
  %v4780 = vunpack.c.h.b16 %v4738
  %v4781 = vunpack.c.l.b16 %v4739
  %v4782 = vunpack.c.h.b16 %v4739
  %v4783 = vunpack.c.l.b16 %v4740
  %v4784 = vunpack.c.h.b16 %v4740
  %v4785 = vunpack.c.l.b16 %v4741
  %v4786 = vunpack.c.h.b16 %v4741
  %v4787 = vunpack.c.l.b16 %v4742
  %v4788 = vunpack.c.h.b16 %v4742
  %v4789 = vpack.c.b16 %v4771, %v4765
  %v4790 = vpack.c.b16 %v4772, %v4766
  %v4791 = vpack.c.b16 %v4773, %v4767
  %v4792 = vpack.c.b16 %v4774, %v4768
  %v4793 = vpack.c.b16 %v4775, %v4769
  %v4794 = vpack.c.b16 %v4776, %v4770
  %v4795 = vpack.c.b16 %v4783, %v4777
  %v4796 = vpack.c.b16 %v4784, %v4778
  %v4797 = vpack.c.b16 %v4785, %v4779
  %v4798 = vpack.c.b16 %v4786, %v4780
  %v4799 = vpack.c.b16 %v4787, %v4781
  %v4800 = vpack.c.b16 %v4788, %v4782
  %4801 = vrot.lane.b32.xlu0 %v4789, 92
  %v4802 = vpop.permute.xlu0 %4801
  %4803 = vrot.lane.b32.xlu0 %v4790, 92
  %v4804 = vpop.permute.xlu0 %4803
  %4805 = vrot.lane.b32.xlu0 %v4791, 92
  %v4806 = vpop.permute.xlu0 %4805
  %4807 = vrot.lane.b32.xlu0 %v4792, 92
  %v4808 = vpop.permute.xlu0 %4807
  %4809 = vrot.lane.b32.xlu0 %v4793, 92
  %v4810 = vpop.permute.xlu0 %4809
  %4811 = vrot.lane.b32.xlu0 %v4794, 92
  %v4812 = vpop.permute.xlu0 %4811
  %4813 = vrot.lane.b32.xlu0 %v4795, 92
  %v4814 = vpop.permute.xlu0 %4813
  %4815 = vrot.lane.b32.xlu0 %v4796, 92
  %v4816 = vpop.permute.xlu0 %4815
  %4817 = vrot.lane.b32.xlu0 %v4797, 92
  %v4818 = vpop.permute.xlu0 %4817
  %4819 = vrot.lane.b32.xlu0 %v4798, 92
  %v4820 = vpop.permute.xlu0 %4819
  %4821 = vrot.lane.b32.xlu0 %v4799, 92
  %v4822 = vpop.permute.xlu0 %4821
  %4823 = vrot.lane.b32.xlu0 %v4800, 92
  %v4824 = vpop.permute.xlu0 %4823
  %v4825 = vsel %vm2756, %v4802, %v4804
  %v4826 = vsel %vm2756, %v4804, %v4806
  %v4827 = vsel %vm2756, %v4806, %v4808
  %v4828 = vsel %vm2756, %v4808, %v4810
  %v4829 = vsel %vm2756, %v4810, %v4812
  %v4830 = vsel %vm2756, %v4814, %v4816
  %v4831 = vsel %vm2756, %v4816, %v4818
  %v4832 = vsel %vm2756, %v4818, %v4820
  %v4833 = vsel %vm2756, %v4820, %v4822
  %v4834 = vsel %vm2756, %v4822, %v4824
  %v4846 = vsel %vm1734, %v4751, 0
  %v4849 = vsel %vm1734, %v4752, 0
  %4851 = vmatpush.bf16.msra.mxu0 0
  %4852 = vmatpush.bf16.msra.mxu0 0
  %4853 = vmatpush.bf16.msra.mxu0 0
  %4854 = vmatpush.bf16.msra.mxu0 0
  %4855 = vmatpush.bf16.msra.mxu0 0
  %4856 = vmatpush.bf16.msra.mxu0 0
  %4857 = vmatpush.bf16.msra.mxu0 %v4830
  %4858 = vmatpush.bf16.msra.mxu0 %v4825
  %4859 = vmatmul.bf16.gmra.mxu0 %v4846
  %v4860 = vpop.f32.mrf.mxu0
  %v4861 = vadd.f32 0.0, %v4860
  %v4862 = vpop.f32.mrf.mxu0
  %v4863 = vadd.f32 0.0, %v4862
  %4864 = vmatmul.bf16.gmra.mxu0 %v4849
  %v4865 = vpop.f32.mrf.mxu0
  %v4866 = vadd.f32 0.0, %v4865
  %v4867 = vpop.f32.mrf.mxu0
  %v4868 = vadd.f32 0.0, %v4867
  %4869 = vdwg.mxu0
  %4870 = vmatpush.bf16.msra.mxu0 0
  %4871 = vmatpush.bf16.msra.mxu0 0
  %4872 = vmatpush.bf16.msra.mxu0 0
  %4873 = vmatpush.bf16.msra.mxu0 0
  %4874 = vmatpush.bf16.msra.mxu0 0
  %4875 = vmatpush.bf16.msra.mxu0 0
  %4876 = vmatpush.bf16.msra.mxu0 %v4831
  %4877 = vmatpush.bf16.msra.mxu0 %v4826
  %4878 = vmatmul.bf16.gmra.mxu0 %v4846
  %v4879 = vpop.f32.mrf.mxu0
  %v4880 = vadd.f32 0.0, %v4879
  %v4881 = vpop.f32.mrf.mxu0
  %v4882 = vadd.f32 0.0, %v4881
  %4883 = vmatmul.bf16.gmra.mxu0 %v4849
  %v4884 = vpop.f32.mrf.mxu0
  %v4885 = vadd.f32 0.0, %v4884
  %v4886 = vpop.f32.mrf.mxu0
  %v4887 = vadd.f32 0.0, %v4886
  %4888 = vdwg.mxu0
  %4889 = vmatpush.bf16.msra.mxu0 0
  %4890 = vmatpush.bf16.msra.mxu0 0
  %4891 = vmatpush.bf16.msra.mxu0 0
  %4892 = vmatpush.bf16.msra.mxu0 0
  %4893 = vmatpush.bf16.msra.mxu0 0
  %4894 = vmatpush.bf16.msra.mxu0 0
  %4895 = vmatpush.bf16.msra.mxu0 %v4832
  %4896 = vmatpush.bf16.msra.mxu0 %v4827
  %4897 = vmatmul.bf16.gmra.mxu0 %v4846
  %v4898 = vpop.f32.mrf.mxu0
  %v4899 = vadd.f32 0.0, %v4898
  %v4900 = vpop.f32.mrf.mxu0
  %v4901 = vadd.f32 0.0, %v4900
  %4902 = vmatmul.bf16.gmra.mxu0 %v4849
  %v4903 = vpop.f32.mrf.mxu0
  %v4904 = vadd.f32 0.0, %v4903
  %v4905 = vpop.f32.mrf.mxu0
  %v4906 = vadd.f32 0.0, %v4905
  %4907 = vdwg.mxu0
  %4908 = vmatpush.bf16.msra.mxu0 0
  %4909 = vmatpush.bf16.msra.mxu0 0
  %4910 = vmatpush.bf16.msra.mxu0 0
  %4911 = vmatpush.bf16.msra.mxu0 0
  %4912 = vmatpush.bf16.msra.mxu0 0
  %4913 = vmatpush.bf16.msra.mxu0 0
  %4914 = vmatpush.bf16.msra.mxu0 %v4833
  %4915 = vmatpush.bf16.msra.mxu0 %v4828
  %4916 = vmatmul.bf16.gmra.mxu0 %v4846
  %v4917 = vpop.f32.mrf.mxu0
  %v4918 = vadd.f32 0.0, %v4917
  %v4919 = vpop.f32.mrf.mxu0
  %v4920 = vadd.f32 0.0, %v4919
  %4921 = vmatmul.bf16.gmra.mxu0 %v4849
  %v4922 = vpop.f32.mrf.mxu0
  %v4923 = vadd.f32 0.0, %v4922
  %v4924 = vpop.f32.mrf.mxu0
  %v4925 = vadd.f32 0.0, %v4924
  %4926 = vdwg.mxu0
  %4927 = vmatpush.bf16.msra.mxu0 0
  %4928 = vmatpush.bf16.msra.mxu0 0
  %4929 = vmatpush.bf16.msra.mxu0 0
  %4930 = vmatpush.bf16.msra.mxu0 0
  %4931 = vmatpush.bf16.msra.mxu0 0
  %4932 = vmatpush.bf16.msra.mxu0 0
  %4933 = vmatpush.bf16.msra.mxu0 %v4834
  %4934 = vmatpush.bf16.msra.mxu0 %v4829
  %4935 = vmatmul.bf16.gmra.mxu0 %v4846
  %v4936 = vpop.f32.mrf.mxu0
  %v4937 = vadd.f32 0.0, %v4936
  %v4938 = vpop.f32.mrf.mxu0
  %v4939 = vadd.f32 0.0, %v4938
  %4940 = vmatmul.bf16.gmra.mxu0 %v4849
  %v4941 = vpop.f32.mrf.mxu0
  %v4942 = vadd.f32 0.0, %v4941
  %v4943 = vpop.f32.mrf.mxu0
  %v4944 = vadd.f32 0.0, %v4943
  %4945 = vdwg.mxu0
  %v4946 = vadd.f32 %v4706, %v4861
  %v4947 = vadd.f32 %v4707, %v4880
  %v4948 = vadd.f32 %v4708, %v4899
  %v4949 = vadd.f32 %v4709, %v4918
  %v4950 = vadd.f32 %v4710, %v4937
  %v4951 = vadd.f32 %v4711, %v4863
  %v4952 = vadd.f32 %v4712, %v4882
  %v4953 = vadd.f32 %v4713, %v4901
  %v4954 = vadd.f32 %v4714, %v4920
  %v4955 = vadd.f32 %v4715, %v4939
  %v4956 = vadd.f32 %v4716, %v4866
  %v4957 = vadd.f32 %v4717, %v4885
  %v4958 = vadd.f32 %v4718, %v4904
  %v4959 = vadd.f32 %v4719, %v4923
  %v4960 = vadd.f32 %v4720, %v4942
  %v4961 = vadd.f32 %v4721, %v4868
  %v4962 = vadd.f32 %v4722, %v4887
  %v4963 = vadd.f32 %v4723, %v4906
  %v4964 = vadd.f32 %v4724, %v4925
  %v4965 = vadd.f32 %v4725, %v4944
  %s4966 = scalar_lea.vmem %s8, 112
  %v4967 = vld [vmem:[%s4966] sm:$0xf]
  %v4968 = vld [vmem:[%s4966 + $0x4] sm:$0xf]
  %v4969 = vld [vmem:[%s4966 + $0x8] sm:$0xf]
  %v4970 = vld [vmem:[%s4966 + $0xc] sm:$0xf]
  %v4975 = vunpack.c.l.b16 %v4967
  %v4976 = vunpack.c.l.b16 %v4968
  %v4977 = vunpack.c.l.b16 %v4969
  %v4978 = vunpack.c.l.b16 %v4970
  %v4979 = vpack.c.b16 %v4976, %v4975
  %v4980 = vpack.c.b16 %v4978, %v4977
  %4981 = vrot.lane.b32.xlu0 %v4789, 91
  %v4982 = vpop.permute.xlu0 %4981
  %4983 = vrot.lane.b32.xlu0 %v4790, 91
  %v4984 = vpop.permute.xlu0 %4983
  %4985 = vrot.lane.b32.xlu0 %v4791, 91
  %v4986 = vpop.permute.xlu0 %4985
  %4987 = vrot.lane.b32.xlu0 %v4792, 91
  %v4988 = vpop.permute.xlu0 %4987
  %4989 = vrot.lane.b32.xlu0 %v4793, 91
  %v4990 = vpop.permute.xlu0 %4989
  %4991 = vrot.lane.b32.xlu0 %v4794, 91
  %v4992 = vpop.permute.xlu0 %4991
  %4993 = vrot.lane.b32.xlu0 %v4795, 91
  %v4994 = vpop.permute.xlu0 %4993
  %4995 = vrot.lane.b32.xlu0 %v4796, 91
  %v4996 = vpop.permute.xlu0 %4995
  %4997 = vrot.lane.b32.xlu0 %v4797, 91
  %v4998 = vpop.permute.xlu0 %4997
  %4999 = vrot.lane.b32.xlu0 %v4798, 91
  %v5000 = vpop.permute.xlu0 %4999
  %5001 = vrot.lane.b32.xlu0 %v4799, 91
  %v5002 = vpop.permute.xlu0 %5001
  %5003 = vrot.lane.b32.xlu0 %v4800, 91
  %v5004 = vpop.permute.xlu0 %5003
  %v5005 = vsel %vm2937, %v4982, %v4984
  %v5006 = vsel %vm2937, %v4984, %v4986
  %v5007 = vsel %vm2937, %v4986, %v4988
  %v5008 = vsel %vm2937, %v4988, %v4990
  %v5009 = vsel %vm2937, %v4990, %v4992
  %v5010 = vsel %vm2937, %v4994, %v4996
  %v5011 = vsel %vm2937, %v4996, %v4998
  %v5012 = vsel %vm2937, %v4998, %v5000
  %v5013 = vsel %vm2937, %v5000, %v5002
  %v5014 = vsel %vm2937, %v5002, %v5004
  %v5026 = vsel %vm1734, %v4979, 0
  %v5029 = vsel %vm1734, %v4980, 0
  %5031 = vmatpush.bf16.msra.mxu0 0
  %5032 = vmatpush.bf16.msra.mxu0 0
  %5033 = vmatpush.bf16.msra.mxu0 0
  %5034 = vmatpush.bf16.msra.mxu0 0
  %5035 = vmatpush.bf16.msra.mxu0 0
  %5036 = vmatpush.bf16.msra.mxu0 0
  %5037 = vmatpush.bf16.msra.mxu0 %v5010
  %5038 = vmatpush.bf16.msra.mxu0 %v5005
  %5039 = vmatmul.bf16.gmra.mxu0 %v5026
  %v5040 = vpop.f32.mrf.mxu0
  %v5041 = vadd.f32 0.0, %v5040
  %v5042 = vpop.f32.mrf.mxu0
  %v5043 = vadd.f32 0.0, %v5042
  %5044 = vmatmul.bf16.gmra.mxu0 %v5029
  %v5045 = vpop.f32.mrf.mxu0
  %v5046 = vadd.f32 0.0, %v5045
  %v5047 = vpop.f32.mrf.mxu0
  %v5048 = vadd.f32 0.0, %v5047
  %5049 = vdwg.mxu0
  %5050 = vmatpush.bf16.msra.mxu0 0
  %5051 = vmatpush.bf16.msra.mxu0 0
  %5052 = vmatpush.bf16.msra.mxu0 0
  %5053 = vmatpush.bf16.msra.mxu0 0
  %5054 = vmatpush.bf16.msra.mxu0 0
  %5055 = vmatpush.bf16.msra.mxu0 0
  %5056 = vmatpush.bf16.msra.mxu0 %v5011
  %5057 = vmatpush.bf16.msra.mxu0 %v5006
  %5058 = vmatmul.bf16.gmra.mxu0 %v5026
  %v5059 = vpop.f32.mrf.mxu0
  %v5060 = vadd.f32 0.0, %v5059
  %v5061 = vpop.f32.mrf.mxu0
  %v5062 = vadd.f32 0.0, %v5061
  %5063 = vmatmul.bf16.gmra.mxu0 %v5029
  %v5064 = vpop.f32.mrf.mxu0
  %v5065 = vadd.f32 0.0, %v5064
  %v5066 = vpop.f32.mrf.mxu0
  %v5067 = vadd.f32 0.0, %v5066
  %5068 = vdwg.mxu0
  %5069 = vmatpush.bf16.msra.mxu0 0
  %5070 = vmatpush.bf16.msra.mxu0 0
  %5071 = vmatpush.bf16.msra.mxu0 0
  %5072 = vmatpush.bf16.msra.mxu0 0
  %5073 = vmatpush.bf16.msra.mxu0 0
  %5074 = vmatpush.bf16.msra.mxu0 0
  %5075 = vmatpush.bf16.msra.mxu0 %v5012
  %5076 = vmatpush.bf16.msra.mxu0 %v5007
  %5077 = vmatmul.bf16.gmra.mxu0 %v5026
  %v5078 = vpop.f32.mrf.mxu0
  %v5079 = vadd.f32 0.0, %v5078
  %v5080 = vpop.f32.mrf.mxu0
  %v5081 = vadd.f32 0.0, %v5080
  %5082 = vmatmul.bf16.gmra.mxu0 %v5029
  %v5083 = vpop.f32.mrf.mxu0
  %v5084 = vadd.f32 0.0, %v5083
  %v5085 = vpop.f32.mrf.mxu0
  %v5086 = vadd.f32 0.0, %v5085
  %5087 = vdwg.mxu0
  %5088 = vmatpush.bf16.msra.mxu0 0
  %5089 = vmatpush.bf16.msra.mxu0 0
  %5090 = vmatpush.bf16.msra.mxu0 0
  %5091 = vmatpush.bf16.msra.mxu0 0
  %5092 = vmatpush.bf16.msra.mxu0 0
  %5093 = vmatpush.bf16.msra.mxu0 0
  %5094 = vmatpush.bf16.msra.mxu0 %v5013
  %5095 = vmatpush.bf16.msra.mxu0 %v5008
  %5096 = vmatmul.bf16.gmra.mxu0 %v5026
  %v5097 = vpop.f32.mrf.mxu0
  %v5098 = vadd.f32 0.0, %v5097
  %v5099 = vpop.f32.mrf.mxu0
  %v5100 = vadd.f32 0.0, %v5099
  %5101 = vmatmul.bf16.gmra.mxu0 %v5029
  %v5102 = vpop.f32.mrf.mxu0
  %v5103 = vadd.f32 0.0, %v5102
  %v5104 = vpop.f32.mrf.mxu0
  %v5105 = vadd.f32 0.0, %v5104
  %5106 = vdwg.mxu0
  %5107 = vmatpush.bf16.msra.mxu0 0
  %5108 = vmatpush.bf16.msra.mxu0 0
  %5109 = vmatpush.bf16.msra.mxu0 0
  %5110 = vmatpush.bf16.msra.mxu0 0
  %5111 = vmatpush.bf16.msra.mxu0 0
  %5112 = vmatpush.bf16.msra.mxu0 0
  %5113 = vmatpush.bf16.msra.mxu0 %v5014
  %5114 = vmatpush.bf16.msra.mxu0 %v5009
  %5115 = vmatmul.bf16.gmra.mxu0 %v5026
  %v5116 = vpop.f32.mrf.mxu0
  %v5117 = vadd.f32 0.0, %v5116
  %v5118 = vpop.f32.mrf.mxu0
  %v5119 = vadd.f32 0.0, %v5118
  %5120 = vmatmul.bf16.gmra.mxu0 %v5029
  %v5121 = vpop.f32.mrf.mxu0
  %v5122 = vadd.f32 0.0, %v5121
  %v5123 = vpop.f32.mrf.mxu0
  %v5124 = vadd.f32 0.0, %v5123
  %5125 = vdwg.mxu0
  %v5126 = vadd.f32 %v4946, %v5041
  %v5127 = vadd.f32 %v4947, %v5060
  %v5128 = vadd.f32 %v4948, %v5079
  %v5129 = vadd.f32 %v4949, %v5098
  %v5130 = vadd.f32 %v4950, %v5117
  %v5131 = vadd.f32 %v4951, %v5043
  %v5132 = vadd.f32 %v4952, %v5062
  %v5133 = vadd.f32 %v4953, %v5081
  %v5134 = vadd.f32 %v4954, %v5100
  %v5135 = vadd.f32 %v4955, %v5119
  %v5136 = vadd.f32 %v4956, %v5046
  %v5137 = vadd.f32 %v4957, %v5065
  %v5138 = vadd.f32 %v4958, %v5084
  %v5139 = vadd.f32 %v4959, %v5103
  %v5140 = vadd.f32 %v4960, %v5122
  %v5141 = vadd.f32 %v4961, %v5048
  %v5142 = vadd.f32 %v4962, %v5067
  %v5143 = vadd.f32 %v4963, %v5086
  %v5144 = vadd.f32 %v4964, %v5105
  %v5145 = vadd.f32 %v4965, %v5124
  %s5146 = scalar_lea.vmem %s8, 128
  %v5147 = vld [vmem:[%s5146] sm:$0xf]
  %v5148 = vld [vmem:[%s5146 + $0x4] sm:$0xf]
  %v5149 = vld [vmem:[%s5146 + $0x8] sm:$0xf]
  %v5150 = vld [vmem:[%s5146 + $0xc] sm:$0xf]
  %v5155 = vunpack.c.l.b16 %v5147
  %v5156 = vunpack.c.l.b16 %v5148
  %v5157 = vunpack.c.l.b16 %v5149
  %v5158 = vunpack.c.l.b16 %v5150
  %v5159 = vpack.c.b16 %v5156, %v5155
  %v5160 = vpack.c.b16 %v5158, %v5157
  %5161 = vrot.lane.b32.xlu0 %v4789, 90
  %v5162 = vpop.permute.xlu0 %5161
  %5163 = vrot.lane.b32.xlu0 %v4790, 90
  %v5164 = vpop.permute.xlu0 %5163
  %5165 = vrot.lane.b32.xlu0 %v4791, 90
  %v5166 = vpop.permute.xlu0 %5165
  %5167 = vrot.lane.b32.xlu0 %v4792, 90
  %v5168 = vpop.permute.xlu0 %5167
  %5169 = vrot.lane.b32.xlu0 %v4793, 90
  %v5170 = vpop.permute.xlu0 %5169
  %5171 = vrot.lane.b32.xlu0 %v4794, 90
  %v5172 = vpop.permute.xlu0 %5171
  %5173 = vrot.lane.b32.xlu0 %v4795, 90
  %v5174 = vpop.permute.xlu0 %5173
  %5175 = vrot.lane.b32.xlu0 %v4796, 90
  %v5176 = vpop.permute.xlu0 %5175
  %5177 = vrot.lane.b32.xlu0 %v4797, 90
  %v5178 = vpop.permute.xlu0 %5177
  %5179 = vrot.lane.b32.xlu0 %v4798, 90
  %v5180 = vpop.permute.xlu0 %5179
  %5181 = vrot.lane.b32.xlu0 %v4799, 90
  %v5182 = vpop.permute.xlu0 %5181
  %5183 = vrot.lane.b32.xlu0 %v4800, 90
  %v5184 = vpop.permute.xlu0 %5183
  %v5185 = vsel %vm3118, %v5162, %v5164
  %v5186 = vsel %vm3118, %v5164, %v5166
  %v5187 = vsel %vm3118, %v5166, %v5168
  %v5188 = vsel %vm3118, %v5168, %v5170
  %v5189 = vsel %vm3118, %v5170, %v5172
  %v5190 = vsel %vm3118, %v5174, %v5176
  %v5191 = vsel %vm3118, %v5176, %v5178
  %v5192 = vsel %vm3118, %v5178, %v5180
  %v5193 = vsel %vm3118, %v5180, %v5182
  %v5194 = vsel %vm3118, %v5182, %v5184
  %v5206 = vsel %vm1734, %v5159, 0
  %v5209 = vsel %vm1734, %v5160, 0
  %5211 = vmatpush.bf16.msra.mxu0 0
  %5212 = vmatpush.bf16.msra.mxu0 0
  %5213 = vmatpush.bf16.msra.mxu0 0
  %5214 = vmatpush.bf16.msra.mxu0 0
  %5215 = vmatpush.bf16.msra.mxu0 0
  %5216 = vmatpush.bf16.msra.mxu0 0
  %5217 = vmatpush.bf16.msra.mxu0 %v5190
  %5218 = vmatpush.bf16.msra.mxu0 %v5185
  %5219 = vmatmul.bf16.gmra.mxu0 %v5206
  %v5220 = vpop.f32.mrf.mxu0
  %v5221 = vadd.f32 0.0, %v5220
  %v5222 = vpop.f32.mrf.mxu0
  %v5223 = vadd.f32 0.0, %v5222
  %5224 = vmatmul.bf16.gmra.mxu0 %v5209
  %v5225 = vpop.f32.mrf.mxu0
  %v5226 = vadd.f32 0.0, %v5225
  %v5227 = vpop.f32.mrf.mxu0
  %v5228 = vadd.f32 0.0, %v5227
  %5229 = vdwg.mxu0
  %5230 = vmatpush.bf16.msra.mxu0 0
  %5231 = vmatpush.bf16.msra.mxu0 0
  %5232 = vmatpush.bf16.msra.mxu0 0
  %5233 = vmatpush.bf16.msra.mxu0 0
  %5234 = vmatpush.bf16.msra.mxu0 0
  %5235 = vmatpush.bf16.msra.mxu0 0
  %5236 = vmatpush.bf16.msra.mxu0 %v5191
  %5237 = vmatpush.bf16.msra.mxu0 %v5186
  %5238 = vmatmul.bf16.gmra.mxu0 %v5206
  %v5239 = vpop.f32.mrf.mxu0
  %v5240 = vadd.f32 0.0, %v5239
  %v5241 = vpop.f32.mrf.mxu0
  %v5242 = vadd.f32 0.0, %v5241
  %5243 = vmatmul.bf16.gmra.mxu0 %v5209
  %v5244 = vpop.f32.mrf.mxu0
  %v5245 = vadd.f32 0.0, %v5244
  %v5246 = vpop.f32.mrf.mxu0
  %v5247 = vadd.f32 0.0, %v5246
  %5248 = vdwg.mxu0
  %5249 = vmatpush.bf16.msra.mxu0 0
  %5250 = vmatpush.bf16.msra.mxu0 0
  %5251 = vmatpush.bf16.msra.mxu0 0
  %5252 = vmatpush.bf16.msra.mxu0 0
  %5253 = vmatpush.bf16.msra.mxu0 0
  %5254 = vmatpush.bf16.msra.mxu0 0
  %5255 = vmatpush.bf16.msra.mxu0 %v5192
  %5256 = vmatpush.bf16.msra.mxu0 %v5187
  %5257 = vmatmul.bf16.gmra.mxu0 %v5206
  %v5258 = vpop.f32.mrf.mxu0
  %v5259 = vadd.f32 0.0, %v5258
  %v5260 = vpop.f32.mrf.mxu0
  %v5261 = vadd.f32 0.0, %v5260
  %5262 = vmatmul.bf16.gmra.mxu0 %v5209
  %v5263 = vpop.f32.mrf.mxu0
  %v5264 = vadd.f32 0.0, %v5263
  %v5265 = vpop.f32.mrf.mxu0
  %v5266 = vadd.f32 0.0, %v5265
  %5267 = vdwg.mxu0
  %5268 = vmatpush.bf16.msra.mxu0 0
  %5269 = vmatpush.bf16.msra.mxu0 0
  %5270 = vmatpush.bf16.msra.mxu0 0
  %5271 = vmatpush.bf16.msra.mxu0 0
  %5272 = vmatpush.bf16.msra.mxu0 0
  %5273 = vmatpush.bf16.msra.mxu0 0
  %5274 = vmatpush.bf16.msra.mxu0 %v5193
  %5275 = vmatpush.bf16.msra.mxu0 %v5188
  %5276 = vmatmul.bf16.gmra.mxu0 %v5206
  %v5277 = vpop.f32.mrf.mxu0
  %v5278 = vadd.f32 0.0, %v5277
  %v5279 = vpop.f32.mrf.mxu0
  %v5280 = vadd.f32 0.0, %v5279
  %5281 = vmatmul.bf16.gmra.mxu0 %v5209
  %v5282 = vpop.f32.mrf.mxu0
  %v5283 = vadd.f32 0.0, %v5282
  %v5284 = vpop.f32.mrf.mxu0
  %v5285 = vadd.f32 0.0, %v5284
  %5286 = vdwg.mxu0
  %5287 = vmatpush.bf16.msra.mxu0 0
  %5288 = vmatpush.bf16.msra.mxu0 0
  %5289 = vmatpush.bf16.msra.mxu0 0
  %5290 = vmatpush.bf16.msra.mxu0 0
  %5291 = vmatpush.bf16.msra.mxu0 0
  %5292 = vmatpush.bf16.msra.mxu0 0
  %5293 = vmatpush.bf16.msra.mxu0 %v5194
  %5294 = vmatpush.bf16.msra.mxu0 %v5189
  %5295 = vmatmul.bf16.gmra.mxu0 %v5206
  %v5296 = vpop.f32.mrf.mxu0
  %v5297 = vadd.f32 0.0, %v5296
  %v5298 = vpop.f32.mrf.mxu0
  %v5299 = vadd.f32 0.0, %v5298
  %5300 = vmatmul.bf16.gmra.mxu0 %v5209
  %v5301 = vpop.f32.mrf.mxu0
  %v5302 = vadd.f32 0.0, %v5301
  %v5303 = vpop.f32.mrf.mxu0
  %v5304 = vadd.f32 0.0, %v5303
  %5305 = vdwg.mxu0
  %v5306 = vadd.f32 %v5126, %v5221
  %v5307 = vadd.f32 %v5127, %v5240
  %v5308 = vadd.f32 %v5128, %v5259
  %v5309 = vadd.f32 %v5129, %v5278
  %v5310 = vadd.f32 %v5130, %v5297
  %v5311 = vadd.f32 %v5131, %v5223
  %v5312 = vadd.f32 %v5132, %v5242
  %v5313 = vadd.f32 %v5133, %v5261
  %v5314 = vadd.f32 %v5134, %v5280
  %v5315 = vadd.f32 %v5135, %v5299
  %v5316 = vadd.f32 %v5136, %v5226
  %v5317 = vadd.f32 %v5137, %v5245
  %v5318 = vadd.f32 %v5138, %v5264
  %v5319 = vadd.f32 %v5139, %v5283
  %v5320 = vadd.f32 %v5140, %v5302
  %v5321 = vadd.f32 %v5141, %v5228
  %v5322 = vadd.f32 %v5142, %v5247
  %v5323 = vadd.f32 %v5143, %v5266
  %v5324 = vadd.f32 %v5144, %v5285
  %v5325 = vadd.f32 %v5145, %v5304
  %v5326 = vld [vmem:[%s9] sm:$0xff]
  %v5327 = vld [vmem:[%s9 + $0x8] sm:$0xff]
  %v5328 = vld [vmem:[%s9 + $0x10] sm:$0xff]
  %v5329 = vld [vmem:[%s9 + $0x18] sm:$0xff]
  %5331 = vset.pattern.permute.xlu0 0
  %5332 = vperm.xlu0 %5331, %v5326
  %v5333 = vpop.permute.xlu0 %5332
  %5336 = vset.pattern.permute.xlu0 0
  %5337 = vperm.xlu0 %5336, %v5327
  %v5338 = vpop.permute.xlu0 %5337
  %5341 = vset.pattern.permute.xlu0 0
  %5342 = vperm.xlu0 %5341, %v5328
  %v5343 = vpop.permute.xlu0 %5342
  %5346 = vset.pattern.permute.xlu0 0
  %5347 = vperm.xlu0 %5346, %v5329
  %v5348 = vpop.permute.xlu0 %5347
  %v5350 = vadd.f32 %v5306, %v5333
  %v5351 = vadd.f32 %v5307, %v5333
  %v5352 = vadd.f32 %v5308, %v5333
  %v5353 = vadd.f32 %v5309, %v5333
  %v5354 = vadd.f32 %v5310, %v5333
  %v5355 = vadd.f32 %v5311, %v5338
  %v5356 = vadd.f32 %v5312, %v5338
  %v5357 = vadd.f32 %v5313, %v5338
  %v5358 = vadd.f32 %v5314, %v5338
  %v5359 = vadd.f32 %v5315, %v5338
  %v5360 = vadd.f32 %v5316, %v5343
  %v5361 = vadd.f32 %v5317, %v5343
  %v5362 = vadd.f32 %v5318, %v5343
  %v5363 = vadd.f32 %v5319, %v5343
  %v5364 = vadd.f32 %v5320, %v5343
  %v5365 = vadd.f32 %v5321, %v5348
  %v5366 = vadd.f32 %v5322, %v5348
  %v5367 = vadd.f32 %v5323, %v5348
  %v5368 = vadd.f32 %v5324, %v5348
  %v5369 = vadd.f32 %v5325, %v5348
  %v5370 = vmul.f32 %v5350, %v1490
  %v5371 = vmul.f32 %v5351, %v1491
  %v5372 = vmul.f32 %v5352, %v1492
  %v5373 = vmul.f32 %v5353, %v1493
  %v5374 = vmul.f32 %v5354, %v1494
  %v5375 = vmul.f32 %v5355, %v1490
  %v5376 = vmul.f32 %v5356, %v1491
  %v5377 = vmul.f32 %v5357, %v1492
  %v5378 = vmul.f32 %v5358, %v1493
  %v5379 = vmul.f32 %v5359, %v1494
  %v5380 = vmul.f32 %v5360, %v1490
  %v5381 = vmul.f32 %v5361, %v1491
  %v5382 = vmul.f32 %v5362, %v1492
  %v5383 = vmul.f32 %v5363, %v1493
  %v5384 = vmul.f32 %v5364, %v1494
  %v5385 = vmul.f32 %v5365, %v1490
  %v5386 = vmul.f32 %v5366, %v1491
  %v5387 = vmul.f32 %v5367, %v1492
  %v5388 = vmul.f32 %v5368, %v1493
  %v5389 = vmul.f32 %v5369, %v1494
  %v5390 = vadd.f32 %v5370, %v5371
  %v5391 = vadd.f32 %v5390, %v5372
  %v5392 = vadd.f32 %v5391, %v5373
  %v5393 = vsel %vm3327, %v5374, 0.0
  %v5394 = vadd.f32 %v5392, %v5393
  %5395 = vadd.xlane.f32.xlu0 %v5394
  %v5396 = vpop.xlane.xlu0 %5395
  %v5397 = vadd.f32 %v5375, %v5376
  %v5398 = vadd.f32 %v5397, %v5377
  %v5399 = vadd.f32 %v5398, %v5378
  %v5400 = vsel %vm3327, %v5379, 0.0
  %v5401 = vadd.f32 %v5399, %v5400
  %5402 = vadd.xlane.f32.xlu0 %v5401
  %v5403 = vpop.xlane.xlu0 %5402
  %v5404 = vadd.f32 %v5380, %v5381
  %v5405 = vadd.f32 %v5404, %v5382
  %v5406 = vadd.f32 %v5405, %v5383
  %v5407 = vsel %vm3327, %v5384, 0.0
  %v5408 = vadd.f32 %v5406, %v5407
  %5409 = vadd.xlane.f32.xlu0 %v5408
  %v5410 = vpop.xlane.xlu0 %5409
  %v5411 = vadd.f32 %v5385, %v5386
  %v5412 = vadd.f32 %v5411, %v5387
  %v5413 = vadd.f32 %v5412, %v5388
  %v5414 = vsel %vm3327, %v5389, 0.0
  %v5415 = vadd.f32 %v5413, %v5414
  %5416 = vadd.xlane.f32.xlu0 %v5415
  %v5417 = vpop.xlane.xlu0 %5416
  %v5418 = vmul.f32 %v5370, %v5350
  %v5419 = vmul.f32 %v5371, %v5351
  %v5420 = vmul.f32 %v5372, %v5352
  %v5421 = vmul.f32 %v5373, %v5353
  %v5422 = vmul.f32 %v5374, %v5354
  %v5423 = vmul.f32 %v5375, %v5355
  %v5424 = vmul.f32 %v5376, %v5356
  %v5425 = vmul.f32 %v5377, %v5357
  %v5426 = vmul.f32 %v5378, %v5358
  %v5427 = vmul.f32 %v5379, %v5359
  %v5428 = vmul.f32 %v5380, %v5360
  %v5429 = vmul.f32 %v5381, %v5361
  %v5430 = vmul.f32 %v5382, %v5362
  %v5431 = vmul.f32 %v5383, %v5363
  %v5432 = vmul.f32 %v5384, %v5364
  %v5433 = vmul.f32 %v5385, %v5365
  %v5434 = vmul.f32 %v5386, %v5366
  %v5435 = vmul.f32 %v5387, %v5367
  %v5436 = vmul.f32 %v5388, %v5368
  %v5437 = vmul.f32 %v5389, %v5369
  %v5438 = vadd.f32 %v5418, %v5419
  %v5439 = vadd.f32 %v5438, %v5420
  %v5440 = vadd.f32 %v5439, %v5421
  %v5441 = vsel %vm3327, %v5422, 0.0
  %v5442 = vadd.f32 %v5440, %v5441
  %5443 = vadd.xlane.f32.xlu0 %v5442
  %v5444 = vpop.xlane.xlu0 %5443
  %v5445 = vadd.f32 %v5423, %v5424
  %v5446 = vadd.f32 %v5445, %v5425
  %v5447 = vadd.f32 %v5446, %v5426
  %v5448 = vsel %vm3327, %v5427, 0.0
  %v5449 = vadd.f32 %v5447, %v5448
  %5450 = vadd.xlane.f32.xlu0 %v5449
  %v5451 = vpop.xlane.xlu0 %5450
  %v5452 = vadd.f32 %v5428, %v5429
  %v5453 = vadd.f32 %v5452, %v5430
  %v5454 = vadd.f32 %v5453, %v5431
  %v5455 = vsel %vm3327, %v5432, 0.0
  %v5456 = vadd.f32 %v5454, %v5455
  %5457 = vadd.xlane.f32.xlu0 %v5456
  %v5458 = vpop.xlane.xlu0 %5457
  %v5459 = vadd.f32 %v5433, %v5434
  %v5460 = vadd.f32 %v5459, %v5435
  %v5461 = vadd.f32 %v5460, %v5436
  %v5462 = vsel %vm3327, %v5437, 0.0
  %v5463 = vadd.f32 %v5461, %v5462
  %5464 = vadd.xlane.f32.xlu0 %v5463
  %v5465 = vpop.xlane.xlu0 %5464
  %v5466 = vmul.f32 %v5396, 0.001953125
  %v5467 = vmul.f32 %v5403, 0.001953125
  %v5468 = vmul.f32 %v5410, 0.001953125
  %v5469 = vmul.f32 %v5417, 0.001953125
  %v5470 = vmul.f32 %v5444, 0.001953125
  %v5471 = vmul.f32 %v5451, 0.001953125
  %v5472 = vmul.f32 %v5458, 0.001953125
  %v5473 = vmul.f32 %v5465, 0.001953125
  %v5474 = vmul.f32 %v5466, %v5466
  %v5475 = vmul.f32 %v5467, %v5467
  %v5476 = vmul.f32 %v5468, %v5468
  %v5477 = vmul.f32 %v5469, %v5469
  %v5478 = vsub.f32 %v5470, %v5474
  %v5479 = vsub.f32 %v5471, %v5475
  %v5480 = vsub.f32 %v5472, %v5476
  %v5481 = vsub.f32 %v5473, %v5477
  %v5482 = vld [vmem:[%s10] sm:$0xff]
  %v5483 = vld [vmem:[%s10 + $0x8] sm:$0xff]
  %v5484 = vld [vmem:[%s10 + $0x10] sm:$0xff]
  %v5485 = vld [vmem:[%s10 + $0x18] sm:$0xff]
  %v5486 = vadd.f32 %v5478, 0.0001
  %v5487 = vadd.f32 %v5479, 0.0001
  %v5488 = vadd.f32 %v5480, 0.0001
  %v5489 = vadd.f32 %v5481, 0.0001
  %v5490 = vrsqrt.pop %v5486
  %v5491 = vmul.f32 %v5490, %v5486
  %v5492 = vmul.f32 %v5491, %v5490
  %v5493 = vmul.f32 0.5, %v5492
  %v5494 = vsub.f32 1.5, %v5493
  %v5495 = vmul.f32 %v5490, %v5494
  %vm5496 = vweird.f32 %v5486
  %vm5497 = vweird.f32 %v5490
  %vm5498 = vmor %vm5496, %vm5497
  %v5499 = vsel %vm5498, %v5490, %v5495
  %v5500 = vrsqrt.pop %v5487
  %v5501 = vmul.f32 %v5500, %v5487
  %v5502 = vmul.f32 %v5501, %v5500
  %v5503 = vmul.f32 0.5, %v5502
  %v5504 = vsub.f32 1.5, %v5503
  %v5505 = vmul.f32 %v5500, %v5504
  %vm5506 = vweird.f32 %v5487
  %vm5507 = vweird.f32 %v5500
  %vm5508 = vmor %vm5506, %vm5507
  %v5509 = vsel %vm5508, %v5500, %v5505
  %v5510 = vrsqrt.pop %v5488
  %v5511 = vmul.f32 %v5510, %v5488
  %v5512 = vmul.f32 %v5511, %v5510
  %v5513 = vmul.f32 0.5, %v5512
  %v5514 = vsub.f32 1.5, %v5513
  %v5515 = vmul.f32 %v5510, %v5514
  %vm5516 = vweird.f32 %v5488
  %vm5517 = vweird.f32 %v5510
  %vm5518 = vmor %vm5516, %vm5517
  %v5519 = vsel %vm5518, %v5510, %v5515
  %v5520 = vrsqrt.pop %v5489
  %v5521 = vmul.f32 %v5520, %v5489
  %v5522 = vmul.f32 %v5521, %v5520
  %v5523 = vmul.f32 0.5, %v5522
  %v5524 = vsub.f32 1.5, %v5523
  %v5525 = vmul.f32 %v5520, %v5524
  %vm5526 = vweird.f32 %v5489
  %vm5527 = vweird.f32 %v5520
  %vm5528 = vmor %vm5526, %vm5527
  %v5529 = vsel %vm5528, %v5520, %v5525
  %v5530 = vmul.f32 %v5482, %v5499
  %v5531 = vmul.f32 %v5483, %v5509
  %v5532 = vmul.f32 %v5484, %v5519
  %v5533 = vmul.f32 %v5485, %v5529
  %v5534 = vld [vmem:[%s11] sm:$0xff]
  %v5535 = vld [vmem:[%s11 + $0x8] sm:$0xff]
  %v5536 = vld [vmem:[%s11 + $0x10] sm:$0xff]
  %v5537 = vld [vmem:[%s11 + $0x18] sm:$0xff]
  %v5538 = vmul.f32 %v5466, %v5530
  %v5539 = vmul.f32 %v5467, %v5531
  %v5540 = vmul.f32 %v5468, %v5532
  %v5541 = vmul.f32 %v5469, %v5533
  %v5542 = vsub.f32 %v5534, %v5538
  %v5543 = vsub.f32 %v5535, %v5539
  %v5544 = vsub.f32 %v5536, %v5540
  %v5545 = vsub.f32 %v5537, %v5541
  %5547 = vset.pattern.permute.xlu0 0
  %5548 = vperm.xlu0 %5547, %v5530
  %v5549 = vpop.permute.xlu0 %5548
  %5552 = vset.pattern.permute.xlu0 0
  %5553 = vperm.xlu0 %5552, %v5531
  %v5554 = vpop.permute.xlu0 %5553
  %5557 = vset.pattern.permute.xlu0 0
  %5558 = vperm.xlu0 %5557, %v5532
  %v5559 = vpop.permute.xlu0 %5558
  %5562 = vset.pattern.permute.xlu0 0
  %5563 = vperm.xlu0 %5562, %v5533
  %v5564 = vpop.permute.xlu0 %5563
  %v5566 = vmul.f32 %v5350, %v5549
  %v5567 = vmul.f32 %v5351, %v5549
  %v5568 = vmul.f32 %v5352, %v5549
  %v5569 = vmul.f32 %v5353, %v5549
  %v5570 = vmul.f32 %v5354, %v5549
  %v5571 = vmul.f32 %v5355, %v5554
  %v5572 = vmul.f32 %v5356, %v5554
  %v5573 = vmul.f32 %v5357, %v5554
  %v5574 = vmul.f32 %v5358, %v5554
  %v5575 = vmul.f32 %v5359, %v5554
  %v5576 = vmul.f32 %v5360, %v5559
  %v5577 = vmul.f32 %v5361, %v5559
  %v5578 = vmul.f32 %v5362, %v5559
  %v5579 = vmul.f32 %v5363, %v5559
  %v5580 = vmul.f32 %v5364, %v5559
  %v5581 = vmul.f32 %v5365, %v5564
  %v5582 = vmul.f32 %v5366, %v5564
  %v5583 = vmul.f32 %v5367, %v5564
  %v5584 = vmul.f32 %v5368, %v5564
  %v5585 = vmul.f32 %v5369, %v5564
  %5587 = vset.pattern.permute.xlu0 0
  %5588 = vperm.xlu0 %5587, %v5542
  %v5589 = vpop.permute.xlu0 %5588
  %5592 = vset.pattern.permute.xlu0 0
  %5593 = vperm.xlu0 %5592, %v5543
  %v5594 = vpop.permute.xlu0 %5593
  %5597 = vset.pattern.permute.xlu0 0
  %5598 = vperm.xlu0 %5597, %v5544
  %v5599 = vpop.permute.xlu0 %5598
  %5602 = vset.pattern.permute.xlu0 0
  %5603 = vperm.xlu0 %5602, %v5545
  %v5604 = vpop.permute.xlu0 %5603
  %v5606 = vadd.f32 %v5566, %v5589
  %v5607 = vadd.f32 %v5567, %v5589
  %v5608 = vadd.f32 %v5568, %v5589
  %v5609 = vadd.f32 %v5569, %v5589
  %v5610 = vadd.f32 %v5570, %v5589
  %v5611 = vadd.f32 %v5571, %v5594
  %v5612 = vadd.f32 %v5572, %v5594
  %v5613 = vadd.f32 %v5573, %v5594
  %v5614 = vadd.f32 %v5574, %v5594
  %v5615 = vadd.f32 %v5575, %v5594
  %v5616 = vadd.f32 %v5576, %v5599
  %v5617 = vadd.f32 %v5577, %v5599
  %v5618 = vadd.f32 %v5578, %v5599
  %v5619 = vadd.f32 %v5579, %v5599
  %v5620 = vadd.f32 %v5580, %v5599
  %v5621 = vadd.f32 %v5581, %v5604
  %v5622 = vadd.f32 %v5582, %v5604
  %v5623 = vadd.f32 %v5583, %v5604
  %v5624 = vadd.f32 %v5584, %v5604
  %v5625 = vadd.f32 %v5585, %v5604
  %v5626 = vmax.f32 %v5606, 0.0
  %v5627 = vmax.f32 %v5607, 0.0
  %v5628 = vmax.f32 %v5608, 0.0
  %v5629 = vmax.f32 %v5609, 0.0
  %v5630 = vmax.f32 %v5610, 0.0
  %v5631 = vmax.f32 %v5611, 0.0
  %v5632 = vmax.f32 %v5612, 0.0
  %v5633 = vmax.f32 %v5613, 0.0
  %v5634 = vmax.f32 %v5614, 0.0
  %v5635 = vmax.f32 %v5615, 0.0
  %v5636 = vmax.f32 %v5616, 0.0
  %v5637 = vmax.f32 %v5617, 0.0
  %v5638 = vmax.f32 %v5618, 0.0
  %v5639 = vmax.f32 %v5619, 0.0
  %v5640 = vmax.f32 %v5620, 0.0
  %v5641 = vmax.f32 %v5621, 0.0
  %v5642 = vmax.f32 %v5622, 0.0
  %v5643 = vmax.f32 %v5623, 0.0
  %v5644 = vmax.f32 %v5624, 0.0
  %v5645 = vmax.f32 %v5625, 0.0
  %v5646 = vmul.f32 %v5626, %v1490
  %v5647 = vmul.f32 %v5627, %v1491
  %v5648 = vmul.f32 %v5628, %v1492
  %v5649 = vmul.f32 %v5629, %v1493
  %v5650 = vmul.f32 %v5630, %v1494
  %v5651 = vmul.f32 %v5631, %v1490
  %v5652 = vmul.f32 %v5632, %v1491
  %v5653 = vmul.f32 %v5633, %v1492
  %v5654 = vmul.f32 %v5634, %v1493
  %v5655 = vmul.f32 %v5635, %v1494
  %v5656 = vmul.f32 %v5636, %v1490
  %v5657 = vmul.f32 %v5637, %v1491
  %v5658 = vmul.f32 %v5638, %v1492
  %v5659 = vmul.f32 %v5639, %v1493
  %v5660 = vmul.f32 %v5640, %v1494
  %v5661 = vmul.f32 %v5641, %v1490
  %v5662 = vmul.f32 %v5642, %v1491
  %v5663 = vmul.f32 %v5643, %v1492
  %v5664 = vmul.f32 %v5644, %v1493
  %v5665 = vmul.f32 %v5645, %v1494
  %v5666 = vpack.c.bf16 %v5647, %v5646
  %v5667 = vpack.c.bf16 %v5649, %v5648
  %v5668 = vpack.c.bf16 %v5650, %v5650
  %v5669 = vpack.c.bf16 %v5652, %v5651
  %v5670 = vpack.c.bf16 %v5654, %v5653
  %v5671 = vpack.c.bf16 %v5655, %v5655
  %v5672 = vpack.c.bf16 %v5657, %v5656
  %v5673 = vpack.c.bf16 %v5659, %v5658
  %v5674 = vpack.c.bf16 %v5660, %v5660
  %v5675 = vpack.c.bf16 %v5662, %v5661
  %v5676 = vpack.c.bf16 %v5664, %v5663
  %v5677 = vpack.c.bf16 %v5665, %v5665
  %5690 = vrot.lane.b32.xlu0 %v5666, 19
  %v5691 = vpop.permute.xlu0 %5690
  %5692 = vrot.lane.b32.xlu0 %v5667, 19
  %v5693 = vpop.permute.xlu0 %5692
  %5694 = vrot.lane.b32.xlu0 %v5668, 19
  %v5695 = vpop.permute.xlu0 %5694
  %5696 = vrot.lane.b32.xlu0 %v5669, 19
  %v5697 = vpop.permute.xlu0 %5696
  %5698 = vrot.lane.b32.xlu0 %v5670, 19
  %v5699 = vpop.permute.xlu0 %5698
  %5700 = vrot.lane.b32.xlu0 %v5671, 19
  %v5701 = vpop.permute.xlu0 %5700
  %5702 = vrot.lane.b32.xlu0 %v5672, 19
  %v5703 = vpop.permute.xlu0 %5702
  %5704 = vrot.lane.b32.xlu0 %v5673, 19
  %v5705 = vpop.permute.xlu0 %5704
  %5706 = vrot.lane.b32.xlu0 %v5674, 19
  %v5707 = vpop.permute.xlu0 %5706
  %5708 = vrot.lane.b32.xlu0 %v5675, 19
  %v5709 = vpop.permute.xlu0 %5708
  %5710 = vrot.lane.b32.xlu0 %v5676, 19
  %v5711 = vpop.permute.xlu0 %5710
  %5712 = vrot.lane.b32.xlu0 %v5677, 19
  %v5713 = vpop.permute.xlu0 %5712
  %v5714 = vrot.slane %v5691, 4
  %v5715 = vrot.slane %v5693, 4
  %v5716 = vrot.slane %v5697, 4
  %v5717 = vrot.slane %v5699, 4
  %v5718 = vrot.slane %v5703, 4
  %v5719 = vrot.slane %v5705, 4
  %v5720 = vrot.slane %v5709, 4
  %v5721 = vrot.slane %v5711, 4
  %v5722 = vsel %vm1576, %v5714, %v5691
  %v5723 = vsel %vm1578, %v5714, %v5715
  %v5724 = vsel %vm1576, %v5723, %v5693
  %v5725 = vsel %vm1576, %v5715, %v5695
  %v5726 = vsel %vm1576, %v5716, %v5697
  %v5727 = vsel %vm1578, %v5716, %v5717
  %v5728 = vsel %vm1576, %v5727, %v5699
  %v5729 = vsel %vm1576, %v5717, %v5701
  %v5730 = vsel %vm1576, %v5718, %v5703
  %v5731 = vsel %vm1578, %v5718, %v5719
  %v5732 = vsel %vm1576, %v5731, %v5705
  %v5733 = vsel %vm1576, %v5719, %v5707
  %v5734 = vsel %vm1576, %v5720, %v5709
  %v5735 = vsel %vm1578, %v5720, %v5721
  %v5736 = vsel %vm1576, %v5735, %v5711
  %v5737 = vsel %vm1576, %v5721, %v5713
  %5750 = vst.msk [vmem:[#allocation2] sm:$0xff] %vm1608, %v5722
  %5751 = vst [vmem:[#allocation2 + $0x8] sm:$0xff] %v5724
  %5752 = vst.msk [vmem:[#allocation2 + $0x10] sm:$0xf] %vm1611, %v5725
  %5753 = vst.msk [vmem:[#allocation2 + $0x18] sm:$0xff] %vm1608, %v5726
  %5754 = vst [vmem:[#allocation2 + $0x20] sm:$0xff] %v5728
  %5755 = vst.msk [vmem:[#allocation2 + $0x28] sm:$0xf] %vm1611, %v5729
  %5756 = vst.msk [vmem:[#allocation2 + $0x30] sm:$0xff] %vm1608, %v5730
  %5757 = vst [vmem:[#allocation2 + $0x38] sm:$0xff] %v5732
  %5758 = vst.msk [vmem:[#allocation2 + $0x40] sm:$0xf] %vm1611, %v5733
  %5759 = vst.msk [vmem:[#allocation2 + $0x48] sm:$0xff] %vm1608, %v5734
  %5760 = vst [vmem:[#allocation2 + $0x50] sm:$0xff] %v5736
  %5761 = vst.msk [vmem:[#allocation2 + $0x58] sm:$0xf] %vm1611, %v5737
  %v5762 = vld [vmem:[#allocation2] sm:$0xff]
  %v5763 = vld [vmem:[#allocation2 + $0x8] sm:$0xff]
  %v5764 = vld [vmem:[#allocation2 + $0x10] sm:$0xf]
  %v5765 = vld [vmem:[#allocation2 + $0x18] sm:$0xff]
  %v5766 = vld [vmem:[#allocation2 + $0x20] sm:$0xff]
  %v5767 = vld [vmem:[#allocation2 + $0x28] sm:$0xf]
  %v5768 = vld [vmem:[#allocation2 + $0x30] sm:$0xff]
  %v5769 = vld [vmem:[#allocation2 + $0x38] sm:$0xff]
  %v5770 = vld [vmem:[#allocation2 + $0x40] sm:$0xf]
  %v5771 = vld [vmem:[#allocation2 + $0x48] sm:$0xff]
  %v5772 = vld [vmem:[#allocation2 + $0x50] sm:$0xff]
  %v5773 = vld [vmem:[#allocation2 + $0x58] sm:$0xf]
  %v5774 = vunpack.c.l.bf16 %v5762
  %v5775 = vunpack.c.h.bf16 %v5762
  %v5776 = vunpack.c.l.bf16 %v5763
  %v5777 = vunpack.c.h.bf16 %v5763
  %v5778 = vunpack.c.l.bf16 %v5764
  %v5779 = vunpack.c.l.bf16 %v5765
  %v5780 = vunpack.c.h.bf16 %v5765
  %v5781 = vunpack.c.l.bf16 %v5766
  %v5782 = vunpack.c.h.bf16 %v5766
  %v5783 = vunpack.c.l.bf16 %v5767
  %v5784 = vunpack.c.l.bf16 %v5768
  %v5785 = vunpack.c.h.bf16 %v5768
  %v5786 = vunpack.c.l.bf16 %v5769
  %v5787 = vunpack.c.h.bf16 %v5769
  %v5788 = vunpack.c.l.bf16 %v5770
  %v5789 = vunpack.c.l.bf16 %v5771
  %v5790 = vunpack.c.h.bf16 %v5771
  %v5791 = vunpack.c.l.bf16 %v5772
  %v5792 = vunpack.c.h.bf16 %v5772
  %v5793 = vunpack.c.l.bf16 %v5773
  %v5794 = vld [vmem:[%s12] sm:$0xff]
  %v5795 = vld [vmem:[%s12 + $0x8] sm:$0xff]
  %v5796 = vld [vmem:[%s12 + $0x10] sm:$0xff]
  %v5797 = vld [vmem:[%s12 + $0x18] sm:$0xff]
  %5799 = vset.pattern.permute.xlu0 0
  %5800 = vperm.xlu0 %5799, %v5794
  %v5801 = vpop.permute.xlu0 %5800
  %5804 = vset.pattern.permute.xlu0 0
  %5805 = vperm.xlu0 %5804, %v5795
  %v5806 = vpop.permute.xlu0 %5805
  %5809 = vset.pattern.permute.xlu0 0
  %5810 = vperm.xlu0 %5809, %v5796
  %v5811 = vpop.permute.xlu0 %5810
  %5814 = vset.pattern.permute.xlu0 0
  %5815 = vperm.xlu0 %5814, %v5797
  %v5816 = vpop.permute.xlu0 %5815
  %v5818 = vmul.f32 %v5774, %v5801
  %v5819 = vmul.f32 %v5775, %v5801
  %v5820 = vmul.f32 %v5776, %v5801
  %v5821 = vmul.f32 %v5777, %v5801
  %v5822 = vmul.f32 %v5778, %v5801
  %v5823 = vmul.f32 %v5779, %v5806
  %v5824 = vmul.f32 %v5780, %v5806
  %v5825 = vmul.f32 %v5781, %v5806
  %v5826 = vmul.f32 %v5782, %v5806
  %v5827 = vmul.f32 %v5783, %v5806
  %v5828 = vmul.f32 %v5784, %v5811
  %v5829 = vmul.f32 %v5785, %v5811
  %v5830 = vmul.f32 %v5786, %v5811
  %v5831 = vmul.f32 %v5787, %v5811
  %v5832 = vmul.f32 %v5788, %v5811
  %v5833 = vmul.f32 %v5789, %v5816
  %v5834 = vmul.f32 %v5790, %v5816
  %v5835 = vmul.f32 %v5791, %v5816
  %v5836 = vmul.f32 %v5792, %v5816
  %v5837 = vmul.f32 %v5793, %v5816
  %v5838 = vadd.f32 %v5818, 0.0
  %v5839 = vadd.f32 %v5819, 0.0
  %v5840 = vadd.f32 %v5820, 0.0
  %v5841 = vadd.f32 %v5821, 0.0
  %v5842 = vadd.f32 %v5822, 0.0
  %v5843 = vadd.f32 %v5823, 0.0
  %v5844 = vadd.f32 %v5824, 0.0
  %v5845 = vadd.f32 %v5825, 0.0
  %v5846 = vadd.f32 %v5826, 0.0
  %v5847 = vadd.f32 %v5827, 0.0
  %v5848 = vadd.f32 %v5828, 0.0
  %v5849 = vadd.f32 %v5829, 0.0
  %v5850 = vadd.f32 %v5830, 0.0
  %v5851 = vadd.f32 %v5831, 0.0
  %v5852 = vadd.f32 %v5832, 0.0
  %v5853 = vadd.f32 %v5833, 0.0
  %v5854 = vadd.f32 %v5834, 0.0
  %v5855 = vadd.f32 %v5835, 0.0
  %v5856 = vadd.f32 %v5836, 0.0
  %v5857 = vadd.f32 %v5837, 0.0
  %5858 = vset.pattern.permute.xlu0 1
  %5859 = vperm.xlu0 %5858, %v5794
  %v5860 = vpop.permute.xlu0 %5859
  %5862 = vset.pattern.permute.xlu0 1
  %5863 = vperm.xlu0 %5862, %v5795
  %v5864 = vpop.permute.xlu0 %5863
  %5866 = vset.pattern.permute.xlu0 1
  %5867 = vperm.xlu0 %5866, %v5796
  %v5868 = vpop.permute.xlu0 %5867
  %5870 = vset.pattern.permute.xlu0 1
  %5871 = vperm.xlu0 %5870, %v5797
  %v5872 = vpop.permute.xlu0 %5871
  %v5874 = vmul.f32 %v5774, %v5860
  %v5875 = vmul.f32 %v5775, %v5860
  %v5876 = vmul.f32 %v5776, %v5860
  %v5877 = vmul.f32 %v5777, %v5860
  %v5878 = vmul.f32 %v5778, %v5860
  %v5879 = vmul.f32 %v5779, %v5864
  %v5880 = vmul.f32 %v5780, %v5864
  %v5881 = vmul.f32 %v5781, %v5864
  %v5882 = vmul.f32 %v5782, %v5864
  %v5883 = vmul.f32 %v5783, %v5864
  %v5884 = vmul.f32 %v5784, %v5868
  %v5885 = vmul.f32 %v5785, %v5868
  %v5886 = vmul.f32 %v5786, %v5868
  %v5887 = vmul.f32 %v5787, %v5868
  %v5888 = vmul.f32 %v5788, %v5868
  %v5889 = vmul.f32 %v5789, %v5872
  %v5890 = vmul.f32 %v5790, %v5872
  %v5891 = vmul.f32 %v5791, %v5872
  %v5892 = vmul.f32 %v5792, %v5872
  %v5893 = vmul.f32 %v5793, %v5872
  %5914 = vrot.lane.b32.xlu0 %v5874, 127
  %v5915 = vpop.permute.xlu0 %5914
  %5916 = vrot.lane.b32.xlu0 %v5875, 127
  %v5917 = vpop.permute.xlu0 %5916
  %5918 = vrot.lane.b32.xlu0 %v5876, 127
  %v5919 = vpop.permute.xlu0 %5918
  %5920 = vrot.lane.b32.xlu0 %v5877, 127
  %v5921 = vpop.permute.xlu0 %5920
  %5922 = vrot.lane.b32.xlu0 %v5878, 127
  %v5923 = vpop.permute.xlu0 %5922
  %5924 = vrot.lane.b32.xlu0 %v5879, 127
  %v5925 = vpop.permute.xlu0 %5924
  %5926 = vrot.lane.b32.xlu0 %v5880, 127
  %v5927 = vpop.permute.xlu0 %5926
  %5928 = vrot.lane.b32.xlu0 %v5881, 127
  %v5929 = vpop.permute.xlu0 %5928
  %5930 = vrot.lane.b32.xlu0 %v5882, 127
  %v5931 = vpop.permute.xlu0 %5930
  %5932 = vrot.lane.b32.xlu0 %v5883, 127
  %v5933 = vpop.permute.xlu0 %5932
  %5934 = vrot.lane.b32.xlu0 %v5884, 127
  %v5935 = vpop.permute.xlu0 %5934
  %5936 = vrot.lane.b32.xlu0 %v5885, 127
  %v5937 = vpop.permute.xlu0 %5936
  %5938 = vrot.lane.b32.xlu0 %v5886, 127
  %v5939 = vpop.permute.xlu0 %5938
  %5940 = vrot.lane.b32.xlu0 %v5887, 127
  %v5941 = vpop.permute.xlu0 %5940
  %5942 = vrot.lane.b32.xlu0 %v5888, 127
  %v5943 = vpop.permute.xlu0 %5942
  %5944 = vrot.lane.b32.xlu0 %v5889, 127
  %v5945 = vpop.permute.xlu0 %5944
  %5946 = vrot.lane.b32.xlu0 %v5890, 127
  %v5947 = vpop.permute.xlu0 %5946
  %5948 = vrot.lane.b32.xlu0 %v5891, 127
  %v5949 = vpop.permute.xlu0 %5948
  %5950 = vrot.lane.b32.xlu0 %v5892, 127
  %v5951 = vpop.permute.xlu0 %5950
  %5952 = vrot.lane.b32.xlu0 %v5893, 127
  %v5953 = vpop.permute.xlu0 %5952
  %v5954 = vsel %vm267, %v5915, %v5917
  %v5955 = vsel %vm267, %v5917, %v5919
  %v5956 = vsel %vm267, %v5919, %v5921
  %v5957 = vsel %vm267, %v5921, %v5923
  %v5958 = vsel %vm267, %v5925, %v5927
  %v5959 = vsel %vm267, %v5927, %v5929
  %v5960 = vsel %vm267, %v5929, %v5931
  %v5961 = vsel %vm267, %v5931, %v5933
  %v5962 = vsel %vm267, %v5935, %v5937
  %v5963 = vsel %vm267, %v5937, %v5939
  %v5964 = vsel %vm267, %v5939, %v5941
  %v5965 = vsel %vm267, %v5941, %v5943
  %v5966 = vsel %vm267, %v5945, %v5947
  %v5967 = vsel %vm267, %v5947, %v5949
  %v5968 = vsel %vm267, %v5949, %v5951
  %v5969 = vsel %vm267, %v5951, %v5953
  %v5990 = vadd.f32 %v5838, %v5954
  %v5991 = vadd.f32 %v5839, %v5955
  %v5992 = vadd.f32 %v5840, %v5956
  %v5993 = vadd.f32 %v5841, %v5957
  %v5994 = vadd.f32 %v5842, %v5923
  %v5995 = vadd.f32 %v5843, %v5958
  %v5996 = vadd.f32 %v5844, %v5959
  %v5997 = vadd.f32 %v5845, %v5960
  %v5998 = vadd.f32 %v5846, %v5961
  %v5999 = vadd.f32 %v5847, %v5933
  %v6000 = vadd.f32 %v5848, %v5962
  %v6001 = vadd.f32 %v5849, %v5963
  %v6002 = vadd.f32 %v5850, %v5964
  %v6003 = vadd.f32 %v5851, %v5965
  %v6004 = vadd.f32 %v5852, %v5943
  %v6005 = vadd.f32 %v5853, %v5966
  %v6006 = vadd.f32 %v5854, %v5967
  %v6007 = vadd.f32 %v5855, %v5968
  %v6008 = vadd.f32 %v5856, %v5969
  %v6009 = vadd.f32 %v5857, %v5953
  %6010 = vset.pattern.permute.xlu0 2
  %6011 = vperm.xlu0 %6010, %v5794
  %v6012 = vpop.permute.xlu0 %6011
  %6014 = vset.pattern.permute.xlu0 2
  %6015 = vperm.xlu0 %6014, %v5795
  %v6016 = vpop.permute.xlu0 %6015
  %6018 = vset.pattern.permute.xlu0 2
  %6019 = vperm.xlu0 %6018, %v5796
  %v6020 = vpop.permute.xlu0 %6019
  %6022 = vset.pattern.permute.xlu0 2
  %6023 = vperm.xlu0 %6022, %v5797
  %v6024 = vpop.permute.xlu0 %6023
  %v6026 = vmul.f32 %v5774, %v6012
  %v6027 = vmul.f32 %v5775, %v6012
  %v6028 = vmul.f32 %v5776, %v6012
  %v6029 = vmul.f32 %v5777, %v6012
  %v6030 = vmul.f32 %v5778, %v6012
  %v6031 = vmul.f32 %v5779, %v6016
  %v6032 = vmul.f32 %v5780, %v6016
  %v6033 = vmul.f32 %v5781, %v6016
  %v6034 = vmul.f32 %v5782, %v6016
  %v6035 = vmul.f32 %v5783, %v6016
  %v6036 = vmul.f32 %v5784, %v6020
  %v6037 = vmul.f32 %v5785, %v6020
  %v6038 = vmul.f32 %v5786, %v6020
  %v6039 = vmul.f32 %v5787, %v6020
  %v6040 = vmul.f32 %v5788, %v6020
  %v6041 = vmul.f32 %v5789, %v6024
  %v6042 = vmul.f32 %v5790, %v6024
  %v6043 = vmul.f32 %v5791, %v6024
  %v6044 = vmul.f32 %v5792, %v6024
  %v6045 = vmul.f32 %v5793, %v6024
  %6066 = vrot.lane.b32.xlu0 %v6026, 126
  %v6067 = vpop.permute.xlu0 %6066
  %6068 = vrot.lane.b32.xlu0 %v6027, 126
  %v6069 = vpop.permute.xlu0 %6068
  %6070 = vrot.lane.b32.xlu0 %v6028, 126
  %v6071 = vpop.permute.xlu0 %6070
  %6072 = vrot.lane.b32.xlu0 %v6029, 126
  %v6073 = vpop.permute.xlu0 %6072
  %6074 = vrot.lane.b32.xlu0 %v6030, 126
  %v6075 = vpop.permute.xlu0 %6074
  %6076 = vrot.lane.b32.xlu0 %v6031, 126
  %v6077 = vpop.permute.xlu0 %6076
  %6078 = vrot.lane.b32.xlu0 %v6032, 126
  %v6079 = vpop.permute.xlu0 %6078
  %6080 = vrot.lane.b32.xlu0 %v6033, 126
  %v6081 = vpop.permute.xlu0 %6080
  %6082 = vrot.lane.b32.xlu0 %v6034, 126
  %v6083 = vpop.permute.xlu0 %6082
  %6084 = vrot.lane.b32.xlu0 %v6035, 126
  %v6085 = vpop.permute.xlu0 %6084
  %6086 = vrot.lane.b32.xlu0 %v6036, 126
  %v6087 = vpop.permute.xlu0 %6086
  %6088 = vrot.lane.b32.xlu0 %v6037, 126
  %v6089 = vpop.permute.xlu0 %6088
  %6090 = vrot.lane.b32.xlu0 %v6038, 126
  %v6091 = vpop.permute.xlu0 %6090
  %6092 = vrot.lane.b32.xlu0 %v6039, 126
  %v6093 = vpop.permute.xlu0 %6092
  %6094 = vrot.lane.b32.xlu0 %v6040, 126
  %v6095 = vpop.permute.xlu0 %6094
  %6096 = vrot.lane.b32.xlu0 %v6041, 126
  %v6097 = vpop.permute.xlu0 %6096
  %6098 = vrot.lane.b32.xlu0 %v6042, 126
  %v6099 = vpop.permute.xlu0 %6098
  %6100 = vrot.lane.b32.xlu0 %v6043, 126
  %v6101 = vpop.permute.xlu0 %6100
  %6102 = vrot.lane.b32.xlu0 %v6044, 126
  %v6103 = vpop.permute.xlu0 %6102
  %6104 = vrot.lane.b32.xlu0 %v6045, 126
  %v6105 = vpop.permute.xlu0 %6104
  %v6106 = vsel %vm420, %v6067, %v6069
  %v6107 = vsel %vm420, %v6069, %v6071
  %v6108 = vsel %vm420, %v6071, %v6073
  %v6109 = vsel %vm420, %v6073, %v6075
  %v6110 = vsel %vm420, %v6077, %v6079
  %v6111 = vsel %vm420, %v6079, %v6081
  %v6112 = vsel %vm420, %v6081, %v6083
  %v6113 = vsel %vm420, %v6083, %v6085
  %v6114 = vsel %vm420, %v6087, %v6089
  %v6115 = vsel %vm420, %v6089, %v6091
  %v6116 = vsel %vm420, %v6091, %v6093
  %v6117 = vsel %vm420, %v6093, %v6095
  %v6118 = vsel %vm420, %v6097, %v6099
  %v6119 = vsel %vm420, %v6099, %v6101
  %v6120 = vsel %vm420, %v6101, %v6103
  %v6121 = vsel %vm420, %v6103, %v6105
  %v6142 = vadd.f32 %v5990, %v6106
  %v6143 = vadd.f32 %v5991, %v6107
  %v6144 = vadd.f32 %v5992, %v6108
  %v6145 = vadd.f32 %v5993, %v6109
  %v6146 = vadd.f32 %v5994, %v6075
  %v6147 = vadd.f32 %v5995, %v6110
  %v6148 = vadd.f32 %v5996, %v6111
  %v6149 = vadd.f32 %v5997, %v6112
  %v6150 = vadd.f32 %v5998, %v6113
  %v6151 = vadd.f32 %v5999, %v6085
  %v6152 = vadd.f32 %v6000, %v6114
  %v6153 = vadd.f32 %v6001, %v6115
  %v6154 = vadd.f32 %v6002, %v6116
  %v6155 = vadd.f32 %v6003, %v6117
  %v6156 = vadd.f32 %v6004, %v6095
  %v6157 = vadd.f32 %v6005, %v6118
  %v6158 = vadd.f32 %v6006, %v6119
  %v6159 = vadd.f32 %v6007, %v6120
  %v6160 = vadd.f32 %v6008, %v6121
  %v6161 = vadd.f32 %v6009, %v6105
  %6162 = vset.pattern.permute.xlu0 3
  %6163 = vperm.xlu0 %6162, %v5794
  %v6164 = vpop.permute.xlu0 %6163
  %6166 = vset.pattern.permute.xlu0 3
  %6167 = vperm.xlu0 %6166, %v5795
  %v6168 = vpop.permute.xlu0 %6167
  %6170 = vset.pattern.permute.xlu0 3
  %6171 = vperm.xlu0 %6170, %v5796
  %v6172 = vpop.permute.xlu0 %6171
  %6174 = vset.pattern.permute.xlu0 3
  %6175 = vperm.xlu0 %6174, %v5797
  %v6176 = vpop.permute.xlu0 %6175
  %v6178 = vmul.f32 %v5774, %v6164
  %v6179 = vmul.f32 %v5775, %v6164
  %v6180 = vmul.f32 %v5776, %v6164
  %v6181 = vmul.f32 %v5777, %v6164
  %v6182 = vmul.f32 %v5778, %v6164
  %v6183 = vmul.f32 %v5779, %v6168
  %v6184 = vmul.f32 %v5780, %v6168
  %v6185 = vmul.f32 %v5781, %v6168
  %v6186 = vmul.f32 %v5782, %v6168
  %v6187 = vmul.f32 %v5783, %v6168
  %v6188 = vmul.f32 %v5784, %v6172
  %v6189 = vmul.f32 %v5785, %v6172
  %v6190 = vmul.f32 %v5786, %v6172
  %v6191 = vmul.f32 %v5787, %v6172
  %v6192 = vmul.f32 %v5788, %v6172
  %v6193 = vmul.f32 %v5789, %v6176
  %v6194 = vmul.f32 %v5790, %v6176
  %v6195 = vmul.f32 %v5791, %v6176
  %v6196 = vmul.f32 %v5792, %v6176
  %v6197 = vmul.f32 %v5793, %v6176
  %6218 = vrot.lane.b32.xlu0 %v6178, 110
  %v6219 = vpop.permute.xlu0 %6218
  %6220 = vrot.lane.b32.xlu0 %v6179, 110
  %v6221 = vpop.permute.xlu0 %6220
  %6222 = vrot.lane.b32.xlu0 %v6180, 110
  %v6223 = vpop.permute.xlu0 %6222
  %6224 = vrot.lane.b32.xlu0 %v6181, 110
  %v6225 = vpop.permute.xlu0 %6224
  %6226 = vrot.lane.b32.xlu0 %v6182, 110
  %v6227 = vpop.permute.xlu0 %6226
  %6228 = vrot.lane.b32.xlu0 %v6183, 110
  %v6229 = vpop.permute.xlu0 %6228
  %6230 = vrot.lane.b32.xlu0 %v6184, 110
  %v6231 = vpop.permute.xlu0 %6230
  %6232 = vrot.lane.b32.xlu0 %v6185, 110
  %v6233 = vpop.permute.xlu0 %6232
  %6234 = vrot.lane.b32.xlu0 %v6186, 110
  %v6235 = vpop.permute.xlu0 %6234
  %6236 = vrot.lane.b32.xlu0 %v6187, 110
  %v6237 = vpop.permute.xlu0 %6236
  %6238 = vrot.lane.b32.xlu0 %v6188, 110
  %v6239 = vpop.permute.xlu0 %6238
  %6240 = vrot.lane.b32.xlu0 %v6189, 110
  %v6241 = vpop.permute.xlu0 %6240
  %6242 = vrot.lane.b32.xlu0 %v6190, 110
  %v6243 = vpop.permute.xlu0 %6242
  %6244 = vrot.lane.b32.xlu0 %v6191, 110
  %v6245 = vpop.permute.xlu0 %6244
  %6246 = vrot.lane.b32.xlu0 %v6192, 110
  %v6247 = vpop.permute.xlu0 %6246
  %6248 = vrot.lane.b32.xlu0 %v6193, 110
  %v6249 = vpop.permute.xlu0 %6248
  %6250 = vrot.lane.b32.xlu0 %v6194, 110
  %v6251 = vpop.permute.xlu0 %6250
  %6252 = vrot.lane.b32.xlu0 %v6195, 110
  %v6253 = vpop.permute.xlu0 %6252
  %6254 = vrot.lane.b32.xlu0 %v6196, 110
  %v6255 = vpop.permute.xlu0 %6254
  %6256 = vrot.lane.b32.xlu0 %v6197, 110
  %v6257 = vpop.permute.xlu0 %6256
  %v6258 = vsel %vm573, %v6219, %v6221
  %v6259 = vsel %vm573, %v6221, %v6223
  %v6260 = vsel %vm573, %v6223, %v6225
  %v6261 = vsel %vm573, %v6225, %v6227
  %v6262 = vsel %vm573, %v6229, %v6231
  %v6263 = vsel %vm573, %v6231, %v6233
  %v6264 = vsel %vm573, %v6233, %v6235
  %v6265 = vsel %vm573, %v6235, %v6237
  %v6266 = vsel %vm573, %v6239, %v6241
  %v6267 = vsel %vm573, %v6241, %v6243
  %v6268 = vsel %vm573, %v6243, %v6245
  %v6269 = vsel %vm573, %v6245, %v6247
  %v6270 = vsel %vm573, %v6249, %v6251
  %v6271 = vsel %vm573, %v6251, %v6253
  %v6272 = vsel %vm573, %v6253, %v6255
  %v6273 = vsel %vm573, %v6255, %v6257
  %v6294 = vadd.f32 %v6142, %v6258
  %v6295 = vadd.f32 %v6143, %v6259
  %v6296 = vadd.f32 %v6144, %v6260
  %v6297 = vadd.f32 %v6145, %v6261
  %v6298 = vadd.f32 %v6146, %v6227
  %v6299 = vadd.f32 %v6147, %v6262
  %v6300 = vadd.f32 %v6148, %v6263
  %v6301 = vadd.f32 %v6149, %v6264
  %v6302 = vadd.f32 %v6150, %v6265
  %v6303 = vadd.f32 %v6151, %v6237
  %v6304 = vadd.f32 %v6152, %v6266
  %v6305 = vadd.f32 %v6153, %v6267
  %v6306 = vadd.f32 %v6154, %v6268
  %v6307 = vadd.f32 %v6155, %v6269
  %v6308 = vadd.f32 %v6156, %v6247
  %v6309 = vadd.f32 %v6157, %v6270
  %v6310 = vadd.f32 %v6158, %v6271
  %v6311 = vadd.f32 %v6159, %v6272
  %v6312 = vadd.f32 %v6160, %v6273
  %v6313 = vadd.f32 %v6161, %v6257
  %6314 = vset.pattern.permute.xlu0 4
  %6315 = vperm.xlu0 %6314, %v5794
  %v6316 = vpop.permute.xlu0 %6315
  %6318 = vset.pattern.permute.xlu0 4
  %6319 = vperm.xlu0 %6318, %v5795
  %v6320 = vpop.permute.xlu0 %6319
  %6322 = vset.pattern.permute.xlu0 4
  %6323 = vperm.xlu0 %6322, %v5796
  %v6324 = vpop.permute.xlu0 %6323
  %6326 = vset.pattern.permute.xlu0 4
  %6327 = vperm.xlu0 %6326, %v5797
  %v6328 = vpop.permute.xlu0 %6327
  %v6330 = vmul.f32 %v5774, %v6316
  %v6331 = vmul.f32 %v5775, %v6316
  %v6332 = vmul.f32 %v5776, %v6316
  %v6333 = vmul.f32 %v5777, %v6316
  %v6334 = vmul.f32 %v5778, %v6316
  %v6335 = vmul.f32 %v5779, %v6320
  %v6336 = vmul.f32 %v5780, %v6320
  %v6337 = vmul.f32 %v5781, %v6320
  %v6338 = vmul.f32 %v5782, %v6320
  %v6339 = vmul.f32 %v5783, %v6320
  %v6340 = vmul.f32 %v5784, %v6324
  %v6341 = vmul.f32 %v5785, %v6324
  %v6342 = vmul.f32 %v5786, %v6324
  %v6343 = vmul.f32 %v5787, %v6324
  %v6344 = vmul.f32 %v5788, %v6324
  %v6345 = vmul.f32 %v5789, %v6328
  %v6346 = vmul.f32 %v5790, %v6328
  %v6347 = vmul.f32 %v5791, %v6328
  %v6348 = vmul.f32 %v5792, %v6328
  %v6349 = vmul.f32 %v5793, %v6328
  %6370 = vrot.lane.b32.xlu0 %v6330, 109
  %v6371 = vpop.permute.xlu0 %6370
  %6372 = vrot.lane.b32.xlu0 %v6331, 109
  %v6373 = vpop.permute.xlu0 %6372
  %6374 = vrot.lane.b32.xlu0 %v6332, 109
  %v6375 = vpop.permute.xlu0 %6374
  %6376 = vrot.lane.b32.xlu0 %v6333, 109
  %v6377 = vpop.permute.xlu0 %6376
  %6378 = vrot.lane.b32.xlu0 %v6334, 109
  %v6379 = vpop.permute.xlu0 %6378
  %6380 = vrot.lane.b32.xlu0 %v6335, 109
  %v6381 = vpop.permute.xlu0 %6380
  %6382 = vrot.lane.b32.xlu0 %v6336, 109
  %v6383 = vpop.permute.xlu0 %6382
  %6384 = vrot.lane.b32.xlu0 %v6337, 109
  %v6385 = vpop.permute.xlu0 %6384
  %6386 = vrot.lane.b32.xlu0 %v6338, 109
  %v6387 = vpop.permute.xlu0 %6386
  %6388 = vrot.lane.b32.xlu0 %v6339, 109
  %v6389 = vpop.permute.xlu0 %6388
  %6390 = vrot.lane.b32.xlu0 %v6340, 109
  %v6391 = vpop.permute.xlu0 %6390
  %6392 = vrot.lane.b32.xlu0 %v6341, 109
  %v6393 = vpop.permute.xlu0 %6392
  %6394 = vrot.lane.b32.xlu0 %v6342, 109
  %v6395 = vpop.permute.xlu0 %6394
  %6396 = vrot.lane.b32.xlu0 %v6343, 109
  %v6397 = vpop.permute.xlu0 %6396
  %6398 = vrot.lane.b32.xlu0 %v6344, 109
  %v6399 = vpop.permute.xlu0 %6398
  %6400 = vrot.lane.b32.xlu0 %v6345, 109
  %v6401 = vpop.permute.xlu0 %6400
  %6402 = vrot.lane.b32.xlu0 %v6346, 109
  %v6403 = vpop.permute.xlu0 %6402
  %6404 = vrot.lane.b32.xlu0 %v6347, 109
  %v6405 = vpop.permute.xlu0 %6404
  %6406 = vrot.lane.b32.xlu0 %v6348, 109
  %v6407 = vpop.permute.xlu0 %6406
  %6408 = vrot.lane.b32.xlu0 %v6349, 109
  %v6409 = vpop.permute.xlu0 %6408
  %v6410 = vsel %vm726, %v6371, %v6373
  %v6411 = vsel %vm726, %v6373, %v6375
  %v6412 = vsel %vm726, %v6375, %v6377
  %v6413 = vsel %vm726, %v6377, %v6379
  %v6414 = vsel %vm726, %v6381, %v6383
  %v6415 = vsel %vm726, %v6383, %v6385
  %v6416 = vsel %vm726, %v6385, %v6387
  %v6417 = vsel %vm726, %v6387, %v6389
  %v6418 = vsel %vm726, %v6391, %v6393
  %v6419 = vsel %vm726, %v6393, %v6395
  %v6420 = vsel %vm726, %v6395, %v6397
  %v6421 = vsel %vm726, %v6397, %v6399
  %v6422 = vsel %vm726, %v6401, %v6403
  %v6423 = vsel %vm726, %v6403, %v6405
  %v6424 = vsel %vm726, %v6405, %v6407
  %v6425 = vsel %vm726, %v6407, %v6409
  %v6446 = vadd.f32 %v6294, %v6410
  %v6447 = vadd.f32 %v6295, %v6411
  %v6448 = vadd.f32 %v6296, %v6412
  %v6449 = vadd.f32 %v6297, %v6413
  %v6450 = vadd.f32 %v6298, %v6379
  %v6451 = vadd.f32 %v6299, %v6414
  %v6452 = vadd.f32 %v6300, %v6415
  %v6453 = vadd.f32 %v6301, %v6416
  %v6454 = vadd.f32 %v6302, %v6417
  %v6455 = vadd.f32 %v6303, %v6389
  %v6456 = vadd.f32 %v6304, %v6418
  %v6457 = vadd.f32 %v6305, %v6419
  %v6458 = vadd.f32 %v6306, %v6420
  %v6459 = vadd.f32 %v6307, %v6421
  %v6460 = vadd.f32 %v6308, %v6399
  %v6461 = vadd.f32 %v6309, %v6422
  %v6462 = vadd.f32 %v6310, %v6423
  %v6463 = vadd.f32 %v6311, %v6424
  %v6464 = vadd.f32 %v6312, %v6425
  %v6465 = vadd.f32 %v6313, %v6409
  %6466 = vset.pattern.permute.xlu0 5
  %6467 = vperm.xlu0 %6466, %v5794
  %v6468 = vpop.permute.xlu0 %6467
  %6470 = vset.pattern.permute.xlu0 5
  %6471 = vperm.xlu0 %6470, %v5795
  %v6472 = vpop.permute.xlu0 %6471
  %6474 = vset.pattern.permute.xlu0 5
  %6475 = vperm.xlu0 %6474, %v5796
  %v6476 = vpop.permute.xlu0 %6475
  %6478 = vset.pattern.permute.xlu0 5
  %6479 = vperm.xlu0 %6478, %v5797
  %v6480 = vpop.permute.xlu0 %6479
  %v6482 = vmul.f32 %v5774, %v6468
  %v6483 = vmul.f32 %v5775, %v6468
  %v6484 = vmul.f32 %v5776, %v6468
  %v6485 = vmul.f32 %v5777, %v6468
  %v6486 = vmul.f32 %v5778, %v6468
  %v6487 = vmul.f32 %v5779, %v6472
  %v6488 = vmul.f32 %v5780, %v6472
  %v6489 = vmul.f32 %v5781, %v6472
  %v6490 = vmul.f32 %v5782, %v6472
  %v6491 = vmul.f32 %v5783, %v6472
  %v6492 = vmul.f32 %v5784, %v6476
  %v6493 = vmul.f32 %v5785, %v6476
  %v6494 = vmul.f32 %v5786, %v6476
  %v6495 = vmul.f32 %v5787, %v6476
  %v6496 = vmul.f32 %v5788, %v6476
  %v6497 = vmul.f32 %v5789, %v6480
  %v6498 = vmul.f32 %v5790, %v6480
  %v6499 = vmul.f32 %v5791, %v6480
  %v6500 = vmul.f32 %v5792, %v6480
  %v6501 = vmul.f32 %v5793, %v6480
  %6522 = vrot.lane.b32.xlu0 %v6482, 108
  %v6523 = vpop.permute.xlu0 %6522
  %6524 = vrot.lane.b32.xlu0 %v6483, 108
  %v6525 = vpop.permute.xlu0 %6524
  %6526 = vrot.lane.b32.xlu0 %v6484, 108
  %v6527 = vpop.permute.xlu0 %6526
  %6528 = vrot.lane.b32.xlu0 %v6485, 108
  %v6529 = vpop.permute.xlu0 %6528
  %6530 = vrot.lane.b32.xlu0 %v6486, 108
  %v6531 = vpop.permute.xlu0 %6530
  %6532 = vrot.lane.b32.xlu0 %v6487, 108
  %v6533 = vpop.permute.xlu0 %6532
  %6534 = vrot.lane.b32.xlu0 %v6488, 108
  %v6535 = vpop.permute.xlu0 %6534
  %6536 = vrot.lane.b32.xlu0 %v6489, 108
  %v6537 = vpop.permute.xlu0 %6536
  %6538 = vrot.lane.b32.xlu0 %v6490, 108
  %v6539 = vpop.permute.xlu0 %6538
  %6540 = vrot.lane.b32.xlu0 %v6491, 108
  %v6541 = vpop.permute.xlu0 %6540
  %6542 = vrot.lane.b32.xlu0 %v6492, 108
  %v6543 = vpop.permute.xlu0 %6542
  %6544 = vrot.lane.b32.xlu0 %v6493, 108
  %v6545 = vpop.permute.xlu0 %6544
  %6546 = vrot.lane.b32.xlu0 %v6494, 108
  %v6547 = vpop.permute.xlu0 %6546
  %6548 = vrot.lane.b32.xlu0 %v6495, 108
  %v6549 = vpop.permute.xlu0 %6548
  %6550 = vrot.lane.b32.xlu0 %v6496, 108
  %v6551 = vpop.permute.xlu0 %6550
  %6552 = vrot.lane.b32.xlu0 %v6497, 108
  %v6553 = vpop.permute.xlu0 %6552
  %6554 = vrot.lane.b32.xlu0 %v6498, 108
  %v6555 = vpop.permute.xlu0 %6554
  %6556 = vrot.lane.b32.xlu0 %v6499, 108
  %v6557 = vpop.permute.xlu0 %6556
  %6558 = vrot.lane.b32.xlu0 %v6500, 108
  %v6559 = vpop.permute.xlu0 %6558
  %6560 = vrot.lane.b32.xlu0 %v6501, 108
  %v6561 = vpop.permute.xlu0 %6560
  %v6562 = vsel %vm879, %v6523, %v6525
  %v6563 = vsel %vm879, %v6525, %v6527
  %v6564 = vsel %vm879, %v6527, %v6529
  %v6565 = vsel %vm879, %v6529, %v6531
  %v6566 = vsel %vm879, %v6533, %v6535
  %v6567 = vsel %vm879, %v6535, %v6537
  %v6568 = vsel %vm879, %v6537, %v6539
  %v6569 = vsel %vm879, %v6539, %v6541
  %v6570 = vsel %vm879, %v6543, %v6545
  %v6571 = vsel %vm879, %v6545, %v6547
  %v6572 = vsel %vm879, %v6547, %v6549
  %v6573 = vsel %vm879, %v6549, %v6551
  %v6574 = vsel %vm879, %v6553, %v6555
  %v6575 = vsel %vm879, %v6555, %v6557
  %v6576 = vsel %vm879, %v6557, %v6559
  %v6577 = vsel %vm879, %v6559, %v6561
  %v6598 = vadd.f32 %v6446, %v6562
  %v6599 = vadd.f32 %v6447, %v6563
  %v6600 = vadd.f32 %v6448, %v6564
  %v6601 = vadd.f32 %v6449, %v6565
  %v6602 = vadd.f32 %v6450, %v6531
  %v6603 = vadd.f32 %v6451, %v6566
  %v6604 = vadd.f32 %v6452, %v6567
  %v6605 = vadd.f32 %v6453, %v6568
  %v6606 = vadd.f32 %v6454, %v6569
  %v6607 = vadd.f32 %v6455, %v6541
  %v6608 = vadd.f32 %v6456, %v6570
  %v6609 = vadd.f32 %v6457, %v6571
  %v6610 = vadd.f32 %v6458, %v6572
  %v6611 = vadd.f32 %v6459, %v6573
  %v6612 = vadd.f32 %v6460, %v6551
  %v6613 = vadd.f32 %v6461, %v6574
  %v6614 = vadd.f32 %v6462, %v6575
  %v6615 = vadd.f32 %v6463, %v6576
  %v6616 = vadd.f32 %v6464, %v6577
  %v6617 = vadd.f32 %v6465, %v6561
  %v6618 = vld [vmem:[#allocation2] sm:$0xff]
  %v6619 = vld [vmem:[#allocation2 + $0x8] sm:$0xff]
  %v6620 = vld [vmem:[#allocation2 + $0x10] sm:$0xff]
  %v6621 = vld [vmem:[#allocation2 + $0x18] sm:$0xff]
  %v6622 = vld [vmem:[#allocation2 + $0x20] sm:$0xff]
  %v6623 = vld [vmem:[#allocation2 + $0x28] sm:$0xff]
  %v6624 = vld [vmem:[#allocation2 + $0x30] sm:$0xff]
  %v6625 = vld [vmem:[#allocation2 + $0x38] sm:$0xff]
  %v6626 = vld [vmem:[#allocation2 + $0x40] sm:$0xff]
  %v6627 = vld [vmem:[#allocation2 + $0x48] sm:$0xff]
  %v6628 = vld [vmem:[#allocation2 + $0x50] sm:$0xff]
  %v6629 = vld [vmem:[#allocation2 + $0x58] sm:$0xff]
  %v6630 = vunpack.c.l.bf16 %v6618
  %v6631 = vunpack.c.h.bf16 %v6618
  %v6632 = vunpack.c.l.bf16 %v6619
  %v6633 = vunpack.c.h.bf16 %v6619
  %v6634 = vunpack.c.l.bf16 %v6620
  %v6635 = vunpack.c.h.bf16 %v6620
  %v6636 = vunpack.c.l.bf16 %v6621
  %v6637 = vunpack.c.h.bf16 %v6621
  %v6638 = vunpack.c.l.bf16 %v6622
  %v6639 = vunpack.c.h.bf16 %v6622
  %v6640 = vunpack.c.l.bf16 %v6623
  %v6641 = vunpack.c.h.bf16 %v6623
  %v6642 = vunpack.c.l.bf16 %v6624
  %v6643 = vunpack.c.h.bf16 %v6624
  %v6644 = vunpack.c.l.bf16 %v6625
  %v6645 = vunpack.c.h.bf16 %v6625
  %v6646 = vunpack.c.l.bf16 %v6626
  %v6647 = vunpack.c.h.bf16 %v6626
  %v6648 = vunpack.c.l.bf16 %v6627
  %v6649 = vunpack.c.h.bf16 %v6627
  %v6650 = vunpack.c.l.bf16 %v6628
  %v6651 = vunpack.c.h.bf16 %v6628
  %v6652 = vunpack.c.l.bf16 %v6629
  %v6653 = vunpack.c.h.bf16 %v6629
  %6654 = vset.pattern.permute.xlu0 6
  %6655 = vperm.xlu0 %6654, %v5794
  %v6656 = vpop.permute.xlu0 %6655
  %6658 = vset.pattern.permute.xlu0 6
  %6659 = vperm.xlu0 %6658, %v5795
  %v6660 = vpop.permute.xlu0 %6659
  %6662 = vset.pattern.permute.xlu0 6
  %6663 = vperm.xlu0 %6662, %v5796
  %v6664 = vpop.permute.xlu0 %6663
  %6666 = vset.pattern.permute.xlu0 6
  %6667 = vperm.xlu0 %6666, %v5797
  %v6668 = vpop.permute.xlu0 %6667
  %v6670 = vmul.f32 %v6630, %v6656
  %v6671 = vmul.f32 %v6631, %v6656
  %v6672 = vmul.f32 %v6632, %v6656
  %v6673 = vmul.f32 %v6633, %v6656
  %v6674 = vmul.f32 %v6634, %v6656
  %v6675 = vmul.f32 %v6635, %v6656
  %v6676 = vmul.f32 %v6636, %v6660
  %v6677 = vmul.f32 %v6637, %v6660
  %v6678 = vmul.f32 %v6638, %v6660
  %v6679 = vmul.f32 %v6639, %v6660
  %v6680 = vmul.f32 %v6640, %v6660
  %v6681 = vmul.f32 %v6641, %v6660
  %v6682 = vmul.f32 %v6642, %v6664
  %v6683 = vmul.f32 %v6643, %v6664
  %v6684 = vmul.f32 %v6644, %v6664
  %v6685 = vmul.f32 %v6645, %v6664
  %v6686 = vmul.f32 %v6646, %v6664
  %v6687 = vmul.f32 %v6647, %v6664
  %v6688 = vmul.f32 %v6648, %v6668
  %v6689 = vmul.f32 %v6649, %v6668
  %v6690 = vmul.f32 %v6650, %v6668
  %v6691 = vmul.f32 %v6651, %v6668
  %v6692 = vmul.f32 %v6652, %v6668
  %v6693 = vmul.f32 %v6653, %v6668
  %6718 = vrot.lane.b32.xlu0 %v6670, 92
  %v6719 = vpop.permute.xlu0 %6718
  %6720 = vrot.lane.b32.xlu0 %v6671, 92
  %v6721 = vpop.permute.xlu0 %6720
  %6722 = vrot.lane.b32.xlu0 %v6672, 92
  %v6723 = vpop.permute.xlu0 %6722
  %6724 = vrot.lane.b32.xlu0 %v6673, 92
  %v6725 = vpop.permute.xlu0 %6724
  %6726 = vrot.lane.b32.xlu0 %v6674, 92
  %v6727 = vpop.permute.xlu0 %6726
  %6728 = vrot.lane.b32.xlu0 %v6675, 92
  %v6729 = vpop.permute.xlu0 %6728
  %6730 = vrot.lane.b32.xlu0 %v6676, 92
  %v6731 = vpop.permute.xlu0 %6730
  %6732 = vrot.lane.b32.xlu0 %v6677, 92
  %v6733 = vpop.permute.xlu0 %6732
  %6734 = vrot.lane.b32.xlu0 %v6678, 92
  %v6735 = vpop.permute.xlu0 %6734
  %6736 = vrot.lane.b32.xlu0 %v6679, 92
  %v6737 = vpop.permute.xlu0 %6736
  %6738 = vrot.lane.b32.xlu0 %v6680, 92
  %v6739 = vpop.permute.xlu0 %6738
  %6740 = vrot.lane.b32.xlu0 %v6681, 92
  %v6741 = vpop.permute.xlu0 %6740
  %6742 = vrot.lane.b32.xlu0 %v6682, 92
  %v6743 = vpop.permute.xlu0 %6742
  %6744 = vrot.lane.b32.xlu0 %v6683, 92
  %v6745 = vpop.permute.xlu0 %6744
  %6746 = vrot.lane.b32.xlu0 %v6684, 92
  %v6747 = vpop.permute.xlu0 %6746
  %6748 = vrot.lane.b32.xlu0 %v6685, 92
  %v6749 = vpop.permute.xlu0 %6748
  %6750 = vrot.lane.b32.xlu0 %v6686, 92
  %v6751 = vpop.permute.xlu0 %6750
  %6752 = vrot.lane.b32.xlu0 %v6687, 92
  %v6753 = vpop.permute.xlu0 %6752
  %6754 = vrot.lane.b32.xlu0 %v6688, 92
  %v6755 = vpop.permute.xlu0 %6754
  %6756 = vrot.lane.b32.xlu0 %v6689, 92
  %v6757 = vpop.permute.xlu0 %6756
  %6758 = vrot.lane.b32.xlu0 %v6690, 92
  %v6759 = vpop.permute.xlu0 %6758
  %6760 = vrot.lane.b32.xlu0 %v6691, 92
  %v6761 = vpop.permute.xlu0 %6760
  %6762 = vrot.lane.b32.xlu0 %v6692, 92
  %v6763 = vpop.permute.xlu0 %6762
  %6764 = vrot.lane.b32.xlu0 %v6693, 92
  %v6765 = vpop.permute.xlu0 %6764
  %v6766 = vsel %vm1062, %v6719, %v6721
  %v6767 = vsel %vm1062, %v6721, %v6723
  %v6768 = vsel %vm1062, %v6723, %v6725
  %v6769 = vsel %vm1062, %v6725, %v6727
  %v6770 = vsel %vm1062, %v6727, %v6729
  %v6771 = vsel %vm1062, %v6731, %v6733
  %v6772 = vsel %vm1062, %v6733, %v6735
  %v6773 = vsel %vm1062, %v6735, %v6737
  %v6774 = vsel %vm1062, %v6737, %v6739
  %v6775 = vsel %vm1062, %v6739, %v6741
  %v6776 = vsel %vm1062, %v6743, %v6745
  %v6777 = vsel %vm1062, %v6745, %v6747
  %v6778 = vsel %vm1062, %v6747, %v6749
  %v6779 = vsel %vm1062, %v6749, %v6751
  %v6780 = vsel %vm1062, %v6751, %v6753
  %v6781 = vsel %vm1062, %v6755, %v6757
  %v6782 = vsel %vm1062, %v6757, %v6759
  %v6783 = vsel %vm1062, %v6759, %v6761
  %v6784 = vsel %vm1062, %v6761, %v6763
  %v6785 = vsel %vm1062, %v6763, %v6765
  %v6806 = vadd.f32 %v6598, %v6766
  %v6807 = vadd.f32 %v6599, %v6767
  %v6808 = vadd.f32 %v6600, %v6768
  %v6809 = vadd.f32 %v6601, %v6769
  %v6810 = vadd.f32 %v6602, %v6770
  %v6811 = vadd.f32 %v6603, %v6771
  %v6812 = vadd.f32 %v6604, %v6772
  %v6813 = vadd.f32 %v6605, %v6773
  %v6814 = vadd.f32 %v6606, %v6774
  %v6815 = vadd.f32 %v6607, %v6775
  %v6816 = vadd.f32 %v6608, %v6776
  %v6817 = vadd.f32 %v6609, %v6777
  %v6818 = vadd.f32 %v6610, %v6778
  %v6819 = vadd.f32 %v6611, %v6779
  %v6820 = vadd.f32 %v6612, %v6780
  %v6821 = vadd.f32 %v6613, %v6781
  %v6822 = vadd.f32 %v6614, %v6782
  %v6823 = vadd.f32 %v6615, %v6783
  %v6824 = vadd.f32 %v6616, %v6784
  %v6825 = vadd.f32 %v6617, %v6785
  %6826 = vset.pattern.permute.xlu0 7
  %6827 = vperm.xlu0 %6826, %v5794
  %v6828 = vpop.permute.xlu0 %6827
  %6830 = vset.pattern.permute.xlu0 7
  %6831 = vperm.xlu0 %6830, %v5795
  %v6832 = vpop.permute.xlu0 %6831
  %6834 = vset.pattern.permute.xlu0 7
  %6835 = vperm.xlu0 %6834, %v5796
  %v6836 = vpop.permute.xlu0 %6835
  %6838 = vset.pattern.permute.xlu0 7
  %6839 = vperm.xlu0 %6838, %v5797
  %v6840 = vpop.permute.xlu0 %6839
  %v6842 = vmul.f32 %v6630, %v6828
  %v6843 = vmul.f32 %v6631, %v6828
  %v6844 = vmul.f32 %v6632, %v6828
  %v6845 = vmul.f32 %v6633, %v6828
  %v6846 = vmul.f32 %v6634, %v6828
  %v6847 = vmul.f32 %v6635, %v6828
  %v6848 = vmul.f32 %v6636, %v6832
  %v6849 = vmul.f32 %v6637, %v6832
  %v6850 = vmul.f32 %v6638, %v6832
  %v6851 = vmul.f32 %v6639, %v6832
  %v6852 = vmul.f32 %v6640, %v6832
  %v6853 = vmul.f32 %v6641, %v6832
  %v6854 = vmul.f32 %v6642, %v6836
  %v6855 = vmul.f32 %v6643, %v6836
  %v6856 = vmul.f32 %v6644, %v6836
  %v6857 = vmul.f32 %v6645, %v6836
  %v6858 = vmul.f32 %v6646, %v6836
  %v6859 = vmul.f32 %v6647, %v6836
  %v6860 = vmul.f32 %v6648, %v6840
  %v6861 = vmul.f32 %v6649, %v6840
  %v6862 = vmul.f32 %v6650, %v6840
  %v6863 = vmul.f32 %v6651, %v6840
  %v6864 = vmul.f32 %v6652, %v6840
  %v6865 = vmul.f32 %v6653, %v6840
  %6890 = vrot.lane.b32.xlu0 %v6842, 91
  %v6891 = vpop.permute.xlu0 %6890
  %6892 = vrot.lane.b32.xlu0 %v6843, 91
  %v6893 = vpop.permute.xlu0 %6892
  %6894 = vrot.lane.b32.xlu0 %v6844, 91
  %v6895 = vpop.permute.xlu0 %6894
  %6896 = vrot.lane.b32.xlu0 %v6845, 91
  %v6897 = vpop.permute.xlu0 %6896
  %6898 = vrot.lane.b32.xlu0 %v6846, 91
  %v6899 = vpop.permute.xlu0 %6898
  %6900 = vrot.lane.b32.xlu0 %v6847, 91
  %v6901 = vpop.permute.xlu0 %6900
  %6902 = vrot.lane.b32.xlu0 %v6848, 91
  %v6903 = vpop.permute.xlu0 %6902
  %6904 = vrot.lane.b32.xlu0 %v6849, 91
  %v6905 = vpop.permute.xlu0 %6904
  %6906 = vrot.lane.b32.xlu0 %v6850, 91
  %v6907 = vpop.permute.xlu0 %6906
  %6908 = vrot.lane.b32.xlu0 %v6851, 91
  %v6909 = vpop.permute.xlu0 %6908
  %6910 = vrot.lane.b32.xlu0 %v6852, 91
  %v6911 = vpop.permute.xlu0 %6910
  %6912 = vrot.lane.b32.xlu0 %v6853, 91
  %v6913 = vpop.permute.xlu0 %6912
  %6914 = vrot.lane.b32.xlu0 %v6854, 91
  %v6915 = vpop.permute.xlu0 %6914
  %6916 = vrot.lane.b32.xlu0 %v6855, 91
  %v6917 = vpop.permute.xlu0 %6916
  %6918 = vrot.lane.b32.xlu0 %v6856, 91
  %v6919 = vpop.permute.xlu0 %6918
  %6920 = vrot.lane.b32.xlu0 %v6857, 91
  %v6921 = vpop.permute.xlu0 %6920
  %6922 = vrot.lane.b32.xlu0 %v6858, 91
  %v6923 = vpop.permute.xlu0 %6922
  %6924 = vrot.lane.b32.xlu0 %v6859, 91
  %v6925 = vpop.permute.xlu0 %6924
  %6926 = vrot.lane.b32.xlu0 %v6860, 91
  %v6927 = vpop.permute.xlu0 %6926
  %6928 = vrot.lane.b32.xlu0 %v6861, 91
  %v6929 = vpop.permute.xlu0 %6928
  %6930 = vrot.lane.b32.xlu0 %v6862, 91
  %v6931 = vpop.permute.xlu0 %6930
  %6932 = vrot.lane.b32.xlu0 %v6863, 91
  %v6933 = vpop.permute.xlu0 %6932
  %6934 = vrot.lane.b32.xlu0 %v6864, 91
  %v6935 = vpop.permute.xlu0 %6934
  %6936 = vrot.lane.b32.xlu0 %v6865, 91
  %v6937 = vpop.permute.xlu0 %6936
  %v6938 = vsel %vm1235, %v6891, %v6893
  %v6939 = vsel %vm1235, %v6893, %v6895
  %v6940 = vsel %vm1235, %v6895, %v6897
  %v6941 = vsel %vm1235, %v6897, %v6899
  %v6942 = vsel %vm1235, %v6899, %v6901
  %v6943 = vsel %vm1235, %v6903, %v6905
  %v6944 = vsel %vm1235, %v6905, %v6907
  %v6945 = vsel %vm1235, %v6907, %v6909
  %v6946 = vsel %vm1235, %v6909, %v6911
  %v6947 = vsel %vm1235, %v6911, %v6913
  %v6948 = vsel %vm1235, %v6915, %v6917
  %v6949 = vsel %vm1235, %v6917, %v6919
  %v6950 = vsel %vm1235, %v6919, %v6921
  %v6951 = vsel %vm1235, %v6921, %v6923
  %v6952 = vsel %vm1235, %v6923, %v6925
  %v6953 = vsel %vm1235, %v6927, %v6929
  %v6954 = vsel %vm1235, %v6929, %v6931
  %v6955 = vsel %vm1235, %v6931, %v6933
  %v6956 = vsel %vm1235, %v6933, %v6935
  %v6957 = vsel %vm1235, %v6935, %v6937
  %v6978 = vadd.f32 %v6806, %v6938
  %v6979 = vadd.f32 %v6807, %v6939
  %v6980 = vadd.f32 %v6808, %v6940
  %v6981 = vadd.f32 %v6809, %v6941
  %v6982 = vadd.f32 %v6810, %v6942
  %v6983 = vadd.f32 %v6811, %v6943
  %v6984 = vadd.f32 %v6812, %v6944
  %v6985 = vadd.f32 %v6813, %v6945
  %v6986 = vadd.f32 %v6814, %v6946
  %v6987 = vadd.f32 %v6815, %v6947
  %v6988 = vadd.f32 %v6816, %v6948
  %v6989 = vadd.f32 %v6817, %v6949
  %v6990 = vadd.f32 %v6818, %v6950
  %v6991 = vadd.f32 %v6819, %v6951
  %v6992 = vadd.f32 %v6820, %v6952
  %v6993 = vadd.f32 %v6821, %v6953
  %v6994 = vadd.f32 %v6822, %v6954
  %v6995 = vadd.f32 %v6823, %v6955
  %v6996 = vadd.f32 %v6824, %v6956
  %v6997 = vadd.f32 %v6825, %v6957
  %6998 = vset.pattern.permute.xlu0 8
  %6999 = vperm.xlu0 %6998, %v5794
  %v7000 = vpop.permute.xlu0 %6999
  %7002 = vset.pattern.permute.xlu0 8
  %7003 = vperm.xlu0 %7002, %v5795
  %v7004 = vpop.permute.xlu0 %7003
  %7006 = vset.pattern.permute.xlu0 8
  %7007 = vperm.xlu0 %7006, %v5796
  %v7008 = vpop.permute.xlu0 %7007
  %7010 = vset.pattern.permute.xlu0 8
  %7011 = vperm.xlu0 %7010, %v5797
  %v7012 = vpop.permute.xlu0 %7011
  %v7014 = vmul.f32 %v6630, %v7000
  %v7015 = vmul.f32 %v6631, %v7000
  %v7016 = vmul.f32 %v6632, %v7000
  %v7017 = vmul.f32 %v6633, %v7000
  %v7018 = vmul.f32 %v6634, %v7000
  %v7019 = vmul.f32 %v6635, %v7000
  %v7020 = vmul.f32 %v6636, %v7004
  %v7021 = vmul.f32 %v6637, %v7004
  %v7022 = vmul.f32 %v6638, %v7004
  %v7023 = vmul.f32 %v6639, %v7004
  %v7024 = vmul.f32 %v6640, %v7004
  %v7025 = vmul.f32 %v6641, %v7004
  %v7026 = vmul.f32 %v6642, %v7008
  %v7027 = vmul.f32 %v6643, %v7008
  %v7028 = vmul.f32 %v6644, %v7008
  %v7029 = vmul.f32 %v6645, %v7008
  %v7030 = vmul.f32 %v6646, %v7008
  %v7031 = vmul.f32 %v6647, %v7008
  %v7032 = vmul.f32 %v6648, %v7012
  %v7033 = vmul.f32 %v6649, %v7012
  %v7034 = vmul.f32 %v6650, %v7012
  %v7035 = vmul.f32 %v6651, %v7012
  %v7036 = vmul.f32 %v6652, %v7012
  %v7037 = vmul.f32 %v6653, %v7012
  %7062 = vrot.lane.b32.xlu0 %v7014, 90
  %v7063 = vpop.permute.xlu0 %7062
  %7064 = vrot.lane.b32.xlu0 %v7015, 90
  %v7065 = vpop.permute.xlu0 %7064
  %7066 = vrot.lane.b32.xlu0 %v7016, 90
  %v7067 = vpop.permute.xlu0 %7066
  %7068 = vrot.lane.b32.xlu0 %v7017, 90
  %v7069 = vpop.permute.xlu0 %7068
  %7070 = vrot.lane.b32.xlu0 %v7018, 90
  %v7071 = vpop.permute.xlu0 %7070
  %7072 = vrot.lane.b32.xlu0 %v7019, 90
  %v7073 = vpop.permute.xlu0 %7072
  %7074 = vrot.lane.b32.xlu0 %v7020, 90
  %v7075 = vpop.permute.xlu0 %7074
  %7076 = vrot.lane.b32.xlu0 %v7021, 90
  %v7077 = vpop.permute.xlu0 %7076
  %7078 = vrot.lane.b32.xlu0 %v7022, 90
  %v7079 = vpop.permute.xlu0 %7078
  %7080 = vrot.lane.b32.xlu0 %v7023, 90
  %v7081 = vpop.permute.xlu0 %7080
  %7082 = vrot.lane.b32.xlu0 %v7024, 90
  %v7083 = vpop.permute.xlu0 %7082
  %7084 = vrot.lane.b32.xlu0 %v7025, 90
  %v7085 = vpop.permute.xlu0 %7084
  %7086 = vrot.lane.b32.xlu0 %v7026, 90
  %v7087 = vpop.permute.xlu0 %7086
  %7088 = vrot.lane.b32.xlu0 %v7027, 90
  %v7089 = vpop.permute.xlu0 %7088
  %7090 = vrot.lane.b32.xlu0 %v7028, 90
  %v7091 = vpop.permute.xlu0 %7090
  %7092 = vrot.lane.b32.xlu0 %v7029, 90
  %v7093 = vpop.permute.xlu0 %7092
  %7094 = vrot.lane.b32.xlu0 %v7030, 90
  %v7095 = vpop.permute.xlu0 %7094
  %7096 = vrot.lane.b32.xlu0 %v7031, 90
  %v7097 = vpop.permute.xlu0 %7096
  %7098 = vrot.lane.b32.xlu0 %v7032, 90
  %v7099 = vpop.permute.xlu0 %7098
  %7100 = vrot.lane.b32.xlu0 %v7033, 90
  %v7101 = vpop.permute.xlu0 %7100
  %7102 = vrot.lane.b32.xlu0 %v7034, 90
  %v7103 = vpop.permute.xlu0 %7102
  %7104 = vrot.lane.b32.xlu0 %v7035, 90
  %v7105 = vpop.permute.xlu0 %7104
  %7106 = vrot.lane.b32.xlu0 %v7036, 90
  %v7107 = vpop.permute.xlu0 %7106
  %7108 = vrot.lane.b32.xlu0 %v7037, 90
  %v7109 = vpop.permute.xlu0 %7108
  %v7110 = vsel %vm1408, %v7063, %v7065
  %v7111 = vsel %vm1408, %v7065, %v7067
  %v7112 = vsel %vm1408, %v7067, %v7069
  %v7113 = vsel %vm1408, %v7069, %v7071
  %v7114 = vsel %vm1408, %v7071, %v7073
  %v7115 = vsel %vm1408, %v7075, %v7077
  %v7116 = vsel %vm1408, %v7077, %v7079
  %v7117 = vsel %vm1408, %v7079, %v7081
  %v7118 = vsel %vm1408, %v7081, %v7083
  %v7119 = vsel %vm1408, %v7083, %v7085
  %v7120 = vsel %vm1408, %v7087, %v7089
  %v7121 = vsel %vm1408, %v7089, %v7091
  %v7122 = vsel %vm1408, %v7091, %v7093
  %v7123 = vsel %vm1408, %v7093, %v7095
  %v7124 = vsel %vm1408, %v7095, %v7097
  %v7125 = vsel %vm1408, %v7099, %v7101
  %v7126 = vsel %vm1408, %v7101, %v7103
  %v7127 = vsel %vm1408, %v7103, %v7105
  %v7128 = vsel %vm1408, %v7105, %v7107
  %v7129 = vsel %vm1408, %v7107, %v7109
  %v7150 = vadd.f32 %v6978, %v7110
  %v7151 = vadd.f32 %v6979, %v7111
  %v7152 = vadd.f32 %v6980, %v7112
  %v7153 = vadd.f32 %v6981, %v7113
  %v7154 = vadd.f32 %v6982, %v7114
  %v7155 = vadd.f32 %v6983, %v7115
  %v7156 = vadd.f32 %v6984, %v7116
  %v7157 = vadd.f32 %v6985, %v7117
  %v7158 = vadd.f32 %v6986, %v7118
  %v7159 = vadd.f32 %v6987, %v7119
  %v7160 = vadd.f32 %v6988, %v7120
  %v7161 = vadd.f32 %v6989, %v7121
  %v7162 = vadd.f32 %v6990, %v7122
  %v7163 = vadd.f32 %v6991, %v7123
  %v7164 = vadd.f32 %v6992, %v7124
  %v7165 = vadd.f32 %v6993, %v7125
  %v7166 = vadd.f32 %v6994, %v7126
  %v7167 = vadd.f32 %v6995, %v7127
  %v7168 = vadd.f32 %v6996, %v7128
  %v7169 = vadd.f32 %v6997, %v7129
  %v7170 = vadd.f32 %v7150, %v7155
  %v7171 = vadd.f32 %v7170, %v7160
  %v7172 = vadd.f32 %v7171, %v7165
  %v7173 = vrot.slane %v7172, 4
  %v7174 = vadd.f32 %v7172, %v7173
  %v7175 = vrot.slane %v7174, 2
  %v7176 = vadd.f32 %v7174, %v7175
  %v7177 = vrot.slane %v7176, 1
  %v7178 = vadd.f32 %v7176, %v7177
  %v7179 = vadd.f32 %v7151, %v7156
  %v7180 = vadd.f32 %v7179, %v7161
  %v7181 = vadd.f32 %v7180, %v7166
  %v7182 = vrot.slane %v7181, 4
  %v7183 = vadd.f32 %v7181, %v7182
  %v7184 = vrot.slane %v7183, 2
  %v7185 = vadd.f32 %v7183, %v7184
  %v7186 = vrot.slane %v7185, 1
  %v7187 = vadd.f32 %v7185, %v7186
  %v7188 = vadd.f32 %v7152, %v7157
  %v7189 = vadd.f32 %v7188, %v7162
  %v7190 = vadd.f32 %v7189, %v7167
  %v7191 = vrot.slane %v7190, 4
  %v7192 = vadd.f32 %v7190, %v7191
  %v7193 = vrot.slane %v7192, 2
  %v7194 = vadd.f32 %v7192, %v7193
  %v7195 = vrot.slane %v7194, 1
  %v7196 = vadd.f32 %v7194, %v7195
  %v7197 = vadd.f32 %v7153, %v7158
  %v7198 = vadd.f32 %v7197, %v7163
  %v7199 = vadd.f32 %v7198, %v7168
  %v7200 = vrot.slane %v7199, 4
  %v7201 = vadd.f32 %v7199, %v7200
  %v7202 = vrot.slane %v7201, 2
  %v7203 = vadd.f32 %v7201, %v7202
  %v7204 = vrot.slane %v7203, 1
  %v7205 = vadd.f32 %v7203, %v7204
  %v7206 = vsel %vm3327, %v7154, 0.0
  %v7207 = vsel %vm3327, %v7159, 0.0
  %v7208 = vadd.f32 %v7206, %v7207
  %v7209 = vsel %vm3327, %v7164, 0.0
  %v7210 = vadd.f32 %v7208, %v7209
  %v7211 = vsel %vm3327, %v7169, 0.0
  %v7212 = vadd.f32 %v7210, %v7211
  %v7213 = vrot.slane %v7212, 4
  %v7214 = vadd.f32 %v7212, %v7213
  %v7215 = vrot.slane %v7214, 2
  %v7216 = vadd.f32 %v7214, %v7215
  %v7217 = vrot.slane %v7216, 1
  %v7218 = vadd.f32 %v7216, %v7217
  %v7219 = vld [vmem:[#allocation4] sm:$0x1]
  %7221 = vset.pattern.permute.xlu0 0
  %7222 = vperm.xlu0 %7221, %v7219
  %v7223 = vpop.permute.xlu0 %7222
  %v7225 = vperm.slane %v7223, 0
  %v7226 = vadd.f32 %v7178, %v7225
  %v7227 = vadd.f32 %v7187, %v7225
  %v7228 = vadd.f32 %v7196, %v7225
  %v7229 = vadd.f32 %v7205, %v7225
  %v7230 = vadd.f32 %v7218, %v7225
  %v7231 = vlaneseq
  %vm7232 = vcmp.ge.s32.totalorder %v7231, 0
  %vm7233 = vcmp.lt.s32.totalorder %v7231, 648
  %vm7234 = vmand %vm7232, %vm7233
  %7235 = vst.msk [vmem:[%s14] sm:$0x3f] %vm7234, 0.0
  %v7236 = vld [vmem:[%s0] sm:$0x1f]
  %v7242 = vrot.slane %v7227, 7
  %v7243 = vrot.slane %v7228, 6
  %v7244 = vrot.slane %v7229, 5
  %v7245 = vrot.slane %v7230, 4
  %vm7246 = vcmask 1040384
  %v7247 = vsel %vm7246, %v7226, %v7242
  %vm7248 = vcmask 1041408
  %v7249 = vsel %vm7248, %v7247, %v7243
  %vm7250 = vcmask 1043459
  %v7251 = vsel %vm7250, %v7244, %v7245
  %vm7252 = vcmask 1042432
  %v7253 = vsel %vm7252, %v7249, %v7251
  %7254 = vrot.lane.b32.xlu0 %v7253, 19
  %v7255 = vpop.permute.xlu0 %7254
  %v7256 = vrot.slane %v7255, 7
  %vm7257 = vcmask 154624
  %v7258 = vsel %vm7257, %v7256, %v7255
  %v7260 = vsub.f32 %v7236, %v7258
  %7261 = vrot.lane.b32.xlu0 %v50, 19
  %v7262 = vpop.permute.xlu0 %7261
  %v7263 = vrot.slane %v7262, 7
  %v7264 = vsel %vm7257, %v7263, %v7262
  %v7266 = vmul.f32 %v7260, %v7264
  %vm7267 = vcmp.ge.s32.totalorder %v7231, 19
  %vm7268 = vcmp.lt.s32.totalorder %v7231, 629
  %vm7269 = vmand %vm7267, %vm7268
  %7270 = vst.msk [vmem:[%s14] sm:$0x1f] %vm7269, %v7266
  // Predicated region
  $region58: #{wdnn_forward.1} parent=0 // pred_check
    _
  $region59: #{wdnn_forward.1} parent=0 // pred_check_branch
    %7272 = sbr.rel (0) target = $region61
  $region60: #{wdnn_forward.1} parent=0 // pred_region
    _
  $region61: #{wdnn_forward.1} parent=0 // pred_fallthru
    _
  // Predicated region
  $region62: #{wdnn_forward.1} parent=0 // pred_check
    _
  $region63: #{wdnn_forward.1} parent=0 // pred_check_branch
    %7274 = sbr.rel (0) target = $region65
  $region64: #{wdnn_forward.1} parent=0 // pred_region
    _
  $region65: #{wdnn_forward.1} parent=0 // pred_fallthru
    _

</llo_original>
